<compile_context>
chip_gen: v7x
topology: tpu7x:2x2x1
jax: 0.10.0
libtpu: 0.0.40
codegen_flags: <defaults>
</compile_context>

<pallas_src>
import functools

import jax
import jax.numpy as jnp
from jax.experimental import pallas as pl
from jax.experimental.pallas import tpu as pltpu


def drrnn_kernel(x_ref, w0_ref, b0_ref, wb1_ref, bb1_ref, wb2_ref, bb2_ref,
                 wf_ref, bf_ref, o_ref, *, depth):
    # x tile: (in_N=3, tb)  -- batch on lanes
    x = x_ref[...]
    dx = x[0:1, :]                                   # (1, tb)
    dy = x[1:2, :]
    dz = x[2:3, :]

    # stack[0]: Linear(3, m) as three broadcast FMAs on the VPU
    # (a K=3 matmul would waste a full MXU pass).
    w0 = w0_ref[...]                                 # (m, 3)
    h = (w0[:, 0:1] * dx + w0[:, 1:2] * dy + w0[:, 2:3] * dz
         + b0_ref[...])                              # (m, tb)

    # residual Blocks: tanh(L2(tanh(L1(h)))) + h   (transposed: W_t @ h + b_t)
    # depth is small here, so a static Python loop (full unroll) is fine.
    # TODO(synk): switch to lax.fori_loop with dynamic wb1_ref[d] indexing if
    # depth grows large enough to blow up vreg pressure / compile time.
    for d in range(depth):
        h1 = jnp.tanh(
            jnp.dot(wb1_ref[d], h, preferred_element_type=jnp.float32)
            + bb1_ref[d])
        h2 = jnp.tanh(
            jnp.dot(wb2_ref[d], h1, preferred_element_type=jnp.float32)
            + bb2_ref[d])
        h = h2 + h

    # final Linear(m, out_N)
    out = jnp.dot(wf_ref[...], h, preferred_element_type=jnp.float32) \
        + bf_ref[...]                                # (out_N, tb)

    # boundary factor x(1-x) y(1-y) z(1-z), computed once, single multiply.
    factor = (dx - dx * dx) * (dy - dy * dy) * (dz - dz * dz)   # (1, tb)
    o_ref[...] = out * factor


def drrnn_forward(x, params, *, depth, tb=2048):
    """x: (B, in_N=3) float32.  Returns (B, out_N)."""
    w0, b0, wb1, bb1, wb2, bb2, wf, bf = params
    B, in_N = x.shape
    m = w0.shape[1]
    out_N = wf.shape[1]

    # Lane tile: multiple of 128, no bigger than the (padded) batch.
    b_pad = ((B + 127) // 128) * 128
    tb = max(128, min(tb, b_pad))
    tb = (tb // 128) * 128
    b_pad = ((b_pad + tb - 1) // tb) * tb            # divisible by tb

    # Host-side transposes: batch-on-lanes data, (out, in) weights, (out, 1) biases.
    xt = x.T                                         # (in_N, B)
    if b_pad != B:
        xt = jnp.pad(xt, ((0, 0), (0, b_pad - B)))   # zero-pad ragged batch
    w0t = w0.T                                       # (m, in_N)
    b0t = b0.reshape(m, 1)                           # (m, 1)
    wb1t = jnp.swapaxes(wb1, 1, 2)                   # (depth, m, m)
    bb1t = jnp.swapaxes(bb1, 1, 2)                   # (depth, m, 1)
    wb2t = jnp.swapaxes(wb2, 1, 2)
    bb2t = jnp.swapaxes(bb2, 1, 2)
    wft = wf.T                                       # (out_N, m)
    bft = bf.reshape(out_N, 1)                       # (out_N, 1)

    full = lambda shape: pl.BlockSpec(shape, lambda i: tuple(0 for _ in shape))

    flops = (4 * m * m * b_pad * depth) + (2 * m * out_N * b_pad) + (6 * m * b_pad)
    transcendentals = 2 * depth * b_pad * m
    weight_bytes = 4 * (m * in_N + m + 2 * depth * (m * m + m) + m * out_N + out_N)
    bytes_accessed = 4 * b_pad * (in_N + out_N) + weight_bytes

    yt = pl.pallas_call(
        functools.partial(drrnn_kernel, depth=depth),
        out_shape=jax.ShapeDtypeStruct((out_N, b_pad), jnp.float32),
        grid_spec=pltpu.PrefetchScalarGridSpec(
            num_scalar_prefetch=0,
            grid=(b_pad // tb,),
            in_specs=[
                pl.BlockSpec((in_N, tb), lambda i: (0, i)),   # x tile (3, tb)
                full(w0t.shape), full(b0t.shape),
                full(wb1t.shape), full(bb1t.shape),
                full(wb2t.shape), full(bb2t.shape),
                full(wft.shape), full(bft.shape),
            ],
            out_specs=pl.BlockSpec((out_N, tb), lambda i: (0, i)),
        ),
        compiler_params=pltpu.CompilerParams(
            dimension_semantics=("parallel",)),
        cost_estimate=pl.CostEstimate(
            flops=flops,
            transcendentals=transcendentals,
            bytes_accessed=bytes_accessed),
    )(xt, w0t, b0t, wb1t, bb1t, wb2t, bb2t, wft, bft)

    return yt[:, :B].T                               # (B, out_N)


def init_params(key, in_N, m, out_N, depth):
    ks = jax.random.split(key, 8)
    scale = 0.5
    w0 = scale * jax.random.normal(ks[0], (in_N, m), jnp.float32)
    b0 = scale * jax.random.normal(ks[1], (1, m), jnp.float32)
    wb1 = scale * jax.random.normal(ks[2], (depth, m, m), jnp.float32)
    bb1 = scale * jax.random.normal(ks[3], (depth, 1, m), jnp.float32)
    wb2 = scale * jax.random.normal(ks[4], (depth, m, m), jnp.float32)
    bb2 = scale * jax.random.normal(ks[5], (depth, 1, m), jnp.float32)
    wf = scale * jax.random.normal(ks[6], (m, out_N), jnp.float32)
    bf = scale * jax.random.normal(ks[7], (1, out_N), jnp.float32)
    return (w0, b0, wb1, bb1, wb2, bb2, wf, bf)


def drrnn_reference(x, params, *, depth):
    # pure-JAX reference mirroring the PyTorch forward
    w0, b0, wb1, bb1, wb2, bb2, wf, bf = params
    dx, dy, dz = x[:, 0:1], x[:, 1:2], x[:, 2:3]
    h = x @ w0 + b0[0]
    for d in range(depth):
        h1 = jnp.tanh(h @ wb1[d] + bb1[d, 0])
        h2 = jnp.tanh(h1 @ wb2[d] + bb2[d, 0])
        h = h2 + h
    out = h @ wf + bf[0]
    return out * dx * dy * dz * (1 - dx) * (1 - dy) * (1 - dz)


if __name__ == "__main__":
    in_N, m, out_N, depth = 3, 32, 1, 4
    B = 4096            # grid = (2,)  -> even, >= 2 (keeps both v7x TCs busy)
    tb = 2048

    key = jax.random.PRNGKey(0)
    kx, kp = jax.random.split(key)
    x = jax.random.uniform(kx, (B, in_N), jnp.float32)      # points in [0,1)^3
    params = init_params(kp, in_N, m, out_N, depth)

    y = drrnn_forward(x, params, depth=depth, tb=tb)
    y = jax.block_until_ready(y)

    y_ref = drrnn_reference(x, params, depth=depth)
    assert y.shape == (B, out_N)
    assert jnp.allclose(y, y_ref, atol=2e-3, rtol=2e-3)

    print("KERNEL_OK")
</pallas_src>

<mosaic_0001>
module attributes {stable_mosaic.version = 11 : i64} {
  func.func @drrnn_kernel(%arg0: i32, %arg1: memref<3x2048xf32, #tpu.memory_space<vmem>>, %arg2: memref<32x3xf32, #tpu.memory_space<vmem>>, %arg3: memref<32x1xf32, #tpu.memory_space<vmem>>, %arg4: memref<4x32x32xf32, #tpu.memory_space<vmem>>, %arg5: memref<4x32x1xf32, #tpu.memory_space<vmem>>, %arg6: memref<4x32x32xf32, #tpu.memory_space<vmem>>, %arg7: memref<4x32x1xf32, #tpu.memory_space<vmem>>, %arg8: memref<1x32xf32, #tpu.memory_space<vmem>>, %arg9: memref<1x1xf32, #tpu.memory_space<vmem>>, %arg10: memref<1x2048xf32, #tpu.memory_space<vmem>>) attributes {dimension_semantics = [#tpu.dimension_semantics<parallel>], iteration_bounds = array<i64: 2>, scalar_prefetch = 0 : i64, scratch_operands = 0 : i64, tpu.core_type = #tpu.core_type<tc>, window_params = [{transform_indices = @transform_0, window_bounds = array<i64: 3, 2048>}, {pipeline_mode = #tpu.pipeline_mode<synchronous>, transform_indices = @transform_1, window_bounds = array<i64: 32, 3>}, {pipeline_mode = #tpu.pipeline_mode<synchronous>, transform_indices = @transform_2, window_bounds = array<i64: 32, 1>}, {pipeline_mode = #tpu.pipeline_mode<synchronous>, transform_indices = @transform_3, window_bounds = array<i64: 4, 32, 32>}, {pipeline_mode = #tpu.pipeline_mode<synchronous>, transform_indices = @transform_4, window_bounds = array<i64: 4, 32, 1>}, {pipeline_mode = #tpu.pipeline_mode<synchronous>, transform_indices = @transform_5, window_bounds = array<i64: 4, 32, 32>}, {pipeline_mode = #tpu.pipeline_mode<synchronous>, transform_indices = @transform_6, window_bounds = array<i64: 4, 32, 1>}, {pipeline_mode = #tpu.pipeline_mode<synchronous>, transform_indices = @transform_7, window_bounds = array<i64: 1, 32>}, {pipeline_mode = #tpu.pipeline_mode<synchronous>, transform_indices = @transform_8, window_bounds = array<i64: 1, 1>}, {transform_indices = @transform_9, window_bounds = array<i64: 1, 2048>}]} {
    %c0 = arith.constant 0 : index
    %c0_0 = arith.constant 0 : index
    %0 = vector.load %arg1[%c0, %c0_0] : memref<3x2048xf32, #tpu.memory_space<vmem>>, vector<3x2048xf32>
    %1 = vector.extract_strided_slice %0 {offsets = [0, 0], sizes = [1, 2048], strides = [1, 1]} : vector<3x2048xf32> to vector<1x2048xf32>
    %2 = vector.extract_strided_slice %0 {offsets = [1, 0], sizes = [1, 2048], strides = [1, 1]} : vector<3x2048xf32> to vector<1x2048xf32>
    %3 = vector.extract_strided_slice %0 {offsets = [2, 0], sizes = [1, 2048], strides = [1, 1]} : vector<3x2048xf32> to vector<1x2048xf32>
    %c0_1 = arith.constant 0 : index
    %c0_2 = arith.constant 0 : index
    %4 = vector.load %arg2[%c0_1, %c0_2] : memref<32x3xf32, #tpu.memory_space<vmem>>, vector<32x3xf32>
    %5 = vector.extract_strided_slice %4 {offsets = [0, 0], sizes = [32, 1], strides = [1, 1]} : vector<32x3xf32> to vector<32x1xf32>
    %6 = vector.broadcast %5 : vector<32x1xf32> to vector<32x2048xf32>
    %7 = vector.broadcast %1 : vector<1x2048xf32> to vector<32x2048xf32>
    %8 = arith.mulf %6, %7 : vector<32x2048xf32>
    %9 = vector.extract_strided_slice %4 {offsets = [0, 1], sizes = [32, 1], strides = [1, 1]} : vector<32x3xf32> to vector<32x1xf32>
    %10 = vector.broadcast %9 : vector<32x1xf32> to vector<32x2048xf32>
    %11 = vector.broadcast %2 : vector<1x2048xf32> to vector<32x2048xf32>
    %12 = arith.mulf %10, %11 : vector<32x2048xf32>
    %13 = arith.addf %8, %12 : vector<32x2048xf32>
    %14 = vector.extract_strided_slice %4 {offsets = [0, 2], sizes = [32, 1], strides = [1, 1]} : vector<32x3xf32> to vector<32x1xf32>
    %15 = vector.broadcast %14 : vector<32x1xf32> to vector<32x2048xf32>
    %16 = vector.broadcast %3 : vector<1x2048xf32> to vector<32x2048xf32>
    %17 = arith.mulf %15, %16 : vector<32x2048xf32>
    %18 = arith.addf %13, %17 : vector<32x2048xf32>
    %c0_3 = arith.constant 0 : index
    %c0_4 = arith.constant 0 : index
    %19 = vector.load %arg3[%c0_3, %c0_4] : memref<32x1xf32, #tpu.memory_space<vmem>>, vector<32x1xf32>
    %20 = vector.broadcast %19 : vector<32x1xf32> to vector<32x2048xf32>
    %21 = arith.addf %18, %20 : vector<32x2048xf32>
    %c0_5 = arith.constant 0 : index
    %c0_6 = arith.constant 0 : index
    %c0_7 = arith.constant 0 : index
    %22 = vector.load %arg4[%c0_5, %c0_6, %c0_7] : memref<4x32x32xf32, #tpu.memory_space<vmem>>, vector<1x32x32xf32>
    %23 = vector.shape_cast %22 : vector<1x32x32xf32> to vector<32x32xf32>
    %cst = arith.constant dense<0.000000e+00> : vector<32x2048xf32>
    %24 = tpu.matmul %23, %21, %cst {dimension_numbers = #tpu.dot_dimension_numbers<[1], [0], [0], [1], [0, 0, 1, 1], [], []>} : vector<32x32xf32>, vector<32x2048xf32>, vector<32x2048xf32> -> vector<32x2048xf32>
    %c0_8 = arith.constant 0 : index
    %c0_9 = arith.constant 0 : index
    %c0_10 = arith.constant 0 : index
    %25 = vector.load %arg5[%c0_8, %c0_9, %c0_10] : memref<4x32x1xf32, #tpu.memory_space<vmem>>, vector<1x32x1xf32>
    %26 = vector.shape_cast %25 : vector<1x32x1xf32> to vector<32x1xf32>
    %27 = vector.broadcast %26 : vector<32x1xf32> to vector<32x2048xf32>
    %28 = arith.addf %24, %27 : vector<32x2048xf32>
    %29 = math.tanh %28 : vector<32x2048xf32>
    %c0_11 = arith.constant 0 : index
    %c0_12 = arith.constant 0 : index
    %c0_13 = arith.constant 0 : index
    %30 = vector.load %arg6[%c0_11, %c0_12, %c0_13] : memref<4x32x32xf32, #tpu.memory_space<vmem>>, vector<1x32x32xf32>
    %31 = vector.shape_cast %30 : vector<1x32x32xf32> to vector<32x32xf32>
    %cst_14 = arith.constant dense<0.000000e+00> : vector<32x2048xf32>
    %32 = tpu.matmul %31, %29, %cst_14 {dimension_numbers = #tpu.dot_dimension_numbers<[1], [0], [0], [1], [0, 0, 1, 1], [], []>} : vector<32x32xf32>, vector<32x2048xf32>, vector<32x2048xf32> -> vector<32x2048xf32>
    %c0_15 = arith.constant 0 : index
    %c0_16 = arith.constant 0 : index
    %c0_17 = arith.constant 0 : index
    %33 = vector.load %arg7[%c0_15, %c0_16, %c0_17] : memref<4x32x1xf32, #tpu.memory_space<vmem>>, vector<1x32x1xf32>
    %34 = vector.shape_cast %33 : vector<1x32x1xf32> to vector<32x1xf32>
    %35 = vector.broadcast %34 : vector<32x1xf32> to vector<32x2048xf32>
    %36 = arith.addf %32, %35 : vector<32x2048xf32>
    %37 = math.tanh %36 : vector<32x2048xf32>
    %38 = arith.addf %37, %21 : vector<32x2048xf32>
    %c1 = arith.constant 1 : index
    %c0_18 = arith.constant 0 : index
    %c0_19 = arith.constant 0 : index
    %39 = vector.load %arg4[%c1, %c0_18, %c0_19] : memref<4x32x32xf32, #tpu.memory_space<vmem>>, vector<1x32x32xf32>
    %40 = vector.shape_cast %39 : vector<1x32x32xf32> to vector<32x32xf32>
    %cst_20 = arith.constant dense<0.000000e+00> : vector<32x2048xf32>
    %41 = tpu.matmul %40, %38, %cst_20 {dimension_numbers = #tpu.dot_dimension_numbers<[1], [0], [0], [1], [0, 0, 1, 1], [], []>} : vector<32x32xf32>, vector<32x2048xf32>, vector<32x2048xf32> -> vector<32x2048xf32>
    %c1_21 = arith.constant 1 : index
    %c0_22 = arith.constant 0 : index
    %c0_23 = arith.constant 0 : index
    %42 = vector.load %arg5[%c1_21, %c0_22, %c0_23] : memref<4x32x1xf32, #tpu.memory_space<vmem>>, vector<1x32x1xf32>
    %43 = vector.shape_cast %42 : vector<1x32x1xf32> to vector<32x1xf32>
    %44 = vector.broadcast %43 : vector<32x1xf32> to vector<32x2048xf32>
    %45 = arith.addf %41, %44 : vector<32x2048xf32>
    %46 = math.tanh %45 : vector<32x2048xf32>
    %c1_24 = arith.constant 1 : index
    %c0_25 = arith.constant 0 : index
    %c0_26 = arith.constant 0 : index
    %47 = vector.load %arg6[%c1_24, %c0_25, %c0_26] : memref<4x32x32xf32, #tpu.memory_space<vmem>>, vector<1x32x32xf32>
    %48 = vector.shape_cast %47 : vector<1x32x32xf32> to vector<32x32xf32>
    %cst_27 = arith.constant dense<0.000000e+00> : vector<32x2048xf32>
    %49 = tpu.matmul %48, %46, %cst_27 {dimension_numbers = #tpu.dot_dimension_numbers<[1], [0], [0], [1], [0, 0, 1, 1], [], []>} : vector<32x32xf32>, vector<32x2048xf32>, vector<32x2048xf32> -> vector<32x2048xf32>
    %c1_28 = arith.constant 1 : index
    %c0_29 = arith.constant 0 : index
    %c0_30 = arith.constant 0 : index
    %50 = vector.load %arg7[%c1_28, %c0_29, %c0_30] : memref<4x32x1xf32, #tpu.memory_space<vmem>>, vector<1x32x1xf32>
    %51 = vector.shape_cast %50 : vector<1x32x1xf32> to vector<32x1xf32>
    %52 = vector.broadcast %51 : vector<32x1xf32> to vector<32x2048xf32>
    %53 = arith.addf %49, %52 : vector<32x2048xf32>
    %54 = math.tanh %53 : vector<32x2048xf32>
    %55 = arith.addf %54, %38 : vector<32x2048xf32>
    %c2 = arith.constant 2 : index
    %c0_31 = arith.constant 0 : index
    %c0_32 = arith.constant 0 : index
    %56 = vector.load %arg4[%c2, %c0_31, %c0_32] : memref<4x32x32xf32, #tpu.memory_space<vmem>>, vector<1x32x32xf32>
    %57 = vector.shape_cast %56 : vector<1x32x32xf32> to vector<32x32xf32>
    %cst_33 = arith.constant dense<0.000000e+00> : vector<32x2048xf32>
    %58 = tpu.matmul %57, %55, %cst_33 {dimension_numbers = #tpu.dot_dimension_numbers<[1], [0], [0], [1], [0, 0, 1, 1], [], []>} : vector<32x32xf32>, vector<32x2048xf32>, vector<32x2048xf32> -> vector<32x2048xf32>
    %c2_34 = arith.constant 2 : index
    %c0_35 = arith.constant 0 : index
    %c0_36 = arith.constant 0 : index
    %59 = vector.load %arg5[%c2_34, %c0_35, %c0_36] : memref<4x32x1xf32, #tpu.memory_space<vmem>>, vector<1x32x1xf32>
    %60 = vector.shape_cast %59 : vector<1x32x1xf32> to vector<32x1xf32>
    %61 = vector.broadcast %60 : vector<32x1xf32> to vector<32x2048xf32>
    %62 = arith.addf %58, %61 : vector<32x2048xf32>
    %63 = math.tanh %62 : vector<32x2048xf32>
    %c2_37 = arith.constant 2 : index
    %c0_38 = arith.constant 0 : index
    %c0_39 = arith.constant 0 : index
    %64 = vector.load %arg6[%c2_37, %c0_38, %c0_39] : memref<4x32x32xf32, #tpu.memory_space<vmem>>, vector<1x32x32xf32>
    %65 = vector.shape_cast %64 : vector<1x32x32xf32> to vector<32x32xf32>
    %cst_40 = arith.constant dense<0.000000e+00> : vector<32x2048xf32>
    %66 = tpu.matmul %65, %63, %cst_40 {dimension_numbers = #tpu.dot_dimension_numbers<[1], [0], [0], [1], [0, 0, 1, 1], [], []>} : vector<32x32xf32>, vector<32x2048xf32>, vector<32x2048xf32> -> vector<32x2048xf32>
    %c2_41 = arith.constant 2 : index
    %c0_42 = arith.constant 0 : index
    %c0_43 = arith.constant 0 : index
    %67 = vector.load %arg7[%c2_41, %c0_42, %c0_43] : memref<4x32x1xf32, #tpu.memory_space<vmem>>, vector<1x32x1xf32>
    %68 = vector.shape_cast %67 : vector<1x32x1xf32> to vector<32x1xf32>
    %69 = vector.broadcast %68 : vector<32x1xf32> to vector<32x2048xf32>
    %70 = arith.addf %66, %69 : vector<32x2048xf32>
    %71 = math.tanh %70 : vector<32x2048xf32>
    %72 = arith.addf %71, %55 : vector<32x2048xf32>
    %c3 = arith.constant 3 : index
    %c0_44 = arith.constant 0 : index
    %c0_45 = arith.constant 0 : index
    %73 = vector.load %arg4[%c3, %c0_44, %c0_45] : memref<4x32x32xf32, #tpu.memory_space<vmem>>, vector<1x32x32xf32>
    %74 = vector.shape_cast %73 : vector<1x32x32xf32> to vector<32x32xf32>
    %cst_46 = arith.constant dense<0.000000e+00> : vector<32x2048xf32>
    %75 = tpu.matmul %74, %72, %cst_46 {dimension_numbers = #tpu.dot_dimension_numbers<[1], [0], [0], [1], [0, 0, 1, 1], [], []>} : vector<32x32xf32>, vector<32x2048xf32>, vector<32x2048xf32> -> vector<32x2048xf32>
    %c3_47 = arith.constant 3 : index
    %c0_48 = arith.constant 0 : index
    %c0_49 = arith.constant 0 : index
    %76 = vector.load %arg5[%c3_47, %c0_48, %c0_49] : memref<4x32x1xf32, #tpu.memory_space<vmem>>, vector<1x32x1xf32>
    %77 = vector.shape_cast %76 : vector<1x32x1xf32> to vector<32x1xf32>
    %78 = vector.broadcast %77 : vector<32x1xf32> to vector<32x2048xf32>
    %79 = arith.addf %75, %78 : vector<32x2048xf32>
    %80 = math.tanh %79 : vector<32x2048xf32>
    %c3_50 = arith.constant 3 : index
    %c0_51 = arith.constant 0 : index
    %c0_52 = arith.constant 0 : index
    %81 = vector.load %arg6[%c3_50, %c0_51, %c0_52] : memref<4x32x32xf32, #tpu.memory_space<vmem>>, vector<1x32x32xf32>
    %82 = vector.shape_cast %81 : vector<1x32x32xf32> to vector<32x32xf32>
    %cst_53 = arith.constant dense<0.000000e+00> : vector<32x2048xf32>
    %83 = tpu.matmul %82, %80, %cst_53 {dimension_numbers = #tpu.dot_dimension_numbers<[1], [0], [0], [1], [0, 0, 1, 1], [], []>} : vector<32x32xf32>, vector<32x2048xf32>, vector<32x2048xf32> -> vector<32x2048xf32>
    %c3_54 = arith.constant 3 : index
    %c0_55 = arith.constant 0 : index
    %c0_56 = arith.constant 0 : index
    %84 = vector.load %arg7[%c3_54, %c0_55, %c0_56] : memref<4x32x1xf32, #tpu.memory_space<vmem>>, vector<1x32x1xf32>
    %85 = vector.shape_cast %84 : vector<1x32x1xf32> to vector<32x1xf32>
    %86 = vector.broadcast %85 : vector<32x1xf32> to vector<32x2048xf32>
    %87 = arith.addf %83, %86 : vector<32x2048xf32>
    %88 = math.tanh %87 : vector<32x2048xf32>
    %89 = arith.addf %88, %72 : vector<32x2048xf32>
    %c0_57 = arith.constant 0 : index
    %c0_58 = arith.constant 0 : index
    %90 = vector.load %arg8[%c0_57, %c0_58] : memref<1x32xf32, #tpu.memory_space<vmem>>, vector<1x32xf32>
    %cst_59 = arith.constant dense<0.000000e+00> : vector<1x2048xf32>
    %91 = tpu.matmul %90, %89, %cst_59 {dimension_numbers = #tpu.dot_dimension_numbers<[1], [0], [0], [1], [0, 0, 1, 1], [], []>} : vector<1x32xf32>, vector<32x2048xf32>, vector<1x2048xf32> -> vector<1x2048xf32>
    %c0_60 = arith.constant 0 : index
    %c0_61 = arith.constant 0 : index
    %92 = vector.load %arg9[%c0_60, %c0_61] : memref<1x1xf32, #tpu.memory_space<vmem>>, vector<1x1xf32>
    %93 = vector.broadcast %92 : vector<1x1xf32> to vector<1x2048xf32>
    %94 = arith.addf %91, %93 : vector<1x2048xf32>
    %95 = arith.mulf %1, %1 : vector<1x2048xf32>
    %96 = arith.subf %1, %95 : vector<1x2048xf32>
    %97 = arith.mulf %2, %2 : vector<1x2048xf32>
    %98 = arith.subf %2, %97 : vector<1x2048xf32>
    %99 = arith.mulf %96, %98 : vector<1x2048xf32>
    %100 = arith.mulf %3, %3 : vector<1x2048xf32>
    %101 = arith.subf %3, %100 : vector<1x2048xf32>
    %102 = arith.mulf %99, %101 : vector<1x2048xf32>
    %103 = arith.mulf %94, %102 : vector<1x2048xf32>
    %c0_62 = arith.constant 0 : index
    %c0_63 = arith.constant 0 : index
    %104 = vector.load %arg10[%c0_62, %c0_63] : memref<1x2048xf32, #tpu.memory_space<vmem>>, vector<1x2048xf32>
    tpu.vector_store %arg10[%c0_62, %c0_63], %103 {strides = array<i32>} : memref<1x2048xf32, #tpu.memory_space<vmem>>, vector<1x2048xf32>,
    return
  }
  func.func @transform_0(%arg0: i32) -> (i32, i32) {
    %c0_i32 = arith.constant 0 : i32
    %c0_i32_0 = arith.constant 0 : i32
    return %c0_i32, %arg0 : i32, i32
  }
  func.func @transform_1(%arg0: i32) -> (i32, i32) {
    %c0_i32 = arith.constant 0 : i32
    %c0_i32_0 = arith.constant 0 : i32
    %c0_i32_1 = arith.constant 0 : i32
    return %c0_i32, %c0_i32_0 : i32, i32
  }
  func.func @transform_2(%arg0: i32) -> (i32, i32) {
    %c0_i32 = arith.constant 0 : i32
    %c0_i32_0 = arith.constant 0 : i32
    %c0_i32_1 = arith.constant 0 : i32
    return %c0_i32, %c0_i32_0 : i32, i32
  }
  func.func @transform_3(%arg0: i32) -> (i32, i32, i32) {
    %c0_i32 = arith.constant 0 : i32
    %c0_i32_0 = arith.constant 0 : i32
    %c0_i32_1 = arith.constant 0 : i32
    %c0_i32_2 = arith.constant 0 : i32
    return %c0_i32, %c0_i32_0, %c0_i32_1 : i32, i32, i32
  }
  func.func @transform_4(%arg0: i32) -> (i32, i32, i32) {
    %c0_i32 = arith.constant 0 : i32
    %c0_i32_0 = arith.constant 0 : i32
    %c0_i32_1 = arith.constant 0 : i32
    %c0_i32_2 = arith.constant 0 : i32
    return %c0_i32, %c0_i32_0, %c0_i32_1 : i32, i32, i32
  }
  func.func @transform_5(%arg0: i32) -> (i32, i32, i32) {
    %c0_i32 = arith.constant 0 : i32
    %c0_i32_0 = arith.constant 0 : i32
    %c0_i32_1 = arith.constant 0 : i32
    %c0_i32_2 = arith.constant 0 : i32
    return %c0_i32, %c0_i32_0, %c0_i32_1 : i32, i32, i32
  }
  func.func @transform_6(%arg0: i32) -> (i32, i32, i32) {
    %c0_i32 = arith.constant 0 : i32
    %c0_i32_0 = arith.constant 0 : i32
    %c0_i32_1 = arith.constant 0 : i32
    %c0_i32_2 = arith.constant 0 : i32
    return %c0_i32, %c0_i32_0, %c0_i32_1 : i32, i32, i32
  }
  func.func @transform_7(%arg0: i32) -> (i32, i32) {
    %c0_i32 = arith.constant 0 : i32
    %c0_i32_0 = arith.constant 0 : i32
    %c0_i32_1 = arith.constant 0 : i32
    return %c0_i32, %c0_i32_0 : i32, i32
  }
  func.func @transform_8(%arg0: i32) -> (i32, i32) {
    %c0_i32 = arith.constant 0 : i32
    %c0_i32_0 = arith.constant 0 : i32
    %c0_i32_1 = arith.constant 0 : i32
    return %c0_i32, %c0_i32_0 : i32, i32
  }
  func.func @transform_9(%arg0: i32) -> (i32, i32) {
    %c0_i32 = arith.constant 0 : i32
    %c0_i32_0 = arith.constant 0 : i32
    return %c0_i32, %arg0 : i32, i32
  }
}

</mosaic_0001>

<llo_original>
// kernel: tpu_custom_call.1
$region0: #{tpu_custom_call.1}
  #allocation0 [shape = 'u32[]', space=smem, size = 0x4, offset = 0x4, fixed_abs, tag = 'smem constant byte address 0x4 - core index']
  #allocation1 [shape = 'u32[144,128]{1,0:T(1,128)}', space=vmem, size = 0x12000, scoped, tag = 'internal scratch']
  #allocation2 [shape = 'f32[1,1]{1,0:T(1,128)S(1)}', space=vmem, size = 0x200, scoped, tag = 'scoped memory for tpu_custom_call.1']
  %s0 = inlined_call_operand.vmem [shape: f32[3,4096], index: 0, kind: input, shape index: {}]
  %s1 = inlined_call_operand.vmem [shape: f32[32,3], index: 1, kind: input, shape index: {}]
  %s2 = inlined_call_operand.vmem [shape: f32[32,1], index: 2, kind: input, shape index: {}]
  %s3 = inlined_call_operand.vmem [shape: f32[4,32,32], index: 3, kind: input, shape index: {}]
  %s4 = inlined_call_operand.vmem [shape: f32[4,32,1], index: 4, kind: input, shape index: {}]
  %s5 = inlined_call_operand.hbm [shape: f32[4,32,32], index: 5, kind: input, shape index: {}]
  %s6 = inlined_call_operand.vmem [shape: f32[4,32,1], index: 6, kind: input, shape index: {}]
  %s7 = inlined_call_operand.vmem [shape: f32[1,32], index: 7, kind: input, shape index: {}]
  %s8 = inlined_call_operand.<no memory space> [shape: f32[1,1], index: 8, kind: input, shape index: {}]
  %s9 = inlined_call_operand.hbm [shape: f32[1,4096], index: 9, kind: output, shape index: {}]
  %s10 = sld [smem:[#allocation0]]
  $region73: #{tpu_custom_call.1} parent=0
    _
  %s12 = ssub.s32 1, %s10
  %s13 = scalar_select 0, %s12, %s10
  %v14 = vstv %s8
  %15 = vst [vmem:[#allocation2] sm:$0x1] %v14
  $region1: #{tpu_custom_call.1} parent=0
    #allocation3 [shape = 'u8[65536]{0}', space=vmem, size = 0x10000, scoped, tag = 'input window, operand 5, single buffered']
    #allocation4 [shape = 's32[2]{0}', space=sflag, size = 0x8, scoped, tag = 'scoped memory for tpu_custom_call.1']
    #allocation5 [shape = 's32[2]{0}', space=sflag, size = 0x8, scoped, tag = 'scoped memory for tpu_custom_call.1']
    #allocation6 [shape = 'u8[16384]{0}', space=vmem, size = 0x4000, scoped, tag = 'output window, operand 0']
    %16 = vsyncpa [#allocation4], 0
    %17 = vsyncpa [#allocation5], 0
    %s18 = scalar_lea.sflag [#allocation5], 1
    %19 = vsyncpa %s18, 0
    loop: start=0, step=1, limit=4
    $region2: #{tpu_custom_call.1} parent=1 // loop_pre_header
      _
    $region3: #{tpu_custom_call.1} parent=1 // loop_header
      %s21 = sphi 0, %s25
      %p22 = scmp.ge.s32.totalorder %s21, 4
      %s31 = sphi 0, %s33
      %s34 = sphi 0, %s31
      %s35 = sphi 0, %s34
      %s51 = sphi 0, %s35
      %s55 = sphi 0, %s55
      %s57 = sphi 0, %s55
      %s58 = sphi 0, %s57
      %s72 = sphi 0, %s58
      %s76 = sphi 0, %s76
      %s78 = sphi 0, %s76
      %s79 = sphi 0, %s78
      %s93 = sphi 0, %s79
      %s97 = sphi 0, %s97
      %s99 = sphi 0, %s97
      %s100 = sphi 0, %s99
      %s114 = sphi 0, %s100
      %s118 = sphi 0, %s118
      %s120 = sphi 0, %s118
      %s121 = sphi 0, %s120
      %s135 = sphi 0, %s121
      %s139 = sphi 0, %s139
      %s141 = sphi 0, %s139
      %s142 = sphi 0, %s141
      %s156 = sphi 0, %s142
      %s160 = sphi 0, %s160
      %s162 = sphi 0, %s160
      %s163 = sphi 0, %s162
      %s177 = sphi 0, %s163
      %s181 = sphi 0, %s181
      %s183 = sphi 0, %s181
      %s184 = sphi 0, %s183
      %s198 = sphi 0, %s184
      %s202 = sphi 0, %s202
      %s204 = sphi 0, %s202
      %s205 = sphi 0, %s204
      %s219 = sphi 0, %s205
      %s225 = sphi 0, %s227
      %s228 = sphi 0, %s225
      %s229 = sphi 0, %s228
      %s245 = sphi 0, %s229
    $region4: #{tpu_custom_call.1} parent=1 // loop_header_branch
      %24 = sbr.rel (%p22) target = $region8
    $region5: #{tpu_custom_call.1} parent=1 // loop_body
      %s26 = ssub.s32 %s21, 1
      %s27 = ssub.s32 %s21, 2
      %s28 = sadd.s32 %s21, 1
      %s29 = ssub.s32 %s21, %s28
      %p30 = scmp.eq.s32.totalorder %s29, 0
      %s32 = sadd.s32 %s31, 1
      %s33 = scalar_select %p30, %s31, %s32
      %p36 = pneg %p30
      %p37 = scmp.eq.s32.totalorder %s21, 1
      %p38 = por %p36, %p37
      %p39 = scmp.ne.s32.totalorder %s31, %s34
      %p40 = scmp.eq.s32.totalorder %s21, 0
      %p41 = por %p39, %p40
      %p42 = scmp.ne.s32.totalorder %s31, %s34
      %p43 = scmp.eq.s32.totalorder %s26, 1
      %p44 = por %p42, %p43
      %p45 = scmp.ne.s32.totalorder %s34, %s35
      %p46 = scmp.eq.s32.totalorder %s26, 0
      %p47 = por %p45, %p46
      %p48 = scmp.ne.s32.totalorder %s34, %s35
      %p49 = scmp.eq.s32.totalorder %s27, 1
      %p50 = por %p48, %p49
      %p52 = scmp.ne.s32.totalorder %s35, %s51
      %p53 = scmp.eq.s32.totalorder %s27, 0
      %p54 = por %p52, %p53
      %s56 = sadd.s32 %s55, 1
      %p59 = scmp.eq.s32.totalorder %s21, 1
      %p60 = scmp.ne.s32.totalorder %s55, %s57
      %p61 = scmp.eq.s32.totalorder %s21, 0
      %p62 = por %p60, %p61
      %p63 = scmp.ne.s32.totalorder %s55, %s57
      %p64 = scmp.eq.s32.totalorder %s26, 1
      %p65 = por %p63, %p64
      %p66 = scmp.ne.s32.totalorder %s57, %s58
      %p67 = scmp.eq.s32.totalorder %s26, 0
      %p68 = por %p66, %p67
      %p69 = scmp.ne.s32.totalorder %s57, %s58
      %p70 = scmp.eq.s32.totalorder %s27, 1
      %p71 = por %p69, %p70
      %p73 = scmp.ne.s32.totalorder %s58, %s72
      %p74 = scmp.eq.s32.totalorder %s27, 0
      %p75 = por %p73, %p74
      %s77 = sadd.s32 %s76, 1
      %p80 = scmp.eq.s32.totalorder %s21, 1
      %p81 = scmp.ne.s32.totalorder %s76, %s78
      %p82 = scmp.eq.s32.totalorder %s21, 0
      %p83 = por %p81, %p82
      %p84 = scmp.ne.s32.totalorder %s76, %s78
      %p85 = scmp.eq.s32.totalorder %s26, 1
      %p86 = por %p84, %p85
      %p87 = scmp.ne.s32.totalorder %s78, %s79
      %p88 = scmp.eq.s32.totalorder %s26, 0
      %p89 = por %p87, %p88
      %p90 = scmp.ne.s32.totalorder %s78, %s79
      %p91 = scmp.eq.s32.totalorder %s27, 1
      %p92 = por %p90, %p91
      %p94 = scmp.ne.s32.totalorder %s79, %s93
      %p95 = scmp.eq.s32.totalorder %s27, 0
      %p96 = por %p94, %p95
      %s98 = sadd.s32 %s97, 1
      %p101 = scmp.eq.s32.totalorder %s21, 1
      %p102 = scmp.ne.s32.totalorder %s97, %s99
      %p103 = scmp.eq.s32.totalorder %s21, 0
      %p104 = por %p102, %p103
      %p105 = scmp.ne.s32.totalorder %s97, %s99
      %p106 = scmp.eq.s32.totalorder %s26, 1
      %p107 = por %p105, %p106
      %p108 = scmp.ne.s32.totalorder %s99, %s100
      %p109 = scmp.eq.s32.totalorder %s26, 0
      %p110 = por %p108, %p109
      %p111 = scmp.ne.s32.totalorder %s99, %s100
      %p112 = scmp.eq.s32.totalorder %s27, 1
      %p113 = por %p111, %p112
      %p115 = scmp.ne.s32.totalorder %s100, %s114
      %p116 = scmp.eq.s32.totalorder %s27, 0
      %p117 = por %p115, %p116
      %s119 = sadd.s32 %s118, 1
      %p122 = scmp.eq.s32.totalorder %s21, 1
      %p123 = scmp.ne.s32.totalorder %s118, %s120
      %p124 = scmp.eq.s32.totalorder %s21, 0
      %p125 = por %p123, %p124
      %p126 = scmp.ne.s32.totalorder %s118, %s120
      %p127 = scmp.eq.s32.totalorder %s26, 1
      %p128 = por %p126, %p127
      %p129 = scmp.ne.s32.totalorder %s120, %s121
      %p130 = scmp.eq.s32.totalorder %s26, 0
      %p131 = por %p129, %p130
      %p132 = scmp.ne.s32.totalorder %s120, %s121
      %p133 = scmp.eq.s32.totalorder %s27, 1
      %p134 = por %p132, %p133
      %p136 = scmp.ne.s32.totalorder %s121, %s135
      %p137 = scmp.eq.s32.totalorder %s27, 0
      %p138 = por %p136, %p137
      %s140 = sadd.s32 %s139, 1
      %p143 = scmp.eq.s32.totalorder %s21, 1
      %p144 = scmp.ne.s32.totalorder %s139, %s141
      %p145 = scmp.eq.s32.totalorder %s21, 0
      %p146 = por %p144, %p145
      %p147 = scmp.ne.s32.totalorder %s139, %s141
      %p148 = scmp.eq.s32.totalorder %s26, 1
      %p149 = por %p147, %p148
      %p150 = scmp.ne.s32.totalorder %s141, %s142
      %p151 = scmp.eq.s32.totalorder %s26, 0
      %p152 = por %p150, %p151
      %p153 = scmp.ne.s32.totalorder %s141, %s142
      %p154 = scmp.eq.s32.totalorder %s27, 1
      %p155 = por %p153, %p154
      %p157 = scmp.ne.s32.totalorder %s142, %s156
      %p158 = scmp.eq.s32.totalorder %s27, 0
      %p159 = por %p157, %p158
      %s161 = sadd.s32 %s160, 1
      %p164 = scmp.eq.s32.totalorder %s21, 1
      %p165 = scmp.ne.s32.totalorder %s160, %s162
      %p166 = scmp.eq.s32.totalorder %s21, 0
      %p167 = por %p165, %p166
      %p168 = scmp.ne.s32.totalorder %s160, %s162
      %p169 = scmp.eq.s32.totalorder %s26, 1
      %p170 = por %p168, %p169
      %p171 = scmp.ne.s32.totalorder %s162, %s163
      %p172 = scmp.eq.s32.totalorder %s26, 0
      %p173 = por %p171, %p172
      %p174 = scmp.ne.s32.totalorder %s162, %s163
      %p175 = scmp.eq.s32.totalorder %s27, 1
      %p176 = por %p174, %p175
      %p178 = scmp.ne.s32.totalorder %s163, %s177
      %p179 = scmp.eq.s32.totalorder %s27, 0
      %p180 = por %p178, %p179
      %s182 = sadd.s32 %s181, 1
      %p185 = scmp.eq.s32.totalorder %s21, 1
      %p186 = scmp.ne.s32.totalorder %s181, %s183
      %p187 = scmp.eq.s32.totalorder %s21, 0
      %p188 = por %p186, %p187
      %p189 = scmp.ne.s32.totalorder %s181, %s183
      %p190 = scmp.eq.s32.totalorder %s26, 1
      %p191 = por %p189, %p190
      %p192 = scmp.ne.s32.totalorder %s183, %s184
      %p193 = scmp.eq.s32.totalorder %s26, 0
      %p194 = por %p192, %p193
      %p195 = scmp.ne.s32.totalorder %s183, %s184
      %p196 = scmp.eq.s32.totalorder %s27, 1
      %p197 = por %p195, %p196
      %p199 = scmp.ne.s32.totalorder %s184, %s198
      %p200 = scmp.eq.s32.totalorder %s27, 0
      %p201 = por %p199, %p200
      %s203 = sadd.s32 %s202, 1
      %p206 = scmp.eq.s32.totalorder %s21, 1
      %p207 = scmp.ne.s32.totalorder %s202, %s204
      %p208 = scmp.eq.s32.totalorder %s21, 0
      %p209 = por %p207, %p208
      %p210 = scmp.ne.s32.totalorder %s202, %s204
      %p211 = scmp.eq.s32.totalorder %s26, 1
      %p212 = por %p210, %p211
      %p213 = scmp.ne.s32.totalorder %s204, %s205
      %p214 = scmp.eq.s32.totalorder %s26, 0
      %p215 = por %p213, %p214
      %p216 = scmp.ne.s32.totalorder %s204, %s205
      %p217 = scmp.eq.s32.totalorder %s27, 1
      %p218 = por %p216, %p217
      %p220 = scmp.ne.s32.totalorder %s205, %s219
      %p221 = scmp.eq.s32.totalorder %s27, 0
      %p222 = por %p220, %p221
      %s223 = ssub.s32 %s21, %s28
      %p224 = scmp.eq.s32.totalorder %s223, 0
      %s226 = sadd.s32 %s225, 1
      %s227 = scalar_select %p224, %s225, %s226
      %p230 = pneg %p224
      %p231 = scmp.eq.s32.totalorder %s21, 1
      %p232 = por %p230, %p231
      %p233 = scmp.ne.s32.totalorder %s225, %s228
      %p234 = scmp.eq.s32.totalorder %s21, 0
      %p235 = por %p233, %p234
      %p236 = scmp.ne.s32.totalorder %s225, %s228
      %p237 = scmp.eq.s32.totalorder %s26, 1
      %p238 = por %p236, %p237
      %p239 = scmp.ne.s32.totalorder %s228, %s229
      %p240 = scmp.eq.s32.totalorder %s26, 0
      %p241 = por %p239, %p240
      %p242 = scmp.ne.s32.totalorder %s228, %s229
      %p243 = scmp.eq.s32.totalorder %s27, 1
      %p244 = por %p242, %p243
      %p246 = scmp.ne.s32.totalorder %s229, %s245
      %p247 = scmp.eq.s32.totalorder %s27, 0
      %p248 = por %p246, %p247
      %p249 = scmp.le.s32.totalorder 1, %s21
      %p250 = scmp.lt.s32.totalorder %s21, 3
      %p251 = pnand %p249, %p250
      %p252 = pneg %p251
      // Predicated region
      $region9: #{tpu_custom_call.1} parent=5 // pred_check
        _
      $region10: #{tpu_custom_call.1} parent=5 // pred_check_branch
        %254 = sbr.rel (%p251) target = $region12
      $region11: #{tpu_custom_call.1} parent=5 // pred_region
        %s255 = ssub.s32 %s21, 1
        // Predicated region
        $region13: #{tpu_custom_call.1} parent=11 // pred_check
          %p256 = pneg %p68
        $region14: #{tpu_custom_call.1} parent=11 // pred_check_branch
          %258 = sbr.rel (%p256) target = $region16
        $region15: #{tpu_custom_call.1} parent=11 // pred_region
          _
        $region16: #{tpu_custom_call.1} parent=11 // pred_fallthru
          _
        // Predicated region
        $region17: #{tpu_custom_call.1} parent=11 // pred_check
          %p259 = pneg %p89
        $region18: #{tpu_custom_call.1} parent=11 // pred_check_branch
          %261 = sbr.rel (%p259) target = $region20
        $region19: #{tpu_custom_call.1} parent=11 // pred_region
          _
        $region20: #{tpu_custom_call.1} parent=11 // pred_fallthru
          _
        // Predicated region
        $region21: #{tpu_custom_call.1} parent=11 // pred_check
          %p262 = pneg %p110
        $region22: #{tpu_custom_call.1} parent=11 // pred_check_branch
          %264 = sbr.rel (%p262) target = $region24
        $region23: #{tpu_custom_call.1} parent=11 // pred_region
          _
        $region24: #{tpu_custom_call.1} parent=11 // pred_fallthru
          _
        // Predicated region
        $region25: #{tpu_custom_call.1} parent=11 // pred_check
          %p265 = pneg %p131
        $region26: #{tpu_custom_call.1} parent=11 // pred_check_branch
          %267 = sbr.rel (%p265) target = $region28
        $region27: #{tpu_custom_call.1} parent=11 // pred_region
          _
        $region28: #{tpu_custom_call.1} parent=11 // pred_fallthru
          _
        // Predicated region
        $region29: #{tpu_custom_call.1} parent=11 // pred_check
          %p268 = pneg %p152
        $region30: #{tpu_custom_call.1} parent=11 // pred_check_branch
          %270 = sbr.rel (%p268) target = $region32
        $region31: #{tpu_custom_call.1} parent=11 // pred_region
          %s272 = ssub.s32 2048, 2048
          %273 = vsyncadd [#allocation4], %s272
          %s274 = sshll.u32 [#allocation3], 4
          %s275 = int_to_ptr.vmem [resolvable:$true] %s274
          %280 = dma.hbm_to_vmem [thread:$0]  %s5, 2048, %s275, [#allocation4], 128, 128, 8
        $region32: #{tpu_custom_call.1} parent=11 // pred_fallthru
          _
        // Predicated region
        $region33: #{tpu_custom_call.1} parent=11 // pred_check
          %p281 = pneg %p173
        $region34: #{tpu_custom_call.1} parent=11 // pred_check_branch
          %283 = sbr.rel (%p281) target = $region36
        $region35: #{tpu_custom_call.1} parent=11 // pred_region
          _
        $region36: #{tpu_custom_call.1} parent=11 // pred_fallthru
          _
        // Predicated region
        $region37: #{tpu_custom_call.1} parent=11 // pred_check
          %p284 = pneg %p194
        $region38: #{tpu_custom_call.1} parent=11 // pred_check_branch
          %286 = sbr.rel (%p284) target = $region40
        $region39: #{tpu_custom_call.1} parent=11 // pred_region
          _
        $region40: #{tpu_custom_call.1} parent=11 // pred_fallthru
          _
        // Predicated region
        $region41: #{tpu_custom_call.1} parent=11 // pred_check
          %p287 = pneg %p215
        $region42: #{tpu_custom_call.1} parent=11 // pred_check_branch
          %289 = sbr.rel (%p287) target = $region44
        $region43: #{tpu_custom_call.1} parent=11 // pred_region
          _
        $region44: #{tpu_custom_call.1} parent=11 // pred_fallthru
          _
      $region12: #{tpu_custom_call.1} parent=5 // pred_fallthru
        _
      %p290 = scmp.lt.s32.totalorder %s21, 2
      // Predicated region
      $region45: #{tpu_custom_call.1} parent=5 // pred_check
        %p291 = pneg %p290
      $region46: #{tpu_custom_call.1} parent=5 // pred_check_branch
        %293 = sbr.rel (%p291) target = $region48
      $region47: #{tpu_custom_call.1} parent=5 // pred_region
        // Predicated region
        $region49: #{tpu_custom_call.1} parent=47 // pred_check
          %p294 = pneg %p41
        $region50: #{tpu_custom_call.1} parent=47 // pred_check_branch
          %296 = sbr.rel (%p294) target = $region52
        $region51: #{tpu_custom_call.1} parent=47 // pred_region
          %s297 = smul.u32 16, %s21
          %p298 = scmp.lt.s32.totalorder %s297, 31
          %s299 = scalar_select %p298, %s297, 31
          %s300 = smul.addr %s299, 4
          %s301 = scalar_lea.vmem %s0, %s300
          %s302 = smul.u32 16, %s21
        $region52: #{tpu_custom_call.1} parent=47 // pred_fallthru
          _
      $region48: #{tpu_custom_call.1} parent=5 // pred_fallthru
        _
      %p303 = scmp.le.s32.totalorder 1, %s21
      %p304 = scmp.lt.s32.totalorder %s21, 3
      %p305 = pnand %p303, %p304
      %p306 = pneg %p305
      // Predicated region
      $region53: #{tpu_custom_call.1} parent=5 // pred_check
        _
      $region54: #{tpu_custom_call.1} parent=5 // pred_check_branch
        %308 = sbr.rel (%p305) target = $region56
      $region55: #{tpu_custom_call.1} parent=5 // pred_region
        %s309 = ssub.s32 %s21, 1
        // Predicated region
        $region57: #{tpu_custom_call.1} parent=55 // pred_check
          %p310 = pneg %p152
        $region58: #{tpu_custom_call.1} parent=55 // pred_check_branch
          %312 = sbr.rel (%p310) target = $region60
        $region59: #{tpu_custom_call.1} parent=55 // pred_region
          %313 = dma.done [#allocation4], 2048
        $region60: #{tpu_custom_call.1} parent=55 // pred_fallthru
          _
        %s314 = smul.u32 16, %s26
        %p315 = scmp.lt.s32.totalorder %s314, 31
        %s316 = scalar_select %p315, %s314, 31
        %s317 = smul.addr %s316, 4
        %s318 = scalar_lea.vmem %s0, %s317
        %p319 = pneg %p47
        %p320 = pneg %p44
        %p321 = pneg %p68
        %p322 = pneg %p65
        %p323 = pneg %p89
        %p324 = pneg %p86
        %p325 = pneg %p110
        %p326 = pneg %p107
        %p327 = pneg %p131
        %p328 = pneg %p128
        %p329 = pneg %p152
        %p330 = pneg %p149
        %p331 = pneg %p173
        %p332 = pneg %p170
        %p333 = pneg %p194
        %p334 = pneg %p191
        %p335 = pneg %p215
        %p336 = pneg %p212
        %p337 = pneg %p241
        %p338 = pneg %p238
        %s339 = sand.u32 %s228, 1
        %s340 = scalar_lea.sflag [#allocation5], %s339
        %s341 = sand.u32 %s228, 1
        %s342 = smul.addr %s341, 16
        %s343 = scalar_lea.vmem [#allocation6], %s342
        %s344 = smul.u32 16, %s26
        %p345 = scmp.lt.s32.totalorder %s344, 31
        %s346 = scalar_select %p345, %s344, 31
        %s347 = smul.addr %s346, 4
        %s348 = scalar_lea.vmem %s0, %s347
        %s349 = smul.u32 16, %s26
        %s350 = smul.u32 16, %s26
        %v351 = vld [vmem:[%s348] sm:$0x77]
        %v352 = vld [vmem:[%s348 + $0x8] sm:$0x77]
        %v353 = vld [vmem:[%s348 + $0x10] sm:$0x77]
        %v354 = vld [vmem:[%s348 + $0x18] sm:$0x77]
        %v355 = vld [vmem:[%s348 + $0x20] sm:$0x77]
        %v356 = vld [vmem:[%s348 + $0x28] sm:$0x77]
        %v357 = vld [vmem:[%s348 + $0x30] sm:$0x77]
        %v358 = vld [vmem:[%s348 + $0x38] sm:$0x77]
        %v359 = vld [vmem:[%s1] sm:$0xff]
        %v360 = vld [vmem:[%s1 + $0x8] sm:$0xff]
        %v361 = vld [vmem:[%s1 + $0x10] sm:$0xff]
        %v362 = vld [vmem:[%s1 + $0x18] sm:$0xff]
        %364 = vset.pattern.permute.xlu0 0
        %365 = vperm.xlu0 %364, %v359
        %v366 = vpop.permute.xlu0 %365
        %369 = vset.pattern.permute.xlu0 0
        %370 = vperm.xlu0 %369, %v360
        %v371 = vpop.permute.xlu0 %370
        %374 = vset.pattern.permute.xlu0 0
        %375 = vperm.xlu0 %374, %v361
        %v376 = vpop.permute.xlu0 %375
        %379 = vset.pattern.permute.xlu0 0
        %380 = vperm.xlu0 %379, %v362
        %v381 = vpop.permute.xlu0 %380
        %v391 = vlaneseq
        %v392 = vshrl.u32 %v391, 7
        %v393 = vsub.s32 0, %v392
        %v394 = vrot.slane %v351, %v393
        %v395 = vlaneseq
        %v396 = vshrl.u32 %v395, 7
        %v397 = vsub.s32 4, %v396
        %v398 = vrot.slane %v351, %v397
        %v399 = vlaneseq
        %v400 = vshrl.u32 %v399, 7
        %v401 = vsub.s32 0, %v400
        %v402 = vrot.slane %v352, %v401
        %v403 = vlaneseq
        %v404 = vshrl.u32 %v403, 7
        %v405 = vsub.s32 4, %v404
        %v406 = vrot.slane %v352, %v405
        %v407 = vlaneseq
        %v408 = vshrl.u32 %v407, 7
        %v409 = vsub.s32 0, %v408
        %v410 = vrot.slane %v353, %v409
        %v411 = vlaneseq
        %v412 = vshrl.u32 %v411, 7
        %v413 = vsub.s32 4, %v412
        %v414 = vrot.slane %v353, %v413
        %v415 = vlaneseq
        %v416 = vshrl.u32 %v415, 7
        %v417 = vsub.s32 0, %v416
        %v418 = vrot.slane %v354, %v417
        %v419 = vlaneseq
        %v420 = vshrl.u32 %v419, 7
        %v421 = vsub.s32 4, %v420
        %v422 = vrot.slane %v354, %v421
        %v423 = vlaneseq
        %v424 = vshrl.u32 %v423, 7
        %v425 = vsub.s32 0, %v424
        %v426 = vrot.slane %v355, %v425
        %v427 = vlaneseq
        %v428 = vshrl.u32 %v427, 7
        %v429 = vsub.s32 4, %v428
        %v430 = vrot.slane %v355, %v429
        %v431 = vlaneseq
        %v432 = vshrl.u32 %v431, 7
        %v433 = vsub.s32 0, %v432
        %v434 = vrot.slane %v356, %v433
        %v435 = vlaneseq
        %v436 = vshrl.u32 %v435, 7
        %v437 = vsub.s32 4, %v436
        %v438 = vrot.slane %v356, %v437
        %v439 = vlaneseq
        %v440 = vshrl.u32 %v439, 7
        %v441 = vsub.s32 0, %v440
        %v442 = vrot.slane %v357, %v441
        %v443 = vlaneseq
        %v444 = vshrl.u32 %v443, 7
        %v445 = vsub.s32 4, %v444
        %v446 = vrot.slane %v357, %v445
        %v447 = vlaneseq
        %v448 = vshrl.u32 %v447, 7
        %v449 = vsub.s32 0, %v448
        %v450 = vrot.slane %v358, %v449
        %v451 = vlaneseq
        %v452 = vshrl.u32 %v451, 7
        %v453 = vsub.s32 4, %v452
        %v454 = vrot.slane %v358, %v453
        %v471 = vlaneseq
        %v472 = vshrl.u32 %v471, 7
        %v473 = vsub.s32 0, %v472
        %v474 = vrot.slane %v394, %v473
        %v475 = vlaneseq
        %v476 = vshrl.u32 %v475, 7
        %v477 = vsub.s32 0, %v476
        %v478 = vrot.slane %v398, %v477
        %v479 = vlaneseq
        %v480 = vshrl.u32 %v479, 7
        %v481 = vsub.s32 0, %v480
        %v482 = vrot.slane %v402, %v481
        %v483 = vlaneseq
        %v484 = vshrl.u32 %v483, 7
        %v485 = vsub.s32 0, %v484
        %v486 = vrot.slane %v406, %v485
        %v487 = vlaneseq
        %v488 = vshrl.u32 %v487, 7
        %v489 = vsub.s32 0, %v488
        %v490 = vrot.slane %v410, %v489
        %v491 = vlaneseq
        %v492 = vshrl.u32 %v491, 7
        %v493 = vsub.s32 0, %v492
        %v494 = vrot.slane %v414, %v493
        %v495 = vlaneseq
        %v496 = vshrl.u32 %v495, 7
        %v497 = vsub.s32 0, %v496
        %v498 = vrot.slane %v418, %v497
        %v499 = vlaneseq
        %v500 = vshrl.u32 %v499, 7
        %v501 = vsub.s32 0, %v500
        %v502 = vrot.slane %v422, %v501
        %v503 = vlaneseq
        %v504 = vshrl.u32 %v503, 7
        %v505 = vsub.s32 0, %v504
        %v506 = vrot.slane %v426, %v505
        %v507 = vlaneseq
        %v508 = vshrl.u32 %v507, 7
        %v509 = vsub.s32 0, %v508
        %v510 = vrot.slane %v430, %v509
        %v511 = vlaneseq
        %v512 = vshrl.u32 %v511, 7
        %v513 = vsub.s32 0, %v512
        %v514 = vrot.slane %v434, %v513
        %v515 = vlaneseq
        %v516 = vshrl.u32 %v515, 7
        %v517 = vsub.s32 0, %v516
        %v518 = vrot.slane %v438, %v517
        %v519 = vlaneseq
        %v520 = vshrl.u32 %v519, 7
        %v521 = vsub.s32 0, %v520
        %v522 = vrot.slane %v442, %v521
        %v523 = vlaneseq
        %v524 = vshrl.u32 %v523, 7
        %v525 = vsub.s32 0, %v524
        %v526 = vrot.slane %v446, %v525
        %v527 = vlaneseq
        %v528 = vshrl.u32 %v527, 7
        %v529 = vsub.s32 0, %v528
        %v530 = vrot.slane %v450, %v529
        %v531 = vlaneseq
        %v532 = vshrl.u32 %v531, 7
        %v533 = vsub.s32 0, %v532
        %v534 = vrot.slane %v454, %v533
        %v535 = vmul.f32 %v366, %v474
        %v536 = vmul.f32 %v366, %v478
        %v537 = vmul.f32 %v366, %v482
        %v538 = vmul.f32 %v366, %v486
        %v539 = vmul.f32 %v366, %v490
        %v540 = vmul.f32 %v366, %v494
        %v541 = vmul.f32 %v366, %v498
        %v542 = vmul.f32 %v366, %v502
        %v543 = vmul.f32 %v366, %v506
        %v544 = vmul.f32 %v366, %v510
        %v545 = vmul.f32 %v366, %v514
        %v546 = vmul.f32 %v366, %v518
        %v547 = vmul.f32 %v366, %v522
        %v548 = vmul.f32 %v366, %v526
        %v549 = vmul.f32 %v366, %v530
        %v550 = vmul.f32 %v366, %v534
        %v551 = vmul.f32 %v371, %v474
        %v552 = vmul.f32 %v371, %v478
        %v553 = vmul.f32 %v371, %v482
        %v554 = vmul.f32 %v371, %v486
        %v555 = vmul.f32 %v371, %v490
        %v556 = vmul.f32 %v371, %v494
        %v557 = vmul.f32 %v371, %v498
        %v558 = vmul.f32 %v371, %v502
        %v559 = vmul.f32 %v371, %v506
        %v560 = vmul.f32 %v371, %v510
        %v561 = vmul.f32 %v371, %v514
        %v562 = vmul.f32 %v371, %v518
        %v563 = vmul.f32 %v371, %v522
        %v564 = vmul.f32 %v371, %v526
        %v565 = vmul.f32 %v371, %v530
        %v566 = vmul.f32 %v371, %v534
        %v567 = vmul.f32 %v376, %v474
        %v568 = vmul.f32 %v376, %v478
        %v569 = vmul.f32 %v376, %v482
        %v570 = vmul.f32 %v376, %v486
        %v571 = vmul.f32 %v376, %v490
        %v572 = vmul.f32 %v376, %v494
        %v573 = vmul.f32 %v376, %v498
        %v574 = vmul.f32 %v376, %v502
        %v575 = vmul.f32 %v376, %v506
        %v576 = vmul.f32 %v376, %v510
        %v577 = vmul.f32 %v376, %v514
        %v578 = vmul.f32 %v376, %v518
        %v579 = vmul.f32 %v376, %v522
        %v580 = vmul.f32 %v376, %v526
        %v581 = vmul.f32 %v376, %v530
        %v582 = vmul.f32 %v376, %v534
        %v583 = vmul.f32 %v381, %v474
        %v584 = vmul.f32 %v381, %v478
        %v585 = vmul.f32 %v381, %v482
        %v586 = vmul.f32 %v381, %v486
        %v587 = vmul.f32 %v381, %v490
        %v588 = vmul.f32 %v381, %v494
        %v589 = vmul.f32 %v381, %v498
        %v590 = vmul.f32 %v381, %v502
        %v591 = vmul.f32 %v381, %v506
        %v592 = vmul.f32 %v381, %v510
        %v593 = vmul.f32 %v381, %v514
        %v594 = vmul.f32 %v381, %v518
        %v595 = vmul.f32 %v381, %v522
        %v596 = vmul.f32 %v381, %v526
        %v597 = vmul.f32 %v381, %v530
        %v598 = vmul.f32 %v381, %v534
        %599 = vset.pattern.permute.xlu0 1
        %600 = vperm.xlu0 %599, %v359
        %v601 = vpop.permute.xlu0 %600
        %603 = vset.pattern.permute.xlu0 1
        %604 = vperm.xlu0 %603, %v360
        %v605 = vpop.permute.xlu0 %604
        %607 = vset.pattern.permute.xlu0 1
        %608 = vperm.xlu0 %607, %v361
        %v609 = vpop.permute.xlu0 %608
        %611 = vset.pattern.permute.xlu0 1
        %612 = vperm.xlu0 %611, %v362
        %v613 = vpop.permute.xlu0 %612
        %v615 = vlaneseq
        %v616 = vshrl.u32 %v615, 7
        %v617 = vsub.s32 1, %v616
        %v618 = vrot.slane %v351, %v617
        %v619 = vlaneseq
        %v620 = vshrl.u32 %v619, 7
        %v621 = vsub.s32 5, %v620
        %v622 = vrot.slane %v351, %v621
        %v623 = vlaneseq
        %v624 = vshrl.u32 %v623, 7
        %v625 = vsub.s32 1, %v624
        %v626 = vrot.slane %v352, %v625
        %v627 = vlaneseq
        %v628 = vshrl.u32 %v627, 7
        %v629 = vsub.s32 5, %v628
        %v630 = vrot.slane %v352, %v629
        %v631 = vlaneseq
        %v632 = vshrl.u32 %v631, 7
        %v633 = vsub.s32 1, %v632
        %v634 = vrot.slane %v353, %v633
        %v635 = vlaneseq
        %v636 = vshrl.u32 %v635, 7
        %v637 = vsub.s32 5, %v636
        %v638 = vrot.slane %v353, %v637
        %v639 = vlaneseq
        %v640 = vshrl.u32 %v639, 7
        %v641 = vsub.s32 1, %v640
        %v642 = vrot.slane %v354, %v641
        %v643 = vlaneseq
        %v644 = vshrl.u32 %v643, 7
        %v645 = vsub.s32 5, %v644
        %v646 = vrot.slane %v354, %v645
        %v647 = vlaneseq
        %v648 = vshrl.u32 %v647, 7
        %v649 = vsub.s32 1, %v648
        %v650 = vrot.slane %v355, %v649
        %v651 = vlaneseq
        %v652 = vshrl.u32 %v651, 7
        %v653 = vsub.s32 5, %v652
        %v654 = vrot.slane %v355, %v653
        %v655 = vlaneseq
        %v656 = vshrl.u32 %v655, 7
        %v657 = vsub.s32 1, %v656
        %v658 = vrot.slane %v356, %v657
        %v659 = vlaneseq
        %v660 = vshrl.u32 %v659, 7
        %v661 = vsub.s32 5, %v660
        %v662 = vrot.slane %v356, %v661
        %v663 = vlaneseq
        %v664 = vshrl.u32 %v663, 7
        %v665 = vsub.s32 1, %v664
        %v666 = vrot.slane %v357, %v665
        %v667 = vlaneseq
        %v668 = vshrl.u32 %v667, 7
        %v669 = vsub.s32 5, %v668
        %v670 = vrot.slane %v357, %v669
        %v671 = vlaneseq
        %v672 = vshrl.u32 %v671, 7
        %v673 = vsub.s32 1, %v672
        %v674 = vrot.slane %v358, %v673
        %v675 = vlaneseq
        %v676 = vshrl.u32 %v675, 7
        %v677 = vsub.s32 5, %v676
        %v678 = vrot.slane %v358, %v677
        %v695 = vlaneseq
        %v696 = vshrl.u32 %v695, 7
        %v697 = vsub.s32 1, %v696
        %v698 = vrot.slane %v618, %v697
        %v699 = vlaneseq
        %v700 = vshrl.u32 %v699, 7
        %v701 = vsub.s32 1, %v700
        %v702 = vrot.slane %v622, %v701
        %v703 = vlaneseq
        %v704 = vshrl.u32 %v703, 7
        %v705 = vsub.s32 1, %v704
        %v706 = vrot.slane %v626, %v705
        %v707 = vlaneseq
        %v708 = vshrl.u32 %v707, 7
        %v709 = vsub.s32 1, %v708
        %v710 = vrot.slane %v630, %v709
        %v711 = vlaneseq
        %v712 = vshrl.u32 %v711, 7
        %v713 = vsub.s32 1, %v712
        %v714 = vrot.slane %v634, %v713
        %v715 = vlaneseq
        %v716 = vshrl.u32 %v715, 7
        %v717 = vsub.s32 1, %v716
        %v718 = vrot.slane %v638, %v717
        %v719 = vlaneseq
        %v720 = vshrl.u32 %v719, 7
        %v721 = vsub.s32 1, %v720
        %v722 = vrot.slane %v642, %v721
        %v723 = vlaneseq
        %v724 = vshrl.u32 %v723, 7
        %v725 = vsub.s32 1, %v724
        %v726 = vrot.slane %v646, %v725
        %v727 = vlaneseq
        %v728 = vshrl.u32 %v727, 7
        %v729 = vsub.s32 1, %v728
        %v730 = vrot.slane %v650, %v729
        %v731 = vlaneseq
        %v732 = vshrl.u32 %v731, 7
        %v733 = vsub.s32 1, %v732
        %v734 = vrot.slane %v654, %v733
        %v735 = vlaneseq
        %v736 = vshrl.u32 %v735, 7
        %v737 = vsub.s32 1, %v736
        %v738 = vrot.slane %v658, %v737
        %v739 = vlaneseq
        %v740 = vshrl.u32 %v739, 7
        %v741 = vsub.s32 1, %v740
        %v742 = vrot.slane %v662, %v741
        %v743 = vlaneseq
        %v744 = vshrl.u32 %v743, 7
        %v745 = vsub.s32 1, %v744
        %v746 = vrot.slane %v666, %v745
        %v747 = vlaneseq
        %v748 = vshrl.u32 %v747, 7
        %v749 = vsub.s32 1, %v748
        %v750 = vrot.slane %v670, %v749
        %v751 = vlaneseq
        %v752 = vshrl.u32 %v751, 7
        %v753 = vsub.s32 1, %v752
        %v754 = vrot.slane %v674, %v753
        %v755 = vlaneseq
        %v756 = vshrl.u32 %v755, 7
        %v757 = vsub.s32 1, %v756
        %v758 = vrot.slane %v678, %v757
        %v759 = vmul.f32 %v601, %v698
        %v760 = vmul.f32 %v601, %v702
        %v761 = vmul.f32 %v601, %v706
        %v762 = vmul.f32 %v601, %v710
        %v763 = vmul.f32 %v601, %v714
        %v764 = vmul.f32 %v601, %v718
        %v765 = vmul.f32 %v601, %v722
        %v766 = vmul.f32 %v601, %v726
        %v767 = vmul.f32 %v601, %v730
        %v768 = vmul.f32 %v601, %v734
        %v769 = vmul.f32 %v601, %v738
        %v770 = vmul.f32 %v601, %v742
        %v771 = vmul.f32 %v601, %v746
        %v772 = vmul.f32 %v601, %v750
        %v773 = vmul.f32 %v601, %v754
        %v774 = vmul.f32 %v601, %v758
        %v775 = vmul.f32 %v605, %v698
        %v776 = vmul.f32 %v605, %v702
        %v777 = vmul.f32 %v605, %v706
        %v778 = vmul.f32 %v605, %v710
        %v779 = vmul.f32 %v605, %v714
        %v780 = vmul.f32 %v605, %v718
        %v781 = vmul.f32 %v605, %v722
        %v782 = vmul.f32 %v605, %v726
        %v783 = vmul.f32 %v605, %v730
        %v784 = vmul.f32 %v605, %v734
        %v785 = vmul.f32 %v605, %v738
        %v786 = vmul.f32 %v605, %v742
        %v787 = vmul.f32 %v605, %v746
        %v788 = vmul.f32 %v605, %v750
        %v789 = vmul.f32 %v605, %v754
        %v790 = vmul.f32 %v605, %v758
        %v791 = vmul.f32 %v609, %v698
        %v792 = vmul.f32 %v609, %v702
        %v793 = vmul.f32 %v609, %v706
        %v794 = vmul.f32 %v609, %v710
        %v795 = vmul.f32 %v609, %v714
        %v796 = vmul.f32 %v609, %v718
        %v797 = vmul.f32 %v609, %v722
        %v798 = vmul.f32 %v609, %v726
        %v799 = vmul.f32 %v609, %v730
        %v800 = vmul.f32 %v609, %v734
        %v801 = vmul.f32 %v609, %v738
        %v802 = vmul.f32 %v609, %v742
        %v803 = vmul.f32 %v609, %v746
        %v804 = vmul.f32 %v609, %v750
        %v805 = vmul.f32 %v609, %v754
        %v806 = vmul.f32 %v609, %v758
        %v807 = vmul.f32 %v613, %v698
        %v808 = vmul.f32 %v613, %v702
        %v809 = vmul.f32 %v613, %v706
        %v810 = vmul.f32 %v613, %v710
        %v811 = vmul.f32 %v613, %v714
        %v812 = vmul.f32 %v613, %v718
        %v813 = vmul.f32 %v613, %v722
        %v814 = vmul.f32 %v613, %v726
        %v815 = vmul.f32 %v613, %v730
        %v816 = vmul.f32 %v613, %v734
        %v817 = vmul.f32 %v613, %v738
        %v818 = vmul.f32 %v613, %v742
        %v819 = vmul.f32 %v613, %v746
        %v820 = vmul.f32 %v613, %v750
        %v821 = vmul.f32 %v613, %v754
        %v822 = vmul.f32 %v613, %v758
        %v823 = vadd.f32 %v535, %v759
        %v824 = vadd.f32 %v536, %v760
        %v825 = vadd.f32 %v537, %v761
        %v826 = vadd.f32 %v538, %v762
        %v827 = vadd.f32 %v539, %v763
        %v828 = vadd.f32 %v540, %v764
        %v829 = vadd.f32 %v541, %v765
        %v830 = vadd.f32 %v542, %v766
        %v831 = vadd.f32 %v543, %v767
        %v832 = vadd.f32 %v544, %v768
        %v833 = vadd.f32 %v545, %v769
        %v834 = vadd.f32 %v546, %v770
        %v835 = vadd.f32 %v547, %v771
        %v836 = vadd.f32 %v548, %v772
        %v837 = vadd.f32 %v549, %v773
        %v838 = vadd.f32 %v550, %v774
        %v839 = vadd.f32 %v551, %v775
        %v840 = vadd.f32 %v552, %v776
        %v841 = vadd.f32 %v553, %v777
        %v842 = vadd.f32 %v554, %v778
        %v843 = vadd.f32 %v555, %v779
        %v844 = vadd.f32 %v556, %v780
        %v845 = vadd.f32 %v557, %v781
        %v846 = vadd.f32 %v558, %v782
        %v847 = vadd.f32 %v559, %v783
        %v848 = vadd.f32 %v560, %v784
        %v849 = vadd.f32 %v561, %v785
        %v850 = vadd.f32 %v562, %v786
        %v851 = vadd.f32 %v563, %v787
        %v852 = vadd.f32 %v564, %v788
        %v853 = vadd.f32 %v565, %v789
        %v854 = vadd.f32 %v566, %v790
        %v855 = vadd.f32 %v567, %v791
        %v856 = vadd.f32 %v568, %v792
        %v857 = vadd.f32 %v569, %v793
        %v858 = vadd.f32 %v570, %v794
        %v859 = vadd.f32 %v571, %v795
        %v860 = vadd.f32 %v572, %v796
        %v861 = vadd.f32 %v573, %v797
        %v862 = vadd.f32 %v574, %v798
        %v863 = vadd.f32 %v575, %v799
        %v864 = vadd.f32 %v576, %v800
        %v865 = vadd.f32 %v577, %v801
        %v866 = vadd.f32 %v578, %v802
        %v867 = vadd.f32 %v579, %v803
        %v868 = vadd.f32 %v580, %v804
        %v869 = vadd.f32 %v581, %v805
        %v870 = vadd.f32 %v582, %v806
        %v871 = vadd.f32 %v583, %v807
        %v872 = vadd.f32 %v584, %v808
        %v873 = vadd.f32 %v585, %v809
        %v874 = vadd.f32 %v586, %v810
        %v875 = vadd.f32 %v587, %v811
        %v876 = vadd.f32 %v588, %v812
        %v877 = vadd.f32 %v589, %v813
        %v878 = vadd.f32 %v590, %v814
        %v879 = vadd.f32 %v591, %v815
        %v880 = vadd.f32 %v592, %v816
        %v881 = vadd.f32 %v593, %v817
        %v882 = vadd.f32 %v594, %v818
        %v883 = vadd.f32 %v595, %v819
        %v884 = vadd.f32 %v596, %v820
        %v885 = vadd.f32 %v597, %v821
        %v886 = vadd.f32 %v598, %v822
        %887 = vset.pattern.permute.xlu0 2
        %888 = vperm.xlu0 %887, %v359
        %v889 = vpop.permute.xlu0 %888
        %891 = vset.pattern.permute.xlu0 2
        %892 = vperm.xlu0 %891, %v360
        %v893 = vpop.permute.xlu0 %892
        %895 = vset.pattern.permute.xlu0 2
        %896 = vperm.xlu0 %895, %v361
        %v897 = vpop.permute.xlu0 %896
        %899 = vset.pattern.permute.xlu0 2
        %900 = vperm.xlu0 %899, %v362
        %v901 = vpop.permute.xlu0 %900
        %v903 = vlaneseq
        %v904 = vshrl.u32 %v903, 7
        %v905 = vsub.s32 2, %v904
        %v906 = vrot.slane %v351, %v905
        %v907 = vlaneseq
        %v908 = vshrl.u32 %v907, 7
        %v909 = vsub.s32 6, %v908
        %v910 = vrot.slane %v351, %v909
        %v911 = vlaneseq
        %v912 = vshrl.u32 %v911, 7
        %v913 = vsub.s32 2, %v912
        %v914 = vrot.slane %v352, %v913
        %v915 = vlaneseq
        %v916 = vshrl.u32 %v915, 7
        %v917 = vsub.s32 6, %v916
        %v918 = vrot.slane %v352, %v917
        %v919 = vlaneseq
        %v920 = vshrl.u32 %v919, 7
        %v921 = vsub.s32 2, %v920
        %v922 = vrot.slane %v353, %v921
        %v923 = vlaneseq
        %v924 = vshrl.u32 %v923, 7
        %v925 = vsub.s32 6, %v924
        %v926 = vrot.slane %v353, %v925
        %v927 = vlaneseq
        %v928 = vshrl.u32 %v927, 7
        %v929 = vsub.s32 2, %v928
        %v930 = vrot.slane %v354, %v929
        %v931 = vlaneseq
        %v932 = vshrl.u32 %v931, 7
        %v933 = vsub.s32 6, %v932
        %v934 = vrot.slane %v354, %v933
        %v935 = vlaneseq
        %v936 = vshrl.u32 %v935, 7
        %v937 = vsub.s32 2, %v936
        %v938 = vrot.slane %v355, %v937
        %v939 = vlaneseq
        %v940 = vshrl.u32 %v939, 7
        %v941 = vsub.s32 6, %v940
        %v942 = vrot.slane %v355, %v941
        %v943 = vlaneseq
        %v944 = vshrl.u32 %v943, 7
        %v945 = vsub.s32 2, %v944
        %v946 = vrot.slane %v356, %v945
        %v947 = vlaneseq
        %v948 = vshrl.u32 %v947, 7
        %v949 = vsub.s32 6, %v948
        %v950 = vrot.slane %v356, %v949
        %v951 = vlaneseq
        %v952 = vshrl.u32 %v951, 7
        %v953 = vsub.s32 2, %v952
        %v954 = vrot.slane %v357, %v953
        %v955 = vlaneseq
        %v956 = vshrl.u32 %v955, 7
        %v957 = vsub.s32 6, %v956
        %v958 = vrot.slane %v357, %v957
        %v959 = vlaneseq
        %v960 = vshrl.u32 %v959, 7
        %v961 = vsub.s32 2, %v960
        %v962 = vrot.slane %v358, %v961
        %v963 = vlaneseq
        %v964 = vshrl.u32 %v963, 7
        %v965 = vsub.s32 6, %v964
        %v966 = vrot.slane %v358, %v965
        %v983 = vlaneseq
        %v984 = vshrl.u32 %v983, 7
        %v985 = vsub.s32 2, %v984
        %v986 = vrot.slane %v906, %v985
        %v987 = vlaneseq
        %v988 = vshrl.u32 %v987, 7
        %v989 = vsub.s32 2, %v988
        %v990 = vrot.slane %v910, %v989
        %v991 = vlaneseq
        %v992 = vshrl.u32 %v991, 7
        %v993 = vsub.s32 2, %v992
        %v994 = vrot.slane %v914, %v993
        %v995 = vlaneseq
        %v996 = vshrl.u32 %v995, 7
        %v997 = vsub.s32 2, %v996
        %v998 = vrot.slane %v918, %v997
        %v999 = vlaneseq
        %v1000 = vshrl.u32 %v999, 7
        %v1001 = vsub.s32 2, %v1000
        %v1002 = vrot.slane %v922, %v1001
        %v1003 = vlaneseq
        %v1004 = vshrl.u32 %v1003, 7
        %v1005 = vsub.s32 2, %v1004
        %v1006 = vrot.slane %v926, %v1005
        %v1007 = vlaneseq
        %v1008 = vshrl.u32 %v1007, 7
        %v1009 = vsub.s32 2, %v1008
        %v1010 = vrot.slane %v930, %v1009
        %v1011 = vlaneseq
        %v1012 = vshrl.u32 %v1011, 7
        %v1013 = vsub.s32 2, %v1012
        %v1014 = vrot.slane %v934, %v1013
        %v1015 = vlaneseq
        %v1016 = vshrl.u32 %v1015, 7
        %v1017 = vsub.s32 2, %v1016
        %v1018 = vrot.slane %v938, %v1017
        %v1019 = vlaneseq
        %v1020 = vshrl.u32 %v1019, 7
        %v1021 = vsub.s32 2, %v1020
        %v1022 = vrot.slane %v942, %v1021
        %v1023 = vlaneseq
        %v1024 = vshrl.u32 %v1023, 7
        %v1025 = vsub.s32 2, %v1024
        %v1026 = vrot.slane %v946, %v1025
        %v1027 = vlaneseq
        %v1028 = vshrl.u32 %v1027, 7
        %v1029 = vsub.s32 2, %v1028
        %v1030 = vrot.slane %v950, %v1029
        %v1031 = vlaneseq
        %v1032 = vshrl.u32 %v1031, 7
        %v1033 = vsub.s32 2, %v1032
        %v1034 = vrot.slane %v954, %v1033
        %v1035 = vlaneseq
        %v1036 = vshrl.u32 %v1035, 7
        %v1037 = vsub.s32 2, %v1036
        %v1038 = vrot.slane %v958, %v1037
        %v1039 = vlaneseq
        %v1040 = vshrl.u32 %v1039, 7
        %v1041 = vsub.s32 2, %v1040
        %v1042 = vrot.slane %v962, %v1041
        %v1043 = vlaneseq
        %v1044 = vshrl.u32 %v1043, 7
        %v1045 = vsub.s32 2, %v1044
        %v1046 = vrot.slane %v966, %v1045
        %v1047 = vmul.f32 %v889, %v986
        %v1048 = vmul.f32 %v889, %v990
        %v1049 = vmul.f32 %v889, %v994
        %v1050 = vmul.f32 %v889, %v998
        %v1051 = vmul.f32 %v889, %v1002
        %v1052 = vmul.f32 %v889, %v1006
        %v1053 = vmul.f32 %v889, %v1010
        %v1054 = vmul.f32 %v889, %v1014
        %v1055 = vmul.f32 %v889, %v1018
        %v1056 = vmul.f32 %v889, %v1022
        %v1057 = vmul.f32 %v889, %v1026
        %v1058 = vmul.f32 %v889, %v1030
        %v1059 = vmul.f32 %v889, %v1034
        %v1060 = vmul.f32 %v889, %v1038
        %v1061 = vmul.f32 %v889, %v1042
        %v1062 = vmul.f32 %v889, %v1046
        %v1063 = vmul.f32 %v893, %v986
        %v1064 = vmul.f32 %v893, %v990
        %v1065 = vmul.f32 %v893, %v994
        %v1066 = vmul.f32 %v893, %v998
        %v1067 = vmul.f32 %v893, %v1002
        %v1068 = vmul.f32 %v893, %v1006
        %v1069 = vmul.f32 %v893, %v1010
        %v1070 = vmul.f32 %v893, %v1014
        %v1071 = vmul.f32 %v893, %v1018
        %v1072 = vmul.f32 %v893, %v1022
        %v1073 = vmul.f32 %v893, %v1026
        %v1074 = vmul.f32 %v893, %v1030
        %v1075 = vmul.f32 %v893, %v1034
        %v1076 = vmul.f32 %v893, %v1038
        %v1077 = vmul.f32 %v893, %v1042
        %v1078 = vmul.f32 %v893, %v1046
        %v1079 = vmul.f32 %v897, %v986
        %v1080 = vmul.f32 %v897, %v990
        %v1081 = vmul.f32 %v897, %v994
        %v1082 = vmul.f32 %v897, %v998
        %v1083 = vmul.f32 %v897, %v1002
        %v1084 = vmul.f32 %v897, %v1006
        %v1085 = vmul.f32 %v897, %v1010
        %v1086 = vmul.f32 %v897, %v1014
        %v1087 = vmul.f32 %v897, %v1018
        %v1088 = vmul.f32 %v897, %v1022
        %v1089 = vmul.f32 %v897, %v1026
        %v1090 = vmul.f32 %v897, %v1030
        %v1091 = vmul.f32 %v897, %v1034
        %v1092 = vmul.f32 %v897, %v1038
        %v1093 = vmul.f32 %v897, %v1042
        %v1094 = vmul.f32 %v897, %v1046
        %v1095 = vmul.f32 %v901, %v986
        %v1096 = vmul.f32 %v901, %v990
        %v1097 = vmul.f32 %v901, %v994
        %v1098 = vmul.f32 %v901, %v998
        %v1099 = vmul.f32 %v901, %v1002
        %v1100 = vmul.f32 %v901, %v1006
        %v1101 = vmul.f32 %v901, %v1010
        %v1102 = vmul.f32 %v901, %v1014
        %v1103 = vmul.f32 %v901, %v1018
        %v1104 = vmul.f32 %v901, %v1022
        %v1105 = vmul.f32 %v901, %v1026
        %v1106 = vmul.f32 %v901, %v1030
        %v1107 = vmul.f32 %v901, %v1034
        %v1108 = vmul.f32 %v901, %v1038
        %v1109 = vmul.f32 %v901, %v1042
        %v1110 = vmul.f32 %v901, %v1046
        %v1111 = vadd.f32 %v823, %v1047
        %v1112 = vadd.f32 %v824, %v1048
        %v1113 = vadd.f32 %v825, %v1049
        %v1114 = vadd.f32 %v826, %v1050
        %v1115 = vadd.f32 %v827, %v1051
        %v1116 = vadd.f32 %v828, %v1052
        %v1117 = vadd.f32 %v829, %v1053
        %v1118 = vadd.f32 %v830, %v1054
        %v1119 = vadd.f32 %v831, %v1055
        %v1120 = vadd.f32 %v832, %v1056
        %v1121 = vadd.f32 %v833, %v1057
        %v1122 = vadd.f32 %v834, %v1058
        %v1123 = vadd.f32 %v835, %v1059
        %v1124 = vadd.f32 %v836, %v1060
        %v1125 = vadd.f32 %v837, %v1061
        %v1126 = vadd.f32 %v838, %v1062
        %v1127 = vadd.f32 %v839, %v1063
        %v1128 = vadd.f32 %v840, %v1064
        %v1129 = vadd.f32 %v841, %v1065
        %v1130 = vadd.f32 %v842, %v1066
        %v1131 = vadd.f32 %v843, %v1067
        %v1132 = vadd.f32 %v844, %v1068
        %v1133 = vadd.f32 %v845, %v1069
        %v1134 = vadd.f32 %v846, %v1070
        %v1135 = vadd.f32 %v847, %v1071
        %v1136 = vadd.f32 %v848, %v1072
        %v1137 = vadd.f32 %v849, %v1073
        %v1138 = vadd.f32 %v850, %v1074
        %v1139 = vadd.f32 %v851, %v1075
        %v1140 = vadd.f32 %v852, %v1076
        %v1141 = vadd.f32 %v853, %v1077
        %v1142 = vadd.f32 %v854, %v1078
        %v1143 = vadd.f32 %v855, %v1079
        %v1144 = vadd.f32 %v856, %v1080
        %v1145 = vadd.f32 %v857, %v1081
        %v1146 = vadd.f32 %v858, %v1082
        %v1147 = vadd.f32 %v859, %v1083
        %v1148 = vadd.f32 %v860, %v1084
        %v1149 = vadd.f32 %v861, %v1085
        %v1150 = vadd.f32 %v862, %v1086
        %v1151 = vadd.f32 %v863, %v1087
        %v1152 = vadd.f32 %v864, %v1088
        %v1153 = vadd.f32 %v865, %v1089
        %v1154 = vadd.f32 %v866, %v1090
        %v1155 = vadd.f32 %v867, %v1091
        %v1156 = vadd.f32 %v868, %v1092
        %v1157 = vadd.f32 %v869, %v1093
        %v1158 = vadd.f32 %v870, %v1094
        %v1159 = vadd.f32 %v871, %v1095
        %v1160 = vadd.f32 %v872, %v1096
        %v1161 = vadd.f32 %v873, %v1097
        %v1162 = vadd.f32 %v874, %v1098
        %v1163 = vadd.f32 %v875, %v1099
        %v1164 = vadd.f32 %v876, %v1100
        %v1165 = vadd.f32 %v877, %v1101
        %v1166 = vadd.f32 %v878, %v1102
        %v1167 = vadd.f32 %v879, %v1103
        %v1168 = vadd.f32 %v880, %v1104
        %v1169 = vadd.f32 %v881, %v1105
        %v1170 = vadd.f32 %v882, %v1106
        %v1171 = vadd.f32 %v883, %v1107
        %v1172 = vadd.f32 %v884, %v1108
        %v1173 = vadd.f32 %v885, %v1109
        %v1174 = vadd.f32 %v886, %v1110
        %v1175 = vld [vmem:[%s2] sm:$0xff]
        %v1176 = vld [vmem:[%s2 + $0x8] sm:$0xff]
        %v1177 = vld [vmem:[%s2 + $0x10] sm:$0xff]
        %v1178 = vld [vmem:[%s2 + $0x18] sm:$0xff]
        %1180 = vset.pattern.permute.xlu0 0
        %1181 = vperm.xlu0 %1180, %v1175
        %v1182 = vpop.permute.xlu0 %1181
        %1185 = vset.pattern.permute.xlu0 0
        %1186 = vperm.xlu0 %1185, %v1176
        %v1187 = vpop.permute.xlu0 %1186
        %1190 = vset.pattern.permute.xlu0 0
        %1191 = vperm.xlu0 %1190, %v1177
        %v1192 = vpop.permute.xlu0 %1191
        %1195 = vset.pattern.permute.xlu0 0
        %1196 = vperm.xlu0 %1195, %v1178
        %v1197 = vpop.permute.xlu0 %1196
        %v1199 = vadd.f32 %v1111, %v1182
        %v1200 = vadd.f32 %v1112, %v1182
        %v1201 = vadd.f32 %v1113, %v1182
        %v1202 = vadd.f32 %v1114, %v1182
        %v1203 = vadd.f32 %v1115, %v1182
        %v1204 = vadd.f32 %v1116, %v1182
        %v1205 = vadd.f32 %v1117, %v1182
        %v1206 = vadd.f32 %v1118, %v1182
        %v1207 = vadd.f32 %v1119, %v1182
        %v1208 = vadd.f32 %v1120, %v1182
        %v1209 = vadd.f32 %v1121, %v1182
        %v1210 = vadd.f32 %v1122, %v1182
        %v1211 = vadd.f32 %v1123, %v1182
        %v1212 = vadd.f32 %v1124, %v1182
        %v1213 = vadd.f32 %v1125, %v1182
        %v1214 = vadd.f32 %v1126, %v1182
        %v1215 = vadd.f32 %v1127, %v1187
        %v1216 = vadd.f32 %v1128, %v1187
        %v1217 = vadd.f32 %v1129, %v1187
        %v1218 = vadd.f32 %v1130, %v1187
        %v1219 = vadd.f32 %v1131, %v1187
        %v1220 = vadd.f32 %v1132, %v1187
        %v1221 = vadd.f32 %v1133, %v1187
        %v1222 = vadd.f32 %v1134, %v1187
        %v1223 = vadd.f32 %v1135, %v1187
        %v1224 = vadd.f32 %v1136, %v1187
        %v1225 = vadd.f32 %v1137, %v1187
        %v1226 = vadd.f32 %v1138, %v1187
        %v1227 = vadd.f32 %v1139, %v1187
        %v1228 = vadd.f32 %v1140, %v1187
        %v1229 = vadd.f32 %v1141, %v1187
        %v1230 = vadd.f32 %v1142, %v1187
        %v1231 = vadd.f32 %v1143, %v1192
        %v1232 = vadd.f32 %v1144, %v1192
        %v1233 = vadd.f32 %v1145, %v1192
        %v1234 = vadd.f32 %v1146, %v1192
        %v1235 = vadd.f32 %v1147, %v1192
        %v1236 = vadd.f32 %v1148, %v1192
        %v1237 = vadd.f32 %v1149, %v1192
        %v1238 = vadd.f32 %v1150, %v1192
        %v1239 = vadd.f32 %v1151, %v1192
        %v1240 = vadd.f32 %v1152, %v1192
        %v1241 = vadd.f32 %v1153, %v1192
        %v1242 = vadd.f32 %v1154, %v1192
        %v1243 = vadd.f32 %v1155, %v1192
        %v1244 = vadd.f32 %v1156, %v1192
        %v1245 = vadd.f32 %v1157, %v1192
        %v1246 = vadd.f32 %v1158, %v1192
        %v1247 = vadd.f32 %v1159, %v1197
        %v1248 = vadd.f32 %v1160, %v1197
        %v1249 = vadd.f32 %v1161, %v1197
        %v1250 = vadd.f32 %v1162, %v1197
        %v1251 = vadd.f32 %v1163, %v1197
        %v1252 = vadd.f32 %v1164, %v1197
        %v1253 = vadd.f32 %v1165, %v1197
        %v1254 = vadd.f32 %v1166, %v1197
        %v1255 = vadd.f32 %v1167, %v1197
        %v1256 = vadd.f32 %v1168, %v1197
        %v1257 = vadd.f32 %v1169, %v1197
        %v1258 = vadd.f32 %v1170, %v1197
        %v1259 = vadd.f32 %v1171, %v1197
        %v1260 = vadd.f32 %v1172, %v1197
        %v1261 = vadd.f32 %v1173, %v1197
        %v1262 = vadd.f32 %v1174, %v1197
        %v1263 = vld [vmem:[%s3] sm:$0xff]
        %v1264 = vld [vmem:[%s3 + $0x8] sm:$0xff]
        %v1265 = vld [vmem:[%s3 + $0x10] sm:$0xff]
        %v1266 = vld [vmem:[%s3 + $0x18] sm:$0xff]
        %v1267 = vld [vmem:[%s4] sm:$0xff]
        %v1268 = vld [vmem:[%s4 + $0x8] sm:$0xff]
        %v1269 = vld [vmem:[%s4 + $0x10] sm:$0xff]
        %v1270 = vld [vmem:[%s4 + $0x18] sm:$0xff]
        %1272 = vset.pattern.permute.xlu0 0
        %1273 = vperm.xlu0 %1272, %v1267
        %v1274 = vpop.permute.xlu0 %1273
        %1277 = vset.pattern.permute.xlu0 0
        %1278 = vperm.xlu0 %1277, %v1268
        %v1279 = vpop.permute.xlu0 %1278
        %1282 = vset.pattern.permute.xlu0 0
        %1283 = vperm.xlu0 %1282, %v1269
        %v1284 = vpop.permute.xlu0 %1283
        %1287 = vset.pattern.permute.xlu0 0
        %1288 = vperm.xlu0 %1287, %v1270
        %v1289 = vpop.permute.xlu0 %1288
        %vm1291 = vcmask 261120
        %v1293 = vsel %vm1291, %v1263, 0
        %v1296 = vsel %vm1291, %v1264, 0
        %v1299 = vsel %vm1291, %v1265, 0
        %v1302 = vsel %vm1291, %v1266, 0
        %1304 = vmatprep.subr.mxu0 %v1200
        %1305 = vmatpush1.msra.mxu0 %v1199
        %1306 = vmatprep.subr.mxu0 %v1216
        %1307 = vmatpush1.msra.mxu0 %v1215
        %1308 = vmatprep.subr.mxu0 %v1232
        %1309 = vmatpush1.msra.mxu0 %v1231
        %1310 = vmatprep.subr.mxu0 %v1248
        %1311 = vmatpush1.msra.mxu0 %v1247
        %1312 = vmatprep.subr.mxu0 0.0
        %1313 = vmatpush1.msra.mxu0 0.0
        %1314 = vmatprep.subr.mxu0 0.0
        %1315 = vmatpush1.msra.mxu0 0.0
        %1316 = vmatprep.subr.mxu0 0.0
        %1317 = vmatpush1.msra.mxu0 0.0
        %1318 = vmatprep.subr.mxu0 0.0
        %1319 = vmatpush1.msra.mxu0 0.0
        %1320 = vmatprep.subr.mxu0 0.0
        %1321 = vmatpush1.msra.mxu0 0.0
        %1322 = vmatprep.subr.mxu0 0.0
        %1323 = vmatpush1.msra.mxu0 0.0
        %1324 = vmatprep.subr.mxu0 0.0
        %1325 = vmatpush1.msra.mxu0 0.0
        %1326 = vmatprep.subr.mxu0 0.0
        %1327 = vmatpush1.msra.mxu0 0.0
        %1328 = vmatprep.subr.mxu0 0.0
        %1329 = vmatpush1.msra.mxu0 0.0
        %1330 = vmatprep.subr.mxu0 0.0
        %1331 = vmatpush1.msra.mxu0 0.0
        %1332 = vmatprep.subr.mxu0 0.0
        %1333 = vmatpush1.msra.mxu0 0.0
        %1334 = vmatprep.subr.mxu0 0.0
        %1335 = vmatpush1.msra.mxu0 0.0
        %1336 = vmatprep.subr.mxu0 0.0
        %1337 = vmatpush1.msra.mxu0 0.0
        %1338 = vmatprep.subr.mxu0 0.0
        %1339 = vmatpush1.msra.mxu0 0.0
        %1340 = vmatprep.subr.mxu0 0.0
        %1341 = vmatpush1.msra.mxu0 0.0
        %1342 = vmatprep.subr.mxu0 0.0
        %1343 = vmatpush1.msra.mxu0 0.0
        %1344 = vmatprep.subr.mxu0 0.0
        %1345 = vmatpush1.msra.mxu0 0.0
        %1346 = vmatprep.subr.mxu0 0.0
        %1347 = vmatpush1.msra.mxu0 0.0
        %1348 = vmatprep.subr.mxu0 0.0
        %1349 = vmatpush1.msra.mxu0 0.0
        %1350 = vmatprep.subr.mxu0 0.0
        %1351 = vmatpush1.msra.mxu0 0.0
        %1352 = vmatprep.subr.mxu0 0.0
        %1353 = vmatpush1.msra.mxu0 0.0
        %1354 = vmatprep.subr.mxu0 0.0
        %1355 = vmatpush1.msra.mxu0 0.0
        %1356 = vmatprep.subr.mxu0 0.0
        %1357 = vmatpush1.msra.mxu0 0.0
        %1358 = vmatprep.subr.mxu0 0.0
        %1359 = vmatpush1.msra.mxu0 0.0
        %1360 = vmatprep.subr.mxu0 0.0
        %1361 = vmatpush1.msra.mxu0 0.0
        %1362 = vmatprep.subr.mxu0 0.0
        %1363 = vmatpush1.msra.mxu0 0.0
        %1364 = vmatprep.subr.mxu0 0.0
        %1365 = vmatpush1.msra.mxu0 0.0
        %1366 = vmatprep.subr.mxu0 0.0
        %1367 = vmatpush1.msra.mxu0 0.0
        %1368 = vmatprep.mubr.f32.mxu0 0.0
        %1369 = vmatmul.mubr.f32.gmra.mrb[0].mxu0 %v1293
        %v1370 = vpop.f32.mrb[0].mxu0
        %v1371 = vadd.f32 %v1274, %v1370
        %v1372 = vpop.f32.mrb[0].mxu0
        %v1373 = vadd.f32 %v1274, %v1372
        %1374 = vmatprep.mubr.f32.mxu0 0.0
        %1375 = vmatmul.mubr.f32.gmra.mrb[0].mxu0 %v1296
        %v1376 = vpop.f32.mrb[0].mxu0
        %v1377 = vadd.f32 %v1279, %v1376
        %v1378 = vpop.f32.mrb[0].mxu0
        %v1379 = vadd.f32 %v1279, %v1378
        %1380 = vmatprep.mubr.f32.mxu0 0.0
        %1381 = vmatmul.mubr.f32.gmra.mrb[0].mxu0 %v1299
        %v1382 = vpop.f32.mrb[0].mxu0
        %v1383 = vadd.f32 %v1284, %v1382
        %v1384 = vpop.f32.mrb[0].mxu0
        %v1385 = vadd.f32 %v1284, %v1384
        %1386 = vmatprep.mubr.f32.mxu0 0.0
        %1387 = vmatmul.mubr.f32.gmra.mrb[0].mxu0 %v1302
        %v1388 = vpop.f32.mrb[0].mxu0
        %v1389 = vadd.f32 %v1289, %v1388
        %v1390 = vpop.f32.mrb[0].mxu0
        %v1391 = vadd.f32 %v1289, %v1390
        %1392 = vdwg.mxu0
        %1393 = vmatprep.subr.mxu0 %v1202
        %1394 = vmatpush1.msra.mxu0 %v1201
        %1395 = vmatprep.subr.mxu0 %v1218
        %1396 = vmatpush1.msra.mxu0 %v1217
        %1397 = vmatprep.subr.mxu0 %v1234
        %1398 = vmatpush1.msra.mxu0 %v1233
        %1399 = vmatprep.subr.mxu0 %v1250
        %1400 = vmatpush1.msra.mxu0 %v1249
        %1401 = vmatprep.subr.mxu0 0.0
        %1402 = vmatpush1.msra.mxu0 0.0
        %1403 = vmatprep.subr.mxu0 0.0
        %1404 = vmatpush1.msra.mxu0 0.0
        %1405 = vmatprep.subr.mxu0 0.0
        %1406 = vmatpush1.msra.mxu0 0.0
        %1407 = vmatprep.subr.mxu0 0.0
        %1408 = vmatpush1.msra.mxu0 0.0
        %1409 = vmatprep.subr.mxu0 0.0
        %1410 = vmatpush1.msra.mxu0 0.0
        %1411 = vmatprep.subr.mxu0 0.0
        %1412 = vmatpush1.msra.mxu0 0.0
        %1413 = vmatprep.subr.mxu0 0.0
        %1414 = vmatpush1.msra.mxu0 0.0
        %1415 = vmatprep.subr.mxu0 0.0
        %1416 = vmatpush1.msra.mxu0 0.0
        %1417 = vmatprep.subr.mxu0 0.0
        %1418 = vmatpush1.msra.mxu0 0.0
        %1419 = vmatprep.subr.mxu0 0.0
        %1420 = vmatpush1.msra.mxu0 0.0
        %1421 = vmatprep.subr.mxu0 0.0
        %1422 = vmatpush1.msra.mxu0 0.0
        %1423 = vmatprep.subr.mxu0 0.0
        %1424 = vmatpush1.msra.mxu0 0.0
        %1425 = vmatprep.subr.mxu0 0.0
        %1426 = vmatpush1.msra.mxu0 0.0
        %1427 = vmatprep.subr.mxu0 0.0
        %1428 = vmatpush1.msra.mxu0 0.0
        %1429 = vmatprep.subr.mxu0 0.0
        %1430 = vmatpush1.msra.mxu0 0.0
        %1431 = vmatprep.subr.mxu0 0.0
        %1432 = vmatpush1.msra.mxu0 0.0
        %1433 = vmatprep.subr.mxu0 0.0
        %1434 = vmatpush1.msra.mxu0 0.0
        %1435 = vmatprep.subr.mxu0 0.0
        %1436 = vmatpush1.msra.mxu0 0.0
        %1437 = vmatprep.subr.mxu0 0.0
        %1438 = vmatpush1.msra.mxu0 0.0
        %1439 = vmatprep.subr.mxu0 0.0
        %1440 = vmatpush1.msra.mxu0 0.0
        %1441 = vmatprep.subr.mxu0 0.0
        %1442 = vmatpush1.msra.mxu0 0.0
        %1443 = vmatprep.subr.mxu0 0.0
        %1444 = vmatpush1.msra.mxu0 0.0
        %1445 = vmatprep.subr.mxu0 0.0
        %1446 = vmatpush1.msra.mxu0 0.0
        %1447 = vmatprep.subr.mxu0 0.0
        %1448 = vmatpush1.msra.mxu0 0.0
        %1449 = vmatprep.subr.mxu0 0.0
        %1450 = vmatpush1.msra.mxu0 0.0
        %1451 = vmatprep.subr.mxu0 0.0
        %1452 = vmatpush1.msra.mxu0 0.0
        %1453 = vmatprep.subr.mxu0 0.0
        %1454 = vmatpush1.msra.mxu0 0.0
        %1455 = vmatprep.subr.mxu0 0.0
        %1456 = vmatpush1.msra.mxu0 0.0
        %1457 = vmatprep.mubr.f32.mxu0 0.0
        %1458 = vmatmul.mubr.f32.gmra.mrb[0].mxu0 %v1293
        %v1459 = vpop.f32.mrb[0].mxu0
        %v1460 = vadd.f32 %v1274, %v1459
        %v1461 = vpop.f32.mrb[0].mxu0
        %v1462 = vadd.f32 %v1274, %v1461
        %1463 = vmatprep.mubr.f32.mxu0 0.0
        %1464 = vmatmul.mubr.f32.gmra.mrb[0].mxu0 %v1296
        %v1465 = vpop.f32.mrb[0].mxu0
        %v1466 = vadd.f32 %v1279, %v1465
        %v1467 = vpop.f32.mrb[0].mxu0
        %v1468 = vadd.f32 %v1279, %v1467
        %1469 = vmatprep.mubr.f32.mxu0 0.0
        %1470 = vmatmul.mubr.f32.gmra.mrb[0].mxu0 %v1299
        %v1471 = vpop.f32.mrb[0].mxu0
        %v1472 = vadd.f32 %v1284, %v1471
        %v1473 = vpop.f32.mrb[0].mxu0
        %v1474 = vadd.f32 %v1284, %v1473
        %1475 = vmatprep.mubr.f32.mxu0 0.0
        %1476 = vmatmul.mubr.f32.gmra.mrb[0].mxu0 %v1302
        %v1477 = vpop.f32.mrb[0].mxu0
        %v1478 = vadd.f32 %v1289, %v1477
        %v1479 = vpop.f32.mrb[0].mxu0
        %v1480 = vadd.f32 %v1289, %v1479
        %1481 = vdwg.mxu0
        %1482 = vmatprep.subr.mxu0 %v1204
        %1483 = vmatpush1.msra.mxu0 %v1203
        %1484 = vmatprep.subr.mxu0 %v1220
        %1485 = vmatpush1.msra.mxu0 %v1219
        %1486 = vmatprep.subr.mxu0 %v1236
        %1487 = vmatpush1.msra.mxu0 %v1235
        %1488 = vmatprep.subr.mxu0 %v1252
        %1489 = vmatpush1.msra.mxu0 %v1251
        %1490 = vmatprep.subr.mxu0 0.0
        %1491 = vmatpush1.msra.mxu0 0.0
        %1492 = vmatprep.subr.mxu0 0.0
        %1493 = vmatpush1.msra.mxu0 0.0
        %1494 = vmatprep.subr.mxu0 0.0
        %1495 = vmatpush1.msra.mxu0 0.0
        %1496 = vmatprep.subr.mxu0 0.0
        %1497 = vmatpush1.msra.mxu0 0.0
        %1498 = vmatprep.subr.mxu0 0.0
        %1499 = vmatpush1.msra.mxu0 0.0
        %1500 = vmatprep.subr.mxu0 0.0
        %1501 = vmatpush1.msra.mxu0 0.0
        %1502 = vmatprep.subr.mxu0 0.0
        %1503 = vmatpush1.msra.mxu0 0.0
        %1504 = vmatprep.subr.mxu0 0.0
        %1505 = vmatpush1.msra.mxu0 0.0
        %1506 = vmatprep.subr.mxu0 0.0
        %1507 = vmatpush1.msra.mxu0 0.0
        %1508 = vmatprep.subr.mxu0 0.0
        %1509 = vmatpush1.msra.mxu0 0.0
        %1510 = vmatprep.subr.mxu0 0.0
        %1511 = vmatpush1.msra.mxu0 0.0
        %1512 = vmatprep.subr.mxu0 0.0
        %1513 = vmatpush1.msra.mxu0 0.0
        %1514 = vmatprep.subr.mxu0 0.0
        %1515 = vmatpush1.msra.mxu0 0.0
        %1516 = vmatprep.subr.mxu0 0.0
        %1517 = vmatpush1.msra.mxu0 0.0
        %1518 = vmatprep.subr.mxu0 0.0
        %1519 = vmatpush1.msra.mxu0 0.0
        %1520 = vmatprep.subr.mxu0 0.0
        %1521 = vmatpush1.msra.mxu0 0.0
        %1522 = vmatprep.subr.mxu0 0.0
        %1523 = vmatpush1.msra.mxu0 0.0
        %1524 = vmatprep.subr.mxu0 0.0
        %1525 = vmatpush1.msra.mxu0 0.0
        %1526 = vmatprep.subr.mxu0 0.0
        %1527 = vmatpush1.msra.mxu0 0.0
        %1528 = vmatprep.subr.mxu0 0.0
        %1529 = vmatpush1.msra.mxu0 0.0
        %1530 = vmatprep.subr.mxu0 0.0
        %1531 = vmatpush1.msra.mxu0 0.0
        %1532 = vmatprep.subr.mxu0 0.0
        %1533 = vmatpush1.msra.mxu0 0.0
        %1534 = vmatprep.subr.mxu0 0.0
        %1535 = vmatpush1.msra.mxu0 0.0
        %1536 = vmatprep.subr.mxu0 0.0
        %1537 = vmatpush1.msra.mxu0 0.0
        %1538 = vmatprep.subr.mxu0 0.0
        %1539 = vmatpush1.msra.mxu0 0.0
        %1540 = vmatprep.subr.mxu0 0.0
        %1541 = vmatpush1.msra.mxu0 0.0
        %1542 = vmatprep.subr.mxu0 0.0
        %1543 = vmatpush1.msra.mxu0 0.0
        %1544 = vmatprep.subr.mxu0 0.0
        %1545 = vmatpush1.msra.mxu0 0.0
        %1546 = vmatprep.mubr.f32.mxu0 0.0
        %1547 = vmatmul.mubr.f32.gmra.mrb[0].mxu0 %v1293
        %v1548 = vpop.f32.mrb[0].mxu0
        %v1549 = vadd.f32 %v1274, %v1548
        %v1550 = vpop.f32.mrb[0].mxu0
        %v1551 = vadd.f32 %v1274, %v1550
        %1552 = vmatprep.mubr.f32.mxu0 0.0
        %1553 = vmatmul.mubr.f32.gmra.mrb[0].mxu0 %v1296
        %v1554 = vpop.f32.mrb[0].mxu0
        %v1555 = vadd.f32 %v1279, %v1554
        %v1556 = vpop.f32.mrb[0].mxu0
        %v1557 = vadd.f32 %v1279, %v1556
        %1558 = vmatprep.mubr.f32.mxu0 0.0
        %1559 = vmatmul.mubr.f32.gmra.mrb[0].mxu0 %v1299
        %v1560 = vpop.f32.mrb[0].mxu0
        %v1561 = vadd.f32 %v1284, %v1560
        %v1562 = vpop.f32.mrb[0].mxu0
        %v1563 = vadd.f32 %v1284, %v1562
        %1564 = vmatprep.mubr.f32.mxu0 0.0
        %1565 = vmatmul.mubr.f32.gmra.mrb[0].mxu0 %v1302
        %v1566 = vpop.f32.mrb[0].mxu0
        %v1567 = vadd.f32 %v1289, %v1566
        %v1568 = vpop.f32.mrb[0].mxu0
        %v1569 = vadd.f32 %v1289, %v1568
        %1570 = vdwg.mxu0
        %1571 = vmatprep.subr.mxu0 %v1206
        %1572 = vmatpush1.msra.mxu0 %v1205
        %1573 = vmatprep.subr.mxu0 %v1222
        %1574 = vmatpush1.msra.mxu0 %v1221
        %1575 = vmatprep.subr.mxu0 %v1238
        %1576 = vmatpush1.msra.mxu0 %v1237
        %1577 = vmatprep.subr.mxu0 %v1254
        %1578 = vmatpush1.msra.mxu0 %v1253
        %1579 = vmatprep.subr.mxu0 0.0
        %1580 = vmatpush1.msra.mxu0 0.0
        %1581 = vmatprep.subr.mxu0 0.0
        %1582 = vmatpush1.msra.mxu0 0.0
        %1583 = vmatprep.subr.mxu0 0.0
        %1584 = vmatpush1.msra.mxu0 0.0
        %1585 = vmatprep.subr.mxu0 0.0
        %1586 = vmatpush1.msra.mxu0 0.0
        %1587 = vmatprep.subr.mxu0 0.0
        %1588 = vmatpush1.msra.mxu0 0.0
        %1589 = vmatprep.subr.mxu0 0.0
        %1590 = vmatpush1.msra.mxu0 0.0
        %1591 = vmatprep.subr.mxu0 0.0
        %1592 = vmatpush1.msra.mxu0 0.0
        %1593 = vmatprep.subr.mxu0 0.0
        %1594 = vmatpush1.msra.mxu0 0.0
        %1595 = vmatprep.subr.mxu0 0.0
        %1596 = vmatpush1.msra.mxu0 0.0
        %1597 = vmatprep.subr.mxu0 0.0
        %1598 = vmatpush1.msra.mxu0 0.0
        %1599 = vmatprep.subr.mxu0 0.0
        %1600 = vmatpush1.msra.mxu0 0.0
        %1601 = vmatprep.subr.mxu0 0.0
        %1602 = vmatpush1.msra.mxu0 0.0
        %1603 = vmatprep.subr.mxu0 0.0
        %1604 = vmatpush1.msra.mxu0 0.0
        %1605 = vmatprep.subr.mxu0 0.0
        %1606 = vmatpush1.msra.mxu0 0.0
        %1607 = vmatprep.subr.mxu0 0.0
        %1608 = vmatpush1.msra.mxu0 0.0
        %1609 = vmatprep.subr.mxu0 0.0
        %1610 = vmatpush1.msra.mxu0 0.0
        %1611 = vmatprep.subr.mxu0 0.0
        %1612 = vmatpush1.msra.mxu0 0.0
        %1613 = vmatprep.subr.mxu0 0.0
        %1614 = vmatpush1.msra.mxu0 0.0
        %1615 = vmatprep.subr.mxu0 0.0
        %1616 = vmatpush1.msra.mxu0 0.0
        %1617 = vmatprep.subr.mxu0 0.0
        %1618 = vmatpush1.msra.mxu0 0.0
        %1619 = vmatprep.subr.mxu0 0.0
        %1620 = vmatpush1.msra.mxu0 0.0
        %1621 = vmatprep.subr.mxu0 0.0
        %1622 = vmatpush1.msra.mxu0 0.0
        %1623 = vmatprep.subr.mxu0 0.0
        %1624 = vmatpush1.msra.mxu0 0.0
        %1625 = vmatprep.subr.mxu0 0.0
        %1626 = vmatpush1.msra.mxu0 0.0
        %1627 = vmatprep.subr.mxu0 0.0
        %1628 = vmatpush1.msra.mxu0 0.0
        %1629 = vmatprep.subr.mxu0 0.0
        %1630 = vmatpush1.msra.mxu0 0.0
        %1631 = vmatprep.subr.mxu0 0.0
        %1632 = vmatpush1.msra.mxu0 0.0
        %1633 = vmatprep.subr.mxu0 0.0
        %1634 = vmatpush1.msra.mxu0 0.0
        %1635 = vmatprep.mubr.f32.mxu0 0.0
        %1636 = vmatmul.mubr.f32.gmra.mrb[0].mxu0 %v1293
        %v1637 = vpop.f32.mrb[0].mxu0
        %v1638 = vadd.f32 %v1274, %v1637
        %v1639 = vpop.f32.mrb[0].mxu0
        %v1640 = vadd.f32 %v1274, %v1639
        %1641 = vmatprep.mubr.f32.mxu0 0.0
        %1642 = vmatmul.mubr.f32.gmra.mrb[0].mxu0 %v1296
        %v1643 = vpop.f32.mrb[0].mxu0
        %v1644 = vadd.f32 %v1279, %v1643
        %v1645 = vpop.f32.mrb[0].mxu0
        %v1646 = vadd.f32 %v1279, %v1645
        %1647 = vmatprep.mubr.f32.mxu0 0.0
        %1648 = vmatmul.mubr.f32.gmra.mrb[0].mxu0 %v1299
        %v1649 = vpop.f32.mrb[0].mxu0
        %v1650 = vadd.f32 %v1284, %v1649
        %v1651 = vpop.f32.mrb[0].mxu0
        %v1652 = vadd.f32 %v1284, %v1651
        %1653 = vmatprep.mubr.f32.mxu0 0.0
        %1654 = vmatmul.mubr.f32.gmra.mrb[0].mxu0 %v1302
        %v1655 = vpop.f32.mrb[0].mxu0
        %v1656 = vadd.f32 %v1289, %v1655
        %v1657 = vpop.f32.mrb[0].mxu0
        %v1658 = vadd.f32 %v1289, %v1657
        %1659 = vdwg.mxu0
        %1660 = vmatprep.subr.mxu0 %v1208
        %1661 = vmatpush1.msra.mxu0 %v1207
        %1662 = vmatprep.subr.mxu0 %v1224
        %1663 = vmatpush1.msra.mxu0 %v1223
        %1664 = vmatprep.subr.mxu0 %v1240
        %1665 = vmatpush1.msra.mxu0 %v1239
        %1666 = vmatprep.subr.mxu0 %v1256
        %1667 = vmatpush1.msra.mxu0 %v1255
        %1668 = vmatprep.subr.mxu0 0.0
        %1669 = vmatpush1.msra.mxu0 0.0
        %1670 = vmatprep.subr.mxu0 0.0
        %1671 = vmatpush1.msra.mxu0 0.0
        %1672 = vmatprep.subr.mxu0 0.0
        %1673 = vmatpush1.msra.mxu0 0.0
        %1674 = vmatprep.subr.mxu0 0.0
        %1675 = vmatpush1.msra.mxu0 0.0
        %1676 = vmatprep.subr.mxu0 0.0
        %1677 = vmatpush1.msra.mxu0 0.0
        %1678 = vmatprep.subr.mxu0 0.0
        %1679 = vmatpush1.msra.mxu0 0.0
        %1680 = vmatprep.subr.mxu0 0.0
        %1681 = vmatpush1.msra.mxu0 0.0
        %1682 = vmatprep.subr.mxu0 0.0
        %1683 = vmatpush1.msra.mxu0 0.0
        %1684 = vmatprep.subr.mxu0 0.0
        %1685 = vmatpush1.msra.mxu0 0.0
        %1686 = vmatprep.subr.mxu0 0.0
        %1687 = vmatpush1.msra.mxu0 0.0
        %1688 = vmatprep.subr.mxu0 0.0
        %1689 = vmatpush1.msra.mxu0 0.0
        %1690 = vmatprep.subr.mxu0 0.0
        %1691 = vmatpush1.msra.mxu0 0.0
        %1692 = vmatprep.subr.mxu0 0.0
        %1693 = vmatpush1.msra.mxu0 0.0
        %1694 = vmatprep.subr.mxu0 0.0
        %1695 = vmatpush1.msra.mxu0 0.0
        %1696 = vmatprep.subr.mxu0 0.0
        %1697 = vmatpush1.msra.mxu0 0.0
        %1698 = vmatprep.subr.mxu0 0.0
        %1699 = vmatpush1.msra.mxu0 0.0
        %1700 = vmatprep.subr.mxu0 0.0
        %1701 = vmatpush1.msra.mxu0 0.0
        %1702 = vmatprep.subr.mxu0 0.0
        %1703 = vmatpush1.msra.mxu0 0.0
        %1704 = vmatprep.subr.mxu0 0.0
        %1705 = vmatpush1.msra.mxu0 0.0
        %1706 = vmatprep.subr.mxu0 0.0
        %1707 = vmatpush1.msra.mxu0 0.0
        %1708 = vmatprep.subr.mxu0 0.0
        %1709 = vmatpush1.msra.mxu0 0.0
        %1710 = vmatprep.subr.mxu0 0.0
        %1711 = vmatpush1.msra.mxu0 0.0
        %1712 = vmatprep.subr.mxu0 0.0
        %1713 = vmatpush1.msra.mxu0 0.0
        %1714 = vmatprep.subr.mxu0 0.0
        %1715 = vmatpush1.msra.mxu0 0.0
        %1716 = vmatprep.subr.mxu0 0.0
        %1717 = vmatpush1.msra.mxu0 0.0
        %1718 = vmatprep.subr.mxu0 0.0
        %1719 = vmatpush1.msra.mxu0 0.0
        %1720 = vmatprep.subr.mxu0 0.0
        %1721 = vmatpush1.msra.mxu0 0.0
        %1722 = vmatprep.subr.mxu0 0.0
        %1723 = vmatpush1.msra.mxu0 0.0
        %1724 = vmatprep.mubr.f32.mxu0 0.0
        %1725 = vmatmul.mubr.f32.gmra.mrb[0].mxu0 %v1293
        %v1726 = vpop.f32.mrb[0].mxu0
        %v1727 = vadd.f32 %v1274, %v1726
        %v1728 = vpop.f32.mrb[0].mxu0
        %v1729 = vadd.f32 %v1274, %v1728
        %1730 = vmatprep.mubr.f32.mxu0 0.0
        %1731 = vmatmul.mubr.f32.gmra.mrb[0].mxu0 %v1296
        %v1732 = vpop.f32.mrb[0].mxu0
        %v1733 = vadd.f32 %v1279, %v1732
        %v1734 = vpop.f32.mrb[0].mxu0
        %v1735 = vadd.f32 %v1279, %v1734
        %1736 = vmatprep.mubr.f32.mxu0 0.0
        %1737 = vmatmul.mubr.f32.gmra.mrb[0].mxu0 %v1299
        %v1738 = vpop.f32.mrb[0].mxu0
        %v1739 = vadd.f32 %v1284, %v1738
        %v1740 = vpop.f32.mrb[0].mxu0
        %v1741 = vadd.f32 %v1284, %v1740
        %1742 = vmatprep.mubr.f32.mxu0 0.0
        %1743 = vmatmul.mubr.f32.gmra.mrb[0].mxu0 %v1302
        %v1744 = vpop.f32.mrb[0].mxu0
        %v1745 = vadd.f32 %v1289, %v1744
        %v1746 = vpop.f32.mrb[0].mxu0
        %v1747 = vadd.f32 %v1289, %v1746
        %1748 = vdwg.mxu0
        %1749 = vmatprep.subr.mxu0 %v1210
        %1750 = vmatpush1.msra.mxu0 %v1209
        %1751 = vmatprep.subr.mxu0 %v1226
        %1752 = vmatpush1.msra.mxu0 %v1225
        %1753 = vmatprep.subr.mxu0 %v1242
        %1754 = vmatpush1.msra.mxu0 %v1241
        %1755 = vmatprep.subr.mxu0 %v1258
        %1756 = vmatpush1.msra.mxu0 %v1257
        %1757 = vmatprep.subr.mxu0 0.0
        %1758 = vmatpush1.msra.mxu0 0.0
        %1759 = vmatprep.subr.mxu0 0.0
        %1760 = vmatpush1.msra.mxu0 0.0
        %1761 = vmatprep.subr.mxu0 0.0
        %1762 = vmatpush1.msra.mxu0 0.0
        %1763 = vmatprep.subr.mxu0 0.0
        %1764 = vmatpush1.msra.mxu0 0.0
        %1765 = vmatprep.subr.mxu0 0.0
        %1766 = vmatpush1.msra.mxu0 0.0
        %1767 = vmatprep.subr.mxu0 0.0
        %1768 = vmatpush1.msra.mxu0 0.0
        %1769 = vmatprep.subr.mxu0 0.0
        %1770 = vmatpush1.msra.mxu0 0.0
        %1771 = vmatprep.subr.mxu0 0.0
        %1772 = vmatpush1.msra.mxu0 0.0
        %1773 = vmatprep.subr.mxu0 0.0
        %1774 = vmatpush1.msra.mxu0 0.0
        %1775 = vmatprep.subr.mxu0 0.0
        %1776 = vmatpush1.msra.mxu0 0.0
        %1777 = vmatprep.subr.mxu0 0.0
        %1778 = vmatpush1.msra.mxu0 0.0
        %1779 = vmatprep.subr.mxu0 0.0
        %1780 = vmatpush1.msra.mxu0 0.0
        %1781 = vmatprep.subr.mxu0 0.0
        %1782 = vmatpush1.msra.mxu0 0.0
        %1783 = vmatprep.subr.mxu0 0.0
        %1784 = vmatpush1.msra.mxu0 0.0
        %1785 = vmatprep.subr.mxu0 0.0
        %1786 = vmatpush1.msra.mxu0 0.0
        %1787 = vmatprep.subr.mxu0 0.0
        %1788 = vmatpush1.msra.mxu0 0.0
        %1789 = vmatprep.subr.mxu0 0.0
        %1790 = vmatpush1.msra.mxu0 0.0
        %1791 = vmatprep.subr.mxu0 0.0
        %1792 = vmatpush1.msra.mxu0 0.0
        %1793 = vmatprep.subr.mxu0 0.0
        %1794 = vmatpush1.msra.mxu0 0.0
        %1795 = vmatprep.subr.mxu0 0.0
        %1796 = vmatpush1.msra.mxu0 0.0
        %1797 = vmatprep.subr.mxu0 0.0
        %1798 = vmatpush1.msra.mxu0 0.0
        %1799 = vmatprep.subr.mxu0 0.0
        %1800 = vmatpush1.msra.mxu0 0.0
        %1801 = vmatprep.subr.mxu0 0.0
        %1802 = vmatpush1.msra.mxu0 0.0
        %1803 = vmatprep.subr.mxu0 0.0
        %1804 = vmatpush1.msra.mxu0 0.0
        %1805 = vmatprep.subr.mxu0 0.0
        %1806 = vmatpush1.msra.mxu0 0.0
        %1807 = vmatprep.subr.mxu0 0.0
        %1808 = vmatpush1.msra.mxu0 0.0
        %1809 = vmatprep.subr.mxu0 0.0
        %1810 = vmatpush1.msra.mxu0 0.0
        %1811 = vmatprep.subr.mxu0 0.0
        %1812 = vmatpush1.msra.mxu0 0.0
        %1813 = vmatprep.mubr.f32.mxu0 0.0
        %1814 = vmatmul.mubr.f32.gmra.mrb[0].mxu0 %v1293
        %v1815 = vpop.f32.mrb[0].mxu0
        %v1816 = vadd.f32 %v1274, %v1815
        %v1817 = vpop.f32.mrb[0].mxu0
        %v1818 = vadd.f32 %v1274, %v1817
        %1819 = vmatprep.mubr.f32.mxu0 0.0
        %1820 = vmatmul.mubr.f32.gmra.mrb[0].mxu0 %v1296
        %v1821 = vpop.f32.mrb[0].mxu0
        %v1822 = vadd.f32 %v1279, %v1821
        %v1823 = vpop.f32.mrb[0].mxu0
        %v1824 = vadd.f32 %v1279, %v1823
        %1825 = vmatprep.mubr.f32.mxu0 0.0
        %1826 = vmatmul.mubr.f32.gmra.mrb[0].mxu0 %v1299
        %v1827 = vpop.f32.mrb[0].mxu0
        %v1828 = vadd.f32 %v1284, %v1827
        %v1829 = vpop.f32.mrb[0].mxu0
        %v1830 = vadd.f32 %v1284, %v1829
        %1831 = vmatprep.mubr.f32.mxu0 0.0
        %1832 = vmatmul.mubr.f32.gmra.mrb[0].mxu0 %v1302
        %v1833 = vpop.f32.mrb[0].mxu0
        %v1834 = vadd.f32 %v1289, %v1833
        %v1835 = vpop.f32.mrb[0].mxu0
        %v1836 = vadd.f32 %v1289, %v1835
        %1837 = vdwg.mxu0
        %1838 = vmatprep.subr.mxu0 %v1212
        %1839 = vmatpush1.msra.mxu0 %v1211
        %1840 = vmatprep.subr.mxu0 %v1228
        %1841 = vmatpush1.msra.mxu0 %v1227
        %1842 = vmatprep.subr.mxu0 %v1244
        %1843 = vmatpush1.msra.mxu0 %v1243
        %1844 = vmatprep.subr.mxu0 %v1260
        %1845 = vmatpush1.msra.mxu0 %v1259
        %1846 = vmatprep.subr.mxu0 0.0
        %1847 = vmatpush1.msra.mxu0 0.0
        %1848 = vmatprep.subr.mxu0 0.0
        %1849 = vmatpush1.msra.mxu0 0.0
        %1850 = vmatprep.subr.mxu0 0.0
        %1851 = vmatpush1.msra.mxu0 0.0
        %1852 = vmatprep.subr.mxu0 0.0
        %1853 = vmatpush1.msra.mxu0 0.0
        %1854 = vmatprep.subr.mxu0 0.0
        %1855 = vmatpush1.msra.mxu0 0.0
        %1856 = vmatprep.subr.mxu0 0.0
        %1857 = vmatpush1.msra.mxu0 0.0
        %1858 = vmatprep.subr.mxu0 0.0
        %1859 = vmatpush1.msra.mxu0 0.0
        %1860 = vmatprep.subr.mxu0 0.0
        %1861 = vmatpush1.msra.mxu0 0.0
        %1862 = vmatprep.subr.mxu0 0.0
        %1863 = vmatpush1.msra.mxu0 0.0
        %1864 = vmatprep.subr.mxu0 0.0
        %1865 = vmatpush1.msra.mxu0 0.0
        %1866 = vmatprep.subr.mxu0 0.0
        %1867 = vmatpush1.msra.mxu0 0.0
        %1868 = vmatprep.subr.mxu0 0.0
        %1869 = vmatpush1.msra.mxu0 0.0
        %1870 = vmatprep.subr.mxu0 0.0
        %1871 = vmatpush1.msra.mxu0 0.0
        %1872 = vmatprep.subr.mxu0 0.0
        %1873 = vmatpush1.msra.mxu0 0.0
        %1874 = vmatprep.subr.mxu0 0.0
        %1875 = vmatpush1.msra.mxu0 0.0
        %1876 = vmatprep.subr.mxu0 0.0
        %1877 = vmatpush1.msra.mxu0 0.0
        %1878 = vmatprep.subr.mxu0 0.0
        %1879 = vmatpush1.msra.mxu0 0.0
        %1880 = vmatprep.subr.mxu0 0.0
        %1881 = vmatpush1.msra.mxu0 0.0
        %1882 = vmatprep.subr.mxu0 0.0
        %1883 = vmatpush1.msra.mxu0 0.0
        %1884 = vmatprep.subr.mxu0 0.0
        %1885 = vmatpush1.msra.mxu0 0.0
        %1886 = vmatprep.subr.mxu0 0.0
        %1887 = vmatpush1.msra.mxu0 0.0
        %1888 = vmatprep.subr.mxu0 0.0
        %1889 = vmatpush1.msra.mxu0 0.0
        %1890 = vmatprep.subr.mxu0 0.0
        %1891 = vmatpush1.msra.mxu0 0.0
        %1892 = vmatprep.subr.mxu0 0.0
        %1893 = vmatpush1.msra.mxu0 0.0
        %1894 = vmatprep.subr.mxu0 0.0
        %1895 = vmatpush1.msra.mxu0 0.0
        %1896 = vmatprep.subr.mxu0 0.0
        %1897 = vmatpush1.msra.mxu0 0.0
        %1898 = vmatprep.subr.mxu0 0.0
        %1899 = vmatpush1.msra.mxu0 0.0
        %1900 = vmatprep.subr.mxu0 0.0
        %1901 = vmatpush1.msra.mxu0 0.0
        %1902 = vmatprep.mubr.f32.mxu0 0.0
        %1903 = vmatmul.mubr.f32.gmra.mrb[0].mxu0 %v1293
        %v1904 = vpop.f32.mrb[0].mxu0
        %v1905 = vadd.f32 %v1274, %v1904
        %v1906 = vpop.f32.mrb[0].mxu0
        %v1907 = vadd.f32 %v1274, %v1906
        %1908 = vmatprep.mubr.f32.mxu0 0.0
        %1909 = vmatmul.mubr.f32.gmra.mrb[0].mxu0 %v1296
        %v1910 = vpop.f32.mrb[0].mxu0
        %v1911 = vadd.f32 %v1279, %v1910
        %v1912 = vpop.f32.mrb[0].mxu0
        %v1913 = vadd.f32 %v1279, %v1912
        %1914 = vmatprep.mubr.f32.mxu0 0.0
        %1915 = vmatmul.mubr.f32.gmra.mrb[0].mxu0 %v1299
        %v1916 = vpop.f32.mrb[0].mxu0
        %v1917 = vadd.f32 %v1284, %v1916
        %v1918 = vpop.f32.mrb[0].mxu0
        %v1919 = vadd.f32 %v1284, %v1918
        %1920 = vmatprep.mubr.f32.mxu0 0.0
        %1921 = vmatmul.mubr.f32.gmra.mrb[0].mxu0 %v1302
        %v1922 = vpop.f32.mrb[0].mxu0
        %v1923 = vadd.f32 %v1289, %v1922
        %v1924 = vpop.f32.mrb[0].mxu0
        %v1925 = vadd.f32 %v1289, %v1924
        %1926 = vdwg.mxu0
        %1927 = vmatprep.subr.mxu0 %v1214
        %1928 = vmatpush1.msra.mxu0 %v1213
        %1929 = vmatprep.subr.mxu0 %v1230
        %1930 = vmatpush1.msra.mxu0 %v1229
        %1931 = vmatprep.subr.mxu0 %v1246
        %1932 = vmatpush1.msra.mxu0 %v1245
        %1933 = vmatprep.subr.mxu0 %v1262
        %1934 = vmatpush1.msra.mxu0 %v1261
        %1935 = vmatprep.subr.mxu0 0.0
        %1936 = vmatpush1.msra.mxu0 0.0
        %1937 = vmatprep.subr.mxu0 0.0
        %1938 = vmatpush1.msra.mxu0 0.0
        %1939 = vmatprep.subr.mxu0 0.0
        %1940 = vmatpush1.msra.mxu0 0.0
        %1941 = vmatprep.subr.mxu0 0.0
        %1942 = vmatpush1.msra.mxu0 0.0
        %1943 = vmatprep.subr.mxu0 0.0
        %1944 = vmatpush1.msra.mxu0 0.0
        %1945 = vmatprep.subr.mxu0 0.0
        %1946 = vmatpush1.msra.mxu0 0.0
        %1947 = vmatprep.subr.mxu0 0.0
        %1948 = vmatpush1.msra.mxu0 0.0
        %1949 = vmatprep.subr.mxu0 0.0
        %1950 = vmatpush1.msra.mxu0 0.0
        %1951 = vmatprep.subr.mxu0 0.0
        %1952 = vmatpush1.msra.mxu0 0.0
        %1953 = vmatprep.subr.mxu0 0.0
        %1954 = vmatpush1.msra.mxu0 0.0
        %1955 = vmatprep.subr.mxu0 0.0
        %1956 = vmatpush1.msra.mxu0 0.0
        %1957 = vmatprep.subr.mxu0 0.0
        %1958 = vmatpush1.msra.mxu0 0.0
        %1959 = vmatprep.subr.mxu0 0.0
        %1960 = vmatpush1.msra.mxu0 0.0
        %1961 = vmatprep.subr.mxu0 0.0
        %1962 = vmatpush1.msra.mxu0 0.0
        %1963 = vmatprep.subr.mxu0 0.0
        %1964 = vmatpush1.msra.mxu0 0.0
        %1965 = vmatprep.subr.mxu0 0.0
        %1966 = vmatpush1.msra.mxu0 0.0
        %1967 = vmatprep.subr.mxu0 0.0
        %1968 = vmatpush1.msra.mxu0 0.0
        %1969 = vmatprep.subr.mxu0 0.0
        %1970 = vmatpush1.msra.mxu0 0.0
        %1971 = vmatprep.subr.mxu0 0.0
        %1972 = vmatpush1.msra.mxu0 0.0
        %1973 = vmatprep.subr.mxu0 0.0
        %1974 = vmatpush1.msra.mxu0 0.0
        %1975 = vmatprep.subr.mxu0 0.0
        %1976 = vmatpush1.msra.mxu0 0.0
        %1977 = vmatprep.subr.mxu0 0.0
        %1978 = vmatpush1.msra.mxu0 0.0
        %1979 = vmatprep.subr.mxu0 0.0
        %1980 = vmatpush1.msra.mxu0 0.0
        %1981 = vmatprep.subr.mxu0 0.0
        %1982 = vmatpush1.msra.mxu0 0.0
        %1983 = vmatprep.subr.mxu0 0.0
        %1984 = vmatpush1.msra.mxu0 0.0
        %1985 = vmatprep.subr.mxu0 0.0
        %1986 = vmatpush1.msra.mxu0 0.0
        %1987 = vmatprep.subr.mxu0 0.0
        %1988 = vmatpush1.msra.mxu0 0.0
        %1989 = vmatprep.subr.mxu0 0.0
        %1990 = vmatpush1.msra.mxu0 0.0
        %1991 = vmatprep.mubr.f32.mxu0 0.0
        %1992 = vmatmul.mubr.f32.gmra.mrb[0].mxu0 %v1293
        %v1993 = vpop.f32.mrb[0].mxu0
        %v1994 = vadd.f32 %v1274, %v1993
        %v1995 = vpop.f32.mrb[0].mxu0
        %v1996 = vadd.f32 %v1274, %v1995
        %1997 = vmatprep.mubr.f32.mxu0 0.0
        %1998 = vmatmul.mubr.f32.gmra.mrb[0].mxu0 %v1296
        %v1999 = vpop.f32.mrb[0].mxu0
        %v2000 = vadd.f32 %v1279, %v1999
        %v2001 = vpop.f32.mrb[0].mxu0
        %v2002 = vadd.f32 %v1279, %v2001
        %2003 = vmatprep.mubr.f32.mxu0 0.0
        %2004 = vmatmul.mubr.f32.gmra.mrb[0].mxu0 %v1299
        %v2005 = vpop.f32.mrb[0].mxu0
        %v2006 = vadd.f32 %v1284, %v2005
        %v2007 = vpop.f32.mrb[0].mxu0
        %v2008 = vadd.f32 %v1284, %v2007
        %2009 = vmatprep.mubr.f32.mxu0 0.0
        %2010 = vmatmul.mubr.f32.gmra.mrb[0].mxu0 %v1302
        %v2011 = vpop.f32.mrb[0].mxu0
        %v2012 = vadd.f32 %v1289, %v2011
        %v2013 = vpop.f32.mrb[0].mxu0
        %v2014 = vadd.f32 %v1289, %v2013
        %2015 = vdwg.mxu0
        %v2016 = vtanh.pop %v1371
        %v2017 = vtanh.pop %v1373
        %v2018 = vtanh.pop %v1460
        %v2019 = vtanh.pop %v1462
        %v2020 = vtanh.pop %v1549
        %v2021 = vtanh.pop %v1551
        %v2022 = vtanh.pop %v1638
        %v2023 = vtanh.pop %v1640
        %v2024 = vtanh.pop %v1727
        %v2025 = vtanh.pop %v1729
        %v2026 = vtanh.pop %v1816
        %v2027 = vtanh.pop %v1818
        %v2028 = vtanh.pop %v1905
        %v2029 = vtanh.pop %v1907
        %v2030 = vtanh.pop %v1994
        %v2031 = vtanh.pop %v1996
        %v2032 = vtanh.pop %v1377
        %v2033 = vtanh.pop %v1379
        %v2034 = vtanh.pop %v1466
        %v2035 = vtanh.pop %v1468
        %v2036 = vtanh.pop %v1555
        %v2037 = vtanh.pop %v1557
        %v2038 = vtanh.pop %v1644
        %v2039 = vtanh.pop %v1646
        %v2040 = vtanh.pop %v1733
        %v2041 = vtanh.pop %v1735
        %v2042 = vtanh.pop %v1822
        %v2043 = vtanh.pop %v1824
        %v2044 = vtanh.pop %v1911
        %v2045 = vtanh.pop %v1913
        %v2046 = vtanh.pop %v2000
        %v2047 = vtanh.pop %v2002
        %v2048 = vtanh.pop %v1383
        %v2049 = vtanh.pop %v1385
        %v2050 = vtanh.pop %v1472
        %v2051 = vtanh.pop %v1474
        %v2052 = vtanh.pop %v1561
        %v2053 = vtanh.pop %v1563
        %v2054 = vtanh.pop %v1650
        %v2055 = vtanh.pop %v1652
        %v2056 = vtanh.pop %v1739
        %v2057 = vtanh.pop %v1741
        %v2058 = vtanh.pop %v1828
        %v2059 = vtanh.pop %v1830
        %v2060 = vtanh.pop %v1917
        %v2061 = vtanh.pop %v1919
        %v2062 = vtanh.pop %v2006
        %v2063 = vtanh.pop %v2008
        %v2064 = vtanh.pop %v1389
        %v2065 = vtanh.pop %v1391
        %v2066 = vtanh.pop %v1478
        %v2067 = vtanh.pop %v1480
        %v2068 = vtanh.pop %v1567
        %v2069 = vtanh.pop %v1569
        %v2070 = vtanh.pop %v1656
        %v2071 = vtanh.pop %v1658
        %v2072 = vtanh.pop %v1745
        %v2073 = vtanh.pop %v1747
        %v2074 = vtanh.pop %v1834
        %v2075 = vtanh.pop %v1836
        %v2076 = vtanh.pop %v1923
        %v2077 = vtanh.pop %v1925
        %v2078 = vtanh.pop %v2012
        %v2079 = vtanh.pop %v2014
        %v2080 = vld [vmem:[#allocation3] sm:$0xff]
        %v2081 = vld [vmem:[#allocation3 + $0x8] sm:$0xff]
        %v2082 = vld [vmem:[#allocation3 + $0x10] sm:$0xff]
        %v2083 = vld [vmem:[#allocation3 + $0x18] sm:$0xff]
        %v2084 = vld [vmem:[%s6] sm:$0xff]
        %v2085 = vld [vmem:[%s6 + $0x8] sm:$0xff]
        %v2086 = vld [vmem:[%s6 + $0x10] sm:$0xff]
        %v2087 = vld [vmem:[%s6 + $0x18] sm:$0xff]
        %2089 = vset.pattern.permute.xlu0 0
        %2090 = vperm.xlu0 %2089, %v2084
        %v2091 = vpop.permute.xlu0 %2090
        %2094 = vset.pattern.permute.xlu0 0
        %2095 = vperm.xlu0 %2094, %v2085
        %v2096 = vpop.permute.xlu0 %2095
        %2099 = vset.pattern.permute.xlu0 0
        %2100 = vperm.xlu0 %2099, %v2086
        %v2101 = vpop.permute.xlu0 %2100
        %2104 = vset.pattern.permute.xlu0 0
        %2105 = vperm.xlu0 %2104, %v2087
        %v2106 = vpop.permute.xlu0 %2105
        %v2109 = vsel %vm1291, %v2080, 0
        %v2112 = vsel %vm1291, %v2081, 0
        %v2115 = vsel %vm1291, %v2082, 0
        %v2118 = vsel %vm1291, %v2083, 0
        %2120 = vmatprep.subr.mxu0 %v2017
        %2121 = vmatpush1.msra.mxu0 %v2016
        %2122 = vmatprep.subr.mxu0 %v2033
        %2123 = vmatpush1.msra.mxu0 %v2032
        %2124 = vmatprep.subr.mxu0 %v2049
        %2125 = vmatpush1.msra.mxu0 %v2048
        %2126 = vmatprep.subr.mxu0 %v2065
        %2127 = vmatpush1.msra.mxu0 %v2064
        %2128 = vmatprep.subr.mxu0 0.0
        %2129 = vmatpush1.msra.mxu0 0.0
        %2130 = vmatprep.subr.mxu0 0.0
        %2131 = vmatpush1.msra.mxu0 0.0
        %2132 = vmatprep.subr.mxu0 0.0
        %2133 = vmatpush1.msra.mxu0 0.0
        %2134 = vmatprep.subr.mxu0 0.0
        %2135 = vmatpush1.msra.mxu0 0.0
        %2136 = vmatprep.subr.mxu0 0.0
        %2137 = vmatpush1.msra.mxu0 0.0
        %2138 = vmatprep.subr.mxu0 0.0
        %2139 = vmatpush1.msra.mxu0 0.0
        %2140 = vmatprep.subr.mxu0 0.0
        %2141 = vmatpush1.msra.mxu0 0.0
        %2142 = vmatprep.subr.mxu0 0.0
        %2143 = vmatpush1.msra.mxu0 0.0
        %2144 = vmatprep.subr.mxu0 0.0
        %2145 = vmatpush1.msra.mxu0 0.0
        %2146 = vmatprep.subr.mxu0 0.0
        %2147 = vmatpush1.msra.mxu0 0.0
        %2148 = vmatprep.subr.mxu0 0.0
        %2149 = vmatpush1.msra.mxu0 0.0
        %2150 = vmatprep.subr.mxu0 0.0
        %2151 = vmatpush1.msra.mxu0 0.0
        %2152 = vmatprep.subr.mxu0 0.0
        %2153 = vmatpush1.msra.mxu0 0.0
        %2154 = vmatprep.subr.mxu0 0.0
        %2155 = vmatpush1.msra.mxu0 0.0
        %2156 = vmatprep.subr.mxu0 0.0
        %2157 = vmatpush1.msra.mxu0 0.0
        %2158 = vmatprep.subr.mxu0 0.0
        %2159 = vmatpush1.msra.mxu0 0.0
        %2160 = vmatprep.subr.mxu0 0.0
        %2161 = vmatpush1.msra.mxu0 0.0
        %2162 = vmatprep.subr.mxu0 0.0
        %2163 = vmatpush1.msra.mxu0 0.0
        %2164 = vmatprep.subr.mxu0 0.0
        %2165 = vmatpush1.msra.mxu0 0.0
        %2166 = vmatprep.subr.mxu0 0.0
        %2167 = vmatpush1.msra.mxu0 0.0
        %2168 = vmatprep.subr.mxu0 0.0
        %2169 = vmatpush1.msra.mxu0 0.0
        %2170 = vmatprep.subr.mxu0 0.0
        %2171 = vmatpush1.msra.mxu0 0.0
        %2172 = vmatprep.subr.mxu0 0.0
        %2173 = vmatpush1.msra.mxu0 0.0
        %2174 = vmatprep.subr.mxu0 0.0
        %2175 = vmatpush1.msra.mxu0 0.0
        %2176 = vmatprep.subr.mxu0 0.0
        %2177 = vmatpush1.msra.mxu0 0.0
        %2178 = vmatprep.subr.mxu0 0.0
        %2179 = vmatpush1.msra.mxu0 0.0
        %2180 = vmatprep.subr.mxu0 0.0
        %2181 = vmatpush1.msra.mxu0 0.0
        %2182 = vmatprep.subr.mxu0 0.0
        %2183 = vmatpush1.msra.mxu0 0.0
        %2184 = vmatprep.mubr.f32.mxu0 0.0
        %2185 = vmatmul.mubr.f32.gmra.mrb[0].mxu0 %v2109
        %v2186 = vpop.f32.mrb[0].mxu0
        %v2187 = vadd.f32 %v2091, %v2186
        %v2188 = vpop.f32.mrb[0].mxu0
        %v2189 = vadd.f32 %v2091, %v2188
        %2190 = vmatprep.mubr.f32.mxu0 0.0
        %2191 = vmatmul.mubr.f32.gmra.mrb[0].mxu0 %v2112
        %v2192 = vpop.f32.mrb[0].mxu0
        %v2193 = vadd.f32 %v2096, %v2192
        %v2194 = vpop.f32.mrb[0].mxu0
        %v2195 = vadd.f32 %v2096, %v2194
        %2196 = vmatprep.mubr.f32.mxu0 0.0
        %2197 = vmatmul.mubr.f32.gmra.mrb[0].mxu0 %v2115
        %v2198 = vpop.f32.mrb[0].mxu0
        %v2199 = vadd.f32 %v2101, %v2198
        %v2200 = vpop.f32.mrb[0].mxu0
        %v2201 = vadd.f32 %v2101, %v2200
        %2202 = vmatprep.mubr.f32.mxu0 0.0
        %2203 = vmatmul.mubr.f32.gmra.mrb[0].mxu0 %v2118
        %v2204 = vpop.f32.mrb[0].mxu0
        %v2205 = vadd.f32 %v2106, %v2204
        %v2206 = vpop.f32.mrb[0].mxu0
        %v2207 = vadd.f32 %v2106, %v2206
        %2208 = vdwg.mxu0
        %2209 = vmatprep.subr.mxu0 %v2019
        %2210 = vmatpush1.msra.mxu0 %v2018
        %2211 = vmatprep.subr.mxu0 %v2035
        %2212 = vmatpush1.msra.mxu0 %v2034
        %2213 = vmatprep.subr.mxu0 %v2051
        %2214 = vmatpush1.msra.mxu0 %v2050
        %2215 = vmatprep.subr.mxu0 %v2067
        %2216 = vmatpush1.msra.mxu0 %v2066
        %2217 = vmatprep.subr.mxu0 0.0
        %2218 = vmatpush1.msra.mxu0 0.0
        %2219 = vmatprep.subr.mxu0 0.0
        %2220 = vmatpush1.msra.mxu0 0.0
        %2221 = vmatprep.subr.mxu0 0.0
        %2222 = vmatpush1.msra.mxu0 0.0
        %2223 = vmatprep.subr.mxu0 0.0
        %2224 = vmatpush1.msra.mxu0 0.0
        %2225 = vmatprep.subr.mxu0 0.0
        %2226 = vmatpush1.msra.mxu0 0.0
        %2227 = vmatprep.subr.mxu0 0.0
        %2228 = vmatpush1.msra.mxu0 0.0
        %2229 = vmatprep.subr.mxu0 0.0
        %2230 = vmatpush1.msra.mxu0 0.0
        %2231 = vmatprep.subr.mxu0 0.0
        %2232 = vmatpush1.msra.mxu0 0.0
        %2233 = vmatprep.subr.mxu0 0.0
        %2234 = vmatpush1.msra.mxu0 0.0
        %2235 = vmatprep.subr.mxu0 0.0
        %2236 = vmatpush1.msra.mxu0 0.0
        %2237 = vmatprep.subr.mxu0 0.0
        %2238 = vmatpush1.msra.mxu0 0.0
        %2239 = vmatprep.subr.mxu0 0.0
        %2240 = vmatpush1.msra.mxu0 0.0
        %2241 = vmatprep.subr.mxu0 0.0
        %2242 = vmatpush1.msra.mxu0 0.0
        %2243 = vmatprep.subr.mxu0 0.0
        %2244 = vmatpush1.msra.mxu0 0.0
        %2245 = vmatprep.subr.mxu0 0.0
        %2246 = vmatpush1.msra.mxu0 0.0
        %2247 = vmatprep.subr.mxu0 0.0
        %2248 = vmatpush1.msra.mxu0 0.0
        %2249 = vmatprep.subr.mxu0 0.0
        %2250 = vmatpush1.msra.mxu0 0.0
        %2251 = vmatprep.subr.mxu0 0.0
        %2252 = vmatpush1.msra.mxu0 0.0
        %2253 = vmatprep.subr.mxu0 0.0
        %2254 = vmatpush1.msra.mxu0 0.0
        %2255 = vmatprep.subr.mxu0 0.0
        %2256 = vmatpush1.msra.mxu0 0.0
        %2257 = vmatprep.subr.mxu0 0.0
        %2258 = vmatpush1.msra.mxu0 0.0
        %2259 = vmatprep.subr.mxu0 0.0
        %2260 = vmatpush1.msra.mxu0 0.0
        %2261 = vmatprep.subr.mxu0 0.0
        %2262 = vmatpush1.msra.mxu0 0.0
        %2263 = vmatprep.subr.mxu0 0.0
        %2264 = vmatpush1.msra.mxu0 0.0
        %2265 = vmatprep.subr.mxu0 0.0
        %2266 = vmatpush1.msra.mxu0 0.0
        %2267 = vmatprep.subr.mxu0 0.0
        %2268 = vmatpush1.msra.mxu0 0.0
        %2269 = vmatprep.subr.mxu0 0.0
        %2270 = vmatpush1.msra.mxu0 0.0
        %2271 = vmatprep.subr.mxu0 0.0
        %2272 = vmatpush1.msra.mxu0 0.0
        %2273 = vmatprep.mubr.f32.mxu0 0.0
        %2274 = vmatmul.mubr.f32.gmra.mrb[0].mxu0 %v2109
        %v2275 = vpop.f32.mrb[0].mxu0
        %v2276 = vadd.f32 %v2091, %v2275
        %v2277 = vpop.f32.mrb[0].mxu0
        %v2278 = vadd.f32 %v2091, %v2277
        %2279 = vmatprep.mubr.f32.mxu0 0.0
        %2280 = vmatmul.mubr.f32.gmra.mrb[0].mxu0 %v2112
        %v2281 = vpop.f32.mrb[0].mxu0
        %v2282 = vadd.f32 %v2096, %v2281
        %v2283 = vpop.f32.mrb[0].mxu0
        %v2284 = vadd.f32 %v2096, %v2283
        %2285 = vmatprep.mubr.f32.mxu0 0.0
        %2286 = vmatmul.mubr.f32.gmra.mrb[0].mxu0 %v2115
        %v2287 = vpop.f32.mrb[0].mxu0
        %v2288 = vadd.f32 %v2101, %v2287
        %v2289 = vpop.f32.mrb[0].mxu0
        %v2290 = vadd.f32 %v2101, %v2289
        %2291 = vmatprep.mubr.f32.mxu0 0.0
        %2292 = vmatmul.mubr.f32.gmra.mrb[0].mxu0 %v2118
        %v2293 = vpop.f32.mrb[0].mxu0
        %v2294 = vadd.f32 %v2106, %v2293
        %v2295 = vpop.f32.mrb[0].mxu0
        %v2296 = vadd.f32 %v2106, %v2295
        %2297 = vdwg.mxu0
        %2298 = vmatprep.subr.mxu0 %v2021
        %2299 = vmatpush1.msra.mxu0 %v2020
        %2300 = vmatprep.subr.mxu0 %v2037
        %2301 = vmatpush1.msra.mxu0 %v2036
        %2302 = vmatprep.subr.mxu0 %v2053
        %2303 = vmatpush1.msra.mxu0 %v2052
        %2304 = vmatprep.subr.mxu0 %v2069
        %2305 = vmatpush1.msra.mxu0 %v2068
        %2306 = vmatprep.subr.mxu0 0.0
        %2307 = vmatpush1.msra.mxu0 0.0
        %2308 = vmatprep.subr.mxu0 0.0
        %2309 = vmatpush1.msra.mxu0 0.0
        %2310 = vmatprep.subr.mxu0 0.0
        %2311 = vmatpush1.msra.mxu0 0.0
        %2312 = vmatprep.subr.mxu0 0.0
        %2313 = vmatpush1.msra.mxu0 0.0
        %2314 = vmatprep.subr.mxu0 0.0
        %2315 = vmatpush1.msra.mxu0 0.0
        %2316 = vmatprep.subr.mxu0 0.0
        %2317 = vmatpush1.msra.mxu0 0.0
        %2318 = vmatprep.subr.mxu0 0.0
        %2319 = vmatpush1.msra.mxu0 0.0
        %2320 = vmatprep.subr.mxu0 0.0
        %2321 = vmatpush1.msra.mxu0 0.0
        %2322 = vmatprep.subr.mxu0 0.0
        %2323 = vmatpush1.msra.mxu0 0.0
        %2324 = vmatprep.subr.mxu0 0.0
        %2325 = vmatpush1.msra.mxu0 0.0
        %2326 = vmatprep.subr.mxu0 0.0
        %2327 = vmatpush1.msra.mxu0 0.0
        %2328 = vmatprep.subr.mxu0 0.0
        %2329 = vmatpush1.msra.mxu0 0.0
        %2330 = vmatprep.subr.mxu0 0.0
        %2331 = vmatpush1.msra.mxu0 0.0
        %2332 = vmatprep.subr.mxu0 0.0
        %2333 = vmatpush1.msra.mxu0 0.0
        %2334 = vmatprep.subr.mxu0 0.0
        %2335 = vmatpush1.msra.mxu0 0.0
        %2336 = vmatprep.subr.mxu0 0.0
        %2337 = vmatpush1.msra.mxu0 0.0
        %2338 = vmatprep.subr.mxu0 0.0
        %2339 = vmatpush1.msra.mxu0 0.0
        %2340 = vmatprep.subr.mxu0 0.0
        %2341 = vmatpush1.msra.mxu0 0.0
        %2342 = vmatprep.subr.mxu0 0.0
        %2343 = vmatpush1.msra.mxu0 0.0
        %2344 = vmatprep.subr.mxu0 0.0
        %2345 = vmatpush1.msra.mxu0 0.0
        %2346 = vmatprep.subr.mxu0 0.0
        %2347 = vmatpush1.msra.mxu0 0.0
        %2348 = vmatprep.subr.mxu0 0.0
        %2349 = vmatpush1.msra.mxu0 0.0
        %2350 = vmatprep.subr.mxu0 0.0
        %2351 = vmatpush1.msra.mxu0 0.0
        %2352 = vmatprep.subr.mxu0 0.0
        %2353 = vmatpush1.msra.mxu0 0.0
        %2354 = vmatprep.subr.mxu0 0.0
        %2355 = vmatpush1.msra.mxu0 0.0
        %2356 = vmatprep.subr.mxu0 0.0
        %2357 = vmatpush1.msra.mxu0 0.0
        %2358 = vmatprep.subr.mxu0 0.0
        %2359 = vmatpush1.msra.mxu0 0.0
        %2360 = vmatprep.subr.mxu0 0.0
        %2361 = vmatpush1.msra.mxu0 0.0
        %2362 = vmatprep.mubr.f32.mxu0 0.0
        %2363 = vmatmul.mubr.f32.gmra.mrb[0].mxu0 %v2109
        %v2364 = vpop.f32.mrb[0].mxu0
        %v2365 = vadd.f32 %v2091, %v2364
        %v2366 = vpop.f32.mrb[0].mxu0
        %v2367 = vadd.f32 %v2091, %v2366
        %2368 = vmatprep.mubr.f32.mxu0 0.0
        %2369 = vmatmul.mubr.f32.gmra.mrb[0].mxu0 %v2112
        %v2370 = vpop.f32.mrb[0].mxu0
        %v2371 = vadd.f32 %v2096, %v2370
        %v2372 = vpop.f32.mrb[0].mxu0
        %v2373 = vadd.f32 %v2096, %v2372
        %2374 = vmatprep.mubr.f32.mxu0 0.0
        %2375 = vmatmul.mubr.f32.gmra.mrb[0].mxu0 %v2115
        %v2376 = vpop.f32.mrb[0].mxu0
        %v2377 = vadd.f32 %v2101, %v2376
        %v2378 = vpop.f32.mrb[0].mxu0
        %v2379 = vadd.f32 %v2101, %v2378
        %2380 = vmatprep.mubr.f32.mxu0 0.0
        %2381 = vmatmul.mubr.f32.gmra.mrb[0].mxu0 %v2118
        %v2382 = vpop.f32.mrb[0].mxu0
        %v2383 = vadd.f32 %v2106, %v2382
        %v2384 = vpop.f32.mrb[0].mxu0
        %v2385 = vadd.f32 %v2106, %v2384
        %2386 = vdwg.mxu0
        %2387 = vmatprep.subr.mxu0 %v2023
        %2388 = vmatpush1.msra.mxu0 %v2022
        %2389 = vmatprep.subr.mxu0 %v2039
        %2390 = vmatpush1.msra.mxu0 %v2038
        %2391 = vmatprep.subr.mxu0 %v2055
        %2392 = vmatpush1.msra.mxu0 %v2054
        %2393 = vmatprep.subr.mxu0 %v2071
        %2394 = vmatpush1.msra.mxu0 %v2070
        %2395 = vmatprep.subr.mxu0 0.0
        %2396 = vmatpush1.msra.mxu0 0.0
        %2397 = vmatprep.subr.mxu0 0.0
        %2398 = vmatpush1.msra.mxu0 0.0
        %2399 = vmatprep.subr.mxu0 0.0
        %2400 = vmatpush1.msra.mxu0 0.0
        %2401 = vmatprep.subr.mxu0 0.0
        %2402 = vmatpush1.msra.mxu0 0.0
        %2403 = vmatprep.subr.mxu0 0.0
        %2404 = vmatpush1.msra.mxu0 0.0
        %2405 = vmatprep.subr.mxu0 0.0
        %2406 = vmatpush1.msra.mxu0 0.0
        %2407 = vmatprep.subr.mxu0 0.0
        %2408 = vmatpush1.msra.mxu0 0.0
        %2409 = vmatprep.subr.mxu0 0.0
        %2410 = vmatpush1.msra.mxu0 0.0
        %2411 = vmatprep.subr.mxu0 0.0
        %2412 = vmatpush1.msra.mxu0 0.0
        %2413 = vmatprep.subr.mxu0 0.0
        %2414 = vmatpush1.msra.mxu0 0.0
        %2415 = vmatprep.subr.mxu0 0.0
        %2416 = vmatpush1.msra.mxu0 0.0
        %2417 = vmatprep.subr.mxu0 0.0
        %2418 = vmatpush1.msra.mxu0 0.0
        %2419 = vmatprep.subr.mxu0 0.0
        %2420 = vmatpush1.msra.mxu0 0.0
        %2421 = vmatprep.subr.mxu0 0.0
        %2422 = vmatpush1.msra.mxu0 0.0
        %2423 = vmatprep.subr.mxu0 0.0
        %2424 = vmatpush1.msra.mxu0 0.0
        %2425 = vmatprep.subr.mxu0 0.0
        %2426 = vmatpush1.msra.mxu0 0.0
        %2427 = vmatprep.subr.mxu0 0.0
        %2428 = vmatpush1.msra.mxu0 0.0
        %2429 = vmatprep.subr.mxu0 0.0
        %2430 = vmatpush1.msra.mxu0 0.0
        %2431 = vmatprep.subr.mxu0 0.0
        %2432 = vmatpush1.msra.mxu0 0.0
        %2433 = vmatprep.subr.mxu0 0.0
        %2434 = vmatpush1.msra.mxu0 0.0
        %2435 = vmatprep.subr.mxu0 0.0
        %2436 = vmatpush1.msra.mxu0 0.0
        %2437 = vmatprep.subr.mxu0 0.0
        %2438 = vmatpush1.msra.mxu0 0.0
        %2439 = vmatprep.subr.mxu0 0.0
        %2440 = vmatpush1.msra.mxu0 0.0
        %2441 = vmatprep.subr.mxu0 0.0
        %2442 = vmatpush1.msra.mxu0 0.0
        %2443 = vmatprep.subr.mxu0 0.0
        %2444 = vmatpush1.msra.mxu0 0.0
        %2445 = vmatprep.subr.mxu0 0.0
        %2446 = vmatpush1.msra.mxu0 0.0
        %2447 = vmatprep.subr.mxu0 0.0
        %2448 = vmatpush1.msra.mxu0 0.0
        %2449 = vmatprep.subr.mxu0 0.0
        %2450 = vmatpush1.msra.mxu0 0.0
        %2451 = vmatprep.mubr.f32.mxu0 0.0
        %2452 = vmatmul.mubr.f32.gmra.mrb[0].mxu0 %v2109
        %v2453 = vpop.f32.mrb[0].mxu0
        %v2454 = vadd.f32 %v2091, %v2453
        %v2455 = vpop.f32.mrb[0].mxu0
        %v2456 = vadd.f32 %v2091, %v2455
        %2457 = vmatprep.mubr.f32.mxu0 0.0
        %2458 = vmatmul.mubr.f32.gmra.mrb[0].mxu0 %v2112
        %v2459 = vpop.f32.mrb[0].mxu0
        %v2460 = vadd.f32 %v2096, %v2459
        %v2461 = vpop.f32.mrb[0].mxu0
        %v2462 = vadd.f32 %v2096, %v2461
        %2463 = vmatprep.mubr.f32.mxu0 0.0
        %2464 = vmatmul.mubr.f32.gmra.mrb[0].mxu0 %v2115
        %v2465 = vpop.f32.mrb[0].mxu0
        %v2466 = vadd.f32 %v2101, %v2465
        %v2467 = vpop.f32.mrb[0].mxu0
        %v2468 = vadd.f32 %v2101, %v2467
        %2469 = vmatprep.mubr.f32.mxu0 0.0
        %2470 = vmatmul.mubr.f32.gmra.mrb[0].mxu0 %v2118
        %v2471 = vpop.f32.mrb[0].mxu0
        %v2472 = vadd.f32 %v2106, %v2471
        %v2473 = vpop.f32.mrb[0].mxu0
        %v2474 = vadd.f32 %v2106, %v2473
        %2475 = vdwg.mxu0
        %2476 = vmatprep.subr.mxu0 %v2025
        %2477 = vmatpush1.msra.mxu0 %v2024
        %2478 = vmatprep.subr.mxu0 %v2041
        %2479 = vmatpush1.msra.mxu0 %v2040
        %2480 = vmatprep.subr.mxu0 %v2057
        %2481 = vmatpush1.msra.mxu0 %v2056
        %2482 = vmatprep.subr.mxu0 %v2073
        %2483 = vmatpush1.msra.mxu0 %v2072
        %2484 = vmatprep.subr.mxu0 0.0
        %2485 = vmatpush1.msra.mxu0 0.0
        %2486 = vmatprep.subr.mxu0 0.0
        %2487 = vmatpush1.msra.mxu0 0.0
        %2488 = vmatprep.subr.mxu0 0.0
        %2489 = vmatpush1.msra.mxu0 0.0
        %2490 = vmatprep.subr.mxu0 0.0
        %2491 = vmatpush1.msra.mxu0 0.0
        %2492 = vmatprep.subr.mxu0 0.0
        %2493 = vmatpush1.msra.mxu0 0.0
        %2494 = vmatprep.subr.mxu0 0.0
        %2495 = vmatpush1.msra.mxu0 0.0
        %2496 = vmatprep.subr.mxu0 0.0
        %2497 = vmatpush1.msra.mxu0 0.0
        %2498 = vmatprep.subr.mxu0 0.0
        %2499 = vmatpush1.msra.mxu0 0.0
        %2500 = vmatprep.subr.mxu0 0.0
        %2501 = vmatpush1.msra.mxu0 0.0
        %2502 = vmatprep.subr.mxu0 0.0
        %2503 = vmatpush1.msra.mxu0 0.0
        %2504 = vmatprep.subr.mxu0 0.0
        %2505 = vmatpush1.msra.mxu0 0.0
        %2506 = vmatprep.subr.mxu0 0.0
        %2507 = vmatpush1.msra.mxu0 0.0
        %2508 = vmatprep.subr.mxu0 0.0
        %2509 = vmatpush1.msra.mxu0 0.0
        %2510 = vmatprep.subr.mxu0 0.0
        %2511 = vmatpush1.msra.mxu0 0.0
        %2512 = vmatprep.subr.mxu0 0.0
        %2513 = vmatpush1.msra.mxu0 0.0
        %2514 = vmatprep.subr.mxu0 0.0
        %2515 = vmatpush1.msra.mxu0 0.0
        %2516 = vmatprep.subr.mxu0 0.0
        %2517 = vmatpush1.msra.mxu0 0.0
        %2518 = vmatprep.subr.mxu0 0.0
        %2519 = vmatpush1.msra.mxu0 0.0
        %2520 = vmatprep.subr.mxu0 0.0
        %2521 = vmatpush1.msra.mxu0 0.0
        %2522 = vmatprep.subr.mxu0 0.0
        %2523 = vmatpush1.msra.mxu0 0.0
        %2524 = vmatprep.subr.mxu0 0.0
        %2525 = vmatpush1.msra.mxu0 0.0
        %2526 = vmatprep.subr.mxu0 0.0
        %2527 = vmatpush1.msra.mxu0 0.0
        %2528 = vmatprep.subr.mxu0 0.0
        %2529 = vmatpush1.msra.mxu0 0.0
        %2530 = vmatprep.subr.mxu0 0.0
        %2531 = vmatpush1.msra.mxu0 0.0
        %2532 = vmatprep.subr.mxu0 0.0
        %2533 = vmatpush1.msra.mxu0 0.0
        %2534 = vmatprep.subr.mxu0 0.0
        %2535 = vmatpush1.msra.mxu0 0.0
        %2536 = vmatprep.subr.mxu0 0.0
        %2537 = vmatpush1.msra.mxu0 0.0
        %2538 = vmatprep.subr.mxu0 0.0
        %2539 = vmatpush1.msra.mxu0 0.0
        %2540 = vmatprep.mubr.f32.mxu0 0.0
        %2541 = vmatmul.mubr.f32.gmra.mrb[0].mxu0 %v2109
        %v2542 = vpop.f32.mrb[0].mxu0
        %v2543 = vadd.f32 %v2091, %v2542
        %v2544 = vpop.f32.mrb[0].mxu0
        %v2545 = vadd.f32 %v2091, %v2544
        %2546 = vmatprep.mubr.f32.mxu0 0.0
        %2547 = vmatmul.mubr.f32.gmra.mrb[0].mxu0 %v2112
        %v2548 = vpop.f32.mrb[0].mxu0
        %v2549 = vadd.f32 %v2096, %v2548
        %v2550 = vpop.f32.mrb[0].mxu0
        %v2551 = vadd.f32 %v2096, %v2550
        %2552 = vmatprep.mubr.f32.mxu0 0.0
        %2553 = vmatmul.mubr.f32.gmra.mrb[0].mxu0 %v2115
        %v2554 = vpop.f32.mrb[0].mxu0
        %v2555 = vadd.f32 %v2101, %v2554
        %v2556 = vpop.f32.mrb[0].mxu0
        %v2557 = vadd.f32 %v2101, %v2556
        %2558 = vmatprep.mubr.f32.mxu0 0.0
        %2559 = vmatmul.mubr.f32.gmra.mrb[0].mxu0 %v2118
        %v2560 = vpop.f32.mrb[0].mxu0
        %v2561 = vadd.f32 %v2106, %v2560
        %v2562 = vpop.f32.mrb[0].mxu0
        %v2563 = vadd.f32 %v2106, %v2562
        %2564 = vdwg.mxu0
        %2565 = vmatprep.subr.mxu0 %v2027
        %2566 = vmatpush1.msra.mxu0 %v2026
        %2567 = vmatprep.subr.mxu0 %v2043
        %2568 = vmatpush1.msra.mxu0 %v2042
        %2569 = vmatprep.subr.mxu0 %v2059
        %2570 = vmatpush1.msra.mxu0 %v2058
        %2571 = vmatprep.subr.mxu0 %v2075
        %2572 = vmatpush1.msra.mxu0 %v2074
        %2573 = vmatprep.subr.mxu0 0.0
        %2574 = vmatpush1.msra.mxu0 0.0
        %2575 = vmatprep.subr.mxu0 0.0
        %2576 = vmatpush1.msra.mxu0 0.0
        %2577 = vmatprep.subr.mxu0 0.0
        %2578 = vmatpush1.msra.mxu0 0.0
        %2579 = vmatprep.subr.mxu0 0.0
        %2580 = vmatpush1.msra.mxu0 0.0
        %2581 = vmatprep.subr.mxu0 0.0
        %2582 = vmatpush1.msra.mxu0 0.0
        %2583 = vmatprep.subr.mxu0 0.0
        %2584 = vmatpush1.msra.mxu0 0.0
        %2585 = vmatprep.subr.mxu0 0.0
        %2586 = vmatpush1.msra.mxu0 0.0
        %2587 = vmatprep.subr.mxu0 0.0
        %2588 = vmatpush1.msra.mxu0 0.0
        %2589 = vmatprep.subr.mxu0 0.0
        %2590 = vmatpush1.msra.mxu0 0.0
        %2591 = vmatprep.subr.mxu0 0.0
        %2592 = vmatpush1.msra.mxu0 0.0
        %2593 = vmatprep.subr.mxu0 0.0
        %2594 = vmatpush1.msra.mxu0 0.0
        %2595 = vmatprep.subr.mxu0 0.0
        %2596 = vmatpush1.msra.mxu0 0.0
        %2597 = vmatprep.subr.mxu0 0.0
        %2598 = vmatpush1.msra.mxu0 0.0
        %2599 = vmatprep.subr.mxu0 0.0
        %2600 = vmatpush1.msra.mxu0 0.0
        %2601 = vmatprep.subr.mxu0 0.0
        %2602 = vmatpush1.msra.mxu0 0.0
        %2603 = vmatprep.subr.mxu0 0.0
        %2604 = vmatpush1.msra.mxu0 0.0
        %2605 = vmatprep.subr.mxu0 0.0
        %2606 = vmatpush1.msra.mxu0 0.0
        %2607 = vmatprep.subr.mxu0 0.0
        %2608 = vmatpush1.msra.mxu0 0.0
        %2609 = vmatprep.subr.mxu0 0.0
        %2610 = vmatpush1.msra.mxu0 0.0
        %2611 = vmatprep.subr.mxu0 0.0
        %2612 = vmatpush1.msra.mxu0 0.0
        %2613 = vmatprep.subr.mxu0 0.0
        %2614 = vmatpush1.msra.mxu0 0.0
        %2615 = vmatprep.subr.mxu0 0.0
        %2616 = vmatpush1.msra.mxu0 0.0
        %2617 = vmatprep.subr.mxu0 0.0
        %2618 = vmatpush1.msra.mxu0 0.0
        %2619 = vmatprep.subr.mxu0 0.0
        %2620 = vmatpush1.msra.mxu0 0.0
        %2621 = vmatprep.subr.mxu0 0.0
        %2622 = vmatpush1.msra.mxu0 0.0
        %2623 = vmatprep.subr.mxu0 0.0
        %2624 = vmatpush1.msra.mxu0 0.0
        %2625 = vmatprep.subr.mxu0 0.0
        %2626 = vmatpush1.msra.mxu0 0.0
        %2627 = vmatprep.subr.mxu0 0.0
        %2628 = vmatpush1.msra.mxu0 0.0
        %2629 = vmatprep.mubr.f32.mxu0 0.0
        %2630 = vmatmul.mubr.f32.gmra.mrb[0].mxu0 %v2109
        %v2631 = vpop.f32.mrb[0].mxu0
        %v2632 = vadd.f32 %v2091, %v2631
        %v2633 = vpop.f32.mrb[0].mxu0
        %v2634 = vadd.f32 %v2091, %v2633
        %2635 = vmatprep.mubr.f32.mxu0 0.0
        %2636 = vmatmul.mubr.f32.gmra.mrb[0].mxu0 %v2112
        %v2637 = vpop.f32.mrb[0].mxu0
        %v2638 = vadd.f32 %v2096, %v2637
        %v2639 = vpop.f32.mrb[0].mxu0
        %v2640 = vadd.f32 %v2096, %v2639
        %2641 = vmatprep.mubr.f32.mxu0 0.0
        %2642 = vmatmul.mubr.f32.gmra.mrb[0].mxu0 %v2115
        %v2643 = vpop.f32.mrb[0].mxu0
        %v2644 = vadd.f32 %v2101, %v2643
        %v2645 = vpop.f32.mrb[0].mxu0
        %v2646 = vadd.f32 %v2101, %v2645
        %2647 = vmatprep.mubr.f32.mxu0 0.0
        %2648 = vmatmul.mubr.f32.gmra.mrb[0].mxu0 %v2118
        %v2649 = vpop.f32.mrb[0].mxu0
        %v2650 = vadd.f32 %v2106, %v2649
        %v2651 = vpop.f32.mrb[0].mxu0
        %v2652 = vadd.f32 %v2106, %v2651
        %2653 = vdwg.mxu0
        %2654 = vmatprep.subr.mxu0 %v2029
        %2655 = vmatpush1.msra.mxu0 %v2028
        %2656 = vmatprep.subr.mxu0 %v2045
        %2657 = vmatpush1.msra.mxu0 %v2044
        %2658 = vmatprep.subr.mxu0 %v2061
        %2659 = vmatpush1.msra.mxu0 %v2060
        %2660 = vmatprep.subr.mxu0 %v2077
        %2661 = vmatpush1.msra.mxu0 %v2076
        %2662 = vmatprep.subr.mxu0 0.0
        %2663 = vmatpush1.msra.mxu0 0.0
        %2664 = vmatprep.subr.mxu0 0.0
        %2665 = vmatpush1.msra.mxu0 0.0
        %2666 = vmatprep.subr.mxu0 0.0
        %2667 = vmatpush1.msra.mxu0 0.0
        %2668 = vmatprep.subr.mxu0 0.0
        %2669 = vmatpush1.msra.mxu0 0.0
        %2670 = vmatprep.subr.mxu0 0.0
        %2671 = vmatpush1.msra.mxu0 0.0
        %2672 = vmatprep.subr.mxu0 0.0
        %2673 = vmatpush1.msra.mxu0 0.0
        %2674 = vmatprep.subr.mxu0 0.0
        %2675 = vmatpush1.msra.mxu0 0.0
        %2676 = vmatprep.subr.mxu0 0.0
        %2677 = vmatpush1.msra.mxu0 0.0
        %2678 = vmatprep.subr.mxu0 0.0
        %2679 = vmatpush1.msra.mxu0 0.0
        %2680 = vmatprep.subr.mxu0 0.0
        %2681 = vmatpush1.msra.mxu0 0.0
        %2682 = vmatprep.subr.mxu0 0.0
        %2683 = vmatpush1.msra.mxu0 0.0
        %2684 = vmatprep.subr.mxu0 0.0
        %2685 = vmatpush1.msra.mxu0 0.0
        %2686 = vmatprep.subr.mxu0 0.0
        %2687 = vmatpush1.msra.mxu0 0.0
        %2688 = vmatprep.subr.mxu0 0.0
        %2689 = vmatpush1.msra.mxu0 0.0
        %2690 = vmatprep.subr.mxu0 0.0
        %2691 = vmatpush1.msra.mxu0 0.0
        %2692 = vmatprep.subr.mxu0 0.0
        %2693 = vmatpush1.msra.mxu0 0.0
        %2694 = vmatprep.subr.mxu0 0.0
        %2695 = vmatpush1.msra.mxu0 0.0
        %2696 = vmatprep.subr.mxu0 0.0
        %2697 = vmatpush1.msra.mxu0 0.0
        %2698 = vmatprep.subr.mxu0 0.0
        %2699 = vmatpush1.msra.mxu0 0.0
        %2700 = vmatprep.subr.mxu0 0.0
        %2701 = vmatpush1.msra.mxu0 0.0
        %2702 = vmatprep.subr.mxu0 0.0
        %2703 = vmatpush1.msra.mxu0 0.0
        %2704 = vmatprep.subr.mxu0 0.0
        %2705 = vmatpush1.msra.mxu0 0.0
        %2706 = vmatprep.subr.mxu0 0.0
        %2707 = vmatpush1.msra.mxu0 0.0
        %2708 = vmatprep.subr.mxu0 0.0
        %2709 = vmatpush1.msra.mxu0 0.0
        %2710 = vmatprep.subr.mxu0 0.0
        %2711 = vmatpush1.msra.mxu0 0.0
        %2712 = vmatprep.subr.mxu0 0.0
        %2713 = vmatpush1.msra.mxu0 0.0
        %2714 = vmatprep.subr.mxu0 0.0
        %2715 = vmatpush1.msra.mxu0 0.0
        %2716 = vmatprep.subr.mxu0 0.0
        %2717 = vmatpush1.msra.mxu0 0.0
        %2718 = vmatprep.mubr.f32.mxu0 0.0
        %2719 = vmatmul.mubr.f32.gmra.mrb[0].mxu0 %v2109
        %v2720 = vpop.f32.mrb[0].mxu0
        %v2721 = vadd.f32 %v2091, %v2720
        %v2722 = vpop.f32.mrb[0].mxu0
        %v2723 = vadd.f32 %v2091, %v2722
        %2724 = vmatprep.mubr.f32.mxu0 0.0
        %2725 = vmatmul.mubr.f32.gmra.mrb[0].mxu0 %v2112
        %v2726 = vpop.f32.mrb[0].mxu0
        %v2727 = vadd.f32 %v2096, %v2726
        %v2728 = vpop.f32.mrb[0].mxu0
        %v2729 = vadd.f32 %v2096, %v2728
        %2730 = vmatprep.mubr.f32.mxu0 0.0
        %2731 = vmatmul.mubr.f32.gmra.mrb[0].mxu0 %v2115
        %v2732 = vpop.f32.mrb[0].mxu0
        %v2733 = vadd.f32 %v2101, %v2732
        %v2734 = vpop.f32.mrb[0].mxu0
        %v2735 = vadd.f32 %v2101, %v2734
        %2736 = vmatprep.mubr.f32.mxu0 0.0
        %2737 = vmatmul.mubr.f32.gmra.mrb[0].mxu0 %v2118
        %v2738 = vpop.f32.mrb[0].mxu0
        %v2739 = vadd.f32 %v2106, %v2738
        %v2740 = vpop.f32.mrb[0].mxu0
        %v2741 = vadd.f32 %v2106, %v2740
        %2742 = vdwg.mxu0
        %2743 = vmatprep.subr.mxu0 %v2031
        %2744 = vmatpush1.msra.mxu0 %v2030
        %2745 = vmatprep.subr.mxu0 %v2047
        %2746 = vmatpush1.msra.mxu0 %v2046
        %2747 = vmatprep.subr.mxu0 %v2063
        %2748 = vmatpush1.msra.mxu0 %v2062
        %2749 = vmatprep.subr.mxu0 %v2079
        %2750 = vmatpush1.msra.mxu0 %v2078
        %2751 = vmatprep.subr.mxu0 0.0
        %2752 = vmatpush1.msra.mxu0 0.0
        %2753 = vmatprep.subr.mxu0 0.0
        %2754 = vmatpush1.msra.mxu0 0.0
        %2755 = vmatprep.subr.mxu0 0.0
        %2756 = vmatpush1.msra.mxu0 0.0
        %2757 = vmatprep.subr.mxu0 0.0
        %2758 = vmatpush1.msra.mxu0 0.0
        %2759 = vmatprep.subr.mxu0 0.0
        %2760 = vmatpush1.msra.mxu0 0.0
        %2761 = vmatprep.subr.mxu0 0.0
        %2762 = vmatpush1.msra.mxu0 0.0
        %2763 = vmatprep.subr.mxu0 0.0
        %2764 = vmatpush1.msra.mxu0 0.0
        %2765 = vmatprep.subr.mxu0 0.0
        %2766 = vmatpush1.msra.mxu0 0.0
        %2767 = vmatprep.subr.mxu0 0.0
        %2768 = vmatpush1.msra.mxu0 0.0
        %2769 = vmatprep.subr.mxu0 0.0
        %2770 = vmatpush1.msra.mxu0 0.0
        %2771 = vmatprep.subr.mxu0 0.0
        %2772 = vmatpush1.msra.mxu0 0.0
        %2773 = vmatprep.subr.mxu0 0.0
        %2774 = vmatpush1.msra.mxu0 0.0
        %2775 = vmatprep.subr.mxu0 0.0
        %2776 = vmatpush1.msra.mxu0 0.0
        %2777 = vmatprep.subr.mxu0 0.0
        %2778 = vmatpush1.msra.mxu0 0.0
        %2779 = vmatprep.subr.mxu0 0.0
        %2780 = vmatpush1.msra.mxu0 0.0
        %2781 = vmatprep.subr.mxu0 0.0
        %2782 = vmatpush1.msra.mxu0 0.0
        %2783 = vmatprep.subr.mxu0 0.0
        %2784 = vmatpush1.msra.mxu0 0.0
        %2785 = vmatprep.subr.mxu0 0.0
        %2786 = vmatpush1.msra.mxu0 0.0
        %2787 = vmatprep.subr.mxu0 0.0
        %2788 = vmatpush1.msra.mxu0 0.0
        %2789 = vmatprep.subr.mxu0 0.0
        %2790 = vmatpush1.msra.mxu0 0.0
        %2791 = vmatprep.subr.mxu0 0.0
        %2792 = vmatpush1.msra.mxu0 0.0
        %2793 = vmatprep.subr.mxu0 0.0
        %2794 = vmatpush1.msra.mxu0 0.0
        %2795 = vmatprep.subr.mxu0 0.0
        %2796 = vmatpush1.msra.mxu0 0.0
        %2797 = vmatprep.subr.mxu0 0.0
        %2798 = vmatpush1.msra.mxu0 0.0
        %2799 = vmatprep.subr.mxu0 0.0
        %2800 = vmatpush1.msra.mxu0 0.0
        %2801 = vmatprep.subr.mxu0 0.0
        %2802 = vmatpush1.msra.mxu0 0.0
        %2803 = vmatprep.subr.mxu0 0.0
        %2804 = vmatpush1.msra.mxu0 0.0
        %2805 = vmatprep.subr.mxu0 0.0
        %2806 = vmatpush1.msra.mxu0 0.0
        %2807 = vmatprep.mubr.f32.mxu0 0.0
        %2808 = vmatmul.mubr.f32.gmra.mrb[0].mxu0 %v2109
        %v2809 = vpop.f32.mrb[0].mxu0
        %v2810 = vadd.f32 %v2091, %v2809
        %v2811 = vpop.f32.mrb[0].mxu0
        %v2812 = vadd.f32 %v2091, %v2811
        %2813 = vmatprep.mubr.f32.mxu0 0.0
        %2814 = vmatmul.mubr.f32.gmra.mrb[0].mxu0 %v2112
        %v2815 = vpop.f32.mrb[0].mxu0
        %v2816 = vadd.f32 %v2096, %v2815
        %v2817 = vpop.f32.mrb[0].mxu0
        %v2818 = vadd.f32 %v2096, %v2817
        %2819 = vmatprep.mubr.f32.mxu0 0.0
        %2820 = vmatmul.mubr.f32.gmra.mrb[0].mxu0 %v2115
        %v2821 = vpop.f32.mrb[0].mxu0
        %v2822 = vadd.f32 %v2101, %v2821
        %v2823 = vpop.f32.mrb[0].mxu0
        %v2824 = vadd.f32 %v2101, %v2823
        %2825 = vmatprep.mubr.f32.mxu0 0.0
        %2826 = vmatmul.mubr.f32.gmra.mrb[0].mxu0 %v2118
        %v2827 = vpop.f32.mrb[0].mxu0
        %v2828 = vadd.f32 %v2106, %v2827
        %v2829 = vpop.f32.mrb[0].mxu0
        %v2830 = vadd.f32 %v2106, %v2829
        %2831 = vdwg.mxu0
        %v2832 = vtanh.pop %v2187
        %v2833 = vtanh.pop %v2189
        %v2834 = vtanh.pop %v2276
        %v2835 = vtanh.pop %v2278
        %v2836 = vtanh.pop %v2365
        %v2837 = vtanh.pop %v2367
        %v2838 = vtanh.pop %v2454
        %v2839 = vtanh.pop %v2456
        %v2840 = vtanh.pop %v2543
        %v2841 = vtanh.pop %v2545
        %v2842 = vtanh.pop %v2632
        %v2843 = vtanh.pop %v2634
        %v2844 = vtanh.pop %v2721
        %v2845 = vtanh.pop %v2723
        %v2846 = vtanh.pop %v2810
        %v2847 = vtanh.pop %v2812
        %v2848 = vtanh.pop %v2193
        %v2849 = vtanh.pop %v2195
        %v2850 = vtanh.pop %v2282
        %v2851 = vtanh.pop %v2284
        %v2852 = vtanh.pop %v2371
        %v2853 = vtanh.pop %v2373
        %v2854 = vtanh.pop %v2460
        %v2855 = vtanh.pop %v2462
        %v2856 = vtanh.pop %v2549
        %v2857 = vtanh.pop %v2551
        %v2858 = vtanh.pop %v2638
        %v2859 = vtanh.pop %v2640
        %v2860 = vtanh.pop %v2727
        %v2861 = vtanh.pop %v2729
        %v2862 = vtanh.pop %v2816
        %v2863 = vtanh.pop %v2818
        %v2864 = vtanh.pop %v2199
        %v2865 = vtanh.pop %v2201
        %v2866 = vtanh.pop %v2288
        %v2867 = vtanh.pop %v2290
        %v2868 = vtanh.pop %v2377
        %v2869 = vtanh.pop %v2379
        %v2870 = vtanh.pop %v2466
        %v2871 = vtanh.pop %v2468
        %v2872 = vtanh.pop %v2555
        %v2873 = vtanh.pop %v2557
        %v2874 = vtanh.pop %v2644
        %v2875 = vtanh.pop %v2646
        %v2876 = vtanh.pop %v2733
        %v2877 = vtanh.pop %v2735
        %v2878 = vtanh.pop %v2822
        %v2879 = vtanh.pop %v2824
        %v2880 = vtanh.pop %v2205
        %v2881 = vtanh.pop %v2207
        %v2882 = vtanh.pop %v2294
        %v2883 = vtanh.pop %v2296
        %v2884 = vtanh.pop %v2383
        %v2885 = vtanh.pop %v2385
        %v2886 = vtanh.pop %v2472
        %v2887 = vtanh.pop %v2474
        %v2888 = vtanh.pop %v2561
        %v2889 = vtanh.pop %v2563
        %v2890 = vtanh.pop %v2650
        %v2891 = vtanh.pop %v2652
        %v2892 = vtanh.pop %v2739
        %v2893 = vtanh.pop %v2741
        %v2894 = vtanh.pop %v2828
        %v2895 = vtanh.pop %v2830
        %v2896 = vadd.f32 %v2832, %v1199
        %v2897 = vadd.f32 %v2833, %v1200
        %v2898 = vadd.f32 %v2834, %v1201
        %v2899 = vadd.f32 %v2835, %v1202
        %v2900 = vadd.f32 %v2836, %v1203
        %v2901 = vadd.f32 %v2837, %v1204
        %v2902 = vadd.f32 %v2838, %v1205
        %v2903 = vadd.f32 %v2839, %v1206
        %v2904 = vadd.f32 %v2840, %v1207
        %v2905 = vadd.f32 %v2841, %v1208
        %v2906 = vadd.f32 %v2842, %v1209
        %v2907 = vadd.f32 %v2843, %v1210
        %v2908 = vadd.f32 %v2844, %v1211
        %v2909 = vadd.f32 %v2845, %v1212
        %v2910 = vadd.f32 %v2846, %v1213
        %v2911 = vadd.f32 %v2847, %v1214
        %v2912 = vadd.f32 %v2848, %v1215
        %v2913 = vadd.f32 %v2849, %v1216
        %v2914 = vadd.f32 %v2850, %v1217
        %v2915 = vadd.f32 %v2851, %v1218
        %v2916 = vadd.f32 %v2852, %v1219
        %v2917 = vadd.f32 %v2853, %v1220
        %v2918 = vadd.f32 %v2854, %v1221
        %v2919 = vadd.f32 %v2855, %v1222
        %v2920 = vadd.f32 %v2856, %v1223
        %v2921 = vadd.f32 %v2857, %v1224
        %v2922 = vadd.f32 %v2858, %v1225
        %v2923 = vadd.f32 %v2859, %v1226
        %v2924 = vadd.f32 %v2860, %v1227
        %v2925 = vadd.f32 %v2861, %v1228
        %v2926 = vadd.f32 %v2862, %v1229
        %v2927 = vadd.f32 %v2863, %v1230
        %v2928 = vadd.f32 %v2864, %v1231
        %v2929 = vadd.f32 %v2865, %v1232
        %v2930 = vadd.f32 %v2866, %v1233
        %v2931 = vadd.f32 %v2867, %v1234
        %v2932 = vadd.f32 %v2868, %v1235
        %v2933 = vadd.f32 %v2869, %v1236
        %v2934 = vadd.f32 %v2870, %v1237
        %v2935 = vadd.f32 %v2871, %v1238
        %v2936 = vadd.f32 %v2872, %v1239
        %v2937 = vadd.f32 %v2873, %v1240
        %v2938 = vadd.f32 %v2874, %v1241
        %v2939 = vadd.f32 %v2875, %v1242
        %v2940 = vadd.f32 %v2876, %v1243
        %v2941 = vadd.f32 %v2877, %v1244
        %v2942 = vadd.f32 %v2878, %v1245
        %v2943 = vadd.f32 %v2879, %v1246
        %v2944 = vadd.f32 %v2880, %v1247
        %v2945 = vadd.f32 %v2881, %v1248
        %v2946 = vadd.f32 %v2882, %v1249
        %v2947 = vadd.f32 %v2883, %v1250
        %v2948 = vadd.f32 %v2884, %v1251
        %v2949 = vadd.f32 %v2885, %v1252
        %v2950 = vadd.f32 %v2886, %v1253
        %v2951 = vadd.f32 %v2887, %v1254
        %v2952 = vadd.f32 %v2888, %v1255
        %v2953 = vadd.f32 %v2889, %v1256
        %v2954 = vadd.f32 %v2890, %v1257
        %v2955 = vadd.f32 %v2891, %v1258
        %v2956 = vadd.f32 %v2892, %v1259
        %v2957 = vadd.f32 %v2893, %v1260
        %v2958 = vadd.f32 %v2894, %v1261
        %v2959 = vadd.f32 %v2895, %v1262
        %s2960 = scalar_lea.vmem %s3, 32
        %v2961 = vld [vmem:[%s2960] sm:$0xff]
        %v2962 = vld [vmem:[%s2960 + $0x8] sm:$0xff]
        %v2963 = vld [vmem:[%s2960 + $0x10] sm:$0xff]
        %v2964 = vld [vmem:[%s2960 + $0x18] sm:$0xff]
        %s2965 = scalar_lea.vmem %s4, 32
        %v2966 = vld [vmem:[%s2965] sm:$0xff]
        %v2967 = vld [vmem:[%s2965 + $0x8] sm:$0xff]
        %v2968 = vld [vmem:[%s2965 + $0x10] sm:$0xff]
        %v2969 = vld [vmem:[%s2965 + $0x18] sm:$0xff]
        %2971 = vset.pattern.permute.xlu0 0
        %2972 = vperm.xlu0 %2971, %v2966
        %v2973 = vpop.permute.xlu0 %2972
        %2976 = vset.pattern.permute.xlu0 0
        %2977 = vperm.xlu0 %2976, %v2967
        %v2978 = vpop.permute.xlu0 %2977
        %2981 = vset.pattern.permute.xlu0 0
        %2982 = vperm.xlu0 %2981, %v2968
        %v2983 = vpop.permute.xlu0 %2982
        %2986 = vset.pattern.permute.xlu0 0
        %2987 = vperm.xlu0 %2986, %v2969
        %v2988 = vpop.permute.xlu0 %2987
        %v2991 = vsel %vm1291, %v2961, 0
        %v2994 = vsel %vm1291, %v2962, 0
        %v2997 = vsel %vm1291, %v2963, 0
        %v3000 = vsel %vm1291, %v2964, 0
        %3002 = vmatprep.subr.mxu0 %v2897
        %3003 = vmatpush1.msra.mxu0 %v2896
        %3004 = vmatprep.subr.mxu0 %v2913
        %3005 = vmatpush1.msra.mxu0 %v2912
        %3006 = vmatprep.subr.mxu0 %v2929
        %3007 = vmatpush1.msra.mxu0 %v2928
        %3008 = vmatprep.subr.mxu0 %v2945
        %3009 = vmatpush1.msra.mxu0 %v2944
        %3010 = vmatprep.subr.mxu0 0.0
        %3011 = vmatpush1.msra.mxu0 0.0
        %3012 = vmatprep.subr.mxu0 0.0
        %3013 = vmatpush1.msra.mxu0 0.0
        %3014 = vmatprep.subr.mxu0 0.0
        %3015 = vmatpush1.msra.mxu0 0.0
        %3016 = vmatprep.subr.mxu0 0.0
        %3017 = vmatpush1.msra.mxu0 0.0
        %3018 = vmatprep.subr.mxu0 0.0
        %3019 = vmatpush1.msra.mxu0 0.0
        %3020 = vmatprep.subr.mxu0 0.0
        %3021 = vmatpush1.msra.mxu0 0.0
        %3022 = vmatprep.subr.mxu0 0.0
        %3023 = vmatpush1.msra.mxu0 0.0
        %3024 = vmatprep.subr.mxu0 0.0
        %3025 = vmatpush1.msra.mxu0 0.0
        %3026 = vmatprep.subr.mxu0 0.0
        %3027 = vmatpush1.msra.mxu0 0.0
        %3028 = vmatprep.subr.mxu0 0.0
        %3029 = vmatpush1.msra.mxu0 0.0
        %3030 = vmatprep.subr.mxu0 0.0
        %3031 = vmatpush1.msra.mxu0 0.0
        %3032 = vmatprep.subr.mxu0 0.0
        %3033 = vmatpush1.msra.mxu0 0.0
        %3034 = vmatprep.subr.mxu0 0.0
        %3035 = vmatpush1.msra.mxu0 0.0
        %3036 = vmatprep.subr.mxu0 0.0
        %3037 = vmatpush1.msra.mxu0 0.0
        %3038 = vmatprep.subr.mxu0 0.0
        %3039 = vmatpush1.msra.mxu0 0.0
        %3040 = vmatprep.subr.mxu0 0.0
        %3041 = vmatpush1.msra.mxu0 0.0
        %3042 = vmatprep.subr.mxu0 0.0
        %3043 = vmatpush1.msra.mxu0 0.0
        %3044 = vmatprep.subr.mxu0 0.0
        %3045 = vmatpush1.msra.mxu0 0.0
        %3046 = vmatprep.subr.mxu0 0.0
        %3047 = vmatpush1.msra.mxu0 0.0
        %3048 = vmatprep.subr.mxu0 0.0
        %3049 = vmatpush1.msra.mxu0 0.0
        %3050 = vmatprep.subr.mxu0 0.0
        %3051 = vmatpush1.msra.mxu0 0.0
        %3052 = vmatprep.subr.mxu0 0.0
        %3053 = vmatpush1.msra.mxu0 0.0
        %3054 = vmatprep.subr.mxu0 0.0
        %3055 = vmatpush1.msra.mxu0 0.0
        %3056 = vmatprep.subr.mxu0 0.0
        %3057 = vmatpush1.msra.mxu0 0.0
        %3058 = vmatprep.subr.mxu0 0.0
        %3059 = vmatpush1.msra.mxu0 0.0
        %3060 = vmatprep.subr.mxu0 0.0
        %3061 = vmatpush1.msra.mxu0 0.0
        %3062 = vmatprep.subr.mxu0 0.0
        %3063 = vmatpush1.msra.mxu0 0.0
        %3064 = vmatprep.subr.mxu0 0.0
        %3065 = vmatpush1.msra.mxu0 0.0
        %3066 = vmatprep.mubr.f32.mxu0 0.0
        %3067 = vmatmul.mubr.f32.gmra.mrb[0].mxu0 %v2991
        %v3068 = vpop.f32.mrb[0].mxu0
        %v3069 = vadd.f32 %v2973, %v3068
        %v3070 = vpop.f32.mrb[0].mxu0
        %v3071 = vadd.f32 %v2973, %v3070
        %3072 = vmatprep.mubr.f32.mxu0 0.0
        %3073 = vmatmul.mubr.f32.gmra.mrb[0].mxu0 %v2994
        %v3074 = vpop.f32.mrb[0].mxu0
        %v3075 = vadd.f32 %v2978, %v3074
        %v3076 = vpop.f32.mrb[0].mxu0
        %v3077 = vadd.f32 %v2978, %v3076
        %3078 = vmatprep.mubr.f32.mxu0 0.0
        %3079 = vmatmul.mubr.f32.gmra.mrb[0].mxu0 %v2997
        %v3080 = vpop.f32.mrb[0].mxu0
        %v3081 = vadd.f32 %v2983, %v3080
        %v3082 = vpop.f32.mrb[0].mxu0
        %v3083 = vadd.f32 %v2983, %v3082
        %3084 = vmatprep.mubr.f32.mxu0 0.0
        %3085 = vmatmul.mubr.f32.gmra.mrb[0].mxu0 %v3000
        %v3086 = vpop.f32.mrb[0].mxu0
        %v3087 = vadd.f32 %v2988, %v3086
        %v3088 = vpop.f32.mrb[0].mxu0
        %v3089 = vadd.f32 %v2988, %v3088
        %3090 = vdwg.mxu0
        %3091 = vmatprep.subr.mxu0 %v2899
        %3092 = vmatpush1.msra.mxu0 %v2898
        %3093 = vmatprep.subr.mxu0 %v2915
        %3094 = vmatpush1.msra.mxu0 %v2914
        %3095 = vmatprep.subr.mxu0 %v2931
        %3096 = vmatpush1.msra.mxu0 %v2930
        %3097 = vmatprep.subr.mxu0 %v2947
        %3098 = vmatpush1.msra.mxu0 %v2946
        %3099 = vmatprep.subr.mxu0 0.0
        %3100 = vmatpush1.msra.mxu0 0.0
        %3101 = vmatprep.subr.mxu0 0.0
        %3102 = vmatpush1.msra.mxu0 0.0
        %3103 = vmatprep.subr.mxu0 0.0
        %3104 = vmatpush1.msra.mxu0 0.0
        %3105 = vmatprep.subr.mxu0 0.0
        %3106 = vmatpush1.msra.mxu0 0.0
        %3107 = vmatprep.subr.mxu0 0.0
        %3108 = vmatpush1.msra.mxu0 0.0
        %3109 = vmatprep.subr.mxu0 0.0
        %3110 = vmatpush1.msra.mxu0 0.0
        %3111 = vmatprep.subr.mxu0 0.0
        %3112 = vmatpush1.msra.mxu0 0.0
        %3113 = vmatprep.subr.mxu0 0.0
        %3114 = vmatpush1.msra.mxu0 0.0
        %3115 = vmatprep.subr.mxu0 0.0
        %3116 = vmatpush1.msra.mxu0 0.0
        %3117 = vmatprep.subr.mxu0 0.0
        %3118 = vmatpush1.msra.mxu0 0.0
        %3119 = vmatprep.subr.mxu0 0.0
        %3120 = vmatpush1.msra.mxu0 0.0
        %3121 = vmatprep.subr.mxu0 0.0
        %3122 = vmatpush1.msra.mxu0 0.0
        %3123 = vmatprep.subr.mxu0 0.0
        %3124 = vmatpush1.msra.mxu0 0.0
        %3125 = vmatprep.subr.mxu0 0.0
        %3126 = vmatpush1.msra.mxu0 0.0
        %3127 = vmatprep.subr.mxu0 0.0
        %3128 = vmatpush1.msra.mxu0 0.0
        %3129 = vmatprep.subr.mxu0 0.0
        %3130 = vmatpush1.msra.mxu0 0.0
        %3131 = vmatprep.subr.mxu0 0.0
        %3132 = vmatpush1.msra.mxu0 0.0
        %3133 = vmatprep.subr.mxu0 0.0
        %3134 = vmatpush1.msra.mxu0 0.0
        %3135 = vmatprep.subr.mxu0 0.0
        %3136 = vmatpush1.msra.mxu0 0.0
        %3137 = vmatprep.subr.mxu0 0.0
        %3138 = vmatpush1.msra.mxu0 0.0
        %3139 = vmatprep.subr.mxu0 0.0
        %3140 = vmatpush1.msra.mxu0 0.0
        %3141 = vmatprep.subr.mxu0 0.0
        %3142 = vmatpush1.msra.mxu0 0.0
        %3143 = vmatprep.subr.mxu0 0.0
        %3144 = vmatpush1.msra.mxu0 0.0
        %3145 = vmatprep.subr.mxu0 0.0
        %3146 = vmatpush1.msra.mxu0 0.0
        %3147 = vmatprep.subr.mxu0 0.0
        %3148 = vmatpush1.msra.mxu0 0.0
        %3149 = vmatprep.subr.mxu0 0.0
        %3150 = vmatpush1.msra.mxu0 0.0
        %3151 = vmatprep.subr.mxu0 0.0
        %3152 = vmatpush1.msra.mxu0 0.0
        %3153 = vmatprep.subr.mxu0 0.0
        %3154 = vmatpush1.msra.mxu0 0.0
        %3155 = vmatprep.mubr.f32.mxu0 0.0
        %3156 = vmatmul.mubr.f32.gmra.mrb[0].mxu0 %v2991
        %v3157 = vpop.f32.mrb[0].mxu0
        %v3158 = vadd.f32 %v2973, %v3157
        %v3159 = vpop.f32.mrb[0].mxu0
        %v3160 = vadd.f32 %v2973, %v3159
        %3161 = vmatprep.mubr.f32.mxu0 0.0
        %3162 = vmatmul.mubr.f32.gmra.mrb[0].mxu0 %v2994
        %v3163 = vpop.f32.mrb[0].mxu0
        %v3164 = vadd.f32 %v2978, %v3163
        %v3165 = vpop.f32.mrb[0].mxu0
        %v3166 = vadd.f32 %v2978, %v3165
        %3167 = vmatprep.mubr.f32.mxu0 0.0
        %3168 = vmatmul.mubr.f32.gmra.mrb[0].mxu0 %v2997
        %v3169 = vpop.f32.mrb[0].mxu0
        %v3170 = vadd.f32 %v2983, %v3169
        %v3171 = vpop.f32.mrb[0].mxu0
        %v3172 = vadd.f32 %v2983, %v3171
        %3173 = vmatprep.mubr.f32.mxu0 0.0
        %3174 = vmatmul.mubr.f32.gmra.mrb[0].mxu0 %v3000
        %v3175 = vpop.f32.mrb[0].mxu0
        %v3176 = vadd.f32 %v2988, %v3175
        %v3177 = vpop.f32.mrb[0].mxu0
        %v3178 = vadd.f32 %v2988, %v3177
        %3179 = vdwg.mxu0
        %3180 = vmatprep.subr.mxu0 %v2901
        %3181 = vmatpush1.msra.mxu0 %v2900
        %3182 = vmatprep.subr.mxu0 %v2917
        %3183 = vmatpush1.msra.mxu0 %v2916
        %3184 = vmatprep.subr.mxu0 %v2933
        %3185 = vmatpush1.msra.mxu0 %v2932
        %3186 = vmatprep.subr.mxu0 %v2949
        %3187 = vmatpush1.msra.mxu0 %v2948
        %3188 = vmatprep.subr.mxu0 0.0
        %3189 = vmatpush1.msra.mxu0 0.0
        %3190 = vmatprep.subr.mxu0 0.0
        %3191 = vmatpush1.msra.mxu0 0.0
        %3192 = vmatprep.subr.mxu0 0.0
        %3193 = vmatpush1.msra.mxu0 0.0
        %3194 = vmatprep.subr.mxu0 0.0
        %3195 = vmatpush1.msra.mxu0 0.0
        %3196 = vmatprep.subr.mxu0 0.0
        %3197 = vmatpush1.msra.mxu0 0.0
        %3198 = vmatprep.subr.mxu0 0.0
        %3199 = vmatpush1.msra.mxu0 0.0
        %3200 = vmatprep.subr.mxu0 0.0
        %3201 = vmatpush1.msra.mxu0 0.0
        %3202 = vmatprep.subr.mxu0 0.0
        %3203 = vmatpush1.msra.mxu0 0.0
        %3204 = vmatprep.subr.mxu0 0.0
        %3205 = vmatpush1.msra.mxu0 0.0
        %3206 = vmatprep.subr.mxu0 0.0
        %3207 = vmatpush1.msra.mxu0 0.0
        %3208 = vmatprep.subr.mxu0 0.0
        %3209 = vmatpush1.msra.mxu0 0.0
        %3210 = vmatprep.subr.mxu0 0.0
        %3211 = vmatpush1.msra.mxu0 0.0
        %3212 = vmatprep.subr.mxu0 0.0
        %3213 = vmatpush1.msra.mxu0 0.0
        %3214 = vmatprep.subr.mxu0 0.0
        %3215 = vmatpush1.msra.mxu0 0.0
        %3216 = vmatprep.subr.mxu0 0.0
        %3217 = vmatpush1.msra.mxu0 0.0
        %3218 = vmatprep.subr.mxu0 0.0
        %3219 = vmatpush1.msra.mxu0 0.0
        %3220 = vmatprep.subr.mxu0 0.0
        %3221 = vmatpush1.msra.mxu0 0.0
        %3222 = vmatprep.subr.mxu0 0.0
        %3223 = vmatpush1.msra.mxu0 0.0
        %3224 = vmatprep.subr.mxu0 0.0
        %3225 = vmatpush1.msra.mxu0 0.0
        %3226 = vmatprep.subr.mxu0 0.0
        %3227 = vmatpush1.msra.mxu0 0.0
        %3228 = vmatprep.subr.mxu0 0.0
        %3229 = vmatpush1.msra.mxu0 0.0
        %3230 = vmatprep.subr.mxu0 0.0
        %3231 = vmatpush1.msra.mxu0 0.0
        %3232 = vmatprep.subr.mxu0 0.0
        %3233 = vmatpush1.msra.mxu0 0.0
        %3234 = vmatprep.subr.mxu0 0.0
        %3235 = vmatpush1.msra.mxu0 0.0
        %3236 = vmatprep.subr.mxu0 0.0
        %3237 = vmatpush1.msra.mxu0 0.0
        %3238 = vmatprep.subr.mxu0 0.0
        %3239 = vmatpush1.msra.mxu0 0.0
        %3240 = vmatprep.subr.mxu0 0.0
        %3241 = vmatpush1.msra.mxu0 0.0
        %3242 = vmatprep.subr.mxu0 0.0
        %3243 = vmatpush1.msra.mxu0 0.0
        %3244 = vmatprep.mubr.f32.mxu0 0.0
        %3245 = vmatmul.mubr.f32.gmra.mrb[0].mxu0 %v2991
        %v3246 = vpop.f32.mrb[0].mxu0
        %v3247 = vadd.f32 %v2973, %v3246
        %v3248 = vpop.f32.mrb[0].mxu0
        %v3249 = vadd.f32 %v2973, %v3248
        %3250 = vmatprep.mubr.f32.mxu0 0.0
        %3251 = vmatmul.mubr.f32.gmra.mrb[0].mxu0 %v2994
        %v3252 = vpop.f32.mrb[0].mxu0
        %v3253 = vadd.f32 %v2978, %v3252
        %v3254 = vpop.f32.mrb[0].mxu0
        %v3255 = vadd.f32 %v2978, %v3254
        %3256 = vmatprep.mubr.f32.mxu0 0.0
        %3257 = vmatmul.mubr.f32.gmra.mrb[0].mxu0 %v2997
        %v3258 = vpop.f32.mrb[0].mxu0
        %v3259 = vadd.f32 %v2983, %v3258
        %v3260 = vpop.f32.mrb[0].mxu0
        %v3261 = vadd.f32 %v2983, %v3260
        %3262 = vmatprep.mubr.f32.mxu0 0.0
        %3263 = vmatmul.mubr.f32.gmra.mrb[0].mxu0 %v3000
        %v3264 = vpop.f32.mrb[0].mxu0
        %v3265 = vadd.f32 %v2988, %v3264
        %v3266 = vpop.f32.mrb[0].mxu0
        %v3267 = vadd.f32 %v2988, %v3266
        %3268 = vdwg.mxu0
        %3269 = vmatprep.subr.mxu0 %v2903
        %3270 = vmatpush1.msra.mxu0 %v2902
        %3271 = vmatprep.subr.mxu0 %v2919
        %3272 = vmatpush1.msra.mxu0 %v2918
        %3273 = vmatprep.subr.mxu0 %v2935
        %3274 = vmatpush1.msra.mxu0 %v2934
        %3275 = vmatprep.subr.mxu0 %v2951
        %3276 = vmatpush1.msra.mxu0 %v2950
        %3277 = vmatprep.subr.mxu0 0.0
        %3278 = vmatpush1.msra.mxu0 0.0
        %3279 = vmatprep.subr.mxu0 0.0
        %3280 = vmatpush1.msra.mxu0 0.0
        %3281 = vmatprep.subr.mxu0 0.0
        %3282 = vmatpush1.msra.mxu0 0.0
        %3283 = vmatprep.subr.mxu0 0.0
        %3284 = vmatpush1.msra.mxu0 0.0
        %3285 = vmatprep.subr.mxu0 0.0
        %3286 = vmatpush1.msra.mxu0 0.0
        %3287 = vmatprep.subr.mxu0 0.0
        %3288 = vmatpush1.msra.mxu0 0.0
        %3289 = vmatprep.subr.mxu0 0.0
        %3290 = vmatpush1.msra.mxu0 0.0
        %3291 = vmatprep.subr.mxu0 0.0
        %3292 = vmatpush1.msra.mxu0 0.0
        %3293 = vmatprep.subr.mxu0 0.0
        %3294 = vmatpush1.msra.mxu0 0.0
        %3295 = vmatprep.subr.mxu0 0.0
        %3296 = vmatpush1.msra.mxu0 0.0
        %3297 = vmatprep.subr.mxu0 0.0
        %3298 = vmatpush1.msra.mxu0 0.0
        %3299 = vmatprep.subr.mxu0 0.0
        %3300 = vmatpush1.msra.mxu0 0.0
        %3301 = vmatprep.subr.mxu0 0.0
        %3302 = vmatpush1.msra.mxu0 0.0
        %3303 = vmatprep.subr.mxu0 0.0
        %3304 = vmatpush1.msra.mxu0 0.0
        %3305 = vmatprep.subr.mxu0 0.0
        %3306 = vmatpush1.msra.mxu0 0.0
        %3307 = vmatprep.subr.mxu0 0.0
        %3308 = vmatpush1.msra.mxu0 0.0
        %3309 = vmatprep.subr.mxu0 0.0
        %3310 = vmatpush1.msra.mxu0 0.0
        %3311 = vmatprep.subr.mxu0 0.0
        %3312 = vmatpush1.msra.mxu0 0.0
        %3313 = vmatprep.subr.mxu0 0.0
        %3314 = vmatpush1.msra.mxu0 0.0
        %3315 = vmatprep.subr.mxu0 0.0
        %3316 = vmatpush1.msra.mxu0 0.0
        %3317 = vmatprep.subr.mxu0 0.0
        %3318 = vmatpush1.msra.mxu0 0.0
        %3319 = vmatprep.subr.mxu0 0.0
        %3320 = vmatpush1.msra.mxu0 0.0
        %3321 = vmatprep.subr.mxu0 0.0
        %3322 = vmatpush1.msra.mxu0 0.0
        %3323 = vmatprep.subr.mxu0 0.0
        %3324 = vmatpush1.msra.mxu0 0.0
        %3325 = vmatprep.subr.mxu0 0.0
        %3326 = vmatpush1.msra.mxu0 0.0
        %3327 = vmatprep.subr.mxu0 0.0
        %3328 = vmatpush1.msra.mxu0 0.0
        %3329 = vmatprep.subr.mxu0 0.0
        %3330 = vmatpush1.msra.mxu0 0.0
        %3331 = vmatprep.subr.mxu0 0.0
        %3332 = vmatpush1.msra.mxu0 0.0
        %3333 = vmatprep.mubr.f32.mxu0 0.0
        %3334 = vmatmul.mubr.f32.gmra.mrb[0].mxu0 %v2991
        %v3335 = vpop.f32.mrb[0].mxu0
        %v3336 = vadd.f32 %v2973, %v3335
        %v3337 = vpop.f32.mrb[0].mxu0
        %v3338 = vadd.f32 %v2973, %v3337
        %3339 = vmatprep.mubr.f32.mxu0 0.0
        %3340 = vmatmul.mubr.f32.gmra.mrb[0].mxu0 %v2994
        %v3341 = vpop.f32.mrb[0].mxu0
        %v3342 = vadd.f32 %v2978, %v3341
        %v3343 = vpop.f32.mrb[0].mxu0
        %v3344 = vadd.f32 %v2978, %v3343
        %3345 = vmatprep.mubr.f32.mxu0 0.0
        %3346 = vmatmul.mubr.f32.gmra.mrb[0].mxu0 %v2997
        %v3347 = vpop.f32.mrb[0].mxu0
        %v3348 = vadd.f32 %v2983, %v3347
        %v3349 = vpop.f32.mrb[0].mxu0
        %v3350 = vadd.f32 %v2983, %v3349
        %3351 = vmatprep.mubr.f32.mxu0 0.0
        %3352 = vmatmul.mubr.f32.gmra.mrb[0].mxu0 %v3000
        %v3353 = vpop.f32.mrb[0].mxu0
        %v3354 = vadd.f32 %v2988, %v3353
        %v3355 = vpop.f32.mrb[0].mxu0
        %v3356 = vadd.f32 %v2988, %v3355
        %3357 = vdwg.mxu0
        %3358 = vmatprep.subr.mxu0 %v2905
        %3359 = vmatpush1.msra.mxu0 %v2904
        %3360 = vmatprep.subr.mxu0 %v2921
        %3361 = vmatpush1.msra.mxu0 %v2920
        %3362 = vmatprep.subr.mxu0 %v2937
        %3363 = vmatpush1.msra.mxu0 %v2936
        %3364 = vmatprep.subr.mxu0 %v2953
        %3365 = vmatpush1.msra.mxu0 %v2952
        %3366 = vmatprep.subr.mxu0 0.0
        %3367 = vmatpush1.msra.mxu0 0.0
        %3368 = vmatprep.subr.mxu0 0.0
        %3369 = vmatpush1.msra.mxu0 0.0
        %3370 = vmatprep.subr.mxu0 0.0
        %3371 = vmatpush1.msra.mxu0 0.0
        %3372 = vmatprep.subr.mxu0 0.0
        %3373 = vmatpush1.msra.mxu0 0.0
        %3374 = vmatprep.subr.mxu0 0.0
        %3375 = vmatpush1.msra.mxu0 0.0
        %3376 = vmatprep.subr.mxu0 0.0
        %3377 = vmatpush1.msra.mxu0 0.0
        %3378 = vmatprep.subr.mxu0 0.0
        %3379 = vmatpush1.msra.mxu0 0.0
        %3380 = vmatprep.subr.mxu0 0.0
        %3381 = vmatpush1.msra.mxu0 0.0
        %3382 = vmatprep.subr.mxu0 0.0
        %3383 = vmatpush1.msra.mxu0 0.0
        %3384 = vmatprep.subr.mxu0 0.0
        %3385 = vmatpush1.msra.mxu0 0.0
        %3386 = vmatprep.subr.mxu0 0.0
        %3387 = vmatpush1.msra.mxu0 0.0
        %3388 = vmatprep.subr.mxu0 0.0
        %3389 = vmatpush1.msra.mxu0 0.0
        %3390 = vmatprep.subr.mxu0 0.0
        %3391 = vmatpush1.msra.mxu0 0.0
        %3392 = vmatprep.subr.mxu0 0.0
        %3393 = vmatpush1.msra.mxu0 0.0
        %3394 = vmatprep.subr.mxu0 0.0
        %3395 = vmatpush1.msra.mxu0 0.0
        %3396 = vmatprep.subr.mxu0 0.0
        %3397 = vmatpush1.msra.mxu0 0.0
        %3398 = vmatprep.subr.mxu0 0.0
        %3399 = vmatpush1.msra.mxu0 0.0
        %3400 = vmatprep.subr.mxu0 0.0
        %3401 = vmatpush1.msra.mxu0 0.0
        %3402 = vmatprep.subr.mxu0 0.0
        %3403 = vmatpush1.msra.mxu0 0.0
        %3404 = vmatprep.subr.mxu0 0.0
        %3405 = vmatpush1.msra.mxu0 0.0
        %3406 = vmatprep.subr.mxu0 0.0
        %3407 = vmatpush1.msra.mxu0 0.0
        %3408 = vmatprep.subr.mxu0 0.0
        %3409 = vmatpush1.msra.mxu0 0.0
        %3410 = vmatprep.subr.mxu0 0.0
        %3411 = vmatpush1.msra.mxu0 0.0
        %3412 = vmatprep.subr.mxu0 0.0
        %3413 = vmatpush1.msra.mxu0 0.0
        %3414 = vmatprep.subr.mxu0 0.0
        %3415 = vmatpush1.msra.mxu0 0.0
        %3416 = vmatprep.subr.mxu0 0.0
        %3417 = vmatpush1.msra.mxu0 0.0
        %3418 = vmatprep.subr.mxu0 0.0
        %3419 = vmatpush1.msra.mxu0 0.0
        %3420 = vmatprep.subr.mxu0 0.0
        %3421 = vmatpush1.msra.mxu0 0.0
        %3422 = vmatprep.mubr.f32.mxu0 0.0
        %3423 = vmatmul.mubr.f32.gmra.mrb[0].mxu0 %v2991
        %v3424 = vpop.f32.mrb[0].mxu0
        %v3425 = vadd.f32 %v2973, %v3424
        %v3426 = vpop.f32.mrb[0].mxu0
        %v3427 = vadd.f32 %v2973, %v3426
        %3428 = vmatprep.mubr.f32.mxu0 0.0
        %3429 = vmatmul.mubr.f32.gmra.mrb[0].mxu0 %v2994
        %v3430 = vpop.f32.mrb[0].mxu0
        %v3431 = vadd.f32 %v2978, %v3430
        %v3432 = vpop.f32.mrb[0].mxu0
        %v3433 = vadd.f32 %v2978, %v3432
        %3434 = vmatprep.mubr.f32.mxu0 0.0
        %3435 = vmatmul.mubr.f32.gmra.mrb[0].mxu0 %v2997
        %v3436 = vpop.f32.mrb[0].mxu0
        %v3437 = vadd.f32 %v2983, %v3436
        %v3438 = vpop.f32.mrb[0].mxu0
        %v3439 = vadd.f32 %v2983, %v3438
        %3440 = vmatprep.mubr.f32.mxu0 0.0
        %3441 = vmatmul.mubr.f32.gmra.mrb[0].mxu0 %v3000
        %v3442 = vpop.f32.mrb[0].mxu0
        %v3443 = vadd.f32 %v2988, %v3442
        %v3444 = vpop.f32.mrb[0].mxu0
        %v3445 = vadd.f32 %v2988, %v3444
        %3446 = vdwg.mxu0
        %3447 = vmatprep.subr.mxu0 %v2907
        %3448 = vmatpush1.msra.mxu0 %v2906
        %3449 = vmatprep.subr.mxu0 %v2923
        %3450 = vmatpush1.msra.mxu0 %v2922
        %3451 = vmatprep.subr.mxu0 %v2939
        %3452 = vmatpush1.msra.mxu0 %v2938
        %3453 = vmatprep.subr.mxu0 %v2955
        %3454 = vmatpush1.msra.mxu0 %v2954
        %3455 = vmatprep.subr.mxu0 0.0
        %3456 = vmatpush1.msra.mxu0 0.0
        %3457 = vmatprep.subr.mxu0 0.0
        %3458 = vmatpush1.msra.mxu0 0.0
        %3459 = vmatprep.subr.mxu0 0.0
        %3460 = vmatpush1.msra.mxu0 0.0
        %3461 = vmatprep.subr.mxu0 0.0
        %3462 = vmatpush1.msra.mxu0 0.0
        %3463 = vmatprep.subr.mxu0 0.0
        %3464 = vmatpush1.msra.mxu0 0.0
        %3465 = vmatprep.subr.mxu0 0.0
        %3466 = vmatpush1.msra.mxu0 0.0
        %3467 = vmatprep.subr.mxu0 0.0
        %3468 = vmatpush1.msra.mxu0 0.0
        %3469 = vmatprep.subr.mxu0 0.0
        %3470 = vmatpush1.msra.mxu0 0.0
        %3471 = vmatprep.subr.mxu0 0.0
        %3472 = vmatpush1.msra.mxu0 0.0
        %3473 = vmatprep.subr.mxu0 0.0
        %3474 = vmatpush1.msra.mxu0 0.0
        %3475 = vmatprep.subr.mxu0 0.0
        %3476 = vmatpush1.msra.mxu0 0.0
        %3477 = vmatprep.subr.mxu0 0.0
        %3478 = vmatpush1.msra.mxu0 0.0
        %3479 = vmatprep.subr.mxu0 0.0
        %3480 = vmatpush1.msra.mxu0 0.0
        %3481 = vmatprep.subr.mxu0 0.0
        %3482 = vmatpush1.msra.mxu0 0.0
        %3483 = vmatprep.subr.mxu0 0.0
        %3484 = vmatpush1.msra.mxu0 0.0
        %3485 = vmatprep.subr.mxu0 0.0
        %3486 = vmatpush1.msra.mxu0 0.0
        %3487 = vmatprep.subr.mxu0 0.0
        %3488 = vmatpush1.msra.mxu0 0.0
        %3489 = vmatprep.subr.mxu0 0.0
        %3490 = vmatpush1.msra.mxu0 0.0
        %3491 = vmatprep.subr.mxu0 0.0
        %3492 = vmatpush1.msra.mxu0 0.0
        %3493 = vmatprep.subr.mxu0 0.0
        %3494 = vmatpush1.msra.mxu0 0.0
        %3495 = vmatprep.subr.mxu0 0.0
        %3496 = vmatpush1.msra.mxu0 0.0
        %3497 = vmatprep.subr.mxu0 0.0
        %3498 = vmatpush1.msra.mxu0 0.0
        %3499 = vmatprep.subr.mxu0 0.0
        %3500 = vmatpush1.msra.mxu0 0.0
        %3501 = vmatprep.subr.mxu0 0.0
        %3502 = vmatpush1.msra.mxu0 0.0
        %3503 = vmatprep.subr.mxu0 0.0
        %3504 = vmatpush1.msra.mxu0 0.0
        %3505 = vmatprep.subr.mxu0 0.0
        %3506 = vmatpush1.msra.mxu0 0.0
        %3507 = vmatprep.subr.mxu0 0.0
        %3508 = vmatpush1.msra.mxu0 0.0
        %3509 = vmatprep.subr.mxu0 0.0
        %3510 = vmatpush1.msra.mxu0 0.0
        %3511 = vmatprep.mubr.f32.mxu0 0.0
        %3512 = vmatmul.mubr.f32.gmra.mrb[0].mxu0 %v2991
        %v3513 = vpop.f32.mrb[0].mxu0
        %v3514 = vadd.f32 %v2973, %v3513
        %v3515 = vpop.f32.mrb[0].mxu0
        %v3516 = vadd.f32 %v2973, %v3515
        %3517 = vmatprep.mubr.f32.mxu0 0.0
        %3518 = vmatmul.mubr.f32.gmra.mrb[0].mxu0 %v2994
        %v3519 = vpop.f32.mrb[0].mxu0
        %v3520 = vadd.f32 %v2978, %v3519
        %v3521 = vpop.f32.mrb[0].mxu0
        %v3522 = vadd.f32 %v2978, %v3521
        %3523 = vmatprep.mubr.f32.mxu0 0.0
        %3524 = vmatmul.mubr.f32.gmra.mrb[0].mxu0 %v2997
        %v3525 = vpop.f32.mrb[0].mxu0
        %v3526 = vadd.f32 %v2983, %v3525
        %v3527 = vpop.f32.mrb[0].mxu0
        %v3528 = vadd.f32 %v2983, %v3527
        %3529 = vmatprep.mubr.f32.mxu0 0.0
        %3530 = vmatmul.mubr.f32.gmra.mrb[0].mxu0 %v3000
        %v3531 = vpop.f32.mrb[0].mxu0
        %v3532 = vadd.f32 %v2988, %v3531
        %v3533 = vpop.f32.mrb[0].mxu0
        %v3534 = vadd.f32 %v2988, %v3533
        %3535 = vdwg.mxu0
        %3536 = vmatprep.subr.mxu0 %v2909
        %3537 = vmatpush1.msra.mxu0 %v2908
        %3538 = vmatprep.subr.mxu0 %v2925
        %3539 = vmatpush1.msra.mxu0 %v2924
        %3540 = vmatprep.subr.mxu0 %v2941
        %3541 = vmatpush1.msra.mxu0 %v2940
        %3542 = vmatprep.subr.mxu0 %v2957
        %3543 = vmatpush1.msra.mxu0 %v2956
        %3544 = vmatprep.subr.mxu0 0.0
        %3545 = vmatpush1.msra.mxu0 0.0
        %3546 = vmatprep.subr.mxu0 0.0
        %3547 = vmatpush1.msra.mxu0 0.0
        %3548 = vmatprep.subr.mxu0 0.0
        %3549 = vmatpush1.msra.mxu0 0.0
        %3550 = vmatprep.subr.mxu0 0.0
        %3551 = vmatpush1.msra.mxu0 0.0
        %3552 = vmatprep.subr.mxu0 0.0
        %3553 = vmatpush1.msra.mxu0 0.0
        %3554 = vmatprep.subr.mxu0 0.0
        %3555 = vmatpush1.msra.mxu0 0.0
        %3556 = vmatprep.subr.mxu0 0.0
        %3557 = vmatpush1.msra.mxu0 0.0
        %3558 = vmatprep.subr.mxu0 0.0
        %3559 = vmatpush1.msra.mxu0 0.0
        %3560 = vmatprep.subr.mxu0 0.0
        %3561 = vmatpush1.msra.mxu0 0.0
        %3562 = vmatprep.subr.mxu0 0.0
        %3563 = vmatpush1.msra.mxu0 0.0
        %3564 = vmatprep.subr.mxu0 0.0
        %3565 = vmatpush1.msra.mxu0 0.0
        %3566 = vmatprep.subr.mxu0 0.0
        %3567 = vmatpush1.msra.mxu0 0.0
        %3568 = vmatprep.subr.mxu0 0.0
        %3569 = vmatpush1.msra.mxu0 0.0
        %3570 = vmatprep.subr.mxu0 0.0
        %3571 = vmatpush1.msra.mxu0 0.0
        %3572 = vmatprep.subr.mxu0 0.0
        %3573 = vmatpush1.msra.mxu0 0.0
        %3574 = vmatprep.subr.mxu0 0.0
        %3575 = vmatpush1.msra.mxu0 0.0
        %3576 = vmatprep.subr.mxu0 0.0
        %3577 = vmatpush1.msra.mxu0 0.0
        %3578 = vmatprep.subr.mxu0 0.0
        %3579 = vmatpush1.msra.mxu0 0.0
        %3580 = vmatprep.subr.mxu0 0.0
        %3581 = vmatpush1.msra.mxu0 0.0
        %3582 = vmatprep.subr.mxu0 0.0
        %3583 = vmatpush1.msra.mxu0 0.0
        %3584 = vmatprep.subr.mxu0 0.0
        %3585 = vmatpush1.msra.mxu0 0.0
        %3586 = vmatprep.subr.mxu0 0.0
        %3587 = vmatpush1.msra.mxu0 0.0
        %3588 = vmatprep.subr.mxu0 0.0
        %3589 = vmatpush1.msra.mxu0 0.0
        %3590 = vmatprep.subr.mxu0 0.0
        %3591 = vmatpush1.msra.mxu0 0.0
        %3592 = vmatprep.subr.mxu0 0.0
        %3593 = vmatpush1.msra.mxu0 0.0
        %3594 = vmatprep.subr.mxu0 0.0
        %3595 = vmatpush1.msra.mxu0 0.0
        %3596 = vmatprep.subr.mxu0 0.0
        %3597 = vmatpush1.msra.mxu0 0.0
        %3598 = vmatprep.subr.mxu0 0.0
        %3599 = vmatpush1.msra.mxu0 0.0
        %3600 = vmatprep.mubr.f32.mxu0 0.0
        %3601 = vmatmul.mubr.f32.gmra.mrb[0].mxu0 %v2991
        %v3602 = vpop.f32.mrb[0].mxu0
        %v3603 = vadd.f32 %v2973, %v3602
        %v3604 = vpop.f32.mrb[0].mxu0
        %v3605 = vadd.f32 %v2973, %v3604
        %3606 = vmatprep.mubr.f32.mxu0 0.0
        %3607 = vmatmul.mubr.f32.gmra.mrb[0].mxu0 %v2994
        %v3608 = vpop.f32.mrb[0].mxu0
        %v3609 = vadd.f32 %v2978, %v3608
        %v3610 = vpop.f32.mrb[0].mxu0
        %v3611 = vadd.f32 %v2978, %v3610
        %3612 = vmatprep.mubr.f32.mxu0 0.0
        %3613 = vmatmul.mubr.f32.gmra.mrb[0].mxu0 %v2997
        %v3614 = vpop.f32.mrb[0].mxu0
        %v3615 = vadd.f32 %v2983, %v3614
        %v3616 = vpop.f32.mrb[0].mxu0
        %v3617 = vadd.f32 %v2983, %v3616
        %3618 = vmatprep.mubr.f32.mxu0 0.0
        %3619 = vmatmul.mubr.f32.gmra.mrb[0].mxu0 %v3000
        %v3620 = vpop.f32.mrb[0].mxu0
        %v3621 = vadd.f32 %v2988, %v3620
        %v3622 = vpop.f32.mrb[0].mxu0
        %v3623 = vadd.f32 %v2988, %v3622
        %3624 = vdwg.mxu0
        %3625 = vmatprep.subr.mxu0 %v2911
        %3626 = vmatpush1.msra.mxu0 %v2910
        %3627 = vmatprep.subr.mxu0 %v2927
        %3628 = vmatpush1.msra.mxu0 %v2926
        %3629 = vmatprep.subr.mxu0 %v2943
        %3630 = vmatpush1.msra.mxu0 %v2942
        %3631 = vmatprep.subr.mxu0 %v2959
        %3632 = vmatpush1.msra.mxu0 %v2958
        %3633 = vmatprep.subr.mxu0 0.0
        %3634 = vmatpush1.msra.mxu0 0.0
        %3635 = vmatprep.subr.mxu0 0.0
        %3636 = vmatpush1.msra.mxu0 0.0
        %3637 = vmatprep.subr.mxu0 0.0
        %3638 = vmatpush1.msra.mxu0 0.0
        %3639 = vmatprep.subr.mxu0 0.0
        %3640 = vmatpush1.msra.mxu0 0.0
        %3641 = vmatprep.subr.mxu0 0.0
        %3642 = vmatpush1.msra.mxu0 0.0
        %3643 = vmatprep.subr.mxu0 0.0
        %3644 = vmatpush1.msra.mxu0 0.0
        %3645 = vmatprep.subr.mxu0 0.0
        %3646 = vmatpush1.msra.mxu0 0.0
        %3647 = vmatprep.subr.mxu0 0.0
        %3648 = vmatpush1.msra.mxu0 0.0
        %3649 = vmatprep.subr.mxu0 0.0
        %3650 = vmatpush1.msra.mxu0 0.0
        %3651 = vmatprep.subr.mxu0 0.0
        %3652 = vmatpush1.msra.mxu0 0.0
        %3653 = vmatprep.subr.mxu0 0.0
        %3654 = vmatpush1.msra.mxu0 0.0
        %3655 = vmatprep.subr.mxu0 0.0
        %3656 = vmatpush1.msra.mxu0 0.0
        %3657 = vmatprep.subr.mxu0 0.0
        %3658 = vmatpush1.msra.mxu0 0.0
        %3659 = vmatprep.subr.mxu0 0.0
        %3660 = vmatpush1.msra.mxu0 0.0
        %3661 = vmatprep.subr.mxu0 0.0
        %3662 = vmatpush1.msra.mxu0 0.0
        %3663 = vmatprep.subr.mxu0 0.0
        %3664 = vmatpush1.msra.mxu0 0.0
        %3665 = vmatprep.subr.mxu0 0.0
        %3666 = vmatpush1.msra.mxu0 0.0
        %3667 = vmatprep.subr.mxu0 0.0
        %3668 = vmatpush1.msra.mxu0 0.0
        %3669 = vmatprep.subr.mxu0 0.0
        %3670 = vmatpush1.msra.mxu0 0.0
        %3671 = vmatprep.subr.mxu0 0.0
        %3672 = vmatpush1.msra.mxu0 0.0
        %3673 = vmatprep.subr.mxu0 0.0
        %3674 = vmatpush1.msra.mxu0 0.0
        %3675 = vmatprep.subr.mxu0 0.0
        %3676 = vmatpush1.msra.mxu0 0.0
        %3677 = vmatprep.subr.mxu0 0.0
        %3678 = vmatpush1.msra.mxu0 0.0
        %3679 = vmatprep.subr.mxu0 0.0
        %3680 = vmatpush1.msra.mxu0 0.0
        %3681 = vmatprep.subr.mxu0 0.0
        %3682 = vmatpush1.msra.mxu0 0.0
        %3683 = vmatprep.subr.mxu0 0.0
        %3684 = vmatpush1.msra.mxu0 0.0
        %3685 = vmatprep.subr.mxu0 0.0
        %3686 = vmatpush1.msra.mxu0 0.0
        %3687 = vmatprep.subr.mxu0 0.0
        %3688 = vmatpush1.msra.mxu0 0.0
        %3689 = vmatprep.mubr.f32.mxu0 0.0
        %3690 = vmatmul.mubr.f32.gmra.mrb[0].mxu0 %v2991
        %v3691 = vpop.f32.mrb[0].mxu0
        %v3692 = vadd.f32 %v2973, %v3691
        %v3693 = vpop.f32.mrb[0].mxu0
        %v3694 = vadd.f32 %v2973, %v3693
        %3695 = vmatprep.mubr.f32.mxu0 0.0
        %3696 = vmatmul.mubr.f32.gmra.mrb[0].mxu0 %v2994
        %v3697 = vpop.f32.mrb[0].mxu0
        %v3698 = vadd.f32 %v2978, %v3697
        %v3699 = vpop.f32.mrb[0].mxu0
        %v3700 = vadd.f32 %v2978, %v3699
        %3701 = vmatprep.mubr.f32.mxu0 0.0
        %3702 = vmatmul.mubr.f32.gmra.mrb[0].mxu0 %v2997
        %v3703 = vpop.f32.mrb[0].mxu0
        %v3704 = vadd.f32 %v2983, %v3703
        %v3705 = vpop.f32.mrb[0].mxu0
        %v3706 = vadd.f32 %v2983, %v3705
        %3707 = vmatprep.mubr.f32.mxu0 0.0
        %3708 = vmatmul.mubr.f32.gmra.mrb[0].mxu0 %v3000
        %v3709 = vpop.f32.mrb[0].mxu0
        %v3710 = vadd.f32 %v2988, %v3709
        %v3711 = vpop.f32.mrb[0].mxu0
        %v3712 = vadd.f32 %v2988, %v3711
        %3713 = vdwg.mxu0
        %v3714 = vtanh.pop %v3069
        %v3715 = vtanh.pop %v3071
        %v3716 = vtanh.pop %v3158
        %v3717 = vtanh.pop %v3160
        %v3718 = vtanh.pop %v3247
        %v3719 = vtanh.pop %v3249
        %v3720 = vtanh.pop %v3336
        %v3721 = vtanh.pop %v3338
        %v3722 = vtanh.pop %v3425
        %v3723 = vtanh.pop %v3427
        %v3724 = vtanh.pop %v3514
        %v3725 = vtanh.pop %v3516
        %v3726 = vtanh.pop %v3603
        %v3727 = vtanh.pop %v3605
        %v3728 = vtanh.pop %v3692
        %v3729 = vtanh.pop %v3694
        %v3730 = vtanh.pop %v3075
        %v3731 = vtanh.pop %v3077
        %v3732 = vtanh.pop %v3164
        %v3733 = vtanh.pop %v3166
        %v3734 = vtanh.pop %v3253
        %v3735 = vtanh.pop %v3255
        %v3736 = vtanh.pop %v3342
        %v3737 = vtanh.pop %v3344
        %v3738 = vtanh.pop %v3431
        %v3739 = vtanh.pop %v3433
        %v3740 = vtanh.pop %v3520
        %v3741 = vtanh.pop %v3522
        %v3742 = vtanh.pop %v3609
        %v3743 = vtanh.pop %v3611
        %v3744 = vtanh.pop %v3698
        %v3745 = vtanh.pop %v3700
        %v3746 = vtanh.pop %v3081
        %v3747 = vtanh.pop %v3083
        %v3748 = vtanh.pop %v3170
        %v3749 = vtanh.pop %v3172
        %v3750 = vtanh.pop %v3259
        %v3751 = vtanh.pop %v3261
        %v3752 = vtanh.pop %v3348
        %v3753 = vtanh.pop %v3350
        %v3754 = vtanh.pop %v3437
        %v3755 = vtanh.pop %v3439
        %v3756 = vtanh.pop %v3526
        %v3757 = vtanh.pop %v3528
        %v3758 = vtanh.pop %v3615
        %v3759 = vtanh.pop %v3617
        %v3760 = vtanh.pop %v3704
        %v3761 = vtanh.pop %v3706
        %v3762 = vtanh.pop %v3087
        %v3763 = vtanh.pop %v3089
        %v3764 = vtanh.pop %v3176
        %v3765 = vtanh.pop %v3178
        %v3766 = vtanh.pop %v3265
        %v3767 = vtanh.pop %v3267
        %v3768 = vtanh.pop %v3354
        %v3769 = vtanh.pop %v3356
        %v3770 = vtanh.pop %v3443
        %v3771 = vtanh.pop %v3445
        %v3772 = vtanh.pop %v3532
        %v3773 = vtanh.pop %v3534
        %v3774 = vtanh.pop %v3621
        %v3775 = vtanh.pop %v3623
        %v3776 = vtanh.pop %v3710
        %v3777 = vtanh.pop %v3712
        %s3778 = scalar_lea.vmem [#allocation3], 32
        %v3779 = vld [vmem:[%s3778] sm:$0xff]
        %v3780 = vld [vmem:[%s3778 + $0x8] sm:$0xff]
        %v3781 = vld [vmem:[%s3778 + $0x10] sm:$0xff]
        %v3782 = vld [vmem:[%s3778 + $0x18] sm:$0xff]
        %s3783 = scalar_lea.vmem %s6, 32
        %v3784 = vld [vmem:[%s3783] sm:$0xff]
        %v3785 = vld [vmem:[%s3783 + $0x8] sm:$0xff]
        %v3786 = vld [vmem:[%s3783 + $0x10] sm:$0xff]
        %v3787 = vld [vmem:[%s3783 + $0x18] sm:$0xff]
        %3789 = vset.pattern.permute.xlu0 0
        %3790 = vperm.xlu0 %3789, %v3784
        %v3791 = vpop.permute.xlu0 %3790
        %3794 = vset.pattern.permute.xlu0 0
        %3795 = vperm.xlu0 %3794, %v3785
        %v3796 = vpop.permute.xlu0 %3795
        %3799 = vset.pattern.permute.xlu0 0
        %3800 = vperm.xlu0 %3799, %v3786
        %v3801 = vpop.permute.xlu0 %3800
        %3804 = vset.pattern.permute.xlu0 0
        %3805 = vperm.xlu0 %3804, %v3787
        %v3806 = vpop.permute.xlu0 %3805
        %v3809 = vsel %vm1291, %v3779, 0
        %v3812 = vsel %vm1291, %v3780, 0
        %v3815 = vsel %vm1291, %v3781, 0
        %v3818 = vsel %vm1291, %v3782, 0
        %3820 = vmatprep.subr.mxu0 %v3715
        %3821 = vmatpush1.msra.mxu0 %v3714
        %3822 = vmatprep.subr.mxu0 %v3731
        %3823 = vmatpush1.msra.mxu0 %v3730
        %3824 = vmatprep.subr.mxu0 %v3747
        %3825 = vmatpush1.msra.mxu0 %v3746
        %3826 = vmatprep.subr.mxu0 %v3763
        %3827 = vmatpush1.msra.mxu0 %v3762
        %3828 = vmatprep.subr.mxu0 0.0
        %3829 = vmatpush1.msra.mxu0 0.0
        %3830 = vmatprep.subr.mxu0 0.0
        %3831 = vmatpush1.msra.mxu0 0.0
        %3832 = vmatprep.subr.mxu0 0.0
        %3833 = vmatpush1.msra.mxu0 0.0
        %3834 = vmatprep.subr.mxu0 0.0
        %3835 = vmatpush1.msra.mxu0 0.0
        %3836 = vmatprep.subr.mxu0 0.0
        %3837 = vmatpush1.msra.mxu0 0.0
        %3838 = vmatprep.subr.mxu0 0.0
        %3839 = vmatpush1.msra.mxu0 0.0
        %3840 = vmatprep.subr.mxu0 0.0
        %3841 = vmatpush1.msra.mxu0 0.0
        %3842 = vmatprep.subr.mxu0 0.0
        %3843 = vmatpush1.msra.mxu0 0.0
        %3844 = vmatprep.subr.mxu0 0.0
        %3845 = vmatpush1.msra.mxu0 0.0
        %3846 = vmatprep.subr.mxu0 0.0
        %3847 = vmatpush1.msra.mxu0 0.0
        %3848 = vmatprep.subr.mxu0 0.0
        %3849 = vmatpush1.msra.mxu0 0.0
        %3850 = vmatprep.subr.mxu0 0.0
        %3851 = vmatpush1.msra.mxu0 0.0
        %3852 = vmatprep.subr.mxu0 0.0
        %3853 = vmatpush1.msra.mxu0 0.0
        %3854 = vmatprep.subr.mxu0 0.0
        %3855 = vmatpush1.msra.mxu0 0.0
        %3856 = vmatprep.subr.mxu0 0.0
        %3857 = vmatpush1.msra.mxu0 0.0
        %3858 = vmatprep.subr.mxu0 0.0
        %3859 = vmatpush1.msra.mxu0 0.0
        %3860 = vmatprep.subr.mxu0 0.0
        %3861 = vmatpush1.msra.mxu0 0.0
        %3862 = vmatprep.subr.mxu0 0.0
        %3863 = vmatpush1.msra.mxu0 0.0
        %3864 = vmatprep.subr.mxu0 0.0
        %3865 = vmatpush1.msra.mxu0 0.0
        %3866 = vmatprep.subr.mxu0 0.0
        %3867 = vmatpush1.msra.mxu0 0.0
        %3868 = vmatprep.subr.mxu0 0.0
        %3869 = vmatpush1.msra.mxu0 0.0
        %3870 = vmatprep.subr.mxu0 0.0
        %3871 = vmatpush1.msra.mxu0 0.0
        %3872 = vmatprep.subr.mxu0 0.0
        %3873 = vmatpush1.msra.mxu0 0.0
        %3874 = vmatprep.subr.mxu0 0.0
        %3875 = vmatpush1.msra.mxu0 0.0
        %3876 = vmatprep.subr.mxu0 0.0
        %3877 = vmatpush1.msra.mxu0 0.0
        %3878 = vmatprep.subr.mxu0 0.0
        %3879 = vmatpush1.msra.mxu0 0.0
        %3880 = vmatprep.subr.mxu0 0.0
        %3881 = vmatpush1.msra.mxu0 0.0
        %3882 = vmatprep.subr.mxu0 0.0
        %3883 = vmatpush1.msra.mxu0 0.0
        %3884 = vmatprep.mubr.f32.mxu0 0.0
        %3885 = vmatmul.mubr.f32.gmra.mrb[0].mxu0 %v3809
        %v3886 = vpop.f32.mrb[0].mxu0
        %v3887 = vadd.f32 %v3791, %v3886
        %v3888 = vpop.f32.mrb[0].mxu0
        %v3889 = vadd.f32 %v3791, %v3888
        %3890 = vmatprep.mubr.f32.mxu0 0.0
        %3891 = vmatmul.mubr.f32.gmra.mrb[0].mxu0 %v3812
        %v3892 = vpop.f32.mrb[0].mxu0
        %v3893 = vadd.f32 %v3796, %v3892
        %v3894 = vpop.f32.mrb[0].mxu0
        %v3895 = vadd.f32 %v3796, %v3894
        %3896 = vmatprep.mubr.f32.mxu0 0.0
        %3897 = vmatmul.mubr.f32.gmra.mrb[0].mxu0 %v3815
        %v3898 = vpop.f32.mrb[0].mxu0
        %v3899 = vadd.f32 %v3801, %v3898
        %v3900 = vpop.f32.mrb[0].mxu0
        %v3901 = vadd.f32 %v3801, %v3900
        %3902 = vmatprep.mubr.f32.mxu0 0.0
        %3903 = vmatmul.mubr.f32.gmra.mrb[0].mxu0 %v3818
        %v3904 = vpop.f32.mrb[0].mxu0
        %v3905 = vadd.f32 %v3806, %v3904
        %v3906 = vpop.f32.mrb[0].mxu0
        %v3907 = vadd.f32 %v3806, %v3906
        %3908 = vdwg.mxu0
        %3909 = vmatprep.subr.mxu0 %v3717
        %3910 = vmatpush1.msra.mxu0 %v3716
        %3911 = vmatprep.subr.mxu0 %v3733
        %3912 = vmatpush1.msra.mxu0 %v3732
        %3913 = vmatprep.subr.mxu0 %v3749
        %3914 = vmatpush1.msra.mxu0 %v3748
        %3915 = vmatprep.subr.mxu0 %v3765
        %3916 = vmatpush1.msra.mxu0 %v3764
        %3917 = vmatprep.subr.mxu0 0.0
        %3918 = vmatpush1.msra.mxu0 0.0
        %3919 = vmatprep.subr.mxu0 0.0
        %3920 = vmatpush1.msra.mxu0 0.0
        %3921 = vmatprep.subr.mxu0 0.0
        %3922 = vmatpush1.msra.mxu0 0.0
        %3923 = vmatprep.subr.mxu0 0.0
        %3924 = vmatpush1.msra.mxu0 0.0
        %3925 = vmatprep.subr.mxu0 0.0
        %3926 = vmatpush1.msra.mxu0 0.0
        %3927 = vmatprep.subr.mxu0 0.0
        %3928 = vmatpush1.msra.mxu0 0.0
        %3929 = vmatprep.subr.mxu0 0.0
        %3930 = vmatpush1.msra.mxu0 0.0
        %3931 = vmatprep.subr.mxu0 0.0
        %3932 = vmatpush1.msra.mxu0 0.0
        %3933 = vmatprep.subr.mxu0 0.0
        %3934 = vmatpush1.msra.mxu0 0.0
        %3935 = vmatprep.subr.mxu0 0.0
        %3936 = vmatpush1.msra.mxu0 0.0
        %3937 = vmatprep.subr.mxu0 0.0
        %3938 = vmatpush1.msra.mxu0 0.0
        %3939 = vmatprep.subr.mxu0 0.0
        %3940 = vmatpush1.msra.mxu0 0.0
        %3941 = vmatprep.subr.mxu0 0.0
        %3942 = vmatpush1.msra.mxu0 0.0
        %3943 = vmatprep.subr.mxu0 0.0
        %3944 = vmatpush1.msra.mxu0 0.0
        %3945 = vmatprep.subr.mxu0 0.0
        %3946 = vmatpush1.msra.mxu0 0.0
        %3947 = vmatprep.subr.mxu0 0.0
        %3948 = vmatpush1.msra.mxu0 0.0
        %3949 = vmatprep.subr.mxu0 0.0
        %3950 = vmatpush1.msra.mxu0 0.0
        %3951 = vmatprep.subr.mxu0 0.0
        %3952 = vmatpush1.msra.mxu0 0.0
        %3953 = vmatprep.subr.mxu0 0.0
        %3954 = vmatpush1.msra.mxu0 0.0
        %3955 = vmatprep.subr.mxu0 0.0
        %3956 = vmatpush1.msra.mxu0 0.0
        %3957 = vmatprep.subr.mxu0 0.0
        %3958 = vmatpush1.msra.mxu0 0.0
        %3959 = vmatprep.subr.mxu0 0.0
        %3960 = vmatpush1.msra.mxu0 0.0
        %3961 = vmatprep.subr.mxu0 0.0
        %3962 = vmatpush1.msra.mxu0 0.0
        %3963 = vmatprep.subr.mxu0 0.0
        %3964 = vmatpush1.msra.mxu0 0.0
        %3965 = vmatprep.subr.mxu0 0.0
        %3966 = vmatpush1.msra.mxu0 0.0
        %3967 = vmatprep.subr.mxu0 0.0
        %3968 = vmatpush1.msra.mxu0 0.0
        %3969 = vmatprep.subr.mxu0 0.0
        %3970 = vmatpush1.msra.mxu0 0.0
        %3971 = vmatprep.subr.mxu0 0.0
        %3972 = vmatpush1.msra.mxu0 0.0
        %3973 = vmatprep.mubr.f32.mxu0 0.0
        %3974 = vmatmul.mubr.f32.gmra.mrb[0].mxu0 %v3809
        %v3975 = vpop.f32.mrb[0].mxu0
        %v3976 = vadd.f32 %v3791, %v3975
        %v3977 = vpop.f32.mrb[0].mxu0
        %v3978 = vadd.f32 %v3791, %v3977
        %3979 = vmatprep.mubr.f32.mxu0 0.0
        %3980 = vmatmul.mubr.f32.gmra.mrb[0].mxu0 %v3812
        %v3981 = vpop.f32.mrb[0].mxu0
        %v3982 = vadd.f32 %v3796, %v3981
        %v3983 = vpop.f32.mrb[0].mxu0
        %v3984 = vadd.f32 %v3796, %v3983
        %3985 = vmatprep.mubr.f32.mxu0 0.0
        %3986 = vmatmul.mubr.f32.gmra.mrb[0].mxu0 %v3815
        %v3987 = vpop.f32.mrb[0].mxu0
        %v3988 = vadd.f32 %v3801, %v3987
        %v3989 = vpop.f32.mrb[0].mxu0
        %v3990 = vadd.f32 %v3801, %v3989
        %3991 = vmatprep.mubr.f32.mxu0 0.0
        %3992 = vmatmul.mubr.f32.gmra.mrb[0].mxu0 %v3818
        %v3993 = vpop.f32.mrb[0].mxu0
        %v3994 = vadd.f32 %v3806, %v3993
        %v3995 = vpop.f32.mrb[0].mxu0
        %v3996 = vadd.f32 %v3806, %v3995
        %3997 = vdwg.mxu0
        %3998 = vmatprep.subr.mxu0 %v3719
        %3999 = vmatpush1.msra.mxu0 %v3718
        %4000 = vmatprep.subr.mxu0 %v3735
        %4001 = vmatpush1.msra.mxu0 %v3734
        %4002 = vmatprep.subr.mxu0 %v3751
        %4003 = vmatpush1.msra.mxu0 %v3750
        %4004 = vmatprep.subr.mxu0 %v3767
        %4005 = vmatpush1.msra.mxu0 %v3766
        %4006 = vmatprep.subr.mxu0 0.0
        %4007 = vmatpush1.msra.mxu0 0.0
        %4008 = vmatprep.subr.mxu0 0.0
        %4009 = vmatpush1.msra.mxu0 0.0
        %4010 = vmatprep.subr.mxu0 0.0
        %4011 = vmatpush1.msra.mxu0 0.0
        %4012 = vmatprep.subr.mxu0 0.0
        %4013 = vmatpush1.msra.mxu0 0.0
        %4014 = vmatprep.subr.mxu0 0.0
        %4015 = vmatpush1.msra.mxu0 0.0
        %4016 = vmatprep.subr.mxu0 0.0
        %4017 = vmatpush1.msra.mxu0 0.0
        %4018 = vmatprep.subr.mxu0 0.0
        %4019 = vmatpush1.msra.mxu0 0.0
        %4020 = vmatprep.subr.mxu0 0.0
        %4021 = vmatpush1.msra.mxu0 0.0
        %4022 = vmatprep.subr.mxu0 0.0
        %4023 = vmatpush1.msra.mxu0 0.0
        %4024 = vmatprep.subr.mxu0 0.0
        %4025 = vmatpush1.msra.mxu0 0.0
        %4026 = vmatprep.subr.mxu0 0.0
        %4027 = vmatpush1.msra.mxu0 0.0
        %4028 = vmatprep.subr.mxu0 0.0
        %4029 = vmatpush1.msra.mxu0 0.0
        %4030 = vmatprep.subr.mxu0 0.0
        %4031 = vmatpush1.msra.mxu0 0.0
        %4032 = vmatprep.subr.mxu0 0.0
        %4033 = vmatpush1.msra.mxu0 0.0
        %4034 = vmatprep.subr.mxu0 0.0
        %4035 = vmatpush1.msra.mxu0 0.0
        %4036 = vmatprep.subr.mxu0 0.0
        %4037 = vmatpush1.msra.mxu0 0.0
        %4038 = vmatprep.subr.mxu0 0.0
        %4039 = vmatpush1.msra.mxu0 0.0
        %4040 = vmatprep.subr.mxu0 0.0
        %4041 = vmatpush1.msra.mxu0 0.0
        %4042 = vmatprep.subr.mxu0 0.0
        %4043 = vmatpush1.msra.mxu0 0.0
        %4044 = vmatprep.subr.mxu0 0.0
        %4045 = vmatpush1.msra.mxu0 0.0
        %4046 = vmatprep.subr.mxu0 0.0
        %4047 = vmatpush1.msra.mxu0 0.0
        %4048 = vmatprep.subr.mxu0 0.0
        %4049 = vmatpush1.msra.mxu0 0.0
        %4050 = vmatprep.subr.mxu0 0.0
        %4051 = vmatpush1.msra.mxu0 0.0
        %4052 = vmatprep.subr.mxu0 0.0
        %4053 = vmatpush1.msra.mxu0 0.0
        %4054 = vmatprep.subr.mxu0 0.0
        %4055 = vmatpush1.msra.mxu0 0.0
        %4056 = vmatprep.subr.mxu0 0.0
        %4057 = vmatpush1.msra.mxu0 0.0
        %4058 = vmatprep.subr.mxu0 0.0
        %4059 = vmatpush1.msra.mxu0 0.0
        %4060 = vmatprep.subr.mxu0 0.0
        %4061 = vmatpush1.msra.mxu0 0.0
        %4062 = vmatprep.mubr.f32.mxu0 0.0
        %4063 = vmatmul.mubr.f32.gmra.mrb[0].mxu0 %v3809
        %v4064 = vpop.f32.mrb[0].mxu0
        %v4065 = vadd.f32 %v3791, %v4064
        %v4066 = vpop.f32.mrb[0].mxu0
        %v4067 = vadd.f32 %v3791, %v4066
        %4068 = vmatprep.mubr.f32.mxu0 0.0
        %4069 = vmatmul.mubr.f32.gmra.mrb[0].mxu0 %v3812
        %v4070 = vpop.f32.mrb[0].mxu0
        %v4071 = vadd.f32 %v3796, %v4070
        %v4072 = vpop.f32.mrb[0].mxu0
        %v4073 = vadd.f32 %v3796, %v4072
        %4074 = vmatprep.mubr.f32.mxu0 0.0
        %4075 = vmatmul.mubr.f32.gmra.mrb[0].mxu0 %v3815
        %v4076 = vpop.f32.mrb[0].mxu0
        %v4077 = vadd.f32 %v3801, %v4076
        %v4078 = vpop.f32.mrb[0].mxu0
        %v4079 = vadd.f32 %v3801, %v4078
        %4080 = vmatprep.mubr.f32.mxu0 0.0
        %4081 = vmatmul.mubr.f32.gmra.mrb[0].mxu0 %v3818
        %v4082 = vpop.f32.mrb[0].mxu0
        %v4083 = vadd.f32 %v3806, %v4082
        %v4084 = vpop.f32.mrb[0].mxu0
        %v4085 = vadd.f32 %v3806, %v4084
        %4086 = vdwg.mxu0
        %4087 = vmatprep.subr.mxu0 %v3721
        %4088 = vmatpush1.msra.mxu0 %v3720
        %4089 = vmatprep.subr.mxu0 %v3737
        %4090 = vmatpush1.msra.mxu0 %v3736
        %4091 = vmatprep.subr.mxu0 %v3753
        %4092 = vmatpush1.msra.mxu0 %v3752
        %4093 = vmatprep.subr.mxu0 %v3769
        %4094 = vmatpush1.msra.mxu0 %v3768
        %4095 = vmatprep.subr.mxu0 0.0
        %4096 = vmatpush1.msra.mxu0 0.0
        %4097 = vmatprep.subr.mxu0 0.0
        %4098 = vmatpush1.msra.mxu0 0.0
        %4099 = vmatprep.subr.mxu0 0.0
        %4100 = vmatpush1.msra.mxu0 0.0
        %4101 = vmatprep.subr.mxu0 0.0
        %4102 = vmatpush1.msra.mxu0 0.0
        %4103 = vmatprep.subr.mxu0 0.0
        %4104 = vmatpush1.msra.mxu0 0.0
        %4105 = vmatprep.subr.mxu0 0.0
        %4106 = vmatpush1.msra.mxu0 0.0
        %4107 = vmatprep.subr.mxu0 0.0
        %4108 = vmatpush1.msra.mxu0 0.0
        %4109 = vmatprep.subr.mxu0 0.0
        %4110 = vmatpush1.msra.mxu0 0.0
        %4111 = vmatprep.subr.mxu0 0.0
        %4112 = vmatpush1.msra.mxu0 0.0
        %4113 = vmatprep.subr.mxu0 0.0
        %4114 = vmatpush1.msra.mxu0 0.0
        %4115 = vmatprep.subr.mxu0 0.0
        %4116 = vmatpush1.msra.mxu0 0.0
        %4117 = vmatprep.subr.mxu0 0.0
        %4118 = vmatpush1.msra.mxu0 0.0
        %4119 = vmatprep.subr.mxu0 0.0
        %4120 = vmatpush1.msra.mxu0 0.0
        %4121 = vmatprep.subr.mxu0 0.0
        %4122 = vmatpush1.msra.mxu0 0.0
        %4123 = vmatprep.subr.mxu0 0.0
        %4124 = vmatpush1.msra.mxu0 0.0
        %4125 = vmatprep.subr.mxu0 0.0
        %4126 = vmatpush1.msra.mxu0 0.0
        %4127 = vmatprep.subr.mxu0 0.0
        %4128 = vmatpush1.msra.mxu0 0.0
        %4129 = vmatprep.subr.mxu0 0.0
        %4130 = vmatpush1.msra.mxu0 0.0
        %4131 = vmatprep.subr.mxu0 0.0
        %4132 = vmatpush1.msra.mxu0 0.0
        %4133 = vmatprep.subr.mxu0 0.0
        %4134 = vmatpush1.msra.mxu0 0.0
        %4135 = vmatprep.subr.mxu0 0.0
        %4136 = vmatpush1.msra.mxu0 0.0
        %4137 = vmatprep.subr.mxu0 0.0
        %4138 = vmatpush1.msra.mxu0 0.0
        %4139 = vmatprep.subr.mxu0 0.0
        %4140 = vmatpush1.msra.mxu0 0.0
        %4141 = vmatprep.subr.mxu0 0.0
        %4142 = vmatpush1.msra.mxu0 0.0
        %4143 = vmatprep.subr.mxu0 0.0
        %4144 = vmatpush1.msra.mxu0 0.0
        %4145 = vmatprep.subr.mxu0 0.0
        %4146 = vmatpush1.msra.mxu0 0.0
        %4147 = vmatprep.subr.mxu0 0.0
        %4148 = vmatpush1.msra.mxu0 0.0
        %4149 = vmatprep.subr.mxu0 0.0
        %4150 = vmatpush1.msra.mxu0 0.0
        %4151 = vmatprep.mubr.f32.mxu0 0.0
        %4152 = vmatmul.mubr.f32.gmra.mrb[0].mxu0 %v3809
        %v4153 = vpop.f32.mrb[0].mxu0
        %v4154 = vadd.f32 %v3791, %v4153
        %v4155 = vpop.f32.mrb[0].mxu0
        %v4156 = vadd.f32 %v3791, %v4155
        %4157 = vmatprep.mubr.f32.mxu0 0.0
        %4158 = vmatmul.mubr.f32.gmra.mrb[0].mxu0 %v3812
        %v4159 = vpop.f32.mrb[0].mxu0
        %v4160 = vadd.f32 %v3796, %v4159
        %v4161 = vpop.f32.mrb[0].mxu0
        %v4162 = vadd.f32 %v3796, %v4161
        %4163 = vmatprep.mubr.f32.mxu0 0.0
        %4164 = vmatmul.mubr.f32.gmra.mrb[0].mxu0 %v3815
        %v4165 = vpop.f32.mrb[0].mxu0
        %v4166 = vadd.f32 %v3801, %v4165
        %v4167 = vpop.f32.mrb[0].mxu0
        %v4168 = vadd.f32 %v3801, %v4167
        %4169 = vmatprep.mubr.f32.mxu0 0.0
        %4170 = vmatmul.mubr.f32.gmra.mrb[0].mxu0 %v3818
        %v4171 = vpop.f32.mrb[0].mxu0
        %v4172 = vadd.f32 %v3806, %v4171
        %v4173 = vpop.f32.mrb[0].mxu0
        %v4174 = vadd.f32 %v3806, %v4173
        %4175 = vdwg.mxu0
        %4176 = vmatprep.subr.mxu0 %v3723
        %4177 = vmatpush1.msra.mxu0 %v3722
        %4178 = vmatprep.subr.mxu0 %v3739
        %4179 = vmatpush1.msra.mxu0 %v3738
        %4180 = vmatprep.subr.mxu0 %v3755
        %4181 = vmatpush1.msra.mxu0 %v3754
        %4182 = vmatprep.subr.mxu0 %v3771
        %4183 = vmatpush1.msra.mxu0 %v3770
        %4184 = vmatprep.subr.mxu0 0.0
        %4185 = vmatpush1.msra.mxu0 0.0
        %4186 = vmatprep.subr.mxu0 0.0
        %4187 = vmatpush1.msra.mxu0 0.0
        %4188 = vmatprep.subr.mxu0 0.0
        %4189 = vmatpush1.msra.mxu0 0.0
        %4190 = vmatprep.subr.mxu0 0.0
        %4191 = vmatpush1.msra.mxu0 0.0
        %4192 = vmatprep.subr.mxu0 0.0
        %4193 = vmatpush1.msra.mxu0 0.0
        %4194 = vmatprep.subr.mxu0 0.0
        %4195 = vmatpush1.msra.mxu0 0.0
        %4196 = vmatprep.subr.mxu0 0.0
        %4197 = vmatpush1.msra.mxu0 0.0
        %4198 = vmatprep.subr.mxu0 0.0
        %4199 = vmatpush1.msra.mxu0 0.0
        %4200 = vmatprep.subr.mxu0 0.0
        %4201 = vmatpush1.msra.mxu0 0.0
        %4202 = vmatprep.subr.mxu0 0.0
        %4203 = vmatpush1.msra.mxu0 0.0
        %4204 = vmatprep.subr.mxu0 0.0
        %4205 = vmatpush1.msra.mxu0 0.0
        %4206 = vmatprep.subr.mxu0 0.0
        %4207 = vmatpush1.msra.mxu0 0.0
        %4208 = vmatprep.subr.mxu0 0.0
        %4209 = vmatpush1.msra.mxu0 0.0
        %4210 = vmatprep.subr.mxu0 0.0
        %4211 = vmatpush1.msra.mxu0 0.0
        %4212 = vmatprep.subr.mxu0 0.0
        %4213 = vmatpush1.msra.mxu0 0.0
        %4214 = vmatprep.subr.mxu0 0.0
        %4215 = vmatpush1.msra.mxu0 0.0
        %4216 = vmatprep.subr.mxu0 0.0
        %4217 = vmatpush1.msra.mxu0 0.0
        %4218 = vmatprep.subr.mxu0 0.0
        %4219 = vmatpush1.msra.mxu0 0.0
        %4220 = vmatprep.subr.mxu0 0.0
        %4221 = vmatpush1.msra.mxu0 0.0
        %4222 = vmatprep.subr.mxu0 0.0
        %4223 = vmatpush1.msra.mxu0 0.0
        %4224 = vmatprep.subr.mxu0 0.0
        %4225 = vmatpush1.msra.mxu0 0.0
        %4226 = vmatprep.subr.mxu0 0.0
        %4227 = vmatpush1.msra.mxu0 0.0
        %4228 = vmatprep.subr.mxu0 0.0
        %4229 = vmatpush1.msra.mxu0 0.0
        %4230 = vmatprep.subr.mxu0 0.0
        %4231 = vmatpush1.msra.mxu0 0.0
        %4232 = vmatprep.subr.mxu0 0.0
        %4233 = vmatpush1.msra.mxu0 0.0
        %4234 = vmatprep.subr.mxu0 0.0
        %4235 = vmatpush1.msra.mxu0 0.0
        %4236 = vmatprep.subr.mxu0 0.0
        %4237 = vmatpush1.msra.mxu0 0.0
        %4238 = vmatprep.subr.mxu0 0.0
        %4239 = vmatpush1.msra.mxu0 0.0
        %4240 = vmatprep.mubr.f32.mxu0 0.0
        %4241 = vmatmul.mubr.f32.gmra.mrb[0].mxu0 %v3809
        %v4242 = vpop.f32.mrb[0].mxu0
        %v4243 = vadd.f32 %v3791, %v4242
        %v4244 = vpop.f32.mrb[0].mxu0
        %v4245 = vadd.f32 %v3791, %v4244
        %4246 = vmatprep.mubr.f32.mxu0 0.0
        %4247 = vmatmul.mubr.f32.gmra.mrb[0].mxu0 %v3812
        %v4248 = vpop.f32.mrb[0].mxu0
        %v4249 = vadd.f32 %v3796, %v4248
        %v4250 = vpop.f32.mrb[0].mxu0
        %v4251 = vadd.f32 %v3796, %v4250
        %4252 = vmatprep.mubr.f32.mxu0 0.0
        %4253 = vmatmul.mubr.f32.gmra.mrb[0].mxu0 %v3815
        %v4254 = vpop.f32.mrb[0].mxu0
        %v4255 = vadd.f32 %v3801, %v4254
        %v4256 = vpop.f32.mrb[0].mxu0
        %v4257 = vadd.f32 %v3801, %v4256
        %4258 = vmatprep.mubr.f32.mxu0 0.0
        %4259 = vmatmul.mubr.f32.gmra.mrb[0].mxu0 %v3818
        %v4260 = vpop.f32.mrb[0].mxu0
        %v4261 = vadd.f32 %v3806, %v4260
        %v4262 = vpop.f32.mrb[0].mxu0
        %v4263 = vadd.f32 %v3806, %v4262
        %4264 = vdwg.mxu0
        %4265 = vmatprep.subr.mxu0 %v3725
        %4266 = vmatpush1.msra.mxu0 %v3724
        %4267 = vmatprep.subr.mxu0 %v3741
        %4268 = vmatpush1.msra.mxu0 %v3740
        %4269 = vmatprep.subr.mxu0 %v3757
        %4270 = vmatpush1.msra.mxu0 %v3756
        %4271 = vmatprep.subr.mxu0 %v3773
        %4272 = vmatpush1.msra.mxu0 %v3772
        %4273 = vmatprep.subr.mxu0 0.0
        %4274 = vmatpush1.msra.mxu0 0.0
        %4275 = vmatprep.subr.mxu0 0.0
        %4276 = vmatpush1.msra.mxu0 0.0
        %4277 = vmatprep.subr.mxu0 0.0
        %4278 = vmatpush1.msra.mxu0 0.0
        %4279 = vmatprep.subr.mxu0 0.0
        %4280 = vmatpush1.msra.mxu0 0.0
        %4281 = vmatprep.subr.mxu0 0.0
        %4282 = vmatpush1.msra.mxu0 0.0
        %4283 = vmatprep.subr.mxu0 0.0
        %4284 = vmatpush1.msra.mxu0 0.0
        %4285 = vmatprep.subr.mxu0 0.0
        %4286 = vmatpush1.msra.mxu0 0.0
        %4287 = vmatprep.subr.mxu0 0.0
        %4288 = vmatpush1.msra.mxu0 0.0
        %4289 = vmatprep.subr.mxu0 0.0
        %4290 = vmatpush1.msra.mxu0 0.0
        %4291 = vmatprep.subr.mxu0 0.0
        %4292 = vmatpush1.msra.mxu0 0.0
        %4293 = vmatprep.subr.mxu0 0.0
        %4294 = vmatpush1.msra.mxu0 0.0
        %4295 = vmatprep.subr.mxu0 0.0
        %4296 = vmatpush1.msra.mxu0 0.0
        %4297 = vmatprep.subr.mxu0 0.0
        %4298 = vmatpush1.msra.mxu0 0.0
        %4299 = vmatprep.subr.mxu0 0.0
        %4300 = vmatpush1.msra.mxu0 0.0
        %4301 = vmatprep.subr.mxu0 0.0
        %4302 = vmatpush1.msra.mxu0 0.0
        %4303 = vmatprep.subr.mxu0 0.0
        %4304 = vmatpush1.msra.mxu0 0.0
        %4305 = vmatprep.subr.mxu0 0.0
        %4306 = vmatpush1.msra.mxu0 0.0
        %4307 = vmatprep.subr.mxu0 0.0
        %4308 = vmatpush1.msra.mxu0 0.0
        %4309 = vmatprep.subr.mxu0 0.0
        %4310 = vmatpush1.msra.mxu0 0.0
        %4311 = vmatprep.subr.mxu0 0.0
        %4312 = vmatpush1.msra.mxu0 0.0
        %4313 = vmatprep.subr.mxu0 0.0
        %4314 = vmatpush1.msra.mxu0 0.0
        %4315 = vmatprep.subr.mxu0 0.0
        %4316 = vmatpush1.msra.mxu0 0.0
        %4317 = vmatprep.subr.mxu0 0.0
        %4318 = vmatpush1.msra.mxu0 0.0
        %4319 = vmatprep.subr.mxu0 0.0
        %4320 = vmatpush1.msra.mxu0 0.0
        %4321 = vmatprep.subr.mxu0 0.0
        %4322 = vmatpush1.msra.mxu0 0.0
        %4323 = vmatprep.subr.mxu0 0.0
        %4324 = vmatpush1.msra.mxu0 0.0
        %4325 = vmatprep.subr.mxu0 0.0
        %4326 = vmatpush1.msra.mxu0 0.0
        %4327 = vmatprep.subr.mxu0 0.0
        %4328 = vmatpush1.msra.mxu0 0.0
        %4329 = vmatprep.mubr.f32.mxu0 0.0
        %4330 = vmatmul.mubr.f32.gmra.mrb[0].mxu0 %v3809
        %v4331 = vpop.f32.mrb[0].mxu0
        %v4332 = vadd.f32 %v3791, %v4331
        %v4333 = vpop.f32.mrb[0].mxu0
        %v4334 = vadd.f32 %v3791, %v4333
        %4335 = vmatprep.mubr.f32.mxu0 0.0
        %4336 = vmatmul.mubr.f32.gmra.mrb[0].mxu0 %v3812
        %v4337 = vpop.f32.mrb[0].mxu0
        %v4338 = vadd.f32 %v3796, %v4337
        %v4339 = vpop.f32.mrb[0].mxu0
        %v4340 = vadd.f32 %v3796, %v4339
        %4341 = vmatprep.mubr.f32.mxu0 0.0
        %4342 = vmatmul.mubr.f32.gmra.mrb[0].mxu0 %v3815
        %v4343 = vpop.f32.mrb[0].mxu0
        %v4344 = vadd.f32 %v3801, %v4343
        %v4345 = vpop.f32.mrb[0].mxu0
        %v4346 = vadd.f32 %v3801, %v4345
        %4347 = vmatprep.mubr.f32.mxu0 0.0
        %4348 = vmatmul.mubr.f32.gmra.mrb[0].mxu0 %v3818
        %v4349 = vpop.f32.mrb[0].mxu0
        %v4350 = vadd.f32 %v3806, %v4349
        %v4351 = vpop.f32.mrb[0].mxu0
        %v4352 = vadd.f32 %v3806, %v4351
        %4353 = vdwg.mxu0
        %4354 = vmatprep.subr.mxu0 %v3727
        %4355 = vmatpush1.msra.mxu0 %v3726
        %4356 = vmatprep.subr.mxu0 %v3743
        %4357 = vmatpush1.msra.mxu0 %v3742
        %4358 = vmatprep.subr.mxu0 %v3759
        %4359 = vmatpush1.msra.mxu0 %v3758
        %4360 = vmatprep.subr.mxu0 %v3775
        %4361 = vmatpush1.msra.mxu0 %v3774
        %4362 = vmatprep.subr.mxu0 0.0
        %4363 = vmatpush1.msra.mxu0 0.0
        %4364 = vmatprep.subr.mxu0 0.0
        %4365 = vmatpush1.msra.mxu0 0.0
        %4366 = vmatprep.subr.mxu0 0.0
        %4367 = vmatpush1.msra.mxu0 0.0
        %4368 = vmatprep.subr.mxu0 0.0
        %4369 = vmatpush1.msra.mxu0 0.0
        %4370 = vmatprep.subr.mxu0 0.0
        %4371 = vmatpush1.msra.mxu0 0.0
        %4372 = vmatprep.subr.mxu0 0.0
        %4373 = vmatpush1.msra.mxu0 0.0
        %4374 = vmatprep.subr.mxu0 0.0
        %4375 = vmatpush1.msra.mxu0 0.0
        %4376 = vmatprep.subr.mxu0 0.0
        %4377 = vmatpush1.msra.mxu0 0.0
        %4378 = vmatprep.subr.mxu0 0.0
        %4379 = vmatpush1.msra.mxu0 0.0
        %4380 = vmatprep.subr.mxu0 0.0
        %4381 = vmatpush1.msra.mxu0 0.0
        %4382 = vmatprep.subr.mxu0 0.0
        %4383 = vmatpush1.msra.mxu0 0.0
        %4384 = vmatprep.subr.mxu0 0.0
        %4385 = vmatpush1.msra.mxu0 0.0
        %4386 = vmatprep.subr.mxu0 0.0
        %4387 = vmatpush1.msra.mxu0 0.0
        %4388 = vmatprep.subr.mxu0 0.0
        %4389 = vmatpush1.msra.mxu0 0.0
        %4390 = vmatprep.subr.mxu0 0.0
        %4391 = vmatpush1.msra.mxu0 0.0
        %4392 = vmatprep.subr.mxu0 0.0
        %4393 = vmatpush1.msra.mxu0 0.0
        %4394 = vmatprep.subr.mxu0 0.0
        %4395 = vmatpush1.msra.mxu0 0.0
        %4396 = vmatprep.subr.mxu0 0.0
        %4397 = vmatpush1.msra.mxu0 0.0
        %4398 = vmatprep.subr.mxu0 0.0
        %4399 = vmatpush1.msra.mxu0 0.0
        %4400 = vmatprep.subr.mxu0 0.0
        %4401 = vmatpush1.msra.mxu0 0.0
        %4402 = vmatprep.subr.mxu0 0.0
        %4403 = vmatpush1.msra.mxu0 0.0
        %4404 = vmatprep.subr.mxu0 0.0
        %4405 = vmatpush1.msra.mxu0 0.0
        %4406 = vmatprep.subr.mxu0 0.0
        %4407 = vmatpush1.msra.mxu0 0.0
        %4408 = vmatprep.subr.mxu0 0.0
        %4409 = vmatpush1.msra.mxu0 0.0
        %4410 = vmatprep.subr.mxu0 0.0
        %4411 = vmatpush1.msra.mxu0 0.0
        %4412 = vmatprep.subr.mxu0 0.0
        %4413 = vmatpush1.msra.mxu0 0.0
        %4414 = vmatprep.subr.mxu0 0.0
        %4415 = vmatpush1.msra.mxu0 0.0
        %4416 = vmatprep.subr.mxu0 0.0
        %4417 = vmatpush1.msra.mxu0 0.0
        %4418 = vmatprep.mubr.f32.mxu0 0.0
        %4419 = vmatmul.mubr.f32.gmra.mrb[0].mxu0 %v3809
        %v4420 = vpop.f32.mrb[0].mxu0
        %v4421 = vadd.f32 %v3791, %v4420
        %v4422 = vpop.f32.mrb[0].mxu0
        %v4423 = vadd.f32 %v3791, %v4422
        %4424 = vmatprep.mubr.f32.mxu0 0.0
        %4425 = vmatmul.mubr.f32.gmra.mrb[0].mxu0 %v3812
        %v4426 = vpop.f32.mrb[0].mxu0
        %v4427 = vadd.f32 %v3796, %v4426
        %v4428 = vpop.f32.mrb[0].mxu0
        %v4429 = vadd.f32 %v3796, %v4428
        %4430 = vmatprep.mubr.f32.mxu0 0.0
        %4431 = vmatmul.mubr.f32.gmra.mrb[0].mxu0 %v3815
        %v4432 = vpop.f32.mrb[0].mxu0
        %v4433 = vadd.f32 %v3801, %v4432
        %v4434 = vpop.f32.mrb[0].mxu0
        %v4435 = vadd.f32 %v3801, %v4434
        %4436 = vmatprep.mubr.f32.mxu0 0.0
        %4437 = vmatmul.mubr.f32.gmra.mrb[0].mxu0 %v3818
        %v4438 = vpop.f32.mrb[0].mxu0
        %v4439 = vadd.f32 %v3806, %v4438
        %v4440 = vpop.f32.mrb[0].mxu0
        %v4441 = vadd.f32 %v3806, %v4440
        %4442 = vdwg.mxu0
        %4443 = vmatprep.subr.mxu0 %v3729
        %4444 = vmatpush1.msra.mxu0 %v3728
        %4445 = vmatprep.subr.mxu0 %v3745
        %4446 = vmatpush1.msra.mxu0 %v3744
        %4447 = vmatprep.subr.mxu0 %v3761
        %4448 = vmatpush1.msra.mxu0 %v3760
        %4449 = vmatprep.subr.mxu0 %v3777
        %4450 = vmatpush1.msra.mxu0 %v3776
        %4451 = vmatprep.subr.mxu0 0.0
        %4452 = vmatpush1.msra.mxu0 0.0
        %4453 = vmatprep.subr.mxu0 0.0
        %4454 = vmatpush1.msra.mxu0 0.0
        %4455 = vmatprep.subr.mxu0 0.0
        %4456 = vmatpush1.msra.mxu0 0.0
        %4457 = vmatprep.subr.mxu0 0.0
        %4458 = vmatpush1.msra.mxu0 0.0
        %4459 = vmatprep.subr.mxu0 0.0
        %4460 = vmatpush1.msra.mxu0 0.0
        %4461 = vmatprep.subr.mxu0 0.0
        %4462 = vmatpush1.msra.mxu0 0.0
        %4463 = vmatprep.subr.mxu0 0.0
        %4464 = vmatpush1.msra.mxu0 0.0
        %4465 = vmatprep.subr.mxu0 0.0
        %4466 = vmatpush1.msra.mxu0 0.0
        %4467 = vmatprep.subr.mxu0 0.0
        %4468 = vmatpush1.msra.mxu0 0.0
        %4469 = vmatprep.subr.mxu0 0.0
        %4470 = vmatpush1.msra.mxu0 0.0
        %4471 = vmatprep.subr.mxu0 0.0
        %4472 = vmatpush1.msra.mxu0 0.0
        %4473 = vmatprep.subr.mxu0 0.0
        %4474 = vmatpush1.msra.mxu0 0.0
        %4475 = vmatprep.subr.mxu0 0.0
        %4476 = vmatpush1.msra.mxu0 0.0
        %4477 = vmatprep.subr.mxu0 0.0
        %4478 = vmatpush1.msra.mxu0 0.0
        %4479 = vmatprep.subr.mxu0 0.0
        %4480 = vmatpush1.msra.mxu0 0.0
        %4481 = vmatprep.subr.mxu0 0.0
        %4482 = vmatpush1.msra.mxu0 0.0
        %4483 = vmatprep.subr.mxu0 0.0
        %4484 = vmatpush1.msra.mxu0 0.0
        %4485 = vmatprep.subr.mxu0 0.0
        %4486 = vmatpush1.msra.mxu0 0.0
        %4487 = vmatprep.subr.mxu0 0.0
        %4488 = vmatpush1.msra.mxu0 0.0
        %4489 = vmatprep.subr.mxu0 0.0
        %4490 = vmatpush1.msra.mxu0 0.0
        %4491 = vmatprep.subr.mxu0 0.0
        %4492 = vmatpush1.msra.mxu0 0.0
        %4493 = vmatprep.subr.mxu0 0.0
        %4494 = vmatpush1.msra.mxu0 0.0
        %4495 = vmatprep.subr.mxu0 0.0
        %4496 = vmatpush1.msra.mxu0 0.0
        %4497 = vmatprep.subr.mxu0 0.0
        %4498 = vmatpush1.msra.mxu0 0.0
        %4499 = vmatprep.subr.mxu0 0.0
        %4500 = vmatpush1.msra.mxu0 0.0
        %4501 = vmatprep.subr.mxu0 0.0
        %4502 = vmatpush1.msra.mxu0 0.0
        %4503 = vmatprep.subr.mxu0 0.0
        %4504 = vmatpush1.msra.mxu0 0.0
        %4505 = vmatprep.subr.mxu0 0.0
        %4506 = vmatpush1.msra.mxu0 0.0
        %4507 = vmatprep.mubr.f32.mxu0 0.0
        %4508 = vmatmul.mubr.f32.gmra.mrb[0].mxu0 %v3809
        %v4509 = vpop.f32.mrb[0].mxu0
        %v4510 = vadd.f32 %v3791, %v4509
        %v4511 = vpop.f32.mrb[0].mxu0
        %v4512 = vadd.f32 %v3791, %v4511
        %4513 = vmatprep.mubr.f32.mxu0 0.0
        %4514 = vmatmul.mubr.f32.gmra.mrb[0].mxu0 %v3812
        %v4515 = vpop.f32.mrb[0].mxu0
        %v4516 = vadd.f32 %v3796, %v4515
        %v4517 = vpop.f32.mrb[0].mxu0
        %v4518 = vadd.f32 %v3796, %v4517
        %4519 = vmatprep.mubr.f32.mxu0 0.0
        %4520 = vmatmul.mubr.f32.gmra.mrb[0].mxu0 %v3815
        %v4521 = vpop.f32.mrb[0].mxu0
        %v4522 = vadd.f32 %v3801, %v4521
        %v4523 = vpop.f32.mrb[0].mxu0
        %v4524 = vadd.f32 %v3801, %v4523
        %4525 = vmatprep.mubr.f32.mxu0 0.0
        %4526 = vmatmul.mubr.f32.gmra.mrb[0].mxu0 %v3818
        %v4527 = vpop.f32.mrb[0].mxu0
        %v4528 = vadd.f32 %v3806, %v4527
        %v4529 = vpop.f32.mrb[0].mxu0
        %v4530 = vadd.f32 %v3806, %v4529
        %4531 = vdwg.mxu0
        %v4532 = vtanh.pop %v3887
        %v4533 = vtanh.pop %v3889
        %v4534 = vtanh.pop %v3976
        %v4535 = vtanh.pop %v3978
        %v4536 = vtanh.pop %v4065
        %v4537 = vtanh.pop %v4067
        %v4538 = vtanh.pop %v4154
        %v4539 = vtanh.pop %v4156
        %v4540 = vtanh.pop %v4243
        %v4541 = vtanh.pop %v4245
        %v4542 = vtanh.pop %v4332
        %v4543 = vtanh.pop %v4334
        %v4544 = vtanh.pop %v4421
        %v4545 = vtanh.pop %v4423
        %v4546 = vtanh.pop %v4510
        %v4547 = vtanh.pop %v4512
        %v4548 = vtanh.pop %v3893
        %v4549 = vtanh.pop %v3895
        %v4550 = vtanh.pop %v3982
        %v4551 = vtanh.pop %v3984
        %v4552 = vtanh.pop %v4071
        %v4553 = vtanh.pop %v4073
        %v4554 = vtanh.pop %v4160
        %v4555 = vtanh.pop %v4162
        %v4556 = vtanh.pop %v4249
        %v4557 = vtanh.pop %v4251
        %v4558 = vtanh.pop %v4338
        %v4559 = vtanh.pop %v4340
        %v4560 = vtanh.pop %v4427
        %v4561 = vtanh.pop %v4429
        %v4562 = vtanh.pop %v4516
        %v4563 = vtanh.pop %v4518
        %v4564 = vtanh.pop %v3899
        %v4565 = vtanh.pop %v3901
        %v4566 = vtanh.pop %v3988
        %v4567 = vtanh.pop %v3990
        %v4568 = vtanh.pop %v4077
        %v4569 = vtanh.pop %v4079
        %v4570 = vtanh.pop %v4166
        %v4571 = vtanh.pop %v4168
        %v4572 = vtanh.pop %v4255
        %v4573 = vtanh.pop %v4257
        %v4574 = vtanh.pop %v4344
        %v4575 = vtanh.pop %v4346
        %v4576 = vtanh.pop %v4433
        %v4577 = vtanh.pop %v4435
        %v4578 = vtanh.pop %v4522
        %v4579 = vtanh.pop %v4524
        %v4580 = vtanh.pop %v3905
        %v4581 = vtanh.pop %v3907
        %v4582 = vtanh.pop %v3994
        %v4583 = vtanh.pop %v3996
        %v4584 = vtanh.pop %v4083
        %v4585 = vtanh.pop %v4085
        %v4586 = vtanh.pop %v4172
        %v4587 = vtanh.pop %v4174
        %v4588 = vtanh.pop %v4261
        %v4589 = vtanh.pop %v4263
        %v4590 = vtanh.pop %v4350
        %v4591 = vtanh.pop %v4352
        %v4592 = vtanh.pop %v4439
        %v4593 = vtanh.pop %v4441
        %v4594 = vtanh.pop %v4528
        %v4595 = vtanh.pop %v4530
        %v4596 = vadd.f32 %v4532, %v2896
        %v4597 = vadd.f32 %v4533, %v2897
        %v4598 = vadd.f32 %v4534, %v2898
        %v4599 = vadd.f32 %v4535, %v2899
        %v4600 = vadd.f32 %v4536, %v2900
        %v4601 = vadd.f32 %v4537, %v2901
        %v4602 = vadd.f32 %v4538, %v2902
        %v4603 = vadd.f32 %v4539, %v2903
        %v4604 = vadd.f32 %v4540, %v2904
        %v4605 = vadd.f32 %v4541, %v2905
        %v4606 = vadd.f32 %v4542, %v2906
        %v4607 = vadd.f32 %v4543, %v2907
        %v4608 = vadd.f32 %v4544, %v2908
        %v4609 = vadd.f32 %v4545, %v2909
        %v4610 = vadd.f32 %v4546, %v2910
        %v4611 = vadd.f32 %v4547, %v2911
        %v4612 = vadd.f32 %v4548, %v2912
        %v4613 = vadd.f32 %v4549, %v2913
        %v4614 = vadd.f32 %v4550, %v2914
        %v4615 = vadd.f32 %v4551, %v2915
        %v4616 = vadd.f32 %v4552, %v2916
        %v4617 = vadd.f32 %v4553, %v2917
        %v4618 = vadd.f32 %v4554, %v2918
        %v4619 = vadd.f32 %v4555, %v2919
        %v4620 = vadd.f32 %v4556, %v2920
        %v4621 = vadd.f32 %v4557, %v2921
        %v4622 = vadd.f32 %v4558, %v2922
        %v4623 = vadd.f32 %v4559, %v2923
        %v4624 = vadd.f32 %v4560, %v2924
        %v4625 = vadd.f32 %v4561, %v2925
        %v4626 = vadd.f32 %v4562, %v2926
        %v4627 = vadd.f32 %v4563, %v2927
        %v4628 = vadd.f32 %v4564, %v2928
        %v4629 = vadd.f32 %v4565, %v2929
        %v4630 = vadd.f32 %v4566, %v2930
        %v4631 = vadd.f32 %v4567, %v2931
        %v4632 = vadd.f32 %v4568, %v2932
        %v4633 = vadd.f32 %v4569, %v2933
        %v4634 = vadd.f32 %v4570, %v2934
        %v4635 = vadd.f32 %v4571, %v2935
        %v4636 = vadd.f32 %v4572, %v2936
        %v4637 = vadd.f32 %v4573, %v2937
        %v4638 = vadd.f32 %v4574, %v2938
        %v4639 = vadd.f32 %v4575, %v2939
        %v4640 = vadd.f32 %v4576, %v2940
        %v4641 = vadd.f32 %v4577, %v2941
        %v4642 = vadd.f32 %v4578, %v2942
        %v4643 = vadd.f32 %v4579, %v2943
        %v4644 = vadd.f32 %v4580, %v2944
        %v4645 = vadd.f32 %v4581, %v2945
        %v4646 = vadd.f32 %v4582, %v2946
        %v4647 = vadd.f32 %v4583, %v2947
        %v4648 = vadd.f32 %v4584, %v2948
        %v4649 = vadd.f32 %v4585, %v2949
        %v4650 = vadd.f32 %v4586, %v2950
        %v4651 = vadd.f32 %v4587, %v2951
        %v4652 = vadd.f32 %v4588, %v2952
        %v4653 = vadd.f32 %v4589, %v2953
        %v4654 = vadd.f32 %v4590, %v2954
        %v4655 = vadd.f32 %v4591, %v2955
        %v4656 = vadd.f32 %v4592, %v2956
        %v4657 = vadd.f32 %v4593, %v2957
        %v4658 = vadd.f32 %v4594, %v2958
        %v4659 = vadd.f32 %v4595, %v2959
        %s4660 = scalar_lea.vmem %s3, 64
        %v4661 = vld [vmem:[%s4660] sm:$0xff]
        %v4662 = vld [vmem:[%s4660 + $0x8] sm:$0xff]
        %v4663 = vld [vmem:[%s4660 + $0x10] sm:$0xff]
        %v4664 = vld [vmem:[%s4660 + $0x18] sm:$0xff]
        %s4665 = scalar_lea.vmem %s4, 64
        %v4666 = vld [vmem:[%s4665] sm:$0xff]
        %v4667 = vld [vmem:[%s4665 + $0x8] sm:$0xff]
        %v4668 = vld [vmem:[%s4665 + $0x10] sm:$0xff]
        %v4669 = vld [vmem:[%s4665 + $0x18] sm:$0xff]
        %4671 = vset.pattern.permute.xlu0 0
        %4672 = vperm.xlu0 %4671, %v4666
        %v4673 = vpop.permute.xlu0 %4672
        %4676 = vset.pattern.permute.xlu0 0
        %4677 = vperm.xlu0 %4676, %v4667
        %v4678 = vpop.permute.xlu0 %4677
        %4681 = vset.pattern.permute.xlu0 0
        %4682 = vperm.xlu0 %4681, %v4668
        %v4683 = vpop.permute.xlu0 %4682
        %4686 = vset.pattern.permute.xlu0 0
        %4687 = vperm.xlu0 %4686, %v4669
        %v4688 = vpop.permute.xlu0 %4687
        %v4691 = vsel %vm1291, %v4661, 0
        %v4694 = vsel %vm1291, %v4662, 0
        %v4697 = vsel %vm1291, %v4663, 0
        %v4700 = vsel %vm1291, %v4664, 0
        %4702 = vmatprep.subr.mxu0 %v4597
        %4703 = vmatpush1.msra.mxu0 %v4596
        %4704 = vmatprep.subr.mxu0 %v4613
        %4705 = vmatpush1.msra.mxu0 %v4612
        %4706 = vmatprep.subr.mxu0 %v4629
        %4707 = vmatpush1.msra.mxu0 %v4628
        %4708 = vmatprep.subr.mxu0 %v4645
        %4709 = vmatpush1.msra.mxu0 %v4644
        %4710 = vmatprep.subr.mxu0 0.0
        %4711 = vmatpush1.msra.mxu0 0.0
        %4712 = vmatprep.subr.mxu0 0.0
        %4713 = vmatpush1.msra.mxu0 0.0
        %4714 = vmatprep.subr.mxu0 0.0
        %4715 = vmatpush1.msra.mxu0 0.0
        %4716 = vmatprep.subr.mxu0 0.0
        %4717 = vmatpush1.msra.mxu0 0.0
        %4718 = vmatprep.subr.mxu0 0.0
        %4719 = vmatpush1.msra.mxu0 0.0
        %4720 = vmatprep.subr.mxu0 0.0
        %4721 = vmatpush1.msra.mxu0 0.0
        %4722 = vmatprep.subr.mxu0 0.0
        %4723 = vmatpush1.msra.mxu0 0.0
        %4724 = vmatprep.subr.mxu0 0.0
        %4725 = vmatpush1.msra.mxu0 0.0
        %4726 = vmatprep.subr.mxu0 0.0
        %4727 = vmatpush1.msra.mxu0 0.0
        %4728 = vmatprep.subr.mxu0 0.0
        %4729 = vmatpush1.msra.mxu0 0.0
        %4730 = vmatprep.subr.mxu0 0.0
        %4731 = vmatpush1.msra.mxu0 0.0
        %4732 = vmatprep.subr.mxu0 0.0
        %4733 = vmatpush1.msra.mxu0 0.0
        %4734 = vmatprep.subr.mxu0 0.0
        %4735 = vmatpush1.msra.mxu0 0.0
        %4736 = vmatprep.subr.mxu0 0.0
        %4737 = vmatpush1.msra.mxu0 0.0
        %4738 = vmatprep.subr.mxu0 0.0
        %4739 = vmatpush1.msra.mxu0 0.0
        %4740 = vmatprep.subr.mxu0 0.0
        %4741 = vmatpush1.msra.mxu0 0.0
        %4742 = vmatprep.subr.mxu0 0.0
        %4743 = vmatpush1.msra.mxu0 0.0
        %4744 = vmatprep.subr.mxu0 0.0
        %4745 = vmatpush1.msra.mxu0 0.0
        %4746 = vmatprep.subr.mxu0 0.0
        %4747 = vmatpush1.msra.mxu0 0.0
        %4748 = vmatprep.subr.mxu0 0.0
        %4749 = vmatpush1.msra.mxu0 0.0
        %4750 = vmatprep.subr.mxu0 0.0
        %4751 = vmatpush1.msra.mxu0 0.0
        %4752 = vmatprep.subr.mxu0 0.0
        %4753 = vmatpush1.msra.mxu0 0.0
        %4754 = vmatprep.subr.mxu0 0.0
        %4755 = vmatpush1.msra.mxu0 0.0
        %4756 = vmatprep.subr.mxu0 0.0
        %4757 = vmatpush1.msra.mxu0 0.0
        %4758 = vmatprep.subr.mxu0 0.0
        %4759 = vmatpush1.msra.mxu0 0.0
        %4760 = vmatprep.subr.mxu0 0.0
        %4761 = vmatpush1.msra.mxu0 0.0
        %4762 = vmatprep.subr.mxu0 0.0
        %4763 = vmatpush1.msra.mxu0 0.0
        %4764 = vmatprep.subr.mxu0 0.0
        %4765 = vmatpush1.msra.mxu0 0.0
        %4766 = vmatprep.mubr.f32.mxu0 0.0
        %4767 = vmatmul.mubr.f32.gmra.mrb[0].mxu0 %v4691
        %v4768 = vpop.f32.mrb[0].mxu0
        %v4769 = vadd.f32 %v4673, %v4768
        %v4770 = vpop.f32.mrb[0].mxu0
        %v4771 = vadd.f32 %v4673, %v4770
        %4772 = vmatprep.mubr.f32.mxu0 0.0
        %4773 = vmatmul.mubr.f32.gmra.mrb[0].mxu0 %v4694
        %v4774 = vpop.f32.mrb[0].mxu0
        %v4775 = vadd.f32 %v4678, %v4774
        %v4776 = vpop.f32.mrb[0].mxu0
        %v4777 = vadd.f32 %v4678, %v4776
        %4778 = vmatprep.mubr.f32.mxu0 0.0
        %4779 = vmatmul.mubr.f32.gmra.mrb[0].mxu0 %v4697
        %v4780 = vpop.f32.mrb[0].mxu0
        %v4781 = vadd.f32 %v4683, %v4780
        %v4782 = vpop.f32.mrb[0].mxu0
        %v4783 = vadd.f32 %v4683, %v4782
        %4784 = vmatprep.mubr.f32.mxu0 0.0
        %4785 = vmatmul.mubr.f32.gmra.mrb[0].mxu0 %v4700
        %v4786 = vpop.f32.mrb[0].mxu0
        %v4787 = vadd.f32 %v4688, %v4786
        %v4788 = vpop.f32.mrb[0].mxu0
        %v4789 = vadd.f32 %v4688, %v4788
        %4790 = vdwg.mxu0
        %4791 = vmatprep.subr.mxu0 %v4599
        %4792 = vmatpush1.msra.mxu0 %v4598
        %4793 = vmatprep.subr.mxu0 %v4615
        %4794 = vmatpush1.msra.mxu0 %v4614
        %4795 = vmatprep.subr.mxu0 %v4631
        %4796 = vmatpush1.msra.mxu0 %v4630
        %4797 = vmatprep.subr.mxu0 %v4647
        %4798 = vmatpush1.msra.mxu0 %v4646
        %4799 = vmatprep.subr.mxu0 0.0
        %4800 = vmatpush1.msra.mxu0 0.0
        %4801 = vmatprep.subr.mxu0 0.0
        %4802 = vmatpush1.msra.mxu0 0.0
        %4803 = vmatprep.subr.mxu0 0.0
        %4804 = vmatpush1.msra.mxu0 0.0
        %4805 = vmatprep.subr.mxu0 0.0
        %4806 = vmatpush1.msra.mxu0 0.0
        %4807 = vmatprep.subr.mxu0 0.0
        %4808 = vmatpush1.msra.mxu0 0.0
        %4809 = vmatprep.subr.mxu0 0.0
        %4810 = vmatpush1.msra.mxu0 0.0
        %4811 = vmatprep.subr.mxu0 0.0
        %4812 = vmatpush1.msra.mxu0 0.0
        %4813 = vmatprep.subr.mxu0 0.0
        %4814 = vmatpush1.msra.mxu0 0.0
        %4815 = vmatprep.subr.mxu0 0.0
        %4816 = vmatpush1.msra.mxu0 0.0
        %4817 = vmatprep.subr.mxu0 0.0
        %4818 = vmatpush1.msra.mxu0 0.0
        %4819 = vmatprep.subr.mxu0 0.0
        %4820 = vmatpush1.msra.mxu0 0.0
        %4821 = vmatprep.subr.mxu0 0.0
        %4822 = vmatpush1.msra.mxu0 0.0
        %4823 = vmatprep.subr.mxu0 0.0
        %4824 = vmatpush1.msra.mxu0 0.0
        %4825 = vmatprep.subr.mxu0 0.0
        %4826 = vmatpush1.msra.mxu0 0.0
        %4827 = vmatprep.subr.mxu0 0.0
        %4828 = vmatpush1.msra.mxu0 0.0
        %4829 = vmatprep.subr.mxu0 0.0
        %4830 = vmatpush1.msra.mxu0 0.0
        %4831 = vmatprep.subr.mxu0 0.0
        %4832 = vmatpush1.msra.mxu0 0.0
        %4833 = vmatprep.subr.mxu0 0.0
        %4834 = vmatpush1.msra.mxu0 0.0
        %4835 = vmatprep.subr.mxu0 0.0
        %4836 = vmatpush1.msra.mxu0 0.0
        %4837 = vmatprep.subr.mxu0 0.0
        %4838 = vmatpush1.msra.mxu0 0.0
        %4839 = vmatprep.subr.mxu0 0.0
        %4840 = vmatpush1.msra.mxu0 0.0
        %4841 = vmatprep.subr.mxu0 0.0
        %4842 = vmatpush1.msra.mxu0 0.0
        %4843 = vmatprep.subr.mxu0 0.0
        %4844 = vmatpush1.msra.mxu0 0.0
        %4845 = vmatprep.subr.mxu0 0.0
        %4846 = vmatpush1.msra.mxu0 0.0
        %4847 = vmatprep.subr.mxu0 0.0
        %4848 = vmatpush1.msra.mxu0 0.0
        %4849 = vmatprep.subr.mxu0 0.0
        %4850 = vmatpush1.msra.mxu0 0.0
        %4851 = vmatprep.subr.mxu0 0.0
        %4852 = vmatpush1.msra.mxu0 0.0
        %4853 = vmatprep.subr.mxu0 0.0
        %4854 = vmatpush1.msra.mxu0 0.0
        %4855 = vmatprep.mubr.f32.mxu0 0.0
        %4856 = vmatmul.mubr.f32.gmra.mrb[0].mxu0 %v4691
        %v4857 = vpop.f32.mrb[0].mxu0
        %v4858 = vadd.f32 %v4673, %v4857
        %v4859 = vpop.f32.mrb[0].mxu0
        %v4860 = vadd.f32 %v4673, %v4859
        %4861 = vmatprep.mubr.f32.mxu0 0.0
        %4862 = vmatmul.mubr.f32.gmra.mrb[0].mxu0 %v4694
        %v4863 = vpop.f32.mrb[0].mxu0
        %v4864 = vadd.f32 %v4678, %v4863
        %v4865 = vpop.f32.mrb[0].mxu0
        %v4866 = vadd.f32 %v4678, %v4865
        %4867 = vmatprep.mubr.f32.mxu0 0.0
        %4868 = vmatmul.mubr.f32.gmra.mrb[0].mxu0 %v4697
        %v4869 = vpop.f32.mrb[0].mxu0
        %v4870 = vadd.f32 %v4683, %v4869
        %v4871 = vpop.f32.mrb[0].mxu0
        %v4872 = vadd.f32 %v4683, %v4871
        %4873 = vmatprep.mubr.f32.mxu0 0.0
        %4874 = vmatmul.mubr.f32.gmra.mrb[0].mxu0 %v4700
        %v4875 = vpop.f32.mrb[0].mxu0
        %v4876 = vadd.f32 %v4688, %v4875
        %v4877 = vpop.f32.mrb[0].mxu0
        %v4878 = vadd.f32 %v4688, %v4877
        %4879 = vdwg.mxu0
        %4880 = vmatprep.subr.mxu0 %v4601
        %4881 = vmatpush1.msra.mxu0 %v4600
        %4882 = vmatprep.subr.mxu0 %v4617
        %4883 = vmatpush1.msra.mxu0 %v4616
        %4884 = vmatprep.subr.mxu0 %v4633
        %4885 = vmatpush1.msra.mxu0 %v4632
        %4886 = vmatprep.subr.mxu0 %v4649
        %4887 = vmatpush1.msra.mxu0 %v4648
        %4888 = vmatprep.subr.mxu0 0.0
        %4889 = vmatpush1.msra.mxu0 0.0
        %4890 = vmatprep.subr.mxu0 0.0
        %4891 = vmatpush1.msra.mxu0 0.0
        %4892 = vmatprep.subr.mxu0 0.0
        %4893 = vmatpush1.msra.mxu0 0.0
        %4894 = vmatprep.subr.mxu0 0.0
        %4895 = vmatpush1.msra.mxu0 0.0
        %4896 = vmatprep.subr.mxu0 0.0
        %4897 = vmatpush1.msra.mxu0 0.0
        %4898 = vmatprep.subr.mxu0 0.0
        %4899 = vmatpush1.msra.mxu0 0.0
        %4900 = vmatprep.subr.mxu0 0.0
        %4901 = vmatpush1.msra.mxu0 0.0
        %4902 = vmatprep.subr.mxu0 0.0
        %4903 = vmatpush1.msra.mxu0 0.0
        %4904 = vmatprep.subr.mxu0 0.0
        %4905 = vmatpush1.msra.mxu0 0.0
        %4906 = vmatprep.subr.mxu0 0.0
        %4907 = vmatpush1.msra.mxu0 0.0
        %4908 = vmatprep.subr.mxu0 0.0
        %4909 = vmatpush1.msra.mxu0 0.0
        %4910 = vmatprep.subr.mxu0 0.0
        %4911 = vmatpush1.msra.mxu0 0.0
        %4912 = vmatprep.subr.mxu0 0.0
        %4913 = vmatpush1.msra.mxu0 0.0
        %4914 = vmatprep.subr.mxu0 0.0
        %4915 = vmatpush1.msra.mxu0 0.0
        %4916 = vmatprep.subr.mxu0 0.0
        %4917 = vmatpush1.msra.mxu0 0.0
        %4918 = vmatprep.subr.mxu0 0.0
        %4919 = vmatpush1.msra.mxu0 0.0
        %4920 = vmatprep.subr.mxu0 0.0
        %4921 = vmatpush1.msra.mxu0 0.0
        %4922 = vmatprep.subr.mxu0 0.0
        %4923 = vmatpush1.msra.mxu0 0.0
        %4924 = vmatprep.subr.mxu0 0.0
        %4925 = vmatpush1.msra.mxu0 0.0
        %4926 = vmatprep.subr.mxu0 0.0
        %4927 = vmatpush1.msra.mxu0 0.0
        %4928 = vmatprep.subr.mxu0 0.0
        %4929 = vmatpush1.msra.mxu0 0.0
        %4930 = vmatprep.subr.mxu0 0.0
        %4931 = vmatpush1.msra.mxu0 0.0
        %4932 = vmatprep.subr.mxu0 0.0
        %4933 = vmatpush1.msra.mxu0 0.0
        %4934 = vmatprep.subr.mxu0 0.0
        %4935 = vmatpush1.msra.mxu0 0.0
        %4936 = vmatprep.subr.mxu0 0.0
        %4937 = vmatpush1.msra.mxu0 0.0
        %4938 = vmatprep.subr.mxu0 0.0
        %4939 = vmatpush1.msra.mxu0 0.0
        %4940 = vmatprep.subr.mxu0 0.0
        %4941 = vmatpush1.msra.mxu0 0.0
        %4942 = vmatprep.subr.mxu0 0.0
        %4943 = vmatpush1.msra.mxu0 0.0
        %4944 = vmatprep.mubr.f32.mxu0 0.0
        %4945 = vmatmul.mubr.f32.gmra.mrb[0].mxu0 %v4691
        %v4946 = vpop.f32.mrb[0].mxu0
        %v4947 = vadd.f32 %v4673, %v4946
        %v4948 = vpop.f32.mrb[0].mxu0
        %v4949 = vadd.f32 %v4673, %v4948
        %4950 = vmatprep.mubr.f32.mxu0 0.0
        %4951 = vmatmul.mubr.f32.gmra.mrb[0].mxu0 %v4694
        %v4952 = vpop.f32.mrb[0].mxu0
        %v4953 = vadd.f32 %v4678, %v4952
        %v4954 = vpop.f32.mrb[0].mxu0
        %v4955 = vadd.f32 %v4678, %v4954
        %4956 = vmatprep.mubr.f32.mxu0 0.0
        %4957 = vmatmul.mubr.f32.gmra.mrb[0].mxu0 %v4697
        %v4958 = vpop.f32.mrb[0].mxu0
        %v4959 = vadd.f32 %v4683, %v4958
        %v4960 = vpop.f32.mrb[0].mxu0
        %v4961 = vadd.f32 %v4683, %v4960
        %4962 = vmatprep.mubr.f32.mxu0 0.0
        %4963 = vmatmul.mubr.f32.gmra.mrb[0].mxu0 %v4700
        %v4964 = vpop.f32.mrb[0].mxu0
        %v4965 = vadd.f32 %v4688, %v4964
        %v4966 = vpop.f32.mrb[0].mxu0
        %v4967 = vadd.f32 %v4688, %v4966
        %4968 = vdwg.mxu0
        %4969 = vmatprep.subr.mxu0 %v4603
        %4970 = vmatpush1.msra.mxu0 %v4602
        %4971 = vmatprep.subr.mxu0 %v4619
        %4972 = vmatpush1.msra.mxu0 %v4618
        %4973 = vmatprep.subr.mxu0 %v4635
        %4974 = vmatpush1.msra.mxu0 %v4634
        %4975 = vmatprep.subr.mxu0 %v4651
        %4976 = vmatpush1.msra.mxu0 %v4650
        %4977 = vmatprep.subr.mxu0 0.0
        %4978 = vmatpush1.msra.mxu0 0.0
        %4979 = vmatprep.subr.mxu0 0.0
        %4980 = vmatpush1.msra.mxu0 0.0
        %4981 = vmatprep.subr.mxu0 0.0
        %4982 = vmatpush1.msra.mxu0 0.0
        %4983 = vmatprep.subr.mxu0 0.0
        %4984 = vmatpush1.msra.mxu0 0.0
        %4985 = vmatprep.subr.mxu0 0.0
        %4986 = vmatpush1.msra.mxu0 0.0
        %4987 = vmatprep.subr.mxu0 0.0
        %4988 = vmatpush1.msra.mxu0 0.0
        %4989 = vmatprep.subr.mxu0 0.0
        %4990 = vmatpush1.msra.mxu0 0.0
        %4991 = vmatprep.subr.mxu0 0.0
        %4992 = vmatpush1.msra.mxu0 0.0
        %4993 = vmatprep.subr.mxu0 0.0
        %4994 = vmatpush1.msra.mxu0 0.0
        %4995 = vmatprep.subr.mxu0 0.0
        %4996 = vmatpush1.msra.mxu0 0.0
        %4997 = vmatprep.subr.mxu0 0.0
        %4998 = vmatpush1.msra.mxu0 0.0
        %4999 = vmatprep.subr.mxu0 0.0
        %5000 = vmatpush1.msra.mxu0 0.0
        %5001 = vmatprep.subr.mxu0 0.0
        %5002 = vmatpush1.msra.mxu0 0.0
        %5003 = vmatprep.subr.mxu0 0.0
        %5004 = vmatpush1.msra.mxu0 0.0
        %5005 = vmatprep.subr.mxu0 0.0
        %5006 = vmatpush1.msra.mxu0 0.0
        %5007 = vmatprep.subr.mxu0 0.0
        %5008 = vmatpush1.msra.mxu0 0.0
        %5009 = vmatprep.subr.mxu0 0.0
        %5010 = vmatpush1.msra.mxu0 0.0
        %5011 = vmatprep.subr.mxu0 0.0
        %5012 = vmatpush1.msra.mxu0 0.0
        %5013 = vmatprep.subr.mxu0 0.0
        %5014 = vmatpush1.msra.mxu0 0.0
        %5015 = vmatprep.subr.mxu0 0.0
        %5016 = vmatpush1.msra.mxu0 0.0
        %5017 = vmatprep.subr.mxu0 0.0
        %5018 = vmatpush1.msra.mxu0 0.0
        %5019 = vmatprep.subr.mxu0 0.0
        %5020 = vmatpush1.msra.mxu0 0.0
        %5021 = vmatprep.subr.mxu0 0.0
        %5022 = vmatpush1.msra.mxu0 0.0
        %5023 = vmatprep.subr.mxu0 0.0
        %5024 = vmatpush1.msra.mxu0 0.0
        %5025 = vmatprep.subr.mxu0 0.0
        %5026 = vmatpush1.msra.mxu0 0.0
        %5027 = vmatprep.subr.mxu0 0.0
        %5028 = vmatpush1.msra.mxu0 0.0
        %5029 = vmatprep.subr.mxu0 0.0
        %5030 = vmatpush1.msra.mxu0 0.0
        %5031 = vmatprep.subr.mxu0 0.0
        %5032 = vmatpush1.msra.mxu0 0.0
        %5033 = vmatprep.mubr.f32.mxu0 0.0
        %5034 = vmatmul.mubr.f32.gmra.mrb[0].mxu0 %v4691
        %v5035 = vpop.f32.mrb[0].mxu0
        %v5036 = vadd.f32 %v4673, %v5035
        %v5037 = vpop.f32.mrb[0].mxu0
        %v5038 = vadd.f32 %v4673, %v5037
        %5039 = vmatprep.mubr.f32.mxu0 0.0
        %5040 = vmatmul.mubr.f32.gmra.mrb[0].mxu0 %v4694
        %v5041 = vpop.f32.mrb[0].mxu0
        %v5042 = vadd.f32 %v4678, %v5041
        %v5043 = vpop.f32.mrb[0].mxu0
        %v5044 = vadd.f32 %v4678, %v5043
        %5045 = vmatprep.mubr.f32.mxu0 0.0
        %5046 = vmatmul.mubr.f32.gmra.mrb[0].mxu0 %v4697
        %v5047 = vpop.f32.mrb[0].mxu0
        %v5048 = vadd.f32 %v4683, %v5047
        %v5049 = vpop.f32.mrb[0].mxu0
        %v5050 = vadd.f32 %v4683, %v5049
        %5051 = vmatprep.mubr.f32.mxu0 0.0
        %5052 = vmatmul.mubr.f32.gmra.mrb[0].mxu0 %v4700
        %v5053 = vpop.f32.mrb[0].mxu0
        %v5054 = vadd.f32 %v4688, %v5053
        %v5055 = vpop.f32.mrb[0].mxu0
        %v5056 = vadd.f32 %v4688, %v5055
        %5057 = vdwg.mxu0
        %5058 = vmatprep.subr.mxu0 %v4605
        %5059 = vmatpush1.msra.mxu0 %v4604
        %5060 = vmatprep.subr.mxu0 %v4621
        %5061 = vmatpush1.msra.mxu0 %v4620
        %5062 = vmatprep.subr.mxu0 %v4637
        %5063 = vmatpush1.msra.mxu0 %v4636
        %5064 = vmatprep.subr.mxu0 %v4653
        %5065 = vmatpush1.msra.mxu0 %v4652
        %5066 = vmatprep.subr.mxu0 0.0
        %5067 = vmatpush1.msra.mxu0 0.0
        %5068 = vmatprep.subr.mxu0 0.0
        %5069 = vmatpush1.msra.mxu0 0.0
        %5070 = vmatprep.subr.mxu0 0.0
        %5071 = vmatpush1.msra.mxu0 0.0
        %5072 = vmatprep.subr.mxu0 0.0
        %5073 = vmatpush1.msra.mxu0 0.0
        %5074 = vmatprep.subr.mxu0 0.0
        %5075 = vmatpush1.msra.mxu0 0.0
        %5076 = vmatprep.subr.mxu0 0.0
        %5077 = vmatpush1.msra.mxu0 0.0
        %5078 = vmatprep.subr.mxu0 0.0
        %5079 = vmatpush1.msra.mxu0 0.0
        %5080 = vmatprep.subr.mxu0 0.0
        %5081 = vmatpush1.msra.mxu0 0.0
        %5082 = vmatprep.subr.mxu0 0.0
        %5083 = vmatpush1.msra.mxu0 0.0
        %5084 = vmatprep.subr.mxu0 0.0
        %5085 = vmatpush1.msra.mxu0 0.0
        %5086 = vmatprep.subr.mxu0 0.0
        %5087 = vmatpush1.msra.mxu0 0.0
        %5088 = vmatprep.subr.mxu0 0.0
        %5089 = vmatpush1.msra.mxu0 0.0
        %5090 = vmatprep.subr.mxu0 0.0
        %5091 = vmatpush1.msra.mxu0 0.0
        %5092 = vmatprep.subr.mxu0 0.0
        %5093 = vmatpush1.msra.mxu0 0.0
        %5094 = vmatprep.subr.mxu0 0.0
        %5095 = vmatpush1.msra.mxu0 0.0
        %5096 = vmatprep.subr.mxu0 0.0
        %5097 = vmatpush1.msra.mxu0 0.0
        %5098 = vmatprep.subr.mxu0 0.0
        %5099 = vmatpush1.msra.mxu0 0.0
        %5100 = vmatprep.subr.mxu0 0.0
        %5101 = vmatpush1.msra.mxu0 0.0
        %5102 = vmatprep.subr.mxu0 0.0
        %5103 = vmatpush1.msra.mxu0 0.0
        %5104 = vmatprep.subr.mxu0 0.0
        %5105 = vmatpush1.msra.mxu0 0.0
        %5106 = vmatprep.subr.mxu0 0.0
        %5107 = vmatpush1.msra.mxu0 0.0
        %5108 = vmatprep.subr.mxu0 0.0
        %5109 = vmatpush1.msra.mxu0 0.0
        %5110 = vmatprep.subr.mxu0 0.0
        %5111 = vmatpush1.msra.mxu0 0.0
        %5112 = vmatprep.subr.mxu0 0.0
        %5113 = vmatpush1.msra.mxu0 0.0
        %5114 = vmatprep.subr.mxu0 0.0
        %5115 = vmatpush1.msra.mxu0 0.0
        %5116 = vmatprep.subr.mxu0 0.0
        %5117 = vmatpush1.msra.mxu0 0.0
        %5118 = vmatprep.subr.mxu0 0.0
        %5119 = vmatpush1.msra.mxu0 0.0
        %5120 = vmatprep.subr.mxu0 0.0
        %5121 = vmatpush1.msra.mxu0 0.0
        %5122 = vmatprep.mubr.f32.mxu0 0.0
        %5123 = vmatmul.mubr.f32.gmra.mrb[0].mxu0 %v4691
        %v5124 = vpop.f32.mrb[0].mxu0
        %v5125 = vadd.f32 %v4673, %v5124
        %v5126 = vpop.f32.mrb[0].mxu0
        %v5127 = vadd.f32 %v4673, %v5126
        %5128 = vmatprep.mubr.f32.mxu0 0.0
        %5129 = vmatmul.mubr.f32.gmra.mrb[0].mxu0 %v4694
        %v5130 = vpop.f32.mrb[0].mxu0
        %v5131 = vadd.f32 %v4678, %v5130
        %v5132 = vpop.f32.mrb[0].mxu0
        %v5133 = vadd.f32 %v4678, %v5132
        %5134 = vmatprep.mubr.f32.mxu0 0.0
        %5135 = vmatmul.mubr.f32.gmra.mrb[0].mxu0 %v4697
        %v5136 = vpop.f32.mrb[0].mxu0
        %v5137 = vadd.f32 %v4683, %v5136
        %v5138 = vpop.f32.mrb[0].mxu0
        %v5139 = vadd.f32 %v4683, %v5138
        %5140 = vmatprep.mubr.f32.mxu0 0.0
        %5141 = vmatmul.mubr.f32.gmra.mrb[0].mxu0 %v4700
        %v5142 = vpop.f32.mrb[0].mxu0
        %v5143 = vadd.f32 %v4688, %v5142
        %v5144 = vpop.f32.mrb[0].mxu0
        %v5145 = vadd.f32 %v4688, %v5144
        %5146 = vdwg.mxu0
        %5147 = vmatprep.subr.mxu0 %v4607
        %5148 = vmatpush1.msra.mxu0 %v4606
        %5149 = vmatprep.subr.mxu0 %v4623
        %5150 = vmatpush1.msra.mxu0 %v4622
        %5151 = vmatprep.subr.mxu0 %v4639
        %5152 = vmatpush1.msra.mxu0 %v4638
        %5153 = vmatprep.subr.mxu0 %v4655
        %5154 = vmatpush1.msra.mxu0 %v4654
        %5155 = vmatprep.subr.mxu0 0.0
        %5156 = vmatpush1.msra.mxu0 0.0
        %5157 = vmatprep.subr.mxu0 0.0
        %5158 = vmatpush1.msra.mxu0 0.0
        %5159 = vmatprep.subr.mxu0 0.0
        %5160 = vmatpush1.msra.mxu0 0.0
        %5161 = vmatprep.subr.mxu0 0.0
        %5162 = vmatpush1.msra.mxu0 0.0
        %5163 = vmatprep.subr.mxu0 0.0
        %5164 = vmatpush1.msra.mxu0 0.0
        %5165 = vmatprep.subr.mxu0 0.0
        %5166 = vmatpush1.msra.mxu0 0.0
        %5167 = vmatprep.subr.mxu0 0.0
        %5168 = vmatpush1.msra.mxu0 0.0
        %5169 = vmatprep.subr.mxu0 0.0
        %5170 = vmatpush1.msra.mxu0 0.0
        %5171 = vmatprep.subr.mxu0 0.0
        %5172 = vmatpush1.msra.mxu0 0.0
        %5173 = vmatprep.subr.mxu0 0.0
        %5174 = vmatpush1.msra.mxu0 0.0
        %5175 = vmatprep.subr.mxu0 0.0
        %5176 = vmatpush1.msra.mxu0 0.0
        %5177 = vmatprep.subr.mxu0 0.0
        %5178 = vmatpush1.msra.mxu0 0.0
        %5179 = vmatprep.subr.mxu0 0.0
        %5180 = vmatpush1.msra.mxu0 0.0
        %5181 = vmatprep.subr.mxu0 0.0
        %5182 = vmatpush1.msra.mxu0 0.0
        %5183 = vmatprep.subr.mxu0 0.0
        %5184 = vmatpush1.msra.mxu0 0.0
        %5185 = vmatprep.subr.mxu0 0.0
        %5186 = vmatpush1.msra.mxu0 0.0
        %5187 = vmatprep.subr.mxu0 0.0
        %5188 = vmatpush1.msra.mxu0 0.0
        %5189 = vmatprep.subr.mxu0 0.0
        %5190 = vmatpush1.msra.mxu0 0.0
        %5191 = vmatprep.subr.mxu0 0.0
        %5192 = vmatpush1.msra.mxu0 0.0
        %5193 = vmatprep.subr.mxu0 0.0
        %5194 = vmatpush1.msra.mxu0 0.0
        %5195 = vmatprep.subr.mxu0 0.0
        %5196 = vmatpush1.msra.mxu0 0.0
        %5197 = vmatprep.subr.mxu0 0.0
        %5198 = vmatpush1.msra.mxu0 0.0
        %5199 = vmatprep.subr.mxu0 0.0
        %5200 = vmatpush1.msra.mxu0 0.0
        %5201 = vmatprep.subr.mxu0 0.0
        %5202 = vmatpush1.msra.mxu0 0.0
        %5203 = vmatprep.subr.mxu0 0.0
        %5204 = vmatpush1.msra.mxu0 0.0
        %5205 = vmatprep.subr.mxu0 0.0
        %5206 = vmatpush1.msra.mxu0 0.0
        %5207 = vmatprep.subr.mxu0 0.0
        %5208 = vmatpush1.msra.mxu0 0.0
        %5209 = vmatprep.subr.mxu0 0.0
        %5210 = vmatpush1.msra.mxu0 0.0
        %5211 = vmatprep.mubr.f32.mxu0 0.0
        %5212 = vmatmul.mubr.f32.gmra.mrb[0].mxu0 %v4691
        %v5213 = vpop.f32.mrb[0].mxu0
        %v5214 = vadd.f32 %v4673, %v5213
        %v5215 = vpop.f32.mrb[0].mxu0
        %v5216 = vadd.f32 %v4673, %v5215
        %5217 = vmatprep.mubr.f32.mxu0 0.0
        %5218 = vmatmul.mubr.f32.gmra.mrb[0].mxu0 %v4694
        %v5219 = vpop.f32.mrb[0].mxu0
        %v5220 = vadd.f32 %v4678, %v5219
        %v5221 = vpop.f32.mrb[0].mxu0
        %v5222 = vadd.f32 %v4678, %v5221
        %5223 = vmatprep.mubr.f32.mxu0 0.0
        %5224 = vmatmul.mubr.f32.gmra.mrb[0].mxu0 %v4697
        %v5225 = vpop.f32.mrb[0].mxu0
        %v5226 = vadd.f32 %v4683, %v5225
        %v5227 = vpop.f32.mrb[0].mxu0
        %v5228 = vadd.f32 %v4683, %v5227
        %5229 = vmatprep.mubr.f32.mxu0 0.0
        %5230 = vmatmul.mubr.f32.gmra.mrb[0].mxu0 %v4700
        %v5231 = vpop.f32.mrb[0].mxu0
        %v5232 = vadd.f32 %v4688, %v5231
        %v5233 = vpop.f32.mrb[0].mxu0
        %v5234 = vadd.f32 %v4688, %v5233
        %5235 = vdwg.mxu0
        %5236 = vmatprep.subr.mxu0 %v4609
        %5237 = vmatpush1.msra.mxu0 %v4608
        %5238 = vmatprep.subr.mxu0 %v4625
        %5239 = vmatpush1.msra.mxu0 %v4624
        %5240 = vmatprep.subr.mxu0 %v4641
        %5241 = vmatpush1.msra.mxu0 %v4640
        %5242 = vmatprep.subr.mxu0 %v4657
        %5243 = vmatpush1.msra.mxu0 %v4656
        %5244 = vmatprep.subr.mxu0 0.0
        %5245 = vmatpush1.msra.mxu0 0.0
        %5246 = vmatprep.subr.mxu0 0.0
        %5247 = vmatpush1.msra.mxu0 0.0
        %5248 = vmatprep.subr.mxu0 0.0
        %5249 = vmatpush1.msra.mxu0 0.0
        %5250 = vmatprep.subr.mxu0 0.0
        %5251 = vmatpush1.msra.mxu0 0.0
        %5252 = vmatprep.subr.mxu0 0.0
        %5253 = vmatpush1.msra.mxu0 0.0
        %5254 = vmatprep.subr.mxu0 0.0
        %5255 = vmatpush1.msra.mxu0 0.0
        %5256 = vmatprep.subr.mxu0 0.0
        %5257 = vmatpush1.msra.mxu0 0.0
        %5258 = vmatprep.subr.mxu0 0.0
        %5259 = vmatpush1.msra.mxu0 0.0
        %5260 = vmatprep.subr.mxu0 0.0
        %5261 = vmatpush1.msra.mxu0 0.0
        %5262 = vmatprep.subr.mxu0 0.0
        %5263 = vmatpush1.msra.mxu0 0.0
        %5264 = vmatprep.subr.mxu0 0.0
        %5265 = vmatpush1.msra.mxu0 0.0
        %5266 = vmatprep.subr.mxu0 0.0
        %5267 = vmatpush1.msra.mxu0 0.0
        %5268 = vmatprep.subr.mxu0 0.0
        %5269 = vmatpush1.msra.mxu0 0.0
        %5270 = vmatprep.subr.mxu0 0.0
        %5271 = vmatpush1.msra.mxu0 0.0
        %5272 = vmatprep.subr.mxu0 0.0
        %5273 = vmatpush1.msra.mxu0 0.0
        %5274 = vmatprep.subr.mxu0 0.0
        %5275 = vmatpush1.msra.mxu0 0.0
        %5276 = vmatprep.subr.mxu0 0.0
        %5277 = vmatpush1.msra.mxu0 0.0
        %5278 = vmatprep.subr.mxu0 0.0
        %5279 = vmatpush1.msra.mxu0 0.0
        %5280 = vmatprep.subr.mxu0 0.0
        %5281 = vmatpush1.msra.mxu0 0.0
        %5282 = vmatprep.subr.mxu0 0.0
        %5283 = vmatpush1.msra.mxu0 0.0
        %5284 = vmatprep.subr.mxu0 0.0
        %5285 = vmatpush1.msra.mxu0 0.0
        %5286 = vmatprep.subr.mxu0 0.0
        %5287 = vmatpush1.msra.mxu0 0.0
        %5288 = vmatprep.subr.mxu0 0.0
        %5289 = vmatpush1.msra.mxu0 0.0
        %5290 = vmatprep.subr.mxu0 0.0
        %5291 = vmatpush1.msra.mxu0 0.0
        %5292 = vmatprep.subr.mxu0 0.0
        %5293 = vmatpush1.msra.mxu0 0.0
        %5294 = vmatprep.subr.mxu0 0.0
        %5295 = vmatpush1.msra.mxu0 0.0
        %5296 = vmatprep.subr.mxu0 0.0
        %5297 = vmatpush1.msra.mxu0 0.0
        %5298 = vmatprep.subr.mxu0 0.0
        %5299 = vmatpush1.msra.mxu0 0.0
        %5300 = vmatprep.mubr.f32.mxu0 0.0
        %5301 = vmatmul.mubr.f32.gmra.mrb[0].mxu0 %v4691
        %v5302 = vpop.f32.mrb[0].mxu0
        %v5303 = vadd.f32 %v4673, %v5302
        %v5304 = vpop.f32.mrb[0].mxu0
        %v5305 = vadd.f32 %v4673, %v5304
        %5306 = vmatprep.mubr.f32.mxu0 0.0
        %5307 = vmatmul.mubr.f32.gmra.mrb[0].mxu0 %v4694
        %v5308 = vpop.f32.mrb[0].mxu0
        %v5309 = vadd.f32 %v4678, %v5308
        %v5310 = vpop.f32.mrb[0].mxu0
        %v5311 = vadd.f32 %v4678, %v5310
        %5312 = vmatprep.mubr.f32.mxu0 0.0
        %5313 = vmatmul.mubr.f32.gmra.mrb[0].mxu0 %v4697
        %v5314 = vpop.f32.mrb[0].mxu0
        %v5315 = vadd.f32 %v4683, %v5314
        %v5316 = vpop.f32.mrb[0].mxu0
        %v5317 = vadd.f32 %v4683, %v5316
        %5318 = vmatprep.mubr.f32.mxu0 0.0
        %5319 = vmatmul.mubr.f32.gmra.mrb[0].mxu0 %v4700
        %v5320 = vpop.f32.mrb[0].mxu0
        %v5321 = vadd.f32 %v4688, %v5320
        %v5322 = vpop.f32.mrb[0].mxu0
        %v5323 = vadd.f32 %v4688, %v5322
        %5324 = vdwg.mxu0
        %5325 = vmatprep.subr.mxu0 %v4611
        %5326 = vmatpush1.msra.mxu0 %v4610
        %5327 = vmatprep.subr.mxu0 %v4627
        %5328 = vmatpush1.msra.mxu0 %v4626
        %5329 = vmatprep.subr.mxu0 %v4643
        %5330 = vmatpush1.msra.mxu0 %v4642
        %5331 = vmatprep.subr.mxu0 %v4659
        %5332 = vmatpush1.msra.mxu0 %v4658
        %5333 = vmatprep.subr.mxu0 0.0
        %5334 = vmatpush1.msra.mxu0 0.0
        %5335 = vmatprep.subr.mxu0 0.0
        %5336 = vmatpush1.msra.mxu0 0.0
        %5337 = vmatprep.subr.mxu0 0.0
        %5338 = vmatpush1.msra.mxu0 0.0
        %5339 = vmatprep.subr.mxu0 0.0
        %5340 = vmatpush1.msra.mxu0 0.0
        %5341 = vmatprep.subr.mxu0 0.0
        %5342 = vmatpush1.msra.mxu0 0.0
        %5343 = vmatprep.subr.mxu0 0.0
        %5344 = vmatpush1.msra.mxu0 0.0
        %5345 = vmatprep.subr.mxu0 0.0
        %5346 = vmatpush1.msra.mxu0 0.0
        %5347 = vmatprep.subr.mxu0 0.0
        %5348 = vmatpush1.msra.mxu0 0.0
        %5349 = vmatprep.subr.mxu0 0.0
        %5350 = vmatpush1.msra.mxu0 0.0
        %5351 = vmatprep.subr.mxu0 0.0
        %5352 = vmatpush1.msra.mxu0 0.0
        %5353 = vmatprep.subr.mxu0 0.0
        %5354 = vmatpush1.msra.mxu0 0.0
        %5355 = vmatprep.subr.mxu0 0.0
        %5356 = vmatpush1.msra.mxu0 0.0
        %5357 = vmatprep.subr.mxu0 0.0
        %5358 = vmatpush1.msra.mxu0 0.0
        %5359 = vmatprep.subr.mxu0 0.0
        %5360 = vmatpush1.msra.mxu0 0.0
        %5361 = vmatprep.subr.mxu0 0.0
        %5362 = vmatpush1.msra.mxu0 0.0
        %5363 = vmatprep.subr.mxu0 0.0
        %5364 = vmatpush1.msra.mxu0 0.0
        %5365 = vmatprep.subr.mxu0 0.0
        %5366 = vmatpush1.msra.mxu0 0.0
        %5367 = vmatprep.subr.mxu0 0.0
        %5368 = vmatpush1.msra.mxu0 0.0
        %5369 = vmatprep.subr.mxu0 0.0
        %5370 = vmatpush1.msra.mxu0 0.0
        %5371 = vmatprep.subr.mxu0 0.0
        %5372 = vmatpush1.msra.mxu0 0.0
        %5373 = vmatprep.subr.mxu0 0.0
        %5374 = vmatpush1.msra.mxu0 0.0
        %5375 = vmatprep.subr.mxu0 0.0
        %5376 = vmatpush1.msra.mxu0 0.0
        %5377 = vmatprep.subr.mxu0 0.0
        %5378 = vmatpush1.msra.mxu0 0.0
        %5379 = vmatprep.subr.mxu0 0.0
        %5380 = vmatpush1.msra.mxu0 0.0
        %5381 = vmatprep.subr.mxu0 0.0
        %5382 = vmatpush1.msra.mxu0 0.0
        %5383 = vmatprep.subr.mxu0 0.0
        %5384 = vmatpush1.msra.mxu0 0.0
        %5385 = vmatprep.subr.mxu0 0.0
        %5386 = vmatpush1.msra.mxu0 0.0
        %5387 = vmatprep.subr.mxu0 0.0
        %5388 = vmatpush1.msra.mxu0 0.0
        %5389 = vmatprep.mubr.f32.mxu0 0.0
        %5390 = vmatmul.mubr.f32.gmra.mrb[0].mxu0 %v4691
        %v5391 = vpop.f32.mrb[0].mxu0
        %v5392 = vadd.f32 %v4673, %v5391
        %v5393 = vpop.f32.mrb[0].mxu0
        %v5394 = vadd.f32 %v4673, %v5393
        %5395 = vmatprep.mubr.f32.mxu0 0.0
        %5396 = vmatmul.mubr.f32.gmra.mrb[0].mxu0 %v4694
        %v5397 = vpop.f32.mrb[0].mxu0
        %v5398 = vadd.f32 %v4678, %v5397
        %v5399 = vpop.f32.mrb[0].mxu0
        %v5400 = vadd.f32 %v4678, %v5399
        %5401 = vmatprep.mubr.f32.mxu0 0.0
        %5402 = vmatmul.mubr.f32.gmra.mrb[0].mxu0 %v4697
        %v5403 = vpop.f32.mrb[0].mxu0
        %v5404 = vadd.f32 %v4683, %v5403
        %v5405 = vpop.f32.mrb[0].mxu0
        %v5406 = vadd.f32 %v4683, %v5405
        %5407 = vmatprep.mubr.f32.mxu0 0.0
        %5408 = vmatmul.mubr.f32.gmra.mrb[0].mxu0 %v4700
        %v5409 = vpop.f32.mrb[0].mxu0
        %v5410 = vadd.f32 %v4688, %v5409
        %v5411 = vpop.f32.mrb[0].mxu0
        %v5412 = vadd.f32 %v4688, %v5411
        %5413 = vdwg.mxu0
        %v5414 = vtanh.pop %v4769
        %v5415 = vtanh.pop %v4771
        %v5416 = vtanh.pop %v4858
        %v5417 = vtanh.pop %v4860
        %v5418 = vtanh.pop %v4947
        %v5419 = vtanh.pop %v4949
        %v5420 = vtanh.pop %v5036
        %v5421 = vtanh.pop %v5038
        %v5422 = vtanh.pop %v5125
        %v5423 = vtanh.pop %v5127
        %v5424 = vtanh.pop %v5214
        %v5425 = vtanh.pop %v5216
        %v5426 = vtanh.pop %v5303
        %v5427 = vtanh.pop %v5305
        %v5428 = vtanh.pop %v5392
        %v5429 = vtanh.pop %v5394
        %v5430 = vtanh.pop %v4775
        %v5431 = vtanh.pop %v4777
        %v5432 = vtanh.pop %v4864
        %v5433 = vtanh.pop %v4866
        %v5434 = vtanh.pop %v4953
        %v5435 = vtanh.pop %v4955
        %v5436 = vtanh.pop %v5042
        %v5437 = vtanh.pop %v5044
        %v5438 = vtanh.pop %v5131
        %v5439 = vtanh.pop %v5133
        %v5440 = vtanh.pop %v5220
        %v5441 = vtanh.pop %v5222
        %v5442 = vtanh.pop %v5309
        %v5443 = vtanh.pop %v5311
        %v5444 = vtanh.pop %v5398
        %v5445 = vtanh.pop %v5400
        %v5446 = vtanh.pop %v4781
        %v5447 = vtanh.pop %v4783
        %v5448 = vtanh.pop %v4870
        %v5449 = vtanh.pop %v4872
        %v5450 = vtanh.pop %v4959
        %v5451 = vtanh.pop %v4961
        %v5452 = vtanh.pop %v5048
        %v5453 = vtanh.pop %v5050
        %v5454 = vtanh.pop %v5137
        %v5455 = vtanh.pop %v5139
        %v5456 = vtanh.pop %v5226
        %v5457 = vtanh.pop %v5228
        %v5458 = vtanh.pop %v5315
        %v5459 = vtanh.pop %v5317
        %v5460 = vtanh.pop %v5404
        %v5461 = vtanh.pop %v5406
        %v5462 = vtanh.pop %v4787
        %v5463 = vtanh.pop %v4789
        %v5464 = vtanh.pop %v4876
        %v5465 = vtanh.pop %v4878
        %v5466 = vtanh.pop %v4965
        %v5467 = vtanh.pop %v4967
        %v5468 = vtanh.pop %v5054
        %v5469 = vtanh.pop %v5056
        %v5470 = vtanh.pop %v5143
        %v5471 = vtanh.pop %v5145
        %v5472 = vtanh.pop %v5232
        %v5473 = vtanh.pop %v5234
        %v5474 = vtanh.pop %v5321
        %v5475 = vtanh.pop %v5323
        %v5476 = vtanh.pop %v5410
        %v5477 = vtanh.pop %v5412
        %s5478 = scalar_lea.vmem [#allocation3], 64
        %v5479 = vld [vmem:[%s5478] sm:$0xff]
        %v5480 = vld [vmem:[%s5478 + $0x8] sm:$0xff]
        %v5481 = vld [vmem:[%s5478 + $0x10] sm:$0xff]
        %v5482 = vld [vmem:[%s5478 + $0x18] sm:$0xff]
        %s5483 = scalar_lea.vmem %s6, 64
        %v5484 = vld [vmem:[%s5483] sm:$0xff]
        %v5485 = vld [vmem:[%s5483 + $0x8] sm:$0xff]
        %v5486 = vld [vmem:[%s5483 + $0x10] sm:$0xff]
        %v5487 = vld [vmem:[%s5483 + $0x18] sm:$0xff]
        %5489 = vset.pattern.permute.xlu0 0
        %5490 = vperm.xlu0 %5489, %v5484
        %v5491 = vpop.permute.xlu0 %5490
        %5494 = vset.pattern.permute.xlu0 0
        %5495 = vperm.xlu0 %5494, %v5485
        %v5496 = vpop.permute.xlu0 %5495
        %5499 = vset.pattern.permute.xlu0 0
        %5500 = vperm.xlu0 %5499, %v5486
        %v5501 = vpop.permute.xlu0 %5500
        %5504 = vset.pattern.permute.xlu0 0
        %5505 = vperm.xlu0 %5504, %v5487
        %v5506 = vpop.permute.xlu0 %5505
        %v5509 = vsel %vm1291, %v5479, 0
        %v5512 = vsel %vm1291, %v5480, 0
        %v5515 = vsel %vm1291, %v5481, 0
        %v5518 = vsel %vm1291, %v5482, 0
        %5520 = vmatprep.subr.mxu0 %v5415
        %5521 = vmatpush1.msra.mxu0 %v5414
        %5522 = vmatprep.subr.mxu0 %v5431
        %5523 = vmatpush1.msra.mxu0 %v5430
        %5524 = vmatprep.subr.mxu0 %v5447
        %5525 = vmatpush1.msra.mxu0 %v5446
        %5526 = vmatprep.subr.mxu0 %v5463
        %5527 = vmatpush1.msra.mxu0 %v5462
        %5528 = vmatprep.subr.mxu0 0.0
        %5529 = vmatpush1.msra.mxu0 0.0
        %5530 = vmatprep.subr.mxu0 0.0
        %5531 = vmatpush1.msra.mxu0 0.0
        %5532 = vmatprep.subr.mxu0 0.0
        %5533 = vmatpush1.msra.mxu0 0.0
        %5534 = vmatprep.subr.mxu0 0.0
        %5535 = vmatpush1.msra.mxu0 0.0
        %5536 = vmatprep.subr.mxu0 0.0
        %5537 = vmatpush1.msra.mxu0 0.0
        %5538 = vmatprep.subr.mxu0 0.0
        %5539 = vmatpush1.msra.mxu0 0.0
        %5540 = vmatprep.subr.mxu0 0.0
        %5541 = vmatpush1.msra.mxu0 0.0
        %5542 = vmatprep.subr.mxu0 0.0
        %5543 = vmatpush1.msra.mxu0 0.0
        %5544 = vmatprep.subr.mxu0 0.0
        %5545 = vmatpush1.msra.mxu0 0.0
        %5546 = vmatprep.subr.mxu0 0.0
        %5547 = vmatpush1.msra.mxu0 0.0
        %5548 = vmatprep.subr.mxu0 0.0
        %5549 = vmatpush1.msra.mxu0 0.0
        %5550 = vmatprep.subr.mxu0 0.0
        %5551 = vmatpush1.msra.mxu0 0.0
        %5552 = vmatprep.subr.mxu0 0.0
        %5553 = vmatpush1.msra.mxu0 0.0
        %5554 = vmatprep.subr.mxu0 0.0
        %5555 = vmatpush1.msra.mxu0 0.0
        %5556 = vmatprep.subr.mxu0 0.0
        %5557 = vmatpush1.msra.mxu0 0.0
        %5558 = vmatprep.subr.mxu0 0.0
        %5559 = vmatpush1.msra.mxu0 0.0
        %5560 = vmatprep.subr.mxu0 0.0
        %5561 = vmatpush1.msra.mxu0 0.0
        %5562 = vmatprep.subr.mxu0 0.0
        %5563 = vmatpush1.msra.mxu0 0.0
        %5564 = vmatprep.subr.mxu0 0.0
        %5565 = vmatpush1.msra.mxu0 0.0
        %5566 = vmatprep.subr.mxu0 0.0
        %5567 = vmatpush1.msra.mxu0 0.0
        %5568 = vmatprep.subr.mxu0 0.0
        %5569 = vmatpush1.msra.mxu0 0.0
        %5570 = vmatprep.subr.mxu0 0.0
        %5571 = vmatpush1.msra.mxu0 0.0
        %5572 = vmatprep.subr.mxu0 0.0
        %5573 = vmatpush1.msra.mxu0 0.0
        %5574 = vmatprep.subr.mxu0 0.0
        %5575 = vmatpush1.msra.mxu0 0.0
        %5576 = vmatprep.subr.mxu0 0.0
        %5577 = vmatpush1.msra.mxu0 0.0
        %5578 = vmatprep.subr.mxu0 0.0
        %5579 = vmatpush1.msra.mxu0 0.0
        %5580 = vmatprep.subr.mxu0 0.0
        %5581 = vmatpush1.msra.mxu0 0.0
        %5582 = vmatprep.subr.mxu0 0.0
        %5583 = vmatpush1.msra.mxu0 0.0
        %5584 = vmatprep.mubr.f32.mxu0 0.0
        %5585 = vmatmul.mubr.f32.gmra.mrb[0].mxu0 %v5509
        %v5586 = vpop.f32.mrb[0].mxu0
        %v5587 = vadd.f32 %v5491, %v5586
        %v5588 = vpop.f32.mrb[0].mxu0
        %v5589 = vadd.f32 %v5491, %v5588
        %5590 = vmatprep.mubr.f32.mxu0 0.0
        %5591 = vmatmul.mubr.f32.gmra.mrb[0].mxu0 %v5512
        %v5592 = vpop.f32.mrb[0].mxu0
        %v5593 = vadd.f32 %v5496, %v5592
        %v5594 = vpop.f32.mrb[0].mxu0
        %v5595 = vadd.f32 %v5496, %v5594
        %5596 = vmatprep.mubr.f32.mxu0 0.0
        %5597 = vmatmul.mubr.f32.gmra.mrb[0].mxu0 %v5515
        %v5598 = vpop.f32.mrb[0].mxu0
        %v5599 = vadd.f32 %v5501, %v5598
        %v5600 = vpop.f32.mrb[0].mxu0
        %v5601 = vadd.f32 %v5501, %v5600
        %5602 = vmatprep.mubr.f32.mxu0 0.0
        %5603 = vmatmul.mubr.f32.gmra.mrb[0].mxu0 %v5518
        %v5604 = vpop.f32.mrb[0].mxu0
        %v5605 = vadd.f32 %v5506, %v5604
        %v5606 = vpop.f32.mrb[0].mxu0
        %v5607 = vadd.f32 %v5506, %v5606
        %5608 = vdwg.mxu0
        %5609 = vmatprep.subr.mxu0 %v5417
        %5610 = vmatpush1.msra.mxu0 %v5416
        %5611 = vmatprep.subr.mxu0 %v5433
        %5612 = vmatpush1.msra.mxu0 %v5432
        %5613 = vmatprep.subr.mxu0 %v5449
        %5614 = vmatpush1.msra.mxu0 %v5448
        %5615 = vmatprep.subr.mxu0 %v5465
        %5616 = vmatpush1.msra.mxu0 %v5464
        %5617 = vmatprep.subr.mxu0 0.0
        %5618 = vmatpush1.msra.mxu0 0.0
        %5619 = vmatprep.subr.mxu0 0.0
        %5620 = vmatpush1.msra.mxu0 0.0
        %5621 = vmatprep.subr.mxu0 0.0
        %5622 = vmatpush1.msra.mxu0 0.0
        %5623 = vmatprep.subr.mxu0 0.0
        %5624 = vmatpush1.msra.mxu0 0.0
        %5625 = vmatprep.subr.mxu0 0.0
        %5626 = vmatpush1.msra.mxu0 0.0
        %5627 = vmatprep.subr.mxu0 0.0
        %5628 = vmatpush1.msra.mxu0 0.0
        %5629 = vmatprep.subr.mxu0 0.0
        %5630 = vmatpush1.msra.mxu0 0.0
        %5631 = vmatprep.subr.mxu0 0.0
        %5632 = vmatpush1.msra.mxu0 0.0
        %5633 = vmatprep.subr.mxu0 0.0
        %5634 = vmatpush1.msra.mxu0 0.0
        %5635 = vmatprep.subr.mxu0 0.0
        %5636 = vmatpush1.msra.mxu0 0.0
        %5637 = vmatprep.subr.mxu0 0.0
        %5638 = vmatpush1.msra.mxu0 0.0
        %5639 = vmatprep.subr.mxu0 0.0
        %5640 = vmatpush1.msra.mxu0 0.0
        %5641 = vmatprep.subr.mxu0 0.0
        %5642 = vmatpush1.msra.mxu0 0.0
        %5643 = vmatprep.subr.mxu0 0.0
        %5644 = vmatpush1.msra.mxu0 0.0
        %5645 = vmatprep.subr.mxu0 0.0
        %5646 = vmatpush1.msra.mxu0 0.0
        %5647 = vmatprep.subr.mxu0 0.0
        %5648 = vmatpush1.msra.mxu0 0.0
        %5649 = vmatprep.subr.mxu0 0.0
        %5650 = vmatpush1.msra.mxu0 0.0
        %5651 = vmatprep.subr.mxu0 0.0
        %5652 = vmatpush1.msra.mxu0 0.0
        %5653 = vmatprep.subr.mxu0 0.0
        %5654 = vmatpush1.msra.mxu0 0.0
        %5655 = vmatprep.subr.mxu0 0.0
        %5656 = vmatpush1.msra.mxu0 0.0
        %5657 = vmatprep.subr.mxu0 0.0
        %5658 = vmatpush1.msra.mxu0 0.0
        %5659 = vmatprep.subr.mxu0 0.0
        %5660 = vmatpush1.msra.mxu0 0.0
        %5661 = vmatprep.subr.mxu0 0.0
        %5662 = vmatpush1.msra.mxu0 0.0
        %5663 = vmatprep.subr.mxu0 0.0
        %5664 = vmatpush1.msra.mxu0 0.0
        %5665 = vmatprep.subr.mxu0 0.0
        %5666 = vmatpush1.msra.mxu0 0.0
        %5667 = vmatprep.subr.mxu0 0.0
        %5668 = vmatpush1.msra.mxu0 0.0
        %5669 = vmatprep.subr.mxu0 0.0
        %5670 = vmatpush1.msra.mxu0 0.0
        %5671 = vmatprep.subr.mxu0 0.0
        %5672 = vmatpush1.msra.mxu0 0.0
        %5673 = vmatprep.mubr.f32.mxu0 0.0
        %5674 = vmatmul.mubr.f32.gmra.mrb[0].mxu0 %v5509
        %v5675 = vpop.f32.mrb[0].mxu0
        %v5676 = vadd.f32 %v5491, %v5675
        %v5677 = vpop.f32.mrb[0].mxu0
        %v5678 = vadd.f32 %v5491, %v5677
        %5679 = vmatprep.mubr.f32.mxu0 0.0
        %5680 = vmatmul.mubr.f32.gmra.mrb[0].mxu0 %v5512
        %v5681 = vpop.f32.mrb[0].mxu0
        %v5682 = vadd.f32 %v5496, %v5681
        %v5683 = vpop.f32.mrb[0].mxu0
        %v5684 = vadd.f32 %v5496, %v5683
        %5685 = vmatprep.mubr.f32.mxu0 0.0
        %5686 = vmatmul.mubr.f32.gmra.mrb[0].mxu0 %v5515
        %v5687 = vpop.f32.mrb[0].mxu0
        %v5688 = vadd.f32 %v5501, %v5687
        %v5689 = vpop.f32.mrb[0].mxu0
        %v5690 = vadd.f32 %v5501, %v5689
        %5691 = vmatprep.mubr.f32.mxu0 0.0
        %5692 = vmatmul.mubr.f32.gmra.mrb[0].mxu0 %v5518
        %v5693 = vpop.f32.mrb[0].mxu0
        %v5694 = vadd.f32 %v5506, %v5693
        %v5695 = vpop.f32.mrb[0].mxu0
        %v5696 = vadd.f32 %v5506, %v5695
        %5697 = vdwg.mxu0
        %5698 = vmatprep.subr.mxu0 %v5419
        %5699 = vmatpush1.msra.mxu0 %v5418
        %5700 = vmatprep.subr.mxu0 %v5435
        %5701 = vmatpush1.msra.mxu0 %v5434
        %5702 = vmatprep.subr.mxu0 %v5451
        %5703 = vmatpush1.msra.mxu0 %v5450
        %5704 = vmatprep.subr.mxu0 %v5467
        %5705 = vmatpush1.msra.mxu0 %v5466
        %5706 = vmatprep.subr.mxu0 0.0
        %5707 = vmatpush1.msra.mxu0 0.0
        %5708 = vmatprep.subr.mxu0 0.0
        %5709 = vmatpush1.msra.mxu0 0.0
        %5710 = vmatprep.subr.mxu0 0.0
        %5711 = vmatpush1.msra.mxu0 0.0
        %5712 = vmatprep.subr.mxu0 0.0
        %5713 = vmatpush1.msra.mxu0 0.0
        %5714 = vmatprep.subr.mxu0 0.0
        %5715 = vmatpush1.msra.mxu0 0.0
        %5716 = vmatprep.subr.mxu0 0.0
        %5717 = vmatpush1.msra.mxu0 0.0
        %5718 = vmatprep.subr.mxu0 0.0
        %5719 = vmatpush1.msra.mxu0 0.0
        %5720 = vmatprep.subr.mxu0 0.0
        %5721 = vmatpush1.msra.mxu0 0.0
        %5722 = vmatprep.subr.mxu0 0.0
        %5723 = vmatpush1.msra.mxu0 0.0
        %5724 = vmatprep.subr.mxu0 0.0
        %5725 = vmatpush1.msra.mxu0 0.0
        %5726 = vmatprep.subr.mxu0 0.0
        %5727 = vmatpush1.msra.mxu0 0.0
        %5728 = vmatprep.subr.mxu0 0.0
        %5729 = vmatpush1.msra.mxu0 0.0
        %5730 = vmatprep.subr.mxu0 0.0
        %5731 = vmatpush1.msra.mxu0 0.0
        %5732 = vmatprep.subr.mxu0 0.0
        %5733 = vmatpush1.msra.mxu0 0.0
        %5734 = vmatprep.subr.mxu0 0.0
        %5735 = vmatpush1.msra.mxu0 0.0
        %5736 = vmatprep.subr.mxu0 0.0
        %5737 = vmatpush1.msra.mxu0 0.0
        %5738 = vmatprep.subr.mxu0 0.0
        %5739 = vmatpush1.msra.mxu0 0.0
        %5740 = vmatprep.subr.mxu0 0.0
        %5741 = vmatpush1.msra.mxu0 0.0
        %5742 = vmatprep.subr.mxu0 0.0
        %5743 = vmatpush1.msra.mxu0 0.0
        %5744 = vmatprep.subr.mxu0 0.0
        %5745 = vmatpush1.msra.mxu0 0.0
        %5746 = vmatprep.subr.mxu0 0.0
        %5747 = vmatpush1.msra.mxu0 0.0
        %5748 = vmatprep.subr.mxu0 0.0
        %5749 = vmatpush1.msra.mxu0 0.0
        %5750 = vmatprep.subr.mxu0 0.0
        %5751 = vmatpush1.msra.mxu0 0.0
        %5752 = vmatprep.subr.mxu0 0.0
        %5753 = vmatpush1.msra.mxu0 0.0
        %5754 = vmatprep.subr.mxu0 0.0
        %5755 = vmatpush1.msra.mxu0 0.0
        %5756 = vmatprep.subr.mxu0 0.0
        %5757 = vmatpush1.msra.mxu0 0.0
        %5758 = vmatprep.subr.mxu0 0.0
        %5759 = vmatpush1.msra.mxu0 0.0
        %5760 = vmatprep.subr.mxu0 0.0
        %5761 = vmatpush1.msra.mxu0 0.0
        %5762 = vmatprep.mubr.f32.mxu0 0.0
        %5763 = vmatmul.mubr.f32.gmra.mrb[0].mxu0 %v5509
        %v5764 = vpop.f32.mrb[0].mxu0
        %v5765 = vadd.f32 %v5491, %v5764
        %v5766 = vpop.f32.mrb[0].mxu0
        %v5767 = vadd.f32 %v5491, %v5766
        %5768 = vmatprep.mubr.f32.mxu0 0.0
        %5769 = vmatmul.mubr.f32.gmra.mrb[0].mxu0 %v5512
        %v5770 = vpop.f32.mrb[0].mxu0
        %v5771 = vadd.f32 %v5496, %v5770
        %v5772 = vpop.f32.mrb[0].mxu0
        %v5773 = vadd.f32 %v5496, %v5772
        %5774 = vmatprep.mubr.f32.mxu0 0.0
        %5775 = vmatmul.mubr.f32.gmra.mrb[0].mxu0 %v5515
        %v5776 = vpop.f32.mrb[0].mxu0
        %v5777 = vadd.f32 %v5501, %v5776
        %v5778 = vpop.f32.mrb[0].mxu0
        %v5779 = vadd.f32 %v5501, %v5778
        %5780 = vmatprep.mubr.f32.mxu0 0.0
        %5781 = vmatmul.mubr.f32.gmra.mrb[0].mxu0 %v5518
        %v5782 = vpop.f32.mrb[0].mxu0
        %v5783 = vadd.f32 %v5506, %v5782
        %v5784 = vpop.f32.mrb[0].mxu0
        %v5785 = vadd.f32 %v5506, %v5784
        %5786 = vdwg.mxu0
        %5787 = vmatprep.subr.mxu0 %v5421
        %5788 = vmatpush1.msra.mxu0 %v5420
        %5789 = vmatprep.subr.mxu0 %v5437
        %5790 = vmatpush1.msra.mxu0 %v5436
        %5791 = vmatprep.subr.mxu0 %v5453
        %5792 = vmatpush1.msra.mxu0 %v5452
        %5793 = vmatprep.subr.mxu0 %v5469
        %5794 = vmatpush1.msra.mxu0 %v5468
        %5795 = vmatprep.subr.mxu0 0.0
        %5796 = vmatpush1.msra.mxu0 0.0
        %5797 = vmatprep.subr.mxu0 0.0
        %5798 = vmatpush1.msra.mxu0 0.0
        %5799 = vmatprep.subr.mxu0 0.0
        %5800 = vmatpush1.msra.mxu0 0.0
        %5801 = vmatprep.subr.mxu0 0.0
        %5802 = vmatpush1.msra.mxu0 0.0
        %5803 = vmatprep.subr.mxu0 0.0
        %5804 = vmatpush1.msra.mxu0 0.0
        %5805 = vmatprep.subr.mxu0 0.0
        %5806 = vmatpush1.msra.mxu0 0.0
        %5807 = vmatprep.subr.mxu0 0.0
        %5808 = vmatpush1.msra.mxu0 0.0
        %5809 = vmatprep.subr.mxu0 0.0
        %5810 = vmatpush1.msra.mxu0 0.0
        %5811 = vmatprep.subr.mxu0 0.0
        %5812 = vmatpush1.msra.mxu0 0.0
        %5813 = vmatprep.subr.mxu0 0.0
        %5814 = vmatpush1.msra.mxu0 0.0
        %5815 = vmatprep.subr.mxu0 0.0
        %5816 = vmatpush1.msra.mxu0 0.0
        %5817 = vmatprep.subr.mxu0 0.0
        %5818 = vmatpush1.msra.mxu0 0.0
        %5819 = vmatprep.subr.mxu0 0.0
        %5820 = vmatpush1.msra.mxu0 0.0
        %5821 = vmatprep.subr.mxu0 0.0
        %5822 = vmatpush1.msra.mxu0 0.0
        %5823 = vmatprep.subr.mxu0 0.0
        %5824 = vmatpush1.msra.mxu0 0.0
        %5825 = vmatprep.subr.mxu0 0.0
        %5826 = vmatpush1.msra.mxu0 0.0
        %5827 = vmatprep.subr.mxu0 0.0
        %5828 = vmatpush1.msra.mxu0 0.0
        %5829 = vmatprep.subr.mxu0 0.0
        %5830 = vmatpush1.msra.mxu0 0.0
        %5831 = vmatprep.subr.mxu0 0.0
        %5832 = vmatpush1.msra.mxu0 0.0
        %5833 = vmatprep.subr.mxu0 0.0
        %5834 = vmatpush1.msra.mxu0 0.0
        %5835 = vmatprep.subr.mxu0 0.0
        %5836 = vmatpush1.msra.mxu0 0.0
        %5837 = vmatprep.subr.mxu0 0.0
        %5838 = vmatpush1.msra.mxu0 0.0
        %5839 = vmatprep.subr.mxu0 0.0
        %5840 = vmatpush1.msra.mxu0 0.0
        %5841 = vmatprep.subr.mxu0 0.0
        %5842 = vmatpush1.msra.mxu0 0.0
        %5843 = vmatprep.subr.mxu0 0.0
        %5844 = vmatpush1.msra.mxu0 0.0
        %5845 = vmatprep.subr.mxu0 0.0
        %5846 = vmatpush1.msra.mxu0 0.0
        %5847 = vmatprep.subr.mxu0 0.0
        %5848 = vmatpush1.msra.mxu0 0.0
        %5849 = vmatprep.subr.mxu0 0.0
        %5850 = vmatpush1.msra.mxu0 0.0
        %5851 = vmatprep.mubr.f32.mxu0 0.0
        %5852 = vmatmul.mubr.f32.gmra.mrb[0].mxu0 %v5509
        %v5853 = vpop.f32.mrb[0].mxu0
        %v5854 = vadd.f32 %v5491, %v5853
        %v5855 = vpop.f32.mrb[0].mxu0
        %v5856 = vadd.f32 %v5491, %v5855
        %5857 = vmatprep.mubr.f32.mxu0 0.0
        %5858 = vmatmul.mubr.f32.gmra.mrb[0].mxu0 %v5512
        %v5859 = vpop.f32.mrb[0].mxu0
        %v5860 = vadd.f32 %v5496, %v5859
        %v5861 = vpop.f32.mrb[0].mxu0
        %v5862 = vadd.f32 %v5496, %v5861
        %5863 = vmatprep.mubr.f32.mxu0 0.0
        %5864 = vmatmul.mubr.f32.gmra.mrb[0].mxu0 %v5515
        %v5865 = vpop.f32.mrb[0].mxu0
        %v5866 = vadd.f32 %v5501, %v5865
        %v5867 = vpop.f32.mrb[0].mxu0
        %v5868 = vadd.f32 %v5501, %v5867
        %5869 = vmatprep.mubr.f32.mxu0 0.0
        %5870 = vmatmul.mubr.f32.gmra.mrb[0].mxu0 %v5518
        %v5871 = vpop.f32.mrb[0].mxu0
        %v5872 = vadd.f32 %v5506, %v5871
        %v5873 = vpop.f32.mrb[0].mxu0
        %v5874 = vadd.f32 %v5506, %v5873
        %5875 = vdwg.mxu0
        %5876 = vmatprep.subr.mxu0 %v5423
        %5877 = vmatpush1.msra.mxu0 %v5422
        %5878 = vmatprep.subr.mxu0 %v5439
        %5879 = vmatpush1.msra.mxu0 %v5438
        %5880 = vmatprep.subr.mxu0 %v5455
        %5881 = vmatpush1.msra.mxu0 %v5454
        %5882 = vmatprep.subr.mxu0 %v5471
        %5883 = vmatpush1.msra.mxu0 %v5470
        %5884 = vmatprep.subr.mxu0 0.0
        %5885 = vmatpush1.msra.mxu0 0.0
        %5886 = vmatprep.subr.mxu0 0.0
        %5887 = vmatpush1.msra.mxu0 0.0
        %5888 = vmatprep.subr.mxu0 0.0
        %5889 = vmatpush1.msra.mxu0 0.0
        %5890 = vmatprep.subr.mxu0 0.0
        %5891 = vmatpush1.msra.mxu0 0.0
        %5892 = vmatprep.subr.mxu0 0.0
        %5893 = vmatpush1.msra.mxu0 0.0
        %5894 = vmatprep.subr.mxu0 0.0
        %5895 = vmatpush1.msra.mxu0 0.0
        %5896 = vmatprep.subr.mxu0 0.0
        %5897 = vmatpush1.msra.mxu0 0.0
        %5898 = vmatprep.subr.mxu0 0.0
        %5899 = vmatpush1.msra.mxu0 0.0
        %5900 = vmatprep.subr.mxu0 0.0
        %5901 = vmatpush1.msra.mxu0 0.0
        %5902 = vmatprep.subr.mxu0 0.0
        %5903 = vmatpush1.msra.mxu0 0.0
        %5904 = vmatprep.subr.mxu0 0.0
        %5905 = vmatpush1.msra.mxu0 0.0
        %5906 = vmatprep.subr.mxu0 0.0
        %5907 = vmatpush1.msra.mxu0 0.0
        %5908 = vmatprep.subr.mxu0 0.0
        %5909 = vmatpush1.msra.mxu0 0.0
        %5910 = vmatprep.subr.mxu0 0.0
        %5911 = vmatpush1.msra.mxu0 0.0
        %5912 = vmatprep.subr.mxu0 0.0
        %5913 = vmatpush1.msra.mxu0 0.0
        %5914 = vmatprep.subr.mxu0 0.0
        %5915 = vmatpush1.msra.mxu0 0.0
        %5916 = vmatprep.subr.mxu0 0.0
        %5917 = vmatpush1.msra.mxu0 0.0
        %5918 = vmatprep.subr.mxu0 0.0
        %5919 = vmatpush1.msra.mxu0 0.0
        %5920 = vmatprep.subr.mxu0 0.0
        %5921 = vmatpush1.msra.mxu0 0.0
        %5922 = vmatprep.subr.mxu0 0.0
        %5923 = vmatpush1.msra.mxu0 0.0
        %5924 = vmatprep.subr.mxu0 0.0
        %5925 = vmatpush1.msra.mxu0 0.0
        %5926 = vmatprep.subr.mxu0 0.0
        %5927 = vmatpush1.msra.mxu0 0.0
        %5928 = vmatprep.subr.mxu0 0.0
        %5929 = vmatpush1.msra.mxu0 0.0
        %5930 = vmatprep.subr.mxu0 0.0
        %5931 = vmatpush1.msra.mxu0 0.0
        %5932 = vmatprep.subr.mxu0 0.0
        %5933 = vmatpush1.msra.mxu0 0.0
        %5934 = vmatprep.subr.mxu0 0.0
        %5935 = vmatpush1.msra.mxu0 0.0
        %5936 = vmatprep.subr.mxu0 0.0
        %5937 = vmatpush1.msra.mxu0 0.0
        %5938 = vmatprep.subr.mxu0 0.0
        %5939 = vmatpush1.msra.mxu0 0.0
        %5940 = vmatprep.mubr.f32.mxu0 0.0
        %5941 = vmatmul.mubr.f32.gmra.mrb[0].mxu0 %v5509
        %v5942 = vpop.f32.mrb[0].mxu0
        %v5943 = vadd.f32 %v5491, %v5942
        %v5944 = vpop.f32.mrb[0].mxu0
        %v5945 = vadd.f32 %v5491, %v5944
        %5946 = vmatprep.mubr.f32.mxu0 0.0
        %5947 = vmatmul.mubr.f32.gmra.mrb[0].mxu0 %v5512
        %v5948 = vpop.f32.mrb[0].mxu0
        %v5949 = vadd.f32 %v5496, %v5948
        %v5950 = vpop.f32.mrb[0].mxu0
        %v5951 = vadd.f32 %v5496, %v5950
        %5952 = vmatprep.mubr.f32.mxu0 0.0
        %5953 = vmatmul.mubr.f32.gmra.mrb[0].mxu0 %v5515
        %v5954 = vpop.f32.mrb[0].mxu0
        %v5955 = vadd.f32 %v5501, %v5954
        %v5956 = vpop.f32.mrb[0].mxu0
        %v5957 = vadd.f32 %v5501, %v5956
        %5958 = vmatprep.mubr.f32.mxu0 0.0
        %5959 = vmatmul.mubr.f32.gmra.mrb[0].mxu0 %v5518
        %v5960 = vpop.f32.mrb[0].mxu0
        %v5961 = vadd.f32 %v5506, %v5960
        %v5962 = vpop.f32.mrb[0].mxu0
        %v5963 = vadd.f32 %v5506, %v5962
        %5964 = vdwg.mxu0
        %5965 = vmatprep.subr.mxu0 %v5425
        %5966 = vmatpush1.msra.mxu0 %v5424
        %5967 = vmatprep.subr.mxu0 %v5441
        %5968 = vmatpush1.msra.mxu0 %v5440
        %5969 = vmatprep.subr.mxu0 %v5457
        %5970 = vmatpush1.msra.mxu0 %v5456
        %5971 = vmatprep.subr.mxu0 %v5473
        %5972 = vmatpush1.msra.mxu0 %v5472
        %5973 = vmatprep.subr.mxu0 0.0
        %5974 = vmatpush1.msra.mxu0 0.0
        %5975 = vmatprep.subr.mxu0 0.0
        %5976 = vmatpush1.msra.mxu0 0.0
        %5977 = vmatprep.subr.mxu0 0.0
        %5978 = vmatpush1.msra.mxu0 0.0
        %5979 = vmatprep.subr.mxu0 0.0
        %5980 = vmatpush1.msra.mxu0 0.0
        %5981 = vmatprep.subr.mxu0 0.0
        %5982 = vmatpush1.msra.mxu0 0.0
        %5983 = vmatprep.subr.mxu0 0.0
        %5984 = vmatpush1.msra.mxu0 0.0
        %5985 = vmatprep.subr.mxu0 0.0
        %5986 = vmatpush1.msra.mxu0 0.0
        %5987 = vmatprep.subr.mxu0 0.0
        %5988 = vmatpush1.msra.mxu0 0.0
        %5989 = vmatprep.subr.mxu0 0.0
        %5990 = vmatpush1.msra.mxu0 0.0
        %5991 = vmatprep.subr.mxu0 0.0
        %5992 = vmatpush1.msra.mxu0 0.0
        %5993 = vmatprep.subr.mxu0 0.0
        %5994 = vmatpush1.msra.mxu0 0.0
        %5995 = vmatprep.subr.mxu0 0.0
        %5996 = vmatpush1.msra.mxu0 0.0
        %5997 = vmatprep.subr.mxu0 0.0
        %5998 = vmatpush1.msra.mxu0 0.0
        %5999 = vmatprep.subr.mxu0 0.0
        %6000 = vmatpush1.msra.mxu0 0.0
        %6001 = vmatprep.subr.mxu0 0.0
        %6002 = vmatpush1.msra.mxu0 0.0
        %6003 = vmatprep.subr.mxu0 0.0
        %6004 = vmatpush1.msra.mxu0 0.0
        %6005 = vmatprep.subr.mxu0 0.0
        %6006 = vmatpush1.msra.mxu0 0.0
        %6007 = vmatprep.subr.mxu0 0.0
        %6008 = vmatpush1.msra.mxu0 0.0
        %6009 = vmatprep.subr.mxu0 0.0
        %6010 = vmatpush1.msra.mxu0 0.0
        %6011 = vmatprep.subr.mxu0 0.0
        %6012 = vmatpush1.msra.mxu0 0.0
        %6013 = vmatprep.subr.mxu0 0.0
        %6014 = vmatpush1.msra.mxu0 0.0
        %6015 = vmatprep.subr.mxu0 0.0
        %6016 = vmatpush1.msra.mxu0 0.0
        %6017 = vmatprep.subr.mxu0 0.0
        %6018 = vmatpush1.msra.mxu0 0.0
        %6019 = vmatprep.subr.mxu0 0.0
        %6020 = vmatpush1.msra.mxu0 0.0
        %6021 = vmatprep.subr.mxu0 0.0
        %6022 = vmatpush1.msra.mxu0 0.0
        %6023 = vmatprep.subr.mxu0 0.0
        %6024 = vmatpush1.msra.mxu0 0.0
        %6025 = vmatprep.subr.mxu0 0.0
        %6026 = vmatpush1.msra.mxu0 0.0
        %6027 = vmatprep.subr.mxu0 0.0
        %6028 = vmatpush1.msra.mxu0 0.0
        %6029 = vmatprep.mubr.f32.mxu0 0.0
        %6030 = vmatmul.mubr.f32.gmra.mrb[0].mxu0 %v5509
        %v6031 = vpop.f32.mrb[0].mxu0
        %v6032 = vadd.f32 %v5491, %v6031
        %v6033 = vpop.f32.mrb[0].mxu0
        %v6034 = vadd.f32 %v5491, %v6033
        %6035 = vmatprep.mubr.f32.mxu0 0.0
        %6036 = vmatmul.mubr.f32.gmra.mrb[0].mxu0 %v5512
        %v6037 = vpop.f32.mrb[0].mxu0
        %v6038 = vadd.f32 %v5496, %v6037
        %v6039 = vpop.f32.mrb[0].mxu0
        %v6040 = vadd.f32 %v5496, %v6039
        %6041 = vmatprep.mubr.f32.mxu0 0.0
        %6042 = vmatmul.mubr.f32.gmra.mrb[0].mxu0 %v5515
        %v6043 = vpop.f32.mrb[0].mxu0
        %v6044 = vadd.f32 %v5501, %v6043
        %v6045 = vpop.f32.mrb[0].mxu0
        %v6046 = vadd.f32 %v5501, %v6045
        %6047 = vmatprep.mubr.f32.mxu0 0.0
        %6048 = vmatmul.mubr.f32.gmra.mrb[0].mxu0 %v5518
        %v6049 = vpop.f32.mrb[0].mxu0
        %v6050 = vadd.f32 %v5506, %v6049
        %v6051 = vpop.f32.mrb[0].mxu0
        %v6052 = vadd.f32 %v5506, %v6051
        %6053 = vdwg.mxu0
        %6054 = vmatprep.subr.mxu0 %v5427
        %6055 = vmatpush1.msra.mxu0 %v5426
        %6056 = vmatprep.subr.mxu0 %v5443
        %6057 = vmatpush1.msra.mxu0 %v5442
        %6058 = vmatprep.subr.mxu0 %v5459
        %6059 = vmatpush1.msra.mxu0 %v5458
        %6060 = vmatprep.subr.mxu0 %v5475
        %6061 = vmatpush1.msra.mxu0 %v5474
        %6062 = vmatprep.subr.mxu0 0.0
        %6063 = vmatpush1.msra.mxu0 0.0
        %6064 = vmatprep.subr.mxu0 0.0
        %6065 = vmatpush1.msra.mxu0 0.0
        %6066 = vmatprep.subr.mxu0 0.0
        %6067 = vmatpush1.msra.mxu0 0.0
        %6068 = vmatprep.subr.mxu0 0.0
        %6069 = vmatpush1.msra.mxu0 0.0
        %6070 = vmatprep.subr.mxu0 0.0
        %6071 = vmatpush1.msra.mxu0 0.0
        %6072 = vmatprep.subr.mxu0 0.0
        %6073 = vmatpush1.msra.mxu0 0.0
        %6074 = vmatprep.subr.mxu0 0.0
        %6075 = vmatpush1.msra.mxu0 0.0
        %6076 = vmatprep.subr.mxu0 0.0
        %6077 = vmatpush1.msra.mxu0 0.0
        %6078 = vmatprep.subr.mxu0 0.0
        %6079 = vmatpush1.msra.mxu0 0.0
        %6080 = vmatprep.subr.mxu0 0.0
        %6081 = vmatpush1.msra.mxu0 0.0
        %6082 = vmatprep.subr.mxu0 0.0
        %6083 = vmatpush1.msra.mxu0 0.0
        %6084 = vmatprep.subr.mxu0 0.0
        %6085 = vmatpush1.msra.mxu0 0.0
        %6086 = vmatprep.subr.mxu0 0.0
        %6087 = vmatpush1.msra.mxu0 0.0
        %6088 = vmatprep.subr.mxu0 0.0
        %6089 = vmatpush1.msra.mxu0 0.0
        %6090 = vmatprep.subr.mxu0 0.0
        %6091 = vmatpush1.msra.mxu0 0.0
        %6092 = vmatprep.subr.mxu0 0.0
        %6093 = vmatpush1.msra.mxu0 0.0
        %6094 = vmatprep.subr.mxu0 0.0
        %6095 = vmatpush1.msra.mxu0 0.0
        %6096 = vmatprep.subr.mxu0 0.0
        %6097 = vmatpush1.msra.mxu0 0.0
        %6098 = vmatprep.subr.mxu0 0.0
        %6099 = vmatpush1.msra.mxu0 0.0
        %6100 = vmatprep.subr.mxu0 0.0
        %6101 = vmatpush1.msra.mxu0 0.0
        %6102 = vmatprep.subr.mxu0 0.0
        %6103 = vmatpush1.msra.mxu0 0.0
        %6104 = vmatprep.subr.mxu0 0.0
        %6105 = vmatpush1.msra.mxu0 0.0
        %6106 = vmatprep.subr.mxu0 0.0
        %6107 = vmatpush1.msra.mxu0 0.0
        %6108 = vmatprep.subr.mxu0 0.0
        %6109 = vmatpush1.msra.mxu0 0.0
        %6110 = vmatprep.subr.mxu0 0.0
        %6111 = vmatpush1.msra.mxu0 0.0
        %6112 = vmatprep.subr.mxu0 0.0
        %6113 = vmatpush1.msra.mxu0 0.0
        %6114 = vmatprep.subr.mxu0 0.0
        %6115 = vmatpush1.msra.mxu0 0.0
        %6116 = vmatprep.subr.mxu0 0.0
        %6117 = vmatpush1.msra.mxu0 0.0
        %6118 = vmatprep.mubr.f32.mxu0 0.0
        %6119 = vmatmul.mubr.f32.gmra.mrb[0].mxu0 %v5509
        %v6120 = vpop.f32.mrb[0].mxu0
        %v6121 = vadd.f32 %v5491, %v6120
        %v6122 = vpop.f32.mrb[0].mxu0
        %v6123 = vadd.f32 %v5491, %v6122
        %6124 = vmatprep.mubr.f32.mxu0 0.0
        %6125 = vmatmul.mubr.f32.gmra.mrb[0].mxu0 %v5512
        %v6126 = vpop.f32.mrb[0].mxu0
        %v6127 = vadd.f32 %v5496, %v6126
        %v6128 = vpop.f32.mrb[0].mxu0
        %v6129 = vadd.f32 %v5496, %v6128
        %6130 = vmatprep.mubr.f32.mxu0 0.0
        %6131 = vmatmul.mubr.f32.gmra.mrb[0].mxu0 %v5515
        %v6132 = vpop.f32.mrb[0].mxu0
        %v6133 = vadd.f32 %v5501, %v6132
        %v6134 = vpop.f32.mrb[0].mxu0
        %v6135 = vadd.f32 %v5501, %v6134
        %6136 = vmatprep.mubr.f32.mxu0 0.0
        %6137 = vmatmul.mubr.f32.gmra.mrb[0].mxu0 %v5518
        %v6138 = vpop.f32.mrb[0].mxu0
        %v6139 = vadd.f32 %v5506, %v6138
        %v6140 = vpop.f32.mrb[0].mxu0
        %v6141 = vadd.f32 %v5506, %v6140
        %6142 = vdwg.mxu0
        %6143 = vmatprep.subr.mxu0 %v5429
        %6144 = vmatpush1.msra.mxu0 %v5428
        %6145 = vmatprep.subr.mxu0 %v5445
        %6146 = vmatpush1.msra.mxu0 %v5444
        %6147 = vmatprep.subr.mxu0 %v5461
        %6148 = vmatpush1.msra.mxu0 %v5460
        %6149 = vmatprep.subr.mxu0 %v5477
        %6150 = vmatpush1.msra.mxu0 %v5476
        %6151 = vmatprep.subr.mxu0 0.0
        %6152 = vmatpush1.msra.mxu0 0.0
        %6153 = vmatprep.subr.mxu0 0.0
        %6154 = vmatpush1.msra.mxu0 0.0
        %6155 = vmatprep.subr.mxu0 0.0
        %6156 = vmatpush1.msra.mxu0 0.0
        %6157 = vmatprep.subr.mxu0 0.0
        %6158 = vmatpush1.msra.mxu0 0.0
        %6159 = vmatprep.subr.mxu0 0.0
        %6160 = vmatpush1.msra.mxu0 0.0
        %6161 = vmatprep.subr.mxu0 0.0
        %6162 = vmatpush1.msra.mxu0 0.0
        %6163 = vmatprep.subr.mxu0 0.0
        %6164 = vmatpush1.msra.mxu0 0.0
        %6165 = vmatprep.subr.mxu0 0.0
        %6166 = vmatpush1.msra.mxu0 0.0
        %6167 = vmatprep.subr.mxu0 0.0
        %6168 = vmatpush1.msra.mxu0 0.0
        %6169 = vmatprep.subr.mxu0 0.0
        %6170 = vmatpush1.msra.mxu0 0.0
        %6171 = vmatprep.subr.mxu0 0.0
        %6172 = vmatpush1.msra.mxu0 0.0
        %6173 = vmatprep.subr.mxu0 0.0
        %6174 = vmatpush1.msra.mxu0 0.0
        %6175 = vmatprep.subr.mxu0 0.0
        %6176 = vmatpush1.msra.mxu0 0.0
        %6177 = vmatprep.subr.mxu0 0.0
        %6178 = vmatpush1.msra.mxu0 0.0
        %6179 = vmatprep.subr.mxu0 0.0
        %6180 = vmatpush1.msra.mxu0 0.0
        %6181 = vmatprep.subr.mxu0 0.0
        %6182 = vmatpush1.msra.mxu0 0.0
        %6183 = vmatprep.subr.mxu0 0.0
        %6184 = vmatpush1.msra.mxu0 0.0
        %6185 = vmatprep.subr.mxu0 0.0
        %6186 = vmatpush1.msra.mxu0 0.0
        %6187 = vmatprep.subr.mxu0 0.0
        %6188 = vmatpush1.msra.mxu0 0.0
        %6189 = vmatprep.subr.mxu0 0.0
        %6190 = vmatpush1.msra.mxu0 0.0
        %6191 = vmatprep.subr.mxu0 0.0
        %6192 = vmatpush1.msra.mxu0 0.0
        %6193 = vmatprep.subr.mxu0 0.0
        %6194 = vmatpush1.msra.mxu0 0.0
        %6195 = vmatprep.subr.mxu0 0.0
        %6196 = vmatpush1.msra.mxu0 0.0
        %6197 = vmatprep.subr.mxu0 0.0
        %6198 = vmatpush1.msra.mxu0 0.0
        %6199 = vmatprep.subr.mxu0 0.0
        %6200 = vmatpush1.msra.mxu0 0.0
        %6201 = vmatprep.subr.mxu0 0.0
        %6202 = vmatpush1.msra.mxu0 0.0
        %6203 = vmatprep.subr.mxu0 0.0
        %6204 = vmatpush1.msra.mxu0 0.0
        %6205 = vmatprep.subr.mxu0 0.0
        %6206 = vmatpush1.msra.mxu0 0.0
        %6207 = vmatprep.mubr.f32.mxu0 0.0
        %6208 = vmatmul.mubr.f32.gmra.mrb[0].mxu0 %v5509
        %v6209 = vpop.f32.mrb[0].mxu0
        %v6210 = vadd.f32 %v5491, %v6209
        %v6211 = vpop.f32.mrb[0].mxu0
        %v6212 = vadd.f32 %v5491, %v6211
        %6213 = vmatprep.mubr.f32.mxu0 0.0
        %6214 = vmatmul.mubr.f32.gmra.mrb[0].mxu0 %v5512
        %v6215 = vpop.f32.mrb[0].mxu0
        %v6216 = vadd.f32 %v5496, %v6215
        %v6217 = vpop.f32.mrb[0].mxu0
        %v6218 = vadd.f32 %v5496, %v6217
        %6219 = vmatprep.mubr.f32.mxu0 0.0
        %6220 = vmatmul.mubr.f32.gmra.mrb[0].mxu0 %v5515
        %v6221 = vpop.f32.mrb[0].mxu0
        %v6222 = vadd.f32 %v5501, %v6221
        %v6223 = vpop.f32.mrb[0].mxu0
        %v6224 = vadd.f32 %v5501, %v6223
        %6225 = vmatprep.mubr.f32.mxu0 0.0
        %6226 = vmatmul.mubr.f32.gmra.mrb[0].mxu0 %v5518
        %v6227 = vpop.f32.mrb[0].mxu0
        %v6228 = vadd.f32 %v5506, %v6227
        %v6229 = vpop.f32.mrb[0].mxu0
        %v6230 = vadd.f32 %v5506, %v6229
        %6231 = vdwg.mxu0
        %v6232 = vtanh.pop %v5587
        %v6233 = vtanh.pop %v5589
        %v6234 = vtanh.pop %v5676
        %v6235 = vtanh.pop %v5678
        %v6236 = vtanh.pop %v5765
        %v6237 = vtanh.pop %v5767
        %v6238 = vtanh.pop %v5854
        %v6239 = vtanh.pop %v5856
        %v6240 = vtanh.pop %v5943
        %v6241 = vtanh.pop %v5945
        %v6242 = vtanh.pop %v6032
        %v6243 = vtanh.pop %v6034
        %v6244 = vtanh.pop %v6121
        %v6245 = vtanh.pop %v6123
        %v6246 = vtanh.pop %v6210
        %v6247 = vtanh.pop %v6212
        %v6248 = vtanh.pop %v5593
        %v6249 = vtanh.pop %v5595
        %v6250 = vtanh.pop %v5682
        %v6251 = vtanh.pop %v5684
        %v6252 = vtanh.pop %v5771
        %v6253 = vtanh.pop %v5773
        %v6254 = vtanh.pop %v5860
        %v6255 = vtanh.pop %v5862
        %v6256 = vtanh.pop %v5949
        %v6257 = vtanh.pop %v5951
        %v6258 = vtanh.pop %v6038
        %v6259 = vtanh.pop %v6040
        %v6260 = vtanh.pop %v6127
        %v6261 = vtanh.pop %v6129
        %v6262 = vtanh.pop %v6216
        %v6263 = vtanh.pop %v6218
        %v6264 = vtanh.pop %v5599
        %v6265 = vtanh.pop %v5601
        %v6266 = vtanh.pop %v5688
        %v6267 = vtanh.pop %v5690
        %v6268 = vtanh.pop %v5777
        %v6269 = vtanh.pop %v5779
        %v6270 = vtanh.pop %v5866
        %v6271 = vtanh.pop %v5868
        %v6272 = vtanh.pop %v5955
        %v6273 = vtanh.pop %v5957
        %v6274 = vtanh.pop %v6044
        %v6275 = vtanh.pop %v6046
        %v6276 = vtanh.pop %v6133
        %v6277 = vtanh.pop %v6135
        %v6278 = vtanh.pop %v6222
        %v6279 = vtanh.pop %v6224
        %v6280 = vtanh.pop %v5605
        %v6281 = vtanh.pop %v5607
        %v6282 = vtanh.pop %v5694
        %v6283 = vtanh.pop %v5696
        %v6284 = vtanh.pop %v5783
        %v6285 = vtanh.pop %v5785
        %v6286 = vtanh.pop %v5872
        %v6287 = vtanh.pop %v5874
        %v6288 = vtanh.pop %v5961
        %v6289 = vtanh.pop %v5963
        %v6290 = vtanh.pop %v6050
        %v6291 = vtanh.pop %v6052
        %v6292 = vtanh.pop %v6139
        %v6293 = vtanh.pop %v6141
        %v6294 = vtanh.pop %v6228
        %v6295 = vtanh.pop %v6230
        %v6296 = vadd.f32 %v6232, %v4596
        %v6297 = vadd.f32 %v6233, %v4597
        %v6298 = vadd.f32 %v6234, %v4598
        %v6299 = vadd.f32 %v6235, %v4599
        %v6300 = vadd.f32 %v6236, %v4600
        %v6301 = vadd.f32 %v6237, %v4601
        %v6302 = vadd.f32 %v6238, %v4602
        %v6303 = vadd.f32 %v6239, %v4603
        %v6304 = vadd.f32 %v6240, %v4604
        %v6305 = vadd.f32 %v6241, %v4605
        %v6306 = vadd.f32 %v6242, %v4606
        %v6307 = vadd.f32 %v6243, %v4607
        %v6308 = vadd.f32 %v6244, %v4608
        %v6309 = vadd.f32 %v6245, %v4609
        %v6310 = vadd.f32 %v6246, %v4610
        %v6311 = vadd.f32 %v6247, %v4611
        %v6312 = vadd.f32 %v6248, %v4612
        %v6313 = vadd.f32 %v6249, %v4613
        %v6314 = vadd.f32 %v6250, %v4614
        %v6315 = vadd.f32 %v6251, %v4615
        %v6316 = vadd.f32 %v6252, %v4616
        %v6317 = vadd.f32 %v6253, %v4617
        %v6318 = vadd.f32 %v6254, %v4618
        %v6319 = vadd.f32 %v6255, %v4619
        %v6320 = vadd.f32 %v6256, %v4620
        %v6321 = vadd.f32 %v6257, %v4621
        %v6322 = vadd.f32 %v6258, %v4622
        %v6323 = vadd.f32 %v6259, %v4623
        %v6324 = vadd.f32 %v6260, %v4624
        %v6325 = vadd.f32 %v6261, %v4625
        %v6326 = vadd.f32 %v6262, %v4626
        %v6327 = vadd.f32 %v6263, %v4627
        %v6328 = vadd.f32 %v6264, %v4628
        %v6329 = vadd.f32 %v6265, %v4629
        %v6330 = vadd.f32 %v6266, %v4630
        %v6331 = vadd.f32 %v6267, %v4631
        %v6332 = vadd.f32 %v6268, %v4632
        %v6333 = vadd.f32 %v6269, %v4633
        %v6334 = vadd.f32 %v6270, %v4634
        %v6335 = vadd.f32 %v6271, %v4635
        %v6336 = vadd.f32 %v6272, %v4636
        %v6337 = vadd.f32 %v6273, %v4637
        %v6338 = vadd.f32 %v6274, %v4638
        %v6339 = vadd.f32 %v6275, %v4639
        %v6340 = vadd.f32 %v6276, %v4640
        %v6341 = vadd.f32 %v6277, %v4641
        %v6342 = vadd.f32 %v6278, %v4642
        %v6343 = vadd.f32 %v6279, %v4643
        %v6344 = vadd.f32 %v6280, %v4644
        %v6345 = vadd.f32 %v6281, %v4645
        %v6346 = vadd.f32 %v6282, %v4646
        %v6347 = vadd.f32 %v6283, %v4647
        %v6348 = vadd.f32 %v6284, %v4648
        %v6349 = vadd.f32 %v6285, %v4649
        %v6350 = vadd.f32 %v6286, %v4650
        %v6351 = vadd.f32 %v6287, %v4651
        %v6352 = vadd.f32 %v6288, %v4652
        %v6353 = vadd.f32 %v6289, %v4653
        %v6354 = vadd.f32 %v6290, %v4654
        %v6355 = vadd.f32 %v6291, %v4655
        %v6356 = vadd.f32 %v6292, %v4656
        %v6357 = vadd.f32 %v6293, %v4657
        %v6358 = vadd.f32 %v6294, %v4658
        %v6359 = vadd.f32 %v6295, %v4659
        %s6360 = scalar_lea.vmem %s3, 96
        %v6361 = vld [vmem:[%s6360] sm:$0xff]
        %v6362 = vld [vmem:[%s6360 + $0x8] sm:$0xff]
        %v6363 = vld [vmem:[%s6360 + $0x10] sm:$0xff]
        %v6364 = vld [vmem:[%s6360 + $0x18] sm:$0xff]
        %s6365 = scalar_lea.vmem %s4, 96
        %v6366 = vld [vmem:[%s6365] sm:$0xff]
        %v6367 = vld [vmem:[%s6365 + $0x8] sm:$0xff]
        %v6368 = vld [vmem:[%s6365 + $0x10] sm:$0xff]
        %v6369 = vld [vmem:[%s6365 + $0x18] sm:$0xff]
        %6371 = vset.pattern.permute.xlu0 0
        %6372 = vperm.xlu0 %6371, %v6366
        %v6373 = vpop.permute.xlu0 %6372
        %6376 = vset.pattern.permute.xlu0 0
        %6377 = vperm.xlu0 %6376, %v6367
        %v6378 = vpop.permute.xlu0 %6377
        %6381 = vset.pattern.permute.xlu0 0
        %6382 = vperm.xlu0 %6381, %v6368
        %v6383 = vpop.permute.xlu0 %6382
        %6386 = vset.pattern.permute.xlu0 0
        %6387 = vperm.xlu0 %6386, %v6369
        %v6388 = vpop.permute.xlu0 %6387
        %v6391 = vsel %vm1291, %v6361, 0
        %v6394 = vsel %vm1291, %v6362, 0
        %v6397 = vsel %vm1291, %v6363, 0
        %v6400 = vsel %vm1291, %v6364, 0
        %6402 = vmatprep.subr.mxu0 %v6297
        %6403 = vmatpush1.msra.mxu0 %v6296
        %6404 = vmatprep.subr.mxu0 %v6313
        %6405 = vmatpush1.msra.mxu0 %v6312
        %6406 = vmatprep.subr.mxu0 %v6329
        %6407 = vmatpush1.msra.mxu0 %v6328
        %6408 = vmatprep.subr.mxu0 %v6345
        %6409 = vmatpush1.msra.mxu0 %v6344
        %6410 = vmatprep.subr.mxu0 0.0
        %6411 = vmatpush1.msra.mxu0 0.0
        %6412 = vmatprep.subr.mxu0 0.0
        %6413 = vmatpush1.msra.mxu0 0.0
        %6414 = vmatprep.subr.mxu0 0.0
        %6415 = vmatpush1.msra.mxu0 0.0
        %6416 = vmatprep.subr.mxu0 0.0
        %6417 = vmatpush1.msra.mxu0 0.0
        %6418 = vmatprep.subr.mxu0 0.0
        %6419 = vmatpush1.msra.mxu0 0.0
        %6420 = vmatprep.subr.mxu0 0.0
        %6421 = vmatpush1.msra.mxu0 0.0
        %6422 = vmatprep.subr.mxu0 0.0
        %6423 = vmatpush1.msra.mxu0 0.0
        %6424 = vmatprep.subr.mxu0 0.0
        %6425 = vmatpush1.msra.mxu0 0.0
        %6426 = vmatprep.subr.mxu0 0.0
        %6427 = vmatpush1.msra.mxu0 0.0
        %6428 = vmatprep.subr.mxu0 0.0
        %6429 = vmatpush1.msra.mxu0 0.0
        %6430 = vmatprep.subr.mxu0 0.0
        %6431 = vmatpush1.msra.mxu0 0.0
        %6432 = vmatprep.subr.mxu0 0.0
        %6433 = vmatpush1.msra.mxu0 0.0
        %6434 = vmatprep.subr.mxu0 0.0
        %6435 = vmatpush1.msra.mxu0 0.0
        %6436 = vmatprep.subr.mxu0 0.0
        %6437 = vmatpush1.msra.mxu0 0.0
        %6438 = vmatprep.subr.mxu0 0.0
        %6439 = vmatpush1.msra.mxu0 0.0
        %6440 = vmatprep.subr.mxu0 0.0
        %6441 = vmatpush1.msra.mxu0 0.0
        %6442 = vmatprep.subr.mxu0 0.0
        %6443 = vmatpush1.msra.mxu0 0.0
        %6444 = vmatprep.subr.mxu0 0.0
        %6445 = vmatpush1.msra.mxu0 0.0
        %6446 = vmatprep.subr.mxu0 0.0
        %6447 = vmatpush1.msra.mxu0 0.0
        %6448 = vmatprep.subr.mxu0 0.0
        %6449 = vmatpush1.msra.mxu0 0.0
        %6450 = vmatprep.subr.mxu0 0.0
        %6451 = vmatpush1.msra.mxu0 0.0
        %6452 = vmatprep.subr.mxu0 0.0
        %6453 = vmatpush1.msra.mxu0 0.0
        %6454 = vmatprep.subr.mxu0 0.0
        %6455 = vmatpush1.msra.mxu0 0.0
        %6456 = vmatprep.subr.mxu0 0.0
        %6457 = vmatpush1.msra.mxu0 0.0
        %6458 = vmatprep.subr.mxu0 0.0
        %6459 = vmatpush1.msra.mxu0 0.0
        %6460 = vmatprep.subr.mxu0 0.0
        %6461 = vmatpush1.msra.mxu0 0.0
        %6462 = vmatprep.subr.mxu0 0.0
        %6463 = vmatpush1.msra.mxu0 0.0
        %6464 = vmatprep.subr.mxu0 0.0
        %6465 = vmatpush1.msra.mxu0 0.0
        %6466 = vmatprep.mubr.f32.mxu0 0.0
        %6467 = vmatmul.mubr.f32.gmra.mrb[0].mxu0 %v6391
        %v6468 = vpop.f32.mrb[0].mxu0
        %v6469 = vadd.f32 %v6373, %v6468
        %v6470 = vpop.f32.mrb[0].mxu0
        %v6471 = vadd.f32 %v6373, %v6470
        %6472 = vmatprep.mubr.f32.mxu0 0.0
        %6473 = vmatmul.mubr.f32.gmra.mrb[0].mxu0 %v6394
        %v6474 = vpop.f32.mrb[0].mxu0
        %v6475 = vadd.f32 %v6378, %v6474
        %v6476 = vpop.f32.mrb[0].mxu0
        %v6477 = vadd.f32 %v6378, %v6476
        %6478 = vmatprep.mubr.f32.mxu0 0.0
        %6479 = vmatmul.mubr.f32.gmra.mrb[0].mxu0 %v6397
        %v6480 = vpop.f32.mrb[0].mxu0
        %v6481 = vadd.f32 %v6383, %v6480
        %v6482 = vpop.f32.mrb[0].mxu0
        %v6483 = vadd.f32 %v6383, %v6482
        %6484 = vmatprep.mubr.f32.mxu0 0.0
        %6485 = vmatmul.mubr.f32.gmra.mrb[0].mxu0 %v6400
        %v6486 = vpop.f32.mrb[0].mxu0
        %v6487 = vadd.f32 %v6388, %v6486
        %v6488 = vpop.f32.mrb[0].mxu0
        %v6489 = vadd.f32 %v6388, %v6488
        %6490 = vdwg.mxu0
        %6491 = vmatprep.subr.mxu0 %v6299
        %6492 = vmatpush1.msra.mxu0 %v6298
        %6493 = vmatprep.subr.mxu0 %v6315
        %6494 = vmatpush1.msra.mxu0 %v6314
        %6495 = vmatprep.subr.mxu0 %v6331
        %6496 = vmatpush1.msra.mxu0 %v6330
        %6497 = vmatprep.subr.mxu0 %v6347
        %6498 = vmatpush1.msra.mxu0 %v6346
        %6499 = vmatprep.subr.mxu0 0.0
        %6500 = vmatpush1.msra.mxu0 0.0
        %6501 = vmatprep.subr.mxu0 0.0
        %6502 = vmatpush1.msra.mxu0 0.0
        %6503 = vmatprep.subr.mxu0 0.0
        %6504 = vmatpush1.msra.mxu0 0.0
        %6505 = vmatprep.subr.mxu0 0.0
        %6506 = vmatpush1.msra.mxu0 0.0
        %6507 = vmatprep.subr.mxu0 0.0
        %6508 = vmatpush1.msra.mxu0 0.0
        %6509 = vmatprep.subr.mxu0 0.0
        %6510 = vmatpush1.msra.mxu0 0.0
        %6511 = vmatprep.subr.mxu0 0.0
        %6512 = vmatpush1.msra.mxu0 0.0
        %6513 = vmatprep.subr.mxu0 0.0
        %6514 = vmatpush1.msra.mxu0 0.0
        %6515 = vmatprep.subr.mxu0 0.0
        %6516 = vmatpush1.msra.mxu0 0.0
        %6517 = vmatprep.subr.mxu0 0.0
        %6518 = vmatpush1.msra.mxu0 0.0
        %6519 = vmatprep.subr.mxu0 0.0
        %6520 = vmatpush1.msra.mxu0 0.0
        %6521 = vmatprep.subr.mxu0 0.0
        %6522 = vmatpush1.msra.mxu0 0.0
        %6523 = vmatprep.subr.mxu0 0.0
        %6524 = vmatpush1.msra.mxu0 0.0
        %6525 = vmatprep.subr.mxu0 0.0
        %6526 = vmatpush1.msra.mxu0 0.0
        %6527 = vmatprep.subr.mxu0 0.0
        %6528 = vmatpush1.msra.mxu0 0.0
        %6529 = vmatprep.subr.mxu0 0.0
        %6530 = vmatpush1.msra.mxu0 0.0
        %6531 = vmatprep.subr.mxu0 0.0
        %6532 = vmatpush1.msra.mxu0 0.0
        %6533 = vmatprep.subr.mxu0 0.0
        %6534 = vmatpush1.msra.mxu0 0.0
        %6535 = vmatprep.subr.mxu0 0.0
        %6536 = vmatpush1.msra.mxu0 0.0
        %6537 = vmatprep.subr.mxu0 0.0
        %6538 = vmatpush1.msra.mxu0 0.0
        %6539 = vmatprep.subr.mxu0 0.0
        %6540 = vmatpush1.msra.mxu0 0.0
        %6541 = vmatprep.subr.mxu0 0.0
        %6542 = vmatpush1.msra.mxu0 0.0
        %6543 = vmatprep.subr.mxu0 0.0
        %6544 = vmatpush1.msra.mxu0 0.0
        %6545 = vmatprep.subr.mxu0 0.0
        %6546 = vmatpush1.msra.mxu0 0.0
        %6547 = vmatprep.subr.mxu0 0.0
        %6548 = vmatpush1.msra.mxu0 0.0
        %6549 = vmatprep.subr.mxu0 0.0
        %6550 = vmatpush1.msra.mxu0 0.0
        %6551 = vmatprep.subr.mxu0 0.0
        %6552 = vmatpush1.msra.mxu0 0.0
        %6553 = vmatprep.subr.mxu0 0.0
        %6554 = vmatpush1.msra.mxu0 0.0
        %6555 = vmatprep.mubr.f32.mxu0 0.0
        %6556 = vmatmul.mubr.f32.gmra.mrb[0].mxu0 %v6391
        %v6557 = vpop.f32.mrb[0].mxu0
        %v6558 = vadd.f32 %v6373, %v6557
        %v6559 = vpop.f32.mrb[0].mxu0
        %v6560 = vadd.f32 %v6373, %v6559
        %6561 = vmatprep.mubr.f32.mxu0 0.0
        %6562 = vmatmul.mubr.f32.gmra.mrb[0].mxu0 %v6394
        %v6563 = vpop.f32.mrb[0].mxu0
        %v6564 = vadd.f32 %v6378, %v6563
        %v6565 = vpop.f32.mrb[0].mxu0
        %v6566 = vadd.f32 %v6378, %v6565
        %6567 = vmatprep.mubr.f32.mxu0 0.0
        %6568 = vmatmul.mubr.f32.gmra.mrb[0].mxu0 %v6397
        %v6569 = vpop.f32.mrb[0].mxu0
        %v6570 = vadd.f32 %v6383, %v6569
        %v6571 = vpop.f32.mrb[0].mxu0
        %v6572 = vadd.f32 %v6383, %v6571
        %6573 = vmatprep.mubr.f32.mxu0 0.0
        %6574 = vmatmul.mubr.f32.gmra.mrb[0].mxu0 %v6400
        %v6575 = vpop.f32.mrb[0].mxu0
        %v6576 = vadd.f32 %v6388, %v6575
        %v6577 = vpop.f32.mrb[0].mxu0
        %v6578 = vadd.f32 %v6388, %v6577
        %6579 = vdwg.mxu0
        %6580 = vmatprep.subr.mxu0 %v6301
        %6581 = vmatpush1.msra.mxu0 %v6300
        %6582 = vmatprep.subr.mxu0 %v6317
        %6583 = vmatpush1.msra.mxu0 %v6316
        %6584 = vmatprep.subr.mxu0 %v6333
        %6585 = vmatpush1.msra.mxu0 %v6332
        %6586 = vmatprep.subr.mxu0 %v6349
        %6587 = vmatpush1.msra.mxu0 %v6348
        %6588 = vmatprep.subr.mxu0 0.0
        %6589 = vmatpush1.msra.mxu0 0.0
        %6590 = vmatprep.subr.mxu0 0.0
        %6591 = vmatpush1.msra.mxu0 0.0
        %6592 = vmatprep.subr.mxu0 0.0
        %6593 = vmatpush1.msra.mxu0 0.0
        %6594 = vmatprep.subr.mxu0 0.0
        %6595 = vmatpush1.msra.mxu0 0.0
        %6596 = vmatprep.subr.mxu0 0.0
        %6597 = vmatpush1.msra.mxu0 0.0
        %6598 = vmatprep.subr.mxu0 0.0
        %6599 = vmatpush1.msra.mxu0 0.0
        %6600 = vmatprep.subr.mxu0 0.0
        %6601 = vmatpush1.msra.mxu0 0.0
        %6602 = vmatprep.subr.mxu0 0.0
        %6603 = vmatpush1.msra.mxu0 0.0
        %6604 = vmatprep.subr.mxu0 0.0
        %6605 = vmatpush1.msra.mxu0 0.0
        %6606 = vmatprep.subr.mxu0 0.0
        %6607 = vmatpush1.msra.mxu0 0.0
        %6608 = vmatprep.subr.mxu0 0.0
        %6609 = vmatpush1.msra.mxu0 0.0
        %6610 = vmatprep.subr.mxu0 0.0
        %6611 = vmatpush1.msra.mxu0 0.0
        %6612 = vmatprep.subr.mxu0 0.0
        %6613 = vmatpush1.msra.mxu0 0.0
        %6614 = vmatprep.subr.mxu0 0.0
        %6615 = vmatpush1.msra.mxu0 0.0
        %6616 = vmatprep.subr.mxu0 0.0
        %6617 = vmatpush1.msra.mxu0 0.0
        %6618 = vmatprep.subr.mxu0 0.0
        %6619 = vmatpush1.msra.mxu0 0.0
        %6620 = vmatprep.subr.mxu0 0.0
        %6621 = vmatpush1.msra.mxu0 0.0
        %6622 = vmatprep.subr.mxu0 0.0
        %6623 = vmatpush1.msra.mxu0 0.0
        %6624 = vmatprep.subr.mxu0 0.0
        %6625 = vmatpush1.msra.mxu0 0.0
        %6626 = vmatprep.subr.mxu0 0.0
        %6627 = vmatpush1.msra.mxu0 0.0
        %6628 = vmatprep.subr.mxu0 0.0
        %6629 = vmatpush1.msra.mxu0 0.0
        %6630 = vmatprep.subr.mxu0 0.0
        %6631 = vmatpush1.msra.mxu0 0.0
        %6632 = vmatprep.subr.mxu0 0.0
        %6633 = vmatpush1.msra.mxu0 0.0
        %6634 = vmatprep.subr.mxu0 0.0
        %6635 = vmatpush1.msra.mxu0 0.0
        %6636 = vmatprep.subr.mxu0 0.0
        %6637 = vmatpush1.msra.mxu0 0.0
        %6638 = vmatprep.subr.mxu0 0.0
        %6639 = vmatpush1.msra.mxu0 0.0
        %6640 = vmatprep.subr.mxu0 0.0
        %6641 = vmatpush1.msra.mxu0 0.0
        %6642 = vmatprep.subr.mxu0 0.0
        %6643 = vmatpush1.msra.mxu0 0.0
        %6644 = vmatprep.mubr.f32.mxu0 0.0
        %6645 = vmatmul.mubr.f32.gmra.mrb[0].mxu0 %v6391
        %v6646 = vpop.f32.mrb[0].mxu0
        %v6647 = vadd.f32 %v6373, %v6646
        %v6648 = vpop.f32.mrb[0].mxu0
        %v6649 = vadd.f32 %v6373, %v6648
        %6650 = vmatprep.mubr.f32.mxu0 0.0
        %6651 = vmatmul.mubr.f32.gmra.mrb[0].mxu0 %v6394
        %v6652 = vpop.f32.mrb[0].mxu0
        %v6653 = vadd.f32 %v6378, %v6652
        %v6654 = vpop.f32.mrb[0].mxu0
        %v6655 = vadd.f32 %v6378, %v6654
        %6656 = vmatprep.mubr.f32.mxu0 0.0
        %6657 = vmatmul.mubr.f32.gmra.mrb[0].mxu0 %v6397
        %v6658 = vpop.f32.mrb[0].mxu0
        %v6659 = vadd.f32 %v6383, %v6658
        %v6660 = vpop.f32.mrb[0].mxu0
        %v6661 = vadd.f32 %v6383, %v6660
        %6662 = vmatprep.mubr.f32.mxu0 0.0
        %6663 = vmatmul.mubr.f32.gmra.mrb[0].mxu0 %v6400
        %v6664 = vpop.f32.mrb[0].mxu0
        %v6665 = vadd.f32 %v6388, %v6664
        %v6666 = vpop.f32.mrb[0].mxu0
        %v6667 = vadd.f32 %v6388, %v6666
        %6668 = vdwg.mxu0
        %6669 = vmatprep.subr.mxu0 %v6303
        %6670 = vmatpush1.msra.mxu0 %v6302
        %6671 = vmatprep.subr.mxu0 %v6319
        %6672 = vmatpush1.msra.mxu0 %v6318
        %6673 = vmatprep.subr.mxu0 %v6335
        %6674 = vmatpush1.msra.mxu0 %v6334
        %6675 = vmatprep.subr.mxu0 %v6351
        %6676 = vmatpush1.msra.mxu0 %v6350
        %6677 = vmatprep.subr.mxu0 0.0
        %6678 = vmatpush1.msra.mxu0 0.0
        %6679 = vmatprep.subr.mxu0 0.0
        %6680 = vmatpush1.msra.mxu0 0.0
        %6681 = vmatprep.subr.mxu0 0.0
        %6682 = vmatpush1.msra.mxu0 0.0
        %6683 = vmatprep.subr.mxu0 0.0
        %6684 = vmatpush1.msra.mxu0 0.0
        %6685 = vmatprep.subr.mxu0 0.0
        %6686 = vmatpush1.msra.mxu0 0.0
        %6687 = vmatprep.subr.mxu0 0.0
        %6688 = vmatpush1.msra.mxu0 0.0
        %6689 = vmatprep.subr.mxu0 0.0
        %6690 = vmatpush1.msra.mxu0 0.0
        %6691 = vmatprep.subr.mxu0 0.0
        %6692 = vmatpush1.msra.mxu0 0.0
        %6693 = vmatprep.subr.mxu0 0.0
        %6694 = vmatpush1.msra.mxu0 0.0
        %6695 = vmatprep.subr.mxu0 0.0
        %6696 = vmatpush1.msra.mxu0 0.0
        %6697 = vmatprep.subr.mxu0 0.0
        %6698 = vmatpush1.msra.mxu0 0.0
        %6699 = vmatprep.subr.mxu0 0.0
        %6700 = vmatpush1.msra.mxu0 0.0
        %6701 = vmatprep.subr.mxu0 0.0
        %6702 = vmatpush1.msra.mxu0 0.0
        %6703 = vmatprep.subr.mxu0 0.0
        %6704 = vmatpush1.msra.mxu0 0.0
        %6705 = vmatprep.subr.mxu0 0.0
        %6706 = vmatpush1.msra.mxu0 0.0
        %6707 = vmatprep.subr.mxu0 0.0
        %6708 = vmatpush1.msra.mxu0 0.0
        %6709 = vmatprep.subr.mxu0 0.0
        %6710 = vmatpush1.msra.mxu0 0.0
        %6711 = vmatprep.subr.mxu0 0.0
        %6712 = vmatpush1.msra.mxu0 0.0
        %6713 = vmatprep.subr.mxu0 0.0
        %6714 = vmatpush1.msra.mxu0 0.0
        %6715 = vmatprep.subr.mxu0 0.0
        %6716 = vmatpush1.msra.mxu0 0.0
        %6717 = vmatprep.subr.mxu0 0.0
        %6718 = vmatpush1.msra.mxu0 0.0
        %6719 = vmatprep.subr.mxu0 0.0
        %6720 = vmatpush1.msra.mxu0 0.0
        %6721 = vmatprep.subr.mxu0 0.0
        %6722 = vmatpush1.msra.mxu0 0.0
        %6723 = vmatprep.subr.mxu0 0.0
        %6724 = vmatpush1.msra.mxu0 0.0
        %6725 = vmatprep.subr.mxu0 0.0
        %6726 = vmatpush1.msra.mxu0 0.0
        %6727 = vmatprep.subr.mxu0 0.0
        %6728 = vmatpush1.msra.mxu0 0.0
        %6729 = vmatprep.subr.mxu0 0.0
        %6730 = vmatpush1.msra.mxu0 0.0
        %6731 = vmatprep.subr.mxu0 0.0
        %6732 = vmatpush1.msra.mxu0 0.0
        %6733 = vmatprep.mubr.f32.mxu0 0.0
        %6734 = vmatmul.mubr.f32.gmra.mrb[0].mxu0 %v6391
        %v6735 = vpop.f32.mrb[0].mxu0
        %v6736 = vadd.f32 %v6373, %v6735
        %v6737 = vpop.f32.mrb[0].mxu0
        %v6738 = vadd.f32 %v6373, %v6737
        %6739 = vmatprep.mubr.f32.mxu0 0.0
        %6740 = vmatmul.mubr.f32.gmra.mrb[0].mxu0 %v6394
        %v6741 = vpop.f32.mrb[0].mxu0
        %v6742 = vadd.f32 %v6378, %v6741
        %v6743 = vpop.f32.mrb[0].mxu0
        %v6744 = vadd.f32 %v6378, %v6743
        %6745 = vmatprep.mubr.f32.mxu0 0.0
        %6746 = vmatmul.mubr.f32.gmra.mrb[0].mxu0 %v6397
        %v6747 = vpop.f32.mrb[0].mxu0
        %v6748 = vadd.f32 %v6383, %v6747
        %v6749 = vpop.f32.mrb[0].mxu0
        %v6750 = vadd.f32 %v6383, %v6749
        %6751 = vmatprep.mubr.f32.mxu0 0.0
        %6752 = vmatmul.mubr.f32.gmra.mrb[0].mxu0 %v6400
        %v6753 = vpop.f32.mrb[0].mxu0
        %v6754 = vadd.f32 %v6388, %v6753
        %v6755 = vpop.f32.mrb[0].mxu0
        %v6756 = vadd.f32 %v6388, %v6755
        %6757 = vdwg.mxu0
        %6758 = vmatprep.subr.mxu0 %v6305
        %6759 = vmatpush1.msra.mxu0 %v6304
        %6760 = vmatprep.subr.mxu0 %v6321
        %6761 = vmatpush1.msra.mxu0 %v6320
        %6762 = vmatprep.subr.mxu0 %v6337
        %6763 = vmatpush1.msra.mxu0 %v6336
        %6764 = vmatprep.subr.mxu0 %v6353
        %6765 = vmatpush1.msra.mxu0 %v6352
        %6766 = vmatprep.subr.mxu0 0.0
        %6767 = vmatpush1.msra.mxu0 0.0
        %6768 = vmatprep.subr.mxu0 0.0
        %6769 = vmatpush1.msra.mxu0 0.0
        %6770 = vmatprep.subr.mxu0 0.0
        %6771 = vmatpush1.msra.mxu0 0.0
        %6772 = vmatprep.subr.mxu0 0.0
        %6773 = vmatpush1.msra.mxu0 0.0
        %6774 = vmatprep.subr.mxu0 0.0
        %6775 = vmatpush1.msra.mxu0 0.0
        %6776 = vmatprep.subr.mxu0 0.0
        %6777 = vmatpush1.msra.mxu0 0.0
        %6778 = vmatprep.subr.mxu0 0.0
        %6779 = vmatpush1.msra.mxu0 0.0
        %6780 = vmatprep.subr.mxu0 0.0
        %6781 = vmatpush1.msra.mxu0 0.0
        %6782 = vmatprep.subr.mxu0 0.0
        %6783 = vmatpush1.msra.mxu0 0.0
        %6784 = vmatprep.subr.mxu0 0.0
        %6785 = vmatpush1.msra.mxu0 0.0
        %6786 = vmatprep.subr.mxu0 0.0
        %6787 = vmatpush1.msra.mxu0 0.0
        %6788 = vmatprep.subr.mxu0 0.0
        %6789 = vmatpush1.msra.mxu0 0.0
        %6790 = vmatprep.subr.mxu0 0.0
        %6791 = vmatpush1.msra.mxu0 0.0
        %6792 = vmatprep.subr.mxu0 0.0
        %6793 = vmatpush1.msra.mxu0 0.0
        %6794 = vmatprep.subr.mxu0 0.0
        %6795 = vmatpush1.msra.mxu0 0.0
        %6796 = vmatprep.subr.mxu0 0.0
        %6797 = vmatpush1.msra.mxu0 0.0
        %6798 = vmatprep.subr.mxu0 0.0
        %6799 = vmatpush1.msra.mxu0 0.0
        %6800 = vmatprep.subr.mxu0 0.0
        %6801 = vmatpush1.msra.mxu0 0.0
        %6802 = vmatprep.subr.mxu0 0.0
        %6803 = vmatpush1.msra.mxu0 0.0
        %6804 = vmatprep.subr.mxu0 0.0
        %6805 = vmatpush1.msra.mxu0 0.0
        %6806 = vmatprep.subr.mxu0 0.0
        %6807 = vmatpush1.msra.mxu0 0.0
        %6808 = vmatprep.subr.mxu0 0.0
        %6809 = vmatpush1.msra.mxu0 0.0
        %6810 = vmatprep.subr.mxu0 0.0
        %6811 = vmatpush1.msra.mxu0 0.0
        %6812 = vmatprep.subr.mxu0 0.0
        %6813 = vmatpush1.msra.mxu0 0.0
        %6814 = vmatprep.subr.mxu0 0.0
        %6815 = vmatpush1.msra.mxu0 0.0
        %6816 = vmatprep.subr.mxu0 0.0
        %6817 = vmatpush1.msra.mxu0 0.0
        %6818 = vmatprep.subr.mxu0 0.0
        %6819 = vmatpush1.msra.mxu0 0.0
        %6820 = vmatprep.subr.mxu0 0.0
        %6821 = vmatpush1.msra.mxu0 0.0
        %6822 = vmatprep.mubr.f32.mxu0 0.0
        %6823 = vmatmul.mubr.f32.gmra.mrb[0].mxu0 %v6391
        %v6824 = vpop.f32.mrb[0].mxu0
        %v6825 = vadd.f32 %v6373, %v6824
        %v6826 = vpop.f32.mrb[0].mxu0
        %v6827 = vadd.f32 %v6373, %v6826
        %6828 = vmatprep.mubr.f32.mxu0 0.0
        %6829 = vmatmul.mubr.f32.gmra.mrb[0].mxu0 %v6394
        %v6830 = vpop.f32.mrb[0].mxu0
        %v6831 = vadd.f32 %v6378, %v6830
        %v6832 = vpop.f32.mrb[0].mxu0
        %v6833 = vadd.f32 %v6378, %v6832
        %6834 = vmatprep.mubr.f32.mxu0 0.0
        %6835 = vmatmul.mubr.f32.gmra.mrb[0].mxu0 %v6397
        %v6836 = vpop.f32.mrb[0].mxu0
        %v6837 = vadd.f32 %v6383, %v6836
        %v6838 = vpop.f32.mrb[0].mxu0
        %v6839 = vadd.f32 %v6383, %v6838
        %6840 = vmatprep.mubr.f32.mxu0 0.0
        %6841 = vmatmul.mubr.f32.gmra.mrb[0].mxu0 %v6400
        %v6842 = vpop.f32.mrb[0].mxu0
        %v6843 = vadd.f32 %v6388, %v6842
        %v6844 = vpop.f32.mrb[0].mxu0
        %v6845 = vadd.f32 %v6388, %v6844
        %6846 = vdwg.mxu0
        %6847 = vmatprep.subr.mxu0 %v6307
        %6848 = vmatpush1.msra.mxu0 %v6306
        %6849 = vmatprep.subr.mxu0 %v6323
        %6850 = vmatpush1.msra.mxu0 %v6322
        %6851 = vmatprep.subr.mxu0 %v6339
        %6852 = vmatpush1.msra.mxu0 %v6338
        %6853 = vmatprep.subr.mxu0 %v6355
        %6854 = vmatpush1.msra.mxu0 %v6354
        %6855 = vmatprep.subr.mxu0 0.0
        %6856 = vmatpush1.msra.mxu0 0.0
        %6857 = vmatprep.subr.mxu0 0.0
        %6858 = vmatpush1.msra.mxu0 0.0
        %6859 = vmatprep.subr.mxu0 0.0
        %6860 = vmatpush1.msra.mxu0 0.0
        %6861 = vmatprep.subr.mxu0 0.0
        %6862 = vmatpush1.msra.mxu0 0.0
        %6863 = vmatprep.subr.mxu0 0.0
        %6864 = vmatpush1.msra.mxu0 0.0
        %6865 = vmatprep.subr.mxu0 0.0
        %6866 = vmatpush1.msra.mxu0 0.0
        %6867 = vmatprep.subr.mxu0 0.0
        %6868 = vmatpush1.msra.mxu0 0.0
        %6869 = vmatprep.subr.mxu0 0.0
        %6870 = vmatpush1.msra.mxu0 0.0
        %6871 = vmatprep.subr.mxu0 0.0
        %6872 = vmatpush1.msra.mxu0 0.0
        %6873 = vmatprep.subr.mxu0 0.0
        %6874 = vmatpush1.msra.mxu0 0.0
        %6875 = vmatprep.subr.mxu0 0.0
        %6876 = vmatpush1.msra.mxu0 0.0
        %6877 = vmatprep.subr.mxu0 0.0
        %6878 = vmatpush1.msra.mxu0 0.0
        %6879 = vmatprep.subr.mxu0 0.0
        %6880 = vmatpush1.msra.mxu0 0.0
        %6881 = vmatprep.subr.mxu0 0.0
        %6882 = vmatpush1.msra.mxu0 0.0
        %6883 = vmatprep.subr.mxu0 0.0
        %6884 = vmatpush1.msra.mxu0 0.0
        %6885 = vmatprep.subr.mxu0 0.0
        %6886 = vmatpush1.msra.mxu0 0.0
        %6887 = vmatprep.subr.mxu0 0.0
        %6888 = vmatpush1.msra.mxu0 0.0
        %6889 = vmatprep.subr.mxu0 0.0
        %6890 = vmatpush1.msra.mxu0 0.0
        %6891 = vmatprep.subr.mxu0 0.0
        %6892 = vmatpush1.msra.mxu0 0.0
        %6893 = vmatprep.subr.mxu0 0.0
        %6894 = vmatpush1.msra.mxu0 0.0
        %6895 = vmatprep.subr.mxu0 0.0
        %6896 = vmatpush1.msra.mxu0 0.0
        %6897 = vmatprep.subr.mxu0 0.0
        %6898 = vmatpush1.msra.mxu0 0.0
        %6899 = vmatprep.subr.mxu0 0.0
        %6900 = vmatpush1.msra.mxu0 0.0
        %6901 = vmatprep.subr.mxu0 0.0
        %6902 = vmatpush1.msra.mxu0 0.0
        %6903 = vmatprep.subr.mxu0 0.0
        %6904 = vmatpush1.msra.mxu0 0.0
        %6905 = vmatprep.subr.mxu0 0.0
        %6906 = vmatpush1.msra.mxu0 0.0
        %6907 = vmatprep.subr.mxu0 0.0
        %6908 = vmatpush1.msra.mxu0 0.0
        %6909 = vmatprep.subr.mxu0 0.0
        %6910 = vmatpush1.msra.mxu0 0.0
        %6911 = vmatprep.mubr.f32.mxu0 0.0
        %6912 = vmatmul.mubr.f32.gmra.mrb[0].mxu0 %v6391
        %v6913 = vpop.f32.mrb[0].mxu0
        %v6914 = vadd.f32 %v6373, %v6913
        %v6915 = vpop.f32.mrb[0].mxu0
        %v6916 = vadd.f32 %v6373, %v6915
        %6917 = vmatprep.mubr.f32.mxu0 0.0
        %6918 = vmatmul.mubr.f32.gmra.mrb[0].mxu0 %v6394
        %v6919 = vpop.f32.mrb[0].mxu0
        %v6920 = vadd.f32 %v6378, %v6919
        %v6921 = vpop.f32.mrb[0].mxu0
        %v6922 = vadd.f32 %v6378, %v6921
        %6923 = vmatprep.mubr.f32.mxu0 0.0
        %6924 = vmatmul.mubr.f32.gmra.mrb[0].mxu0 %v6397
        %v6925 = vpop.f32.mrb[0].mxu0
        %v6926 = vadd.f32 %v6383, %v6925
        %v6927 = vpop.f32.mrb[0].mxu0
        %v6928 = vadd.f32 %v6383, %v6927
        %6929 = vmatprep.mubr.f32.mxu0 0.0
        %6930 = vmatmul.mubr.f32.gmra.mrb[0].mxu0 %v6400
        %v6931 = vpop.f32.mrb[0].mxu0
        %v6932 = vadd.f32 %v6388, %v6931
        %v6933 = vpop.f32.mrb[0].mxu0
        %v6934 = vadd.f32 %v6388, %v6933
        %6935 = vdwg.mxu0
        %6936 = vmatprep.subr.mxu0 %v6309
        %6937 = vmatpush1.msra.mxu0 %v6308
        %6938 = vmatprep.subr.mxu0 %v6325
        %6939 = vmatpush1.msra.mxu0 %v6324
        %6940 = vmatprep.subr.mxu0 %v6341
        %6941 = vmatpush1.msra.mxu0 %v6340
        %6942 = vmatprep.subr.mxu0 %v6357
        %6943 = vmatpush1.msra.mxu0 %v6356
        %6944 = vmatprep.subr.mxu0 0.0
        %6945 = vmatpush1.msra.mxu0 0.0
        %6946 = vmatprep.subr.mxu0 0.0
        %6947 = vmatpush1.msra.mxu0 0.0
        %6948 = vmatprep.subr.mxu0 0.0
        %6949 = vmatpush1.msra.mxu0 0.0
        %6950 = vmatprep.subr.mxu0 0.0
        %6951 = vmatpush1.msra.mxu0 0.0
        %6952 = vmatprep.subr.mxu0 0.0
        %6953 = vmatpush1.msra.mxu0 0.0
        %6954 = vmatprep.subr.mxu0 0.0
        %6955 = vmatpush1.msra.mxu0 0.0
        %6956 = vmatprep.subr.mxu0 0.0
        %6957 = vmatpush1.msra.mxu0 0.0
        %6958 = vmatprep.subr.mxu0 0.0
        %6959 = vmatpush1.msra.mxu0 0.0
        %6960 = vmatprep.subr.mxu0 0.0
        %6961 = vmatpush1.msra.mxu0 0.0
        %6962 = vmatprep.subr.mxu0 0.0
        %6963 = vmatpush1.msra.mxu0 0.0
        %6964 = vmatprep.subr.mxu0 0.0
        %6965 = vmatpush1.msra.mxu0 0.0
        %6966 = vmatprep.subr.mxu0 0.0
        %6967 = vmatpush1.msra.mxu0 0.0
        %6968 = vmatprep.subr.mxu0 0.0
        %6969 = vmatpush1.msra.mxu0 0.0
        %6970 = vmatprep.subr.mxu0 0.0
        %6971 = vmatpush1.msra.mxu0 0.0
        %6972 = vmatprep.subr.mxu0 0.0
        %6973 = vmatpush1.msra.mxu0 0.0
        %6974 = vmatprep.subr.mxu0 0.0
        %6975 = vmatpush1.msra.mxu0 0.0
        %6976 = vmatprep.subr.mxu0 0.0
        %6977 = vmatpush1.msra.mxu0 0.0
        %6978 = vmatprep.subr.mxu0 0.0
        %6979 = vmatpush1.msra.mxu0 0.0
        %6980 = vmatprep.subr.mxu0 0.0
        %6981 = vmatpush1.msra.mxu0 0.0
        %6982 = vmatprep.subr.mxu0 0.0
        %6983 = vmatpush1.msra.mxu0 0.0
        %6984 = vmatprep.subr.mxu0 0.0
        %6985 = vmatpush1.msra.mxu0 0.0
        %6986 = vmatprep.subr.mxu0 0.0
        %6987 = vmatpush1.msra.mxu0 0.0
        %6988 = vmatprep.subr.mxu0 0.0
        %6989 = vmatpush1.msra.mxu0 0.0
        %6990 = vmatprep.subr.mxu0 0.0
        %6991 = vmatpush1.msra.mxu0 0.0
        %6992 = vmatprep.subr.mxu0 0.0
        %6993 = vmatpush1.msra.mxu0 0.0
        %6994 = vmatprep.subr.mxu0 0.0
        %6995 = vmatpush1.msra.mxu0 0.0
        %6996 = vmatprep.subr.mxu0 0.0
        %6997 = vmatpush1.msra.mxu0 0.0
        %6998 = vmatprep.subr.mxu0 0.0
        %6999 = vmatpush1.msra.mxu0 0.0
        %7000 = vmatprep.mubr.f32.mxu0 0.0
        %7001 = vmatmul.mubr.f32.gmra.mrb[0].mxu0 %v6391
        %v7002 = vpop.f32.mrb[0].mxu0
        %v7003 = vadd.f32 %v6373, %v7002
        %v7004 = vpop.f32.mrb[0].mxu0
        %v7005 = vadd.f32 %v6373, %v7004
        %7006 = vmatprep.mubr.f32.mxu0 0.0
        %7007 = vmatmul.mubr.f32.gmra.mrb[0].mxu0 %v6394
        %v7008 = vpop.f32.mrb[0].mxu0
        %v7009 = vadd.f32 %v6378, %v7008
        %v7010 = vpop.f32.mrb[0].mxu0
        %v7011 = vadd.f32 %v6378, %v7010
        %7012 = vmatprep.mubr.f32.mxu0 0.0
        %7013 = vmatmul.mubr.f32.gmra.mrb[0].mxu0 %v6397
        %v7014 = vpop.f32.mrb[0].mxu0
        %v7015 = vadd.f32 %v6383, %v7014
        %v7016 = vpop.f32.mrb[0].mxu0
        %v7017 = vadd.f32 %v6383, %v7016
        %7018 = vmatprep.mubr.f32.mxu0 0.0
        %7019 = vmatmul.mubr.f32.gmra.mrb[0].mxu0 %v6400
        %v7020 = vpop.f32.mrb[0].mxu0
        %v7021 = vadd.f32 %v6388, %v7020
        %v7022 = vpop.f32.mrb[0].mxu0
        %v7023 = vadd.f32 %v6388, %v7022
        %7024 = vdwg.mxu0
        %7025 = vmatprep.subr.mxu0 %v6311
        %7026 = vmatpush1.msra.mxu0 %v6310
        %7027 = vmatprep.subr.mxu0 %v6327
        %7028 = vmatpush1.msra.mxu0 %v6326
        %7029 = vmatprep.subr.mxu0 %v6343
        %7030 = vmatpush1.msra.mxu0 %v6342
        %7031 = vmatprep.subr.mxu0 %v6359
        %7032 = vmatpush1.msra.mxu0 %v6358
        %7033 = vmatprep.subr.mxu0 0.0
        %7034 = vmatpush1.msra.mxu0 0.0
        %7035 = vmatprep.subr.mxu0 0.0
        %7036 = vmatpush1.msra.mxu0 0.0
        %7037 = vmatprep.subr.mxu0 0.0
        %7038 = vmatpush1.msra.mxu0 0.0
        %7039 = vmatprep.subr.mxu0 0.0
        %7040 = vmatpush1.msra.mxu0 0.0
        %7041 = vmatprep.subr.mxu0 0.0
        %7042 = vmatpush1.msra.mxu0 0.0
        %7043 = vmatprep.subr.mxu0 0.0
        %7044 = vmatpush1.msra.mxu0 0.0
        %7045 = vmatprep.subr.mxu0 0.0
        %7046 = vmatpush1.msra.mxu0 0.0
        %7047 = vmatprep.subr.mxu0 0.0
        %7048 = vmatpush1.msra.mxu0 0.0
        %7049 = vmatprep.subr.mxu0 0.0
        %7050 = vmatpush1.msra.mxu0 0.0
        %7051 = vmatprep.subr.mxu0 0.0
        %7052 = vmatpush1.msra.mxu0 0.0
        %7053 = vmatprep.subr.mxu0 0.0
        %7054 = vmatpush1.msra.mxu0 0.0
        %7055 = vmatprep.subr.mxu0 0.0
        %7056 = vmatpush1.msra.mxu0 0.0
        %7057 = vmatprep.subr.mxu0 0.0
        %7058 = vmatpush1.msra.mxu0 0.0
        %7059 = vmatprep.subr.mxu0 0.0
        %7060 = vmatpush1.msra.mxu0 0.0
        %7061 = vmatprep.subr.mxu0 0.0
        %7062 = vmatpush1.msra.mxu0 0.0
        %7063 = vmatprep.subr.mxu0 0.0
        %7064 = vmatpush1.msra.mxu0 0.0
        %7065 = vmatprep.subr.mxu0 0.0
        %7066 = vmatpush1.msra.mxu0 0.0
        %7067 = vmatprep.subr.mxu0 0.0
        %7068 = vmatpush1.msra.mxu0 0.0
        %7069 = vmatprep.subr.mxu0 0.0
        %7070 = vmatpush1.msra.mxu0 0.0
        %7071 = vmatprep.subr.mxu0 0.0
        %7072 = vmatpush1.msra.mxu0 0.0
        %7073 = vmatprep.subr.mxu0 0.0
        %7074 = vmatpush1.msra.mxu0 0.0
        %7075 = vmatprep.subr.mxu0 0.0
        %7076 = vmatpush1.msra.mxu0 0.0
        %7077 = vmatprep.subr.mxu0 0.0
        %7078 = vmatpush1.msra.mxu0 0.0
        %7079 = vmatprep.subr.mxu0 0.0
        %7080 = vmatpush1.msra.mxu0 0.0
        %7081 = vmatprep.subr.mxu0 0.0
        %7082 = vmatpush1.msra.mxu0 0.0
        %7083 = vmatprep.subr.mxu0 0.0
        %7084 = vmatpush1.msra.mxu0 0.0
        %7085 = vmatprep.subr.mxu0 0.0
        %7086 = vmatpush1.msra.mxu0 0.0
        %7087 = vmatprep.subr.mxu0 0.0
        %7088 = vmatpush1.msra.mxu0 0.0
        %7089 = vmatprep.mubr.f32.mxu0 0.0
        %7090 = vmatmul.mubr.f32.gmra.mrb[0].mxu0 %v6391
        %v7091 = vpop.f32.mrb[0].mxu0
        %v7092 = vadd.f32 %v6373, %v7091
        %v7093 = vpop.f32.mrb[0].mxu0
        %v7094 = vadd.f32 %v6373, %v7093
        %7095 = vmatprep.mubr.f32.mxu0 0.0
        %7096 = vmatmul.mubr.f32.gmra.mrb[0].mxu0 %v6394
        %v7097 = vpop.f32.mrb[0].mxu0
        %v7098 = vadd.f32 %v6378, %v7097
        %v7099 = vpop.f32.mrb[0].mxu0
        %v7100 = vadd.f32 %v6378, %v7099
        %7101 = vmatprep.mubr.f32.mxu0 0.0
        %7102 = vmatmul.mubr.f32.gmra.mrb[0].mxu0 %v6397
        %v7103 = vpop.f32.mrb[0].mxu0
        %v7104 = vadd.f32 %v6383, %v7103
        %v7105 = vpop.f32.mrb[0].mxu0
        %v7106 = vadd.f32 %v6383, %v7105
        %7107 = vmatprep.mubr.f32.mxu0 0.0
        %7108 = vmatmul.mubr.f32.gmra.mrb[0].mxu0 %v6400
        %v7109 = vpop.f32.mrb[0].mxu0
        %v7110 = vadd.f32 %v6388, %v7109
        %v7111 = vpop.f32.mrb[0].mxu0
        %v7112 = vadd.f32 %v6388, %v7111
        %7113 = vdwg.mxu0
        %v7114 = vtanh.pop %v6469
        %v7115 = vtanh.pop %v6471
        %v7116 = vtanh.pop %v6558
        %v7117 = vtanh.pop %v6560
        %v7118 = vtanh.pop %v6647
        %v7119 = vtanh.pop %v6649
        %v7120 = vtanh.pop %v6736
        %v7121 = vtanh.pop %v6738
        %v7122 = vtanh.pop %v6825
        %v7123 = vtanh.pop %v6827
        %v7124 = vtanh.pop %v6914
        %v7125 = vtanh.pop %v6916
        %v7126 = vtanh.pop %v7003
        %v7127 = vtanh.pop %v7005
        %v7128 = vtanh.pop %v7092
        %v7129 = vtanh.pop %v7094
        %v7130 = vtanh.pop %v6475
        %v7131 = vtanh.pop %v6477
        %v7132 = vtanh.pop %v6564
        %v7133 = vtanh.pop %v6566
        %v7134 = vtanh.pop %v6653
        %v7135 = vtanh.pop %v6655
        %v7136 = vtanh.pop %v6742
        %v7137 = vtanh.pop %v6744
        %v7138 = vtanh.pop %v6831
        %v7139 = vtanh.pop %v6833
        %v7140 = vtanh.pop %v6920
        %v7141 = vtanh.pop %v6922
        %v7142 = vtanh.pop %v7009
        %v7143 = vtanh.pop %v7011
        %v7144 = vtanh.pop %v7098
        %v7145 = vtanh.pop %v7100
        %v7146 = vtanh.pop %v6481
        %v7147 = vtanh.pop %v6483
        %v7148 = vtanh.pop %v6570
        %v7149 = vtanh.pop %v6572
        %v7150 = vtanh.pop %v6659
        %v7151 = vtanh.pop %v6661
        %v7152 = vtanh.pop %v6748
        %v7153 = vtanh.pop %v6750
        %v7154 = vtanh.pop %v6837
        %v7155 = vtanh.pop %v6839
        %v7156 = vtanh.pop %v6926
        %v7157 = vtanh.pop %v6928
        %v7158 = vtanh.pop %v7015
        %v7159 = vtanh.pop %v7017
        %v7160 = vtanh.pop %v7104
        %v7161 = vtanh.pop %v7106
        %v7162 = vtanh.pop %v6487
        %v7163 = vtanh.pop %v6489
        %v7164 = vtanh.pop %v6576
        %v7165 = vtanh.pop %v6578
        %v7166 = vtanh.pop %v6665
        %v7167 = vtanh.pop %v6667
        %v7168 = vtanh.pop %v6754
        %v7169 = vtanh.pop %v6756
        %v7170 = vtanh.pop %v6843
        %v7171 = vtanh.pop %v6845
        %v7172 = vtanh.pop %v6932
        %v7173 = vtanh.pop %v6934
        %v7174 = vtanh.pop %v7021
        %v7175 = vtanh.pop %v7023
        %v7176 = vtanh.pop %v7110
        %v7177 = vtanh.pop %v7112
        %s7178 = scalar_lea.vmem [#allocation3], 96
        %v7179 = vld [vmem:[%s7178] sm:$0xff]
        %v7180 = vld [vmem:[%s7178 + $0x8] sm:$0xff]
        %v7181 = vld [vmem:[%s7178 + $0x10] sm:$0xff]
        %v7182 = vld [vmem:[%s7178 + $0x18] sm:$0xff]
        %s7183 = scalar_lea.vmem %s6, 96
        %v7184 = vld [vmem:[%s7183] sm:$0xff]
        %v7185 = vld [vmem:[%s7183 + $0x8] sm:$0xff]
        %v7186 = vld [vmem:[%s7183 + $0x10] sm:$0xff]
        %v7187 = vld [vmem:[%s7183 + $0x18] sm:$0xff]
        %7189 = vset.pattern.permute.xlu0 0
        %7190 = vperm.xlu0 %7189, %v7184
        %v7191 = vpop.permute.xlu0 %7190
        %7194 = vset.pattern.permute.xlu0 0
        %7195 = vperm.xlu0 %7194, %v7185
        %v7196 = vpop.permute.xlu0 %7195
        %7199 = vset.pattern.permute.xlu0 0
        %7200 = vperm.xlu0 %7199, %v7186
        %v7201 = vpop.permute.xlu0 %7200
        %7204 = vset.pattern.permute.xlu0 0
        %7205 = vperm.xlu0 %7204, %v7187
        %v7206 = vpop.permute.xlu0 %7205
        %v7209 = vsel %vm1291, %v7179, 0
        %v7212 = vsel %vm1291, %v7180, 0
        %v7215 = vsel %vm1291, %v7181, 0
        %v7218 = vsel %vm1291, %v7182, 0
        %7220 = vmatprep.subr.mxu0 %v7115
        %7221 = vmatpush1.msra.mxu0 %v7114
        %7222 = vmatprep.subr.mxu0 %v7131
        %7223 = vmatpush1.msra.mxu0 %v7130
        %7224 = vmatprep.subr.mxu0 %v7147
        %7225 = vmatpush1.msra.mxu0 %v7146
        %7226 = vmatprep.subr.mxu0 %v7163
        %7227 = vmatpush1.msra.mxu0 %v7162
        %7228 = vmatprep.subr.mxu0 0.0
        %7229 = vmatpush1.msra.mxu0 0.0
        %7230 = vmatprep.subr.mxu0 0.0
        %7231 = vmatpush1.msra.mxu0 0.0
        %7232 = vmatprep.subr.mxu0 0.0
        %7233 = vmatpush1.msra.mxu0 0.0
        %7234 = vmatprep.subr.mxu0 0.0
        %7235 = vmatpush1.msra.mxu0 0.0
        %7236 = vmatprep.subr.mxu0 0.0
        %7237 = vmatpush1.msra.mxu0 0.0
        %7238 = vmatprep.subr.mxu0 0.0
        %7239 = vmatpush1.msra.mxu0 0.0
        %7240 = vmatprep.subr.mxu0 0.0
        %7241 = vmatpush1.msra.mxu0 0.0
        %7242 = vmatprep.subr.mxu0 0.0
        %7243 = vmatpush1.msra.mxu0 0.0
        %7244 = vmatprep.subr.mxu0 0.0
        %7245 = vmatpush1.msra.mxu0 0.0
        %7246 = vmatprep.subr.mxu0 0.0
        %7247 = vmatpush1.msra.mxu0 0.0
        %7248 = vmatprep.subr.mxu0 0.0
        %7249 = vmatpush1.msra.mxu0 0.0
        %7250 = vmatprep.subr.mxu0 0.0
        %7251 = vmatpush1.msra.mxu0 0.0
        %7252 = vmatprep.subr.mxu0 0.0
        %7253 = vmatpush1.msra.mxu0 0.0
        %7254 = vmatprep.subr.mxu0 0.0
        %7255 = vmatpush1.msra.mxu0 0.0
        %7256 = vmatprep.subr.mxu0 0.0
        %7257 = vmatpush1.msra.mxu0 0.0
        %7258 = vmatprep.subr.mxu0 0.0
        %7259 = vmatpush1.msra.mxu0 0.0
        %7260 = vmatprep.subr.mxu0 0.0
        %7261 = vmatpush1.msra.mxu0 0.0
        %7262 = vmatprep.subr.mxu0 0.0
        %7263 = vmatpush1.msra.mxu0 0.0
        %7264 = vmatprep.subr.mxu0 0.0
        %7265 = vmatpush1.msra.mxu0 0.0
        %7266 = vmatprep.subr.mxu0 0.0
        %7267 = vmatpush1.msra.mxu0 0.0
        %7268 = vmatprep.subr.mxu0 0.0
        %7269 = vmatpush1.msra.mxu0 0.0
        %7270 = vmatprep.subr.mxu0 0.0
        %7271 = vmatpush1.msra.mxu0 0.0
        %7272 = vmatprep.subr.mxu0 0.0
        %7273 = vmatpush1.msra.mxu0 0.0
        %7274 = vmatprep.subr.mxu0 0.0
        %7275 = vmatpush1.msra.mxu0 0.0
        %7276 = vmatprep.subr.mxu0 0.0
        %7277 = vmatpush1.msra.mxu0 0.0
        %7278 = vmatprep.subr.mxu0 0.0
        %7279 = vmatpush1.msra.mxu0 0.0
        %7280 = vmatprep.subr.mxu0 0.0
        %7281 = vmatpush1.msra.mxu0 0.0
        %7282 = vmatprep.subr.mxu0 0.0
        %7283 = vmatpush1.msra.mxu0 0.0
        %7284 = vmatprep.mubr.f32.mxu0 0.0
        %7285 = vmatmul.mubr.f32.gmra.mrb[0].mxu0 %v7209
        %v7286 = vpop.f32.mrb[0].mxu0
        %v7287 = vadd.f32 %v7191, %v7286
        %v7288 = vpop.f32.mrb[0].mxu0
        %v7289 = vadd.f32 %v7191, %v7288
        %7290 = vmatprep.mubr.f32.mxu0 0.0
        %7291 = vmatmul.mubr.f32.gmra.mrb[0].mxu0 %v7212
        %v7292 = vpop.f32.mrb[0].mxu0
        %v7293 = vadd.f32 %v7196, %v7292
        %v7294 = vpop.f32.mrb[0].mxu0
        %v7295 = vadd.f32 %v7196, %v7294
        %7296 = vmatprep.mubr.f32.mxu0 0.0
        %7297 = vmatmul.mubr.f32.gmra.mrb[0].mxu0 %v7215
        %v7298 = vpop.f32.mrb[0].mxu0
        %v7299 = vadd.f32 %v7201, %v7298
        %v7300 = vpop.f32.mrb[0].mxu0
        %v7301 = vadd.f32 %v7201, %v7300
        %7302 = vmatprep.mubr.f32.mxu0 0.0
        %7303 = vmatmul.mubr.f32.gmra.mrb[0].mxu0 %v7218
        %v7304 = vpop.f32.mrb[0].mxu0
        %v7305 = vadd.f32 %v7206, %v7304
        %v7306 = vpop.f32.mrb[0].mxu0
        %v7307 = vadd.f32 %v7206, %v7306
        %7308 = vdwg.mxu0
        %7309 = vmatprep.subr.mxu0 %v7117
        %7310 = vmatpush1.msra.mxu0 %v7116
        %7311 = vmatprep.subr.mxu0 %v7133
        %7312 = vmatpush1.msra.mxu0 %v7132
        %7313 = vmatprep.subr.mxu0 %v7149
        %7314 = vmatpush1.msra.mxu0 %v7148
        %7315 = vmatprep.subr.mxu0 %v7165
        %7316 = vmatpush1.msra.mxu0 %v7164
        %7317 = vmatprep.subr.mxu0 0.0
        %7318 = vmatpush1.msra.mxu0 0.0
        %7319 = vmatprep.subr.mxu0 0.0
        %7320 = vmatpush1.msra.mxu0 0.0
        %7321 = vmatprep.subr.mxu0 0.0
        %7322 = vmatpush1.msra.mxu0 0.0
        %7323 = vmatprep.subr.mxu0 0.0
        %7324 = vmatpush1.msra.mxu0 0.0
        %7325 = vmatprep.subr.mxu0 0.0
        %7326 = vmatpush1.msra.mxu0 0.0
        %7327 = vmatprep.subr.mxu0 0.0
        %7328 = vmatpush1.msra.mxu0 0.0
        %7329 = vmatprep.subr.mxu0 0.0
        %7330 = vmatpush1.msra.mxu0 0.0
        %7331 = vmatprep.subr.mxu0 0.0
        %7332 = vmatpush1.msra.mxu0 0.0
        %7333 = vmatprep.subr.mxu0 0.0
        %7334 = vmatpush1.msra.mxu0 0.0
        %7335 = vmatprep.subr.mxu0 0.0
        %7336 = vmatpush1.msra.mxu0 0.0
        %7337 = vmatprep.subr.mxu0 0.0
        %7338 = vmatpush1.msra.mxu0 0.0
        %7339 = vmatprep.subr.mxu0 0.0
        %7340 = vmatpush1.msra.mxu0 0.0
        %7341 = vmatprep.subr.mxu0 0.0
        %7342 = vmatpush1.msra.mxu0 0.0
        %7343 = vmatprep.subr.mxu0 0.0
        %7344 = vmatpush1.msra.mxu0 0.0
        %7345 = vmatprep.subr.mxu0 0.0
        %7346 = vmatpush1.msra.mxu0 0.0
        %7347 = vmatprep.subr.mxu0 0.0
        %7348 = vmatpush1.msra.mxu0 0.0
        %7349 = vmatprep.subr.mxu0 0.0
        %7350 = vmatpush1.msra.mxu0 0.0
        %7351 = vmatprep.subr.mxu0 0.0
        %7352 = vmatpush1.msra.mxu0 0.0
        %7353 = vmatprep.subr.mxu0 0.0
        %7354 = vmatpush1.msra.mxu0 0.0
        %7355 = vmatprep.subr.mxu0 0.0
        %7356 = vmatpush1.msra.mxu0 0.0
        %7357 = vmatprep.subr.mxu0 0.0
        %7358 = vmatpush1.msra.mxu0 0.0
        %7359 = vmatprep.subr.mxu0 0.0
        %7360 = vmatpush1.msra.mxu0 0.0
        %7361 = vmatprep.subr.mxu0 0.0
        %7362 = vmatpush1.msra.mxu0 0.0
        %7363 = vmatprep.subr.mxu0 0.0
        %7364 = vmatpush1.msra.mxu0 0.0
        %7365 = vmatprep.subr.mxu0 0.0
        %7366 = vmatpush1.msra.mxu0 0.0
        %7367 = vmatprep.subr.mxu0 0.0
        %7368 = vmatpush1.msra.mxu0 0.0
        %7369 = vmatprep.subr.mxu0 0.0
        %7370 = vmatpush1.msra.mxu0 0.0
        %7371 = vmatprep.subr.mxu0 0.0
        %7372 = vmatpush1.msra.mxu0 0.0
        %7373 = vmatprep.mubr.f32.mxu0 0.0
        %7374 = vmatmul.mubr.f32.gmra.mrb[0].mxu0 %v7209
        %v7375 = vpop.f32.mrb[0].mxu0
        %v7376 = vadd.f32 %v7191, %v7375
        %v7377 = vpop.f32.mrb[0].mxu0
        %v7378 = vadd.f32 %v7191, %v7377
        %7379 = vmatprep.mubr.f32.mxu0 0.0
        %7380 = vmatmul.mubr.f32.gmra.mrb[0].mxu0 %v7212
        %v7381 = vpop.f32.mrb[0].mxu0
        %v7382 = vadd.f32 %v7196, %v7381
        %v7383 = vpop.f32.mrb[0].mxu0
        %v7384 = vadd.f32 %v7196, %v7383
        %7385 = vmatprep.mubr.f32.mxu0 0.0
        %7386 = vmatmul.mubr.f32.gmra.mrb[0].mxu0 %v7215
        %v7387 = vpop.f32.mrb[0].mxu0
        %v7388 = vadd.f32 %v7201, %v7387
        %v7389 = vpop.f32.mrb[0].mxu0
        %v7390 = vadd.f32 %v7201, %v7389
        %7391 = vmatprep.mubr.f32.mxu0 0.0
        %7392 = vmatmul.mubr.f32.gmra.mrb[0].mxu0 %v7218
        %v7393 = vpop.f32.mrb[0].mxu0
        %v7394 = vadd.f32 %v7206, %v7393
        %v7395 = vpop.f32.mrb[0].mxu0
        %v7396 = vadd.f32 %v7206, %v7395
        %7397 = vdwg.mxu0
        %7398 = vmatprep.subr.mxu0 %v7119
        %7399 = vmatpush1.msra.mxu0 %v7118
        %7400 = vmatprep.subr.mxu0 %v7135
        %7401 = vmatpush1.msra.mxu0 %v7134
        %7402 = vmatprep.subr.mxu0 %v7151
        %7403 = vmatpush1.msra.mxu0 %v7150
        %7404 = vmatprep.subr.mxu0 %v7167
        %7405 = vmatpush1.msra.mxu0 %v7166
        %7406 = vmatprep.subr.mxu0 0.0
        %7407 = vmatpush1.msra.mxu0 0.0
        %7408 = vmatprep.subr.mxu0 0.0
        %7409 = vmatpush1.msra.mxu0 0.0
        %7410 = vmatprep.subr.mxu0 0.0
        %7411 = vmatpush1.msra.mxu0 0.0
        %7412 = vmatprep.subr.mxu0 0.0
        %7413 = vmatpush1.msra.mxu0 0.0
        %7414 = vmatprep.subr.mxu0 0.0
        %7415 = vmatpush1.msra.mxu0 0.0
        %7416 = vmatprep.subr.mxu0 0.0
        %7417 = vmatpush1.msra.mxu0 0.0
        %7418 = vmatprep.subr.mxu0 0.0
        %7419 = vmatpush1.msra.mxu0 0.0
        %7420 = vmatprep.subr.mxu0 0.0
        %7421 = vmatpush1.msra.mxu0 0.0
        %7422 = vmatprep.subr.mxu0 0.0
        %7423 = vmatpush1.msra.mxu0 0.0
        %7424 = vmatprep.subr.mxu0 0.0
        %7425 = vmatpush1.msra.mxu0 0.0
        %7426 = vmatprep.subr.mxu0 0.0
        %7427 = vmatpush1.msra.mxu0 0.0
        %7428 = vmatprep.subr.mxu0 0.0
        %7429 = vmatpush1.msra.mxu0 0.0
        %7430 = vmatprep.subr.mxu0 0.0
        %7431 = vmatpush1.msra.mxu0 0.0
        %7432 = vmatprep.subr.mxu0 0.0
        %7433 = vmatpush1.msra.mxu0 0.0
        %7434 = vmatprep.subr.mxu0 0.0
        %7435 = vmatpush1.msra.mxu0 0.0
        %7436 = vmatprep.subr.mxu0 0.0
        %7437 = vmatpush1.msra.mxu0 0.0
        %7438 = vmatprep.subr.mxu0 0.0
        %7439 = vmatpush1.msra.mxu0 0.0
        %7440 = vmatprep.subr.mxu0 0.0
        %7441 = vmatpush1.msra.mxu0 0.0
        %7442 = vmatprep.subr.mxu0 0.0
        %7443 = vmatpush1.msra.mxu0 0.0
        %7444 = vmatprep.subr.mxu0 0.0
        %7445 = vmatpush1.msra.mxu0 0.0
        %7446 = vmatprep.subr.mxu0 0.0
        %7447 = vmatpush1.msra.mxu0 0.0
        %7448 = vmatprep.subr.mxu0 0.0
        %7449 = vmatpush1.msra.mxu0 0.0
        %7450 = vmatprep.subr.mxu0 0.0
        %7451 = vmatpush1.msra.mxu0 0.0
        %7452 = vmatprep.subr.mxu0 0.0
        %7453 = vmatpush1.msra.mxu0 0.0
        %7454 = vmatprep.subr.mxu0 0.0
        %7455 = vmatpush1.msra.mxu0 0.0
        %7456 = vmatprep.subr.mxu0 0.0
        %7457 = vmatpush1.msra.mxu0 0.0
        %7458 = vmatprep.subr.mxu0 0.0
        %7459 = vmatpush1.msra.mxu0 0.0
        %7460 = vmatprep.subr.mxu0 0.0
        %7461 = vmatpush1.msra.mxu0 0.0
        %7462 = vmatprep.mubr.f32.mxu0 0.0
        %7463 = vmatmul.mubr.f32.gmra.mrb[0].mxu0 %v7209
        %v7464 = vpop.f32.mrb[0].mxu0
        %v7465 = vadd.f32 %v7191, %v7464
        %v7466 = vpop.f32.mrb[0].mxu0
        %v7467 = vadd.f32 %v7191, %v7466
        %7468 = vmatprep.mubr.f32.mxu0 0.0
        %7469 = vmatmul.mubr.f32.gmra.mrb[0].mxu0 %v7212
        %v7470 = vpop.f32.mrb[0].mxu0
        %v7471 = vadd.f32 %v7196, %v7470
        %v7472 = vpop.f32.mrb[0].mxu0
        %v7473 = vadd.f32 %v7196, %v7472
        %7474 = vmatprep.mubr.f32.mxu0 0.0
        %7475 = vmatmul.mubr.f32.gmra.mrb[0].mxu0 %v7215
        %v7476 = vpop.f32.mrb[0].mxu0
        %v7477 = vadd.f32 %v7201, %v7476
        %v7478 = vpop.f32.mrb[0].mxu0
        %v7479 = vadd.f32 %v7201, %v7478
        %7480 = vmatprep.mubr.f32.mxu0 0.0
        %7481 = vmatmul.mubr.f32.gmra.mrb[0].mxu0 %v7218
        %v7482 = vpop.f32.mrb[0].mxu0
        %v7483 = vadd.f32 %v7206, %v7482
        %v7484 = vpop.f32.mrb[0].mxu0
        %v7485 = vadd.f32 %v7206, %v7484
        %7486 = vdwg.mxu0
        %7487 = vmatprep.subr.mxu0 %v7121
        %7488 = vmatpush1.msra.mxu0 %v7120
        %7489 = vmatprep.subr.mxu0 %v7137
        %7490 = vmatpush1.msra.mxu0 %v7136
        %7491 = vmatprep.subr.mxu0 %v7153
        %7492 = vmatpush1.msra.mxu0 %v7152
        %7493 = vmatprep.subr.mxu0 %v7169
        %7494 = vmatpush1.msra.mxu0 %v7168
        %7495 = vmatprep.subr.mxu0 0.0
        %7496 = vmatpush1.msra.mxu0 0.0
        %7497 = vmatprep.subr.mxu0 0.0
        %7498 = vmatpush1.msra.mxu0 0.0
        %7499 = vmatprep.subr.mxu0 0.0
        %7500 = vmatpush1.msra.mxu0 0.0
        %7501 = vmatprep.subr.mxu0 0.0
        %7502 = vmatpush1.msra.mxu0 0.0
        %7503 = vmatprep.subr.mxu0 0.0
        %7504 = vmatpush1.msra.mxu0 0.0
        %7505 = vmatprep.subr.mxu0 0.0
        %7506 = vmatpush1.msra.mxu0 0.0
        %7507 = vmatprep.subr.mxu0 0.0
        %7508 = vmatpush1.msra.mxu0 0.0
        %7509 = vmatprep.subr.mxu0 0.0
        %7510 = vmatpush1.msra.mxu0 0.0
        %7511 = vmatprep.subr.mxu0 0.0
        %7512 = vmatpush1.msra.mxu0 0.0
        %7513 = vmatprep.subr.mxu0 0.0
        %7514 = vmatpush1.msra.mxu0 0.0
        %7515 = vmatprep.subr.mxu0 0.0
        %7516 = vmatpush1.msra.mxu0 0.0
        %7517 = vmatprep.subr.mxu0 0.0
        %7518 = vmatpush1.msra.mxu0 0.0
        %7519 = vmatprep.subr.mxu0 0.0
        %7520 = vmatpush1.msra.mxu0 0.0
        %7521 = vmatprep.subr.mxu0 0.0
        %7522 = vmatpush1.msra.mxu0 0.0
        %7523 = vmatprep.subr.mxu0 0.0
        %7524 = vmatpush1.msra.mxu0 0.0
        %7525 = vmatprep.subr.mxu0 0.0
        %7526 = vmatpush1.msra.mxu0 0.0
        %7527 = vmatprep.subr.mxu0 0.0
        %7528 = vmatpush1.msra.mxu0 0.0
        %7529 = vmatprep.subr.mxu0 0.0
        %7530 = vmatpush1.msra.mxu0 0.0
        %7531 = vmatprep.subr.mxu0 0.0
        %7532 = vmatpush1.msra.mxu0 0.0
        %7533 = vmatprep.subr.mxu0 0.0
        %7534 = vmatpush1.msra.mxu0 0.0
        %7535 = vmatprep.subr.mxu0 0.0
        %7536 = vmatpush1.msra.mxu0 0.0
        %7537 = vmatprep.subr.mxu0 0.0
        %7538 = vmatpush1.msra.mxu0 0.0
        %7539 = vmatprep.subr.mxu0 0.0
        %7540 = vmatpush1.msra.mxu0 0.0
        %7541 = vmatprep.subr.mxu0 0.0
        %7542 = vmatpush1.msra.mxu0 0.0
        %7543 = vmatprep.subr.mxu0 0.0
        %7544 = vmatpush1.msra.mxu0 0.0
        %7545 = vmatprep.subr.mxu0 0.0
        %7546 = vmatpush1.msra.mxu0 0.0
        %7547 = vmatprep.subr.mxu0 0.0
        %7548 = vmatpush1.msra.mxu0 0.0
        %7549 = vmatprep.subr.mxu0 0.0
        %7550 = vmatpush1.msra.mxu0 0.0
        %7551 = vmatprep.mubr.f32.mxu0 0.0
        %7552 = vmatmul.mubr.f32.gmra.mrb[0].mxu0 %v7209
        %v7553 = vpop.f32.mrb[0].mxu0
        %v7554 = vadd.f32 %v7191, %v7553
        %v7555 = vpop.f32.mrb[0].mxu0
        %v7556 = vadd.f32 %v7191, %v7555
        %7557 = vmatprep.mubr.f32.mxu0 0.0
        %7558 = vmatmul.mubr.f32.gmra.mrb[0].mxu0 %v7212
        %v7559 = vpop.f32.mrb[0].mxu0
        %v7560 = vadd.f32 %v7196, %v7559
        %v7561 = vpop.f32.mrb[0].mxu0
        %v7562 = vadd.f32 %v7196, %v7561
        %7563 = vmatprep.mubr.f32.mxu0 0.0
        %7564 = vmatmul.mubr.f32.gmra.mrb[0].mxu0 %v7215
        %v7565 = vpop.f32.mrb[0].mxu0
        %v7566 = vadd.f32 %v7201, %v7565
        %v7567 = vpop.f32.mrb[0].mxu0
        %v7568 = vadd.f32 %v7201, %v7567
        %7569 = vmatprep.mubr.f32.mxu0 0.0
        %7570 = vmatmul.mubr.f32.gmra.mrb[0].mxu0 %v7218
        %v7571 = vpop.f32.mrb[0].mxu0
        %v7572 = vadd.f32 %v7206, %v7571
        %v7573 = vpop.f32.mrb[0].mxu0
        %v7574 = vadd.f32 %v7206, %v7573
        %7575 = vdwg.mxu0
        %7576 = vmatprep.subr.mxu0 %v7123
        %7577 = vmatpush1.msra.mxu0 %v7122
        %7578 = vmatprep.subr.mxu0 %v7139
        %7579 = vmatpush1.msra.mxu0 %v7138
        %7580 = vmatprep.subr.mxu0 %v7155
        %7581 = vmatpush1.msra.mxu0 %v7154
        %7582 = vmatprep.subr.mxu0 %v7171
        %7583 = vmatpush1.msra.mxu0 %v7170
        %7584 = vmatprep.subr.mxu0 0.0
        %7585 = vmatpush1.msra.mxu0 0.0
        %7586 = vmatprep.subr.mxu0 0.0
        %7587 = vmatpush1.msra.mxu0 0.0
        %7588 = vmatprep.subr.mxu0 0.0
        %7589 = vmatpush1.msra.mxu0 0.0
        %7590 = vmatprep.subr.mxu0 0.0
        %7591 = vmatpush1.msra.mxu0 0.0
        %7592 = vmatprep.subr.mxu0 0.0
        %7593 = vmatpush1.msra.mxu0 0.0
        %7594 = vmatprep.subr.mxu0 0.0
        %7595 = vmatpush1.msra.mxu0 0.0
        %7596 = vmatprep.subr.mxu0 0.0
        %7597 = vmatpush1.msra.mxu0 0.0
        %7598 = vmatprep.subr.mxu0 0.0
        %7599 = vmatpush1.msra.mxu0 0.0
        %7600 = vmatprep.subr.mxu0 0.0
        %7601 = vmatpush1.msra.mxu0 0.0
        %7602 = vmatprep.subr.mxu0 0.0
        %7603 = vmatpush1.msra.mxu0 0.0
        %7604 = vmatprep.subr.mxu0 0.0
        %7605 = vmatpush1.msra.mxu0 0.0
        %7606 = vmatprep.subr.mxu0 0.0
        %7607 = vmatpush1.msra.mxu0 0.0
        %7608 = vmatprep.subr.mxu0 0.0
        %7609 = vmatpush1.msra.mxu0 0.0
        %7610 = vmatprep.subr.mxu0 0.0
        %7611 = vmatpush1.msra.mxu0 0.0
        %7612 = vmatprep.subr.mxu0 0.0
        %7613 = vmatpush1.msra.mxu0 0.0
        %7614 = vmatprep.subr.mxu0 0.0
        %7615 = vmatpush1.msra.mxu0 0.0
        %7616 = vmatprep.subr.mxu0 0.0
        %7617 = vmatpush1.msra.mxu0 0.0
        %7618 = vmatprep.subr.mxu0 0.0
        %7619 = vmatpush1.msra.mxu0 0.0
        %7620 = vmatprep.subr.mxu0 0.0
        %7621 = vmatpush1.msra.mxu0 0.0
        %7622 = vmatprep.subr.mxu0 0.0
        %7623 = vmatpush1.msra.mxu0 0.0
        %7624 = vmatprep.subr.mxu0 0.0
        %7625 = vmatpush1.msra.mxu0 0.0
        %7626 = vmatprep.subr.mxu0 0.0
        %7627 = vmatpush1.msra.mxu0 0.0
        %7628 = vmatprep.subr.mxu0 0.0
        %7629 = vmatpush1.msra.mxu0 0.0
        %7630 = vmatprep.subr.mxu0 0.0
        %7631 = vmatpush1.msra.mxu0 0.0
        %7632 = vmatprep.subr.mxu0 0.0
        %7633 = vmatpush1.msra.mxu0 0.0
        %7634 = vmatprep.subr.mxu0 0.0
        %7635 = vmatpush1.msra.mxu0 0.0
        %7636 = vmatprep.subr.mxu0 0.0
        %7637 = vmatpush1.msra.mxu0 0.0
        %7638 = vmatprep.subr.mxu0 0.0
        %7639 = vmatpush1.msra.mxu0 0.0
        %7640 = vmatprep.mubr.f32.mxu0 0.0
        %7641 = vmatmul.mubr.f32.gmra.mrb[0].mxu0 %v7209
        %v7642 = vpop.f32.mrb[0].mxu0
        %v7643 = vadd.f32 %v7191, %v7642
        %v7644 = vpop.f32.mrb[0].mxu0
        %v7645 = vadd.f32 %v7191, %v7644
        %7646 = vmatprep.mubr.f32.mxu0 0.0
        %7647 = vmatmul.mubr.f32.gmra.mrb[0].mxu0 %v7212
        %v7648 = vpop.f32.mrb[0].mxu0
        %v7649 = vadd.f32 %v7196, %v7648
        %v7650 = vpop.f32.mrb[0].mxu0
        %v7651 = vadd.f32 %v7196, %v7650
        %7652 = vmatprep.mubr.f32.mxu0 0.0
        %7653 = vmatmul.mubr.f32.gmra.mrb[0].mxu0 %v7215
        %v7654 = vpop.f32.mrb[0].mxu0
        %v7655 = vadd.f32 %v7201, %v7654
        %v7656 = vpop.f32.mrb[0].mxu0
        %v7657 = vadd.f32 %v7201, %v7656
        %7658 = vmatprep.mubr.f32.mxu0 0.0
        %7659 = vmatmul.mubr.f32.gmra.mrb[0].mxu0 %v7218
        %v7660 = vpop.f32.mrb[0].mxu0
        %v7661 = vadd.f32 %v7206, %v7660
        %v7662 = vpop.f32.mrb[0].mxu0
        %v7663 = vadd.f32 %v7206, %v7662
        %7664 = vdwg.mxu0
        %7665 = vmatprep.subr.mxu0 %v7125
        %7666 = vmatpush1.msra.mxu0 %v7124
        %7667 = vmatprep.subr.mxu0 %v7141
        %7668 = vmatpush1.msra.mxu0 %v7140
        %7669 = vmatprep.subr.mxu0 %v7157
        %7670 = vmatpush1.msra.mxu0 %v7156
        %7671 = vmatprep.subr.mxu0 %v7173
        %7672 = vmatpush1.msra.mxu0 %v7172
        %7673 = vmatprep.subr.mxu0 0.0
        %7674 = vmatpush1.msra.mxu0 0.0
        %7675 = vmatprep.subr.mxu0 0.0
        %7676 = vmatpush1.msra.mxu0 0.0
        %7677 = vmatprep.subr.mxu0 0.0
        %7678 = vmatpush1.msra.mxu0 0.0
        %7679 = vmatprep.subr.mxu0 0.0
        %7680 = vmatpush1.msra.mxu0 0.0
        %7681 = vmatprep.subr.mxu0 0.0
        %7682 = vmatpush1.msra.mxu0 0.0
        %7683 = vmatprep.subr.mxu0 0.0
        %7684 = vmatpush1.msra.mxu0 0.0
        %7685 = vmatprep.subr.mxu0 0.0
        %7686 = vmatpush1.msra.mxu0 0.0
        %7687 = vmatprep.subr.mxu0 0.0
        %7688 = vmatpush1.msra.mxu0 0.0
        %7689 = vmatprep.subr.mxu0 0.0
        %7690 = vmatpush1.msra.mxu0 0.0
        %7691 = vmatprep.subr.mxu0 0.0
        %7692 = vmatpush1.msra.mxu0 0.0
        %7693 = vmatprep.subr.mxu0 0.0
        %7694 = vmatpush1.msra.mxu0 0.0
        %7695 = vmatprep.subr.mxu0 0.0
        %7696 = vmatpush1.msra.mxu0 0.0
        %7697 = vmatprep.subr.mxu0 0.0
        %7698 = vmatpush1.msra.mxu0 0.0
        %7699 = vmatprep.subr.mxu0 0.0
        %7700 = vmatpush1.msra.mxu0 0.0
        %7701 = vmatprep.subr.mxu0 0.0
        %7702 = vmatpush1.msra.mxu0 0.0
        %7703 = vmatprep.subr.mxu0 0.0
        %7704 = vmatpush1.msra.mxu0 0.0
        %7705 = vmatprep.subr.mxu0 0.0
        %7706 = vmatpush1.msra.mxu0 0.0
        %7707 = vmatprep.subr.mxu0 0.0
        %7708 = vmatpush1.msra.mxu0 0.0
        %7709 = vmatprep.subr.mxu0 0.0
        %7710 = vmatpush1.msra.mxu0 0.0
        %7711 = vmatprep.subr.mxu0 0.0
        %7712 = vmatpush1.msra.mxu0 0.0
        %7713 = vmatprep.subr.mxu0 0.0
        %7714 = vmatpush1.msra.mxu0 0.0
        %7715 = vmatprep.subr.mxu0 0.0
        %7716 = vmatpush1.msra.mxu0 0.0
        %7717 = vmatprep.subr.mxu0 0.0
        %7718 = vmatpush1.msra.mxu0 0.0
        %7719 = vmatprep.subr.mxu0 0.0
        %7720 = vmatpush1.msra.mxu0 0.0
        %7721 = vmatprep.subr.mxu0 0.0
        %7722 = vmatpush1.msra.mxu0 0.0
        %7723 = vmatprep.subr.mxu0 0.0
        %7724 = vmatpush1.msra.mxu0 0.0
        %7725 = vmatprep.subr.mxu0 0.0
        %7726 = vmatpush1.msra.mxu0 0.0
        %7727 = vmatprep.subr.mxu0 0.0
        %7728 = vmatpush1.msra.mxu0 0.0
        %7729 = vmatprep.mubr.f32.mxu0 0.0
        %7730 = vmatmul.mubr.f32.gmra.mrb[0].mxu0 %v7209
        %v7731 = vpop.f32.mrb[0].mxu0
        %v7732 = vadd.f32 %v7191, %v7731
        %v7733 = vpop.f32.mrb[0].mxu0
        %v7734 = vadd.f32 %v7191, %v7733
        %7735 = vmatprep.mubr.f32.mxu0 0.0
        %7736 = vmatmul.mubr.f32.gmra.mrb[0].mxu0 %v7212
        %v7737 = vpop.f32.mrb[0].mxu0
        %v7738 = vadd.f32 %v7196, %v7737
        %v7739 = vpop.f32.mrb[0].mxu0
        %v7740 = vadd.f32 %v7196, %v7739
        %7741 = vmatprep.mubr.f32.mxu0 0.0
        %7742 = vmatmul.mubr.f32.gmra.mrb[0].mxu0 %v7215
        %v7743 = vpop.f32.mrb[0].mxu0
        %v7744 = vadd.f32 %v7201, %v7743
        %v7745 = vpop.f32.mrb[0].mxu0
        %v7746 = vadd.f32 %v7201, %v7745
        %7747 = vmatprep.mubr.f32.mxu0 0.0
        %7748 = vmatmul.mubr.f32.gmra.mrb[0].mxu0 %v7218
        %v7749 = vpop.f32.mrb[0].mxu0
        %v7750 = vadd.f32 %v7206, %v7749
        %v7751 = vpop.f32.mrb[0].mxu0
        %v7752 = vadd.f32 %v7206, %v7751
        %7753 = vdwg.mxu0
        %7754 = vmatprep.subr.mxu0 %v7127
        %7755 = vmatpush1.msra.mxu0 %v7126
        %7756 = vmatprep.subr.mxu0 %v7143
        %7757 = vmatpush1.msra.mxu0 %v7142
        %7758 = vmatprep.subr.mxu0 %v7159
        %7759 = vmatpush1.msra.mxu0 %v7158
        %7760 = vmatprep.subr.mxu0 %v7175
        %7761 = vmatpush1.msra.mxu0 %v7174
        %7762 = vmatprep.subr.mxu0 0.0
        %7763 = vmatpush1.msra.mxu0 0.0
        %7764 = vmatprep.subr.mxu0 0.0
        %7765 = vmatpush1.msra.mxu0 0.0
        %7766 = vmatprep.subr.mxu0 0.0
        %7767 = vmatpush1.msra.mxu0 0.0
        %7768 = vmatprep.subr.mxu0 0.0
        %7769 = vmatpush1.msra.mxu0 0.0
        %7770 = vmatprep.subr.mxu0 0.0
        %7771 = vmatpush1.msra.mxu0 0.0
        %7772 = vmatprep.subr.mxu0 0.0
        %7773 = vmatpush1.msra.mxu0 0.0
        %7774 = vmatprep.subr.mxu0 0.0
        %7775 = vmatpush1.msra.mxu0 0.0
        %7776 = vmatprep.subr.mxu0 0.0
        %7777 = vmatpush1.msra.mxu0 0.0
        %7778 = vmatprep.subr.mxu0 0.0
        %7779 = vmatpush1.msra.mxu0 0.0
        %7780 = vmatprep.subr.mxu0 0.0
        %7781 = vmatpush1.msra.mxu0 0.0
        %7782 = vmatprep.subr.mxu0 0.0
        %7783 = vmatpush1.msra.mxu0 0.0
        %7784 = vmatprep.subr.mxu0 0.0
        %7785 = vmatpush1.msra.mxu0 0.0
        %7786 = vmatprep.subr.mxu0 0.0
        %7787 = vmatpush1.msra.mxu0 0.0
        %7788 = vmatprep.subr.mxu0 0.0
        %7789 = vmatpush1.msra.mxu0 0.0
        %7790 = vmatprep.subr.mxu0 0.0
        %7791 = vmatpush1.msra.mxu0 0.0
        %7792 = vmatprep.subr.mxu0 0.0
        %7793 = vmatpush1.msra.mxu0 0.0
        %7794 = vmatprep.subr.mxu0 0.0
        %7795 = vmatpush1.msra.mxu0 0.0
        %7796 = vmatprep.subr.mxu0 0.0
        %7797 = vmatpush1.msra.mxu0 0.0
        %7798 = vmatprep.subr.mxu0 0.0
        %7799 = vmatpush1.msra.mxu0 0.0
        %7800 = vmatprep.subr.mxu0 0.0
        %7801 = vmatpush1.msra.mxu0 0.0
        %7802 = vmatprep.subr.mxu0 0.0
        %7803 = vmatpush1.msra.mxu0 0.0
        %7804 = vmatprep.subr.mxu0 0.0
        %7805 = vmatpush1.msra.mxu0 0.0
        %7806 = vmatprep.subr.mxu0 0.0
        %7807 = vmatpush1.msra.mxu0 0.0
        %7808 = vmatprep.subr.mxu0 0.0
        %7809 = vmatpush1.msra.mxu0 0.0
        %7810 = vmatprep.subr.mxu0 0.0
        %7811 = vmatpush1.msra.mxu0 0.0
        %7812 = vmatprep.subr.mxu0 0.0
        %7813 = vmatpush1.msra.mxu0 0.0
        %7814 = vmatprep.subr.mxu0 0.0
        %7815 = vmatpush1.msra.mxu0 0.0
        %7816 = vmatprep.subr.mxu0 0.0
        %7817 = vmatpush1.msra.mxu0 0.0
        %7818 = vmatprep.mubr.f32.mxu0 0.0
        %7819 = vmatmul.mubr.f32.gmra.mrb[0].mxu0 %v7209
        %v7820 = vpop.f32.mrb[0].mxu0
        %v7821 = vadd.f32 %v7191, %v7820
        %v7822 = vpop.f32.mrb[0].mxu0
        %v7823 = vadd.f32 %v7191, %v7822
        %7824 = vmatprep.mubr.f32.mxu0 0.0
        %7825 = vmatmul.mubr.f32.gmra.mrb[0].mxu0 %v7212
        %v7826 = vpop.f32.mrb[0].mxu0
        %v7827 = vadd.f32 %v7196, %v7826
        %v7828 = vpop.f32.mrb[0].mxu0
        %v7829 = vadd.f32 %v7196, %v7828
        %7830 = vmatprep.mubr.f32.mxu0 0.0
        %7831 = vmatmul.mubr.f32.gmra.mrb[0].mxu0 %v7215
        %v7832 = vpop.f32.mrb[0].mxu0
        %v7833 = vadd.f32 %v7201, %v7832
        %v7834 = vpop.f32.mrb[0].mxu0
        %v7835 = vadd.f32 %v7201, %v7834
        %7836 = vmatprep.mubr.f32.mxu0 0.0
        %7837 = vmatmul.mubr.f32.gmra.mrb[0].mxu0 %v7218
        %v7838 = vpop.f32.mrb[0].mxu0
        %v7839 = vadd.f32 %v7206, %v7838
        %v7840 = vpop.f32.mrb[0].mxu0
        %v7841 = vadd.f32 %v7206, %v7840
        %7842 = vdwg.mxu0
        %7843 = vmatprep.subr.mxu0 %v7129
        %7844 = vmatpush1.msra.mxu0 %v7128
        %7845 = vmatprep.subr.mxu0 %v7145
        %7846 = vmatpush1.msra.mxu0 %v7144
        %7847 = vmatprep.subr.mxu0 %v7161
        %7848 = vmatpush1.msra.mxu0 %v7160
        %7849 = vmatprep.subr.mxu0 %v7177
        %7850 = vmatpush1.msra.mxu0 %v7176
        %7851 = vmatprep.subr.mxu0 0.0
        %7852 = vmatpush1.msra.mxu0 0.0
        %7853 = vmatprep.subr.mxu0 0.0
        %7854 = vmatpush1.msra.mxu0 0.0
        %7855 = vmatprep.subr.mxu0 0.0
        %7856 = vmatpush1.msra.mxu0 0.0
        %7857 = vmatprep.subr.mxu0 0.0
        %7858 = vmatpush1.msra.mxu0 0.0
        %7859 = vmatprep.subr.mxu0 0.0
        %7860 = vmatpush1.msra.mxu0 0.0
        %7861 = vmatprep.subr.mxu0 0.0
        %7862 = vmatpush1.msra.mxu0 0.0
        %7863 = vmatprep.subr.mxu0 0.0
        %7864 = vmatpush1.msra.mxu0 0.0
        %7865 = vmatprep.subr.mxu0 0.0
        %7866 = vmatpush1.msra.mxu0 0.0
        %7867 = vmatprep.subr.mxu0 0.0
        %7868 = vmatpush1.msra.mxu0 0.0
        %7869 = vmatprep.subr.mxu0 0.0
        %7870 = vmatpush1.msra.mxu0 0.0
        %7871 = vmatprep.subr.mxu0 0.0
        %7872 = vmatpush1.msra.mxu0 0.0
        %7873 = vmatprep.subr.mxu0 0.0
        %7874 = vmatpush1.msra.mxu0 0.0
        %7875 = vmatprep.subr.mxu0 0.0
        %7876 = vmatpush1.msra.mxu0 0.0
        %7877 = vmatprep.subr.mxu0 0.0
        %7878 = vmatpush1.msra.mxu0 0.0
        %7879 = vmatprep.subr.mxu0 0.0
        %7880 = vmatpush1.msra.mxu0 0.0
        %7881 = vmatprep.subr.mxu0 0.0
        %7882 = vmatpush1.msra.mxu0 0.0
        %7883 = vmatprep.subr.mxu0 0.0
        %7884 = vmatpush1.msra.mxu0 0.0
        %7885 = vmatprep.subr.mxu0 0.0
        %7886 = vmatpush1.msra.mxu0 0.0
        %7887 = vmatprep.subr.mxu0 0.0
        %7888 = vmatpush1.msra.mxu0 0.0
        %7889 = vmatprep.subr.mxu0 0.0
        %7890 = vmatpush1.msra.mxu0 0.0
        %7891 = vmatprep.subr.mxu0 0.0
        %7892 = vmatpush1.msra.mxu0 0.0
        %7893 = vmatprep.subr.mxu0 0.0
        %7894 = vmatpush1.msra.mxu0 0.0
        %7895 = vmatprep.subr.mxu0 0.0
        %7896 = vmatpush1.msra.mxu0 0.0
        %7897 = vmatprep.subr.mxu0 0.0
        %7898 = vmatpush1.msra.mxu0 0.0
        %7899 = vmatprep.subr.mxu0 0.0
        %7900 = vmatpush1.msra.mxu0 0.0
        %7901 = vmatprep.subr.mxu0 0.0
        %7902 = vmatpush1.msra.mxu0 0.0
        %7903 = vmatprep.subr.mxu0 0.0
        %7904 = vmatpush1.msra.mxu0 0.0
        %7905 = vmatprep.subr.mxu0 0.0
        %7906 = vmatpush1.msra.mxu0 0.0
        %7907 = vmatprep.mubr.f32.mxu0 0.0
        %7908 = vmatmul.mubr.f32.gmra.mrb[0].mxu0 %v7209
        %v7909 = vpop.f32.mrb[0].mxu0
        %v7910 = vadd.f32 %v7191, %v7909
        %v7911 = vpop.f32.mrb[0].mxu0
        %v7912 = vadd.f32 %v7191, %v7911
        %7913 = vmatprep.mubr.f32.mxu0 0.0
        %7914 = vmatmul.mubr.f32.gmra.mrb[0].mxu0 %v7212
        %v7915 = vpop.f32.mrb[0].mxu0
        %v7916 = vadd.f32 %v7196, %v7915
        %v7917 = vpop.f32.mrb[0].mxu0
        %v7918 = vadd.f32 %v7196, %v7917
        %7919 = vmatprep.mubr.f32.mxu0 0.0
        %7920 = vmatmul.mubr.f32.gmra.mrb[0].mxu0 %v7215
        %v7921 = vpop.f32.mrb[0].mxu0
        %v7922 = vadd.f32 %v7201, %v7921
        %v7923 = vpop.f32.mrb[0].mxu0
        %v7924 = vadd.f32 %v7201, %v7923
        %7925 = vmatprep.mubr.f32.mxu0 0.0
        %7926 = vmatmul.mubr.f32.gmra.mrb[0].mxu0 %v7218
        %v7927 = vpop.f32.mrb[0].mxu0
        %v7928 = vadd.f32 %v7206, %v7927
        %v7929 = vpop.f32.mrb[0].mxu0
        %v7930 = vadd.f32 %v7206, %v7929
        %7931 = vdwg.mxu0
        %v7932 = vtanh.pop %v7287
        %v7933 = vtanh.pop %v7289
        %v7934 = vtanh.pop %v7376
        %v7935 = vtanh.pop %v7378
        %v7936 = vtanh.pop %v7465
        %v7937 = vtanh.pop %v7467
        %v7938 = vtanh.pop %v7554
        %v7939 = vtanh.pop %v7556
        %v7940 = vtanh.pop %v7643
        %v7941 = vtanh.pop %v7645
        %v7942 = vtanh.pop %v7732
        %v7943 = vtanh.pop %v7734
        %v7944 = vtanh.pop %v7821
        %v7945 = vtanh.pop %v7823
        %v7946 = vtanh.pop %v7910
        %v7947 = vtanh.pop %v7912
        %v7948 = vtanh.pop %v7293
        %v7949 = vtanh.pop %v7295
        %v7950 = vtanh.pop %v7382
        %v7951 = vtanh.pop %v7384
        %v7952 = vtanh.pop %v7471
        %v7953 = vtanh.pop %v7473
        %v7954 = vtanh.pop %v7560
        %v7955 = vtanh.pop %v7562
        %v7956 = vtanh.pop %v7649
        %v7957 = vtanh.pop %v7651
        %v7958 = vtanh.pop %v7738
        %v7959 = vtanh.pop %v7740
        %v7960 = vtanh.pop %v7827
        %v7961 = vtanh.pop %v7829
        %v7962 = vtanh.pop %v7916
        %v7963 = vtanh.pop %v7918
        %v7964 = vtanh.pop %v7299
        %v7965 = vtanh.pop %v7301
        %v7966 = vtanh.pop %v7388
        %v7967 = vtanh.pop %v7390
        %v7968 = vtanh.pop %v7477
        %v7969 = vtanh.pop %v7479
        %v7970 = vtanh.pop %v7566
        %v7971 = vtanh.pop %v7568
        %v7972 = vtanh.pop %v7655
        %v7973 = vtanh.pop %v7657
        %v7974 = vtanh.pop %v7744
        %v7975 = vtanh.pop %v7746
        %v7976 = vtanh.pop %v7833
        %v7977 = vtanh.pop %v7835
        %v7978 = vtanh.pop %v7922
        %v7979 = vtanh.pop %v7924
        %v7980 = vtanh.pop %v7305
        %v7981 = vtanh.pop %v7307
        %v7982 = vtanh.pop %v7394
        %v7983 = vtanh.pop %v7396
        %v7984 = vtanh.pop %v7483
        %v7985 = vtanh.pop %v7485
        %v7986 = vtanh.pop %v7572
        %v7987 = vtanh.pop %v7574
        %v7988 = vtanh.pop %v7661
        %v7989 = vtanh.pop %v7663
        %v7990 = vtanh.pop %v7750
        %v7991 = vtanh.pop %v7752
        %v7992 = vtanh.pop %v7839
        %v7993 = vtanh.pop %v7841
        %v7994 = vtanh.pop %v7928
        %v7995 = vtanh.pop %v7930
        %v7996 = vadd.f32 %v7932, %v6296
        %v7997 = vadd.f32 %v7933, %v6297
        %v7998 = vadd.f32 %v7934, %v6298
        %v7999 = vadd.f32 %v7935, %v6299
        %v8000 = vadd.f32 %v7936, %v6300
        %v8001 = vadd.f32 %v7937, %v6301
        %v8002 = vadd.f32 %v7938, %v6302
        %v8003 = vadd.f32 %v7939, %v6303
        %v8004 = vadd.f32 %v7940, %v6304
        %v8005 = vadd.f32 %v7941, %v6305
        %v8006 = vadd.f32 %v7942, %v6306
        %v8007 = vadd.f32 %v7943, %v6307
        %v8008 = vadd.f32 %v7944, %v6308
        %v8009 = vadd.f32 %v7945, %v6309
        %v8010 = vadd.f32 %v7946, %v6310
        %v8011 = vadd.f32 %v7947, %v6311
        %v8012 = vadd.f32 %v7948, %v6312
        %v8013 = vadd.f32 %v7949, %v6313
        %v8014 = vadd.f32 %v7950, %v6314
        %v8015 = vadd.f32 %v7951, %v6315
        %v8016 = vadd.f32 %v7952, %v6316
        %v8017 = vadd.f32 %v7953, %v6317
        %v8018 = vadd.f32 %v7954, %v6318
        %v8019 = vadd.f32 %v7955, %v6319
        %v8020 = vadd.f32 %v7956, %v6320
        %v8021 = vadd.f32 %v7957, %v6321
        %v8022 = vadd.f32 %v7958, %v6322
        %v8023 = vadd.f32 %v7959, %v6323
        %v8024 = vadd.f32 %v7960, %v6324
        %v8025 = vadd.f32 %v7961, %v6325
        %v8026 = vadd.f32 %v7962, %v6326
        %v8027 = vadd.f32 %v7963, %v6327
        %v8028 = vadd.f32 %v7964, %v6328
        %v8029 = vadd.f32 %v7965, %v6329
        %v8030 = vadd.f32 %v7966, %v6330
        %v8031 = vadd.f32 %v7967, %v6331
        %v8032 = vadd.f32 %v7968, %v6332
        %v8033 = vadd.f32 %v7969, %v6333
        %v8034 = vadd.f32 %v7970, %v6334
        %v8035 = vadd.f32 %v7971, %v6335
        %v8036 = vadd.f32 %v7972, %v6336
        %v8037 = vadd.f32 %v7973, %v6337
        %v8038 = vadd.f32 %v7974, %v6338
        %v8039 = vadd.f32 %v7975, %v6339
        %v8040 = vadd.f32 %v7976, %v6340
        %v8041 = vadd.f32 %v7977, %v6341
        %v8042 = vadd.f32 %v7978, %v6342
        %v8043 = vadd.f32 %v7979, %v6343
        %v8044 = vadd.f32 %v7980, %v6344
        %v8045 = vadd.f32 %v7981, %v6345
        %v8046 = vadd.f32 %v7982, %v6346
        %v8047 = vadd.f32 %v7983, %v6347
        %v8048 = vadd.f32 %v7984, %v6348
        %v8049 = vadd.f32 %v7985, %v6349
        %v8050 = vadd.f32 %v7986, %v6350
        %v8051 = vadd.f32 %v7987, %v6351
        %v8052 = vadd.f32 %v7988, %v6352
        %v8053 = vadd.f32 %v7989, %v6353
        %v8054 = vadd.f32 %v7990, %v6354
        %v8055 = vadd.f32 %v7991, %v6355
        %v8056 = vadd.f32 %v7992, %v6356
        %v8057 = vadd.f32 %v7993, %v6357
        %v8058 = vadd.f32 %v7994, %v6358
        %v8059 = vadd.f32 %v7995, %v6359
        %v8060 = vld [vmem:[%s7] sm:$0x1]
        %v8061 = vld [vmem:[#allocation2] sm:$0x1]
        %8063 = vset.pattern.permute.xlu0 0
        %8064 = vperm.xlu0 %8063, %v8061
        %v8065 = vpop.permute.xlu0 %8064
        %v8067 = vlaneseq
        %v8068 = vshrl.u32 %v8067, 7
        %v8069 = vsub.s32 0, %v8068
        %v8070 = vrot.slane %v8065, %v8069
        %v8072 = vsel %vm1291, %v8060, 0
        %8074 = vmatprep.subr.mxu0 %v7997
        %8075 = vmatpush1.msra.mxu0 %v7996
        %8076 = vmatprep.subr.mxu0 %v8013
        %8077 = vmatpush1.msra.mxu0 %v8012
        %8078 = vmatprep.subr.mxu0 %v8029
        %8079 = vmatpush1.msra.mxu0 %v8028
        %8080 = vmatprep.subr.mxu0 %v8045
        %8081 = vmatpush1.msra.mxu0 %v8044
        %8082 = vmatprep.subr.mxu0 0.0
        %8083 = vmatpush1.msra.mxu0 0.0
        %8084 = vmatprep.subr.mxu0 0.0
        %8085 = vmatpush1.msra.mxu0 0.0
        %8086 = vmatprep.subr.mxu0 0.0
        %8087 = vmatpush1.msra.mxu0 0.0
        %8088 = vmatprep.subr.mxu0 0.0
        %8089 = vmatpush1.msra.mxu0 0.0
        %8090 = vmatprep.subr.mxu0 0.0
        %8091 = vmatpush1.msra.mxu0 0.0
        %8092 = vmatprep.subr.mxu0 0.0
        %8093 = vmatpush1.msra.mxu0 0.0
        %8094 = vmatprep.subr.mxu0 0.0
        %8095 = vmatpush1.msra.mxu0 0.0
        %8096 = vmatprep.subr.mxu0 0.0
        %8097 = vmatpush1.msra.mxu0 0.0
        %8098 = vmatprep.subr.mxu0 0.0
        %8099 = vmatpush1.msra.mxu0 0.0
        %8100 = vmatprep.subr.mxu0 0.0
        %8101 = vmatpush1.msra.mxu0 0.0
        %8102 = vmatprep.subr.mxu0 0.0
        %8103 = vmatpush1.msra.mxu0 0.0
        %8104 = vmatprep.subr.mxu0 0.0
        %8105 = vmatpush1.msra.mxu0 0.0
        %8106 = vmatprep.subr.mxu0 0.0
        %8107 = vmatpush1.msra.mxu0 0.0
        %8108 = vmatprep.subr.mxu0 0.0
        %8109 = vmatpush1.msra.mxu0 0.0
        %8110 = vmatprep.subr.mxu0 0.0
        %8111 = vmatpush1.msra.mxu0 0.0
        %8112 = vmatprep.subr.mxu0 0.0
        %8113 = vmatpush1.msra.mxu0 0.0
        %8114 = vmatprep.subr.mxu0 0.0
        %8115 = vmatpush1.msra.mxu0 0.0
        %8116 = vmatprep.subr.mxu0 0.0
        %8117 = vmatpush1.msra.mxu0 0.0
        %8118 = vmatprep.subr.mxu0 0.0
        %8119 = vmatpush1.msra.mxu0 0.0
        %8120 = vmatprep.subr.mxu0 0.0
        %8121 = vmatpush1.msra.mxu0 0.0
        %8122 = vmatprep.subr.mxu0 0.0
        %8123 = vmatpush1.msra.mxu0 0.0
        %8124 = vmatprep.subr.mxu0 0.0
        %8125 = vmatpush1.msra.mxu0 0.0
        %8126 = vmatprep.subr.mxu0 0.0
        %8127 = vmatpush1.msra.mxu0 0.0
        %8128 = vmatprep.subr.mxu0 0.0
        %8129 = vmatpush1.msra.mxu0 0.0
        %8130 = vmatprep.subr.mxu0 0.0
        %8131 = vmatpush1.msra.mxu0 0.0
        %8132 = vmatprep.subr.mxu0 0.0
        %8133 = vmatpush1.msra.mxu0 0.0
        %8134 = vmatprep.subr.mxu0 0.0
        %8135 = vmatpush1.msra.mxu0 0.0
        %8136 = vmatprep.subr.mxu0 0.0
        %8137 = vmatpush1.msra.mxu0 0.0
        %8138 = vmatprep.mubr.f32.mxu0 0.0
        %8139 = vmatmul.mubr.f32.gmra.mrb[0].mxu0 %v8072
        %v8140 = vpop.f32.mrb[0].mxu0
        %v8141 = vadd.f32 %v8070, %v8140
        %v8142 = vpop.f32.mrb[0].mxu0
        %v8143 = vadd.f32 %v8070, %v8142
        %8144 = vdwg.mxu0
        %8145 = vmatprep.subr.mxu0 %v7999
        %8146 = vmatpush1.msra.mxu0 %v7998
        %8147 = vmatprep.subr.mxu0 %v8015
        %8148 = vmatpush1.msra.mxu0 %v8014
        %8149 = vmatprep.subr.mxu0 %v8031
        %8150 = vmatpush1.msra.mxu0 %v8030
        %8151 = vmatprep.subr.mxu0 %v8047
        %8152 = vmatpush1.msra.mxu0 %v8046
        %8153 = vmatprep.subr.mxu0 0.0
        %8154 = vmatpush1.msra.mxu0 0.0
        %8155 = vmatprep.subr.mxu0 0.0
        %8156 = vmatpush1.msra.mxu0 0.0
        %8157 = vmatprep.subr.mxu0 0.0
        %8158 = vmatpush1.msra.mxu0 0.0
        %8159 = vmatprep.subr.mxu0 0.0
        %8160 = vmatpush1.msra.mxu0 0.0
        %8161 = vmatprep.subr.mxu0 0.0
        %8162 = vmatpush1.msra.mxu0 0.0
        %8163 = vmatprep.subr.mxu0 0.0
        %8164 = vmatpush1.msra.mxu0 0.0
        %8165 = vmatprep.subr.mxu0 0.0
        %8166 = vmatpush1.msra.mxu0 0.0
        %8167 = vmatprep.subr.mxu0 0.0
        %8168 = vmatpush1.msra.mxu0 0.0
        %8169 = vmatprep.subr.mxu0 0.0
        %8170 = vmatpush1.msra.mxu0 0.0
        %8171 = vmatprep.subr.mxu0 0.0
        %8172 = vmatpush1.msra.mxu0 0.0
        %8173 = vmatprep.subr.mxu0 0.0
        %8174 = vmatpush1.msra.mxu0 0.0
        %8175 = vmatprep.subr.mxu0 0.0
        %8176 = vmatpush1.msra.mxu0 0.0
        %8177 = vmatprep.subr.mxu0 0.0
        %8178 = vmatpush1.msra.mxu0 0.0
        %8179 = vmatprep.subr.mxu0 0.0
        %8180 = vmatpush1.msra.mxu0 0.0
        %8181 = vmatprep.subr.mxu0 0.0
        %8182 = vmatpush1.msra.mxu0 0.0
        %8183 = vmatprep.subr.mxu0 0.0
        %8184 = vmatpush1.msra.mxu0 0.0
        %8185 = vmatprep.subr.mxu0 0.0
        %8186 = vmatpush1.msra.mxu0 0.0
        %8187 = vmatprep.subr.mxu0 0.0
        %8188 = vmatpush1.msra.mxu0 0.0
        %8189 = vmatprep.subr.mxu0 0.0
        %8190 = vmatpush1.msra.mxu0 0.0
        %8191 = vmatprep.subr.mxu0 0.0
        %8192 = vmatpush1.msra.mxu0 0.0
        %8193 = vmatprep.subr.mxu0 0.0
        %8194 = vmatpush1.msra.mxu0 0.0
        %8195 = vmatprep.subr.mxu0 0.0
        %8196 = vmatpush1.msra.mxu0 0.0
        %8197 = vmatprep.subr.mxu0 0.0
        %8198 = vmatpush1.msra.mxu0 0.0
        %8199 = vmatprep.subr.mxu0 0.0
        %8200 = vmatpush1.msra.mxu0 0.0
        %8201 = vmatprep.subr.mxu0 0.0
        %8202 = vmatpush1.msra.mxu0 0.0
        %8203 = vmatprep.subr.mxu0 0.0
        %8204 = vmatpush1.msra.mxu0 0.0
        %8205 = vmatprep.subr.mxu0 0.0
        %8206 = vmatpush1.msra.mxu0 0.0
        %8207 = vmatprep.subr.mxu0 0.0
        %8208 = vmatpush1.msra.mxu0 0.0
        %8209 = vmatprep.mubr.f32.mxu0 0.0
        %8210 = vmatmul.mubr.f32.gmra.mrb[0].mxu0 %v8072
        %v8211 = vpop.f32.mrb[0].mxu0
        %v8212 = vadd.f32 %v8070, %v8211
        %v8213 = vpop.f32.mrb[0].mxu0
        %v8214 = vadd.f32 %v8070, %v8213
        %8215 = vdwg.mxu0
        %8216 = vmatprep.subr.mxu0 %v8001
        %8217 = vmatpush1.msra.mxu0 %v8000
        %8218 = vmatprep.subr.mxu0 %v8017
        %8219 = vmatpush1.msra.mxu0 %v8016
        %8220 = vmatprep.subr.mxu0 %v8033
        %8221 = vmatpush1.msra.mxu0 %v8032
        %8222 = vmatprep.subr.mxu0 %v8049
        %8223 = vmatpush1.msra.mxu0 %v8048
        %8224 = vmatprep.subr.mxu0 0.0
        %8225 = vmatpush1.msra.mxu0 0.0
        %8226 = vmatprep.subr.mxu0 0.0
        %8227 = vmatpush1.msra.mxu0 0.0
        %8228 = vmatprep.subr.mxu0 0.0
        %8229 = vmatpush1.msra.mxu0 0.0
        %8230 = vmatprep.subr.mxu0 0.0
        %8231 = vmatpush1.msra.mxu0 0.0
        %8232 = vmatprep.subr.mxu0 0.0
        %8233 = vmatpush1.msra.mxu0 0.0
        %8234 = vmatprep.subr.mxu0 0.0
        %8235 = vmatpush1.msra.mxu0 0.0
        %8236 = vmatprep.subr.mxu0 0.0
        %8237 = vmatpush1.msra.mxu0 0.0
        %8238 = vmatprep.subr.mxu0 0.0
        %8239 = vmatpush1.msra.mxu0 0.0
        %8240 = vmatprep.subr.mxu0 0.0
        %8241 = vmatpush1.msra.mxu0 0.0
        %8242 = vmatprep.subr.mxu0 0.0
        %8243 = vmatpush1.msra.mxu0 0.0
        %8244 = vmatprep.subr.mxu0 0.0
        %8245 = vmatpush1.msra.mxu0 0.0
        %8246 = vmatprep.subr.mxu0 0.0
        %8247 = vmatpush1.msra.mxu0 0.0
        %8248 = vmatprep.subr.mxu0 0.0
        %8249 = vmatpush1.msra.mxu0 0.0
        %8250 = vmatprep.subr.mxu0 0.0
        %8251 = vmatpush1.msra.mxu0 0.0
        %8252 = vmatprep.subr.mxu0 0.0
        %8253 = vmatpush1.msra.mxu0 0.0
        %8254 = vmatprep.subr.mxu0 0.0
        %8255 = vmatpush1.msra.mxu0 0.0
        %8256 = vmatprep.subr.mxu0 0.0
        %8257 = vmatpush1.msra.mxu0 0.0
        %8258 = vmatprep.subr.mxu0 0.0
        %8259 = vmatpush1.msra.mxu0 0.0
        %8260 = vmatprep.subr.mxu0 0.0
        %8261 = vmatpush1.msra.mxu0 0.0
        %8262 = vmatprep.subr.mxu0 0.0
        %8263 = vmatpush1.msra.mxu0 0.0
        %8264 = vmatprep.subr.mxu0 0.0
        %8265 = vmatpush1.msra.mxu0 0.0
        %8266 = vmatprep.subr.mxu0 0.0
        %8267 = vmatpush1.msra.mxu0 0.0
        %8268 = vmatprep.subr.mxu0 0.0
        %8269 = vmatpush1.msra.mxu0 0.0
        %8270 = vmatprep.subr.mxu0 0.0
        %8271 = vmatpush1.msra.mxu0 0.0
        %8272 = vmatprep.subr.mxu0 0.0
        %8273 = vmatpush1.msra.mxu0 0.0
        %8274 = vmatprep.subr.mxu0 0.0
        %8275 = vmatpush1.msra.mxu0 0.0
        %8276 = vmatprep.subr.mxu0 0.0
        %8277 = vmatpush1.msra.mxu0 0.0
        %8278 = vmatprep.subr.mxu0 0.0
        %8279 = vmatpush1.msra.mxu0 0.0
        %8280 = vmatprep.mubr.f32.mxu0 0.0
        %8281 = vmatmul.mubr.f32.gmra.mrb[0].mxu0 %v8072
        %v8282 = vpop.f32.mrb[0].mxu0
        %v8283 = vadd.f32 %v8070, %v8282
        %v8284 = vpop.f32.mrb[0].mxu0
        %v8285 = vadd.f32 %v8070, %v8284
        %8286 = vdwg.mxu0
        %8287 = vmatprep.subr.mxu0 %v8003
        %8288 = vmatpush1.msra.mxu0 %v8002
        %8289 = vmatprep.subr.mxu0 %v8019
        %8290 = vmatpush1.msra.mxu0 %v8018
        %8291 = vmatprep.subr.mxu0 %v8035
        %8292 = vmatpush1.msra.mxu0 %v8034
        %8293 = vmatprep.subr.mxu0 %v8051
        %8294 = vmatpush1.msra.mxu0 %v8050
        %8295 = vmatprep.subr.mxu0 0.0
        %8296 = vmatpush1.msra.mxu0 0.0
        %8297 = vmatprep.subr.mxu0 0.0
        %8298 = vmatpush1.msra.mxu0 0.0
        %8299 = vmatprep.subr.mxu0 0.0
        %8300 = vmatpush1.msra.mxu0 0.0
        %8301 = vmatprep.subr.mxu0 0.0
        %8302 = vmatpush1.msra.mxu0 0.0
        %8303 = vmatprep.subr.mxu0 0.0
        %8304 = vmatpush1.msra.mxu0 0.0
        %8305 = vmatprep.subr.mxu0 0.0
        %8306 = vmatpush1.msra.mxu0 0.0
        %8307 = vmatprep.subr.mxu0 0.0
        %8308 = vmatpush1.msra.mxu0 0.0
        %8309 = vmatprep.subr.mxu0 0.0
        %8310 = vmatpush1.msra.mxu0 0.0
        %8311 = vmatprep.subr.mxu0 0.0
        %8312 = vmatpush1.msra.mxu0 0.0
        %8313 = vmatprep.subr.mxu0 0.0
        %8314 = vmatpush1.msra.mxu0 0.0
        %8315 = vmatprep.subr.mxu0 0.0
        %8316 = vmatpush1.msra.mxu0 0.0
        %8317 = vmatprep.subr.mxu0 0.0
        %8318 = vmatpush1.msra.mxu0 0.0
        %8319 = vmatprep.subr.mxu0 0.0
        %8320 = vmatpush1.msra.mxu0 0.0
        %8321 = vmatprep.subr.mxu0 0.0
        %8322 = vmatpush1.msra.mxu0 0.0
        %8323 = vmatprep.subr.mxu0 0.0
        %8324 = vmatpush1.msra.mxu0 0.0
        %8325 = vmatprep.subr.mxu0 0.0
        %8326 = vmatpush1.msra.mxu0 0.0
        %8327 = vmatprep.subr.mxu0 0.0
        %8328 = vmatpush1.msra.mxu0 0.0
        %8329 = vmatprep.subr.mxu0 0.0
        %8330 = vmatpush1.msra.mxu0 0.0
        %8331 = vmatprep.subr.mxu0 0.0
        %8332 = vmatpush1.msra.mxu0 0.0
        %8333 = vmatprep.subr.mxu0 0.0
        %8334 = vmatpush1.msra.mxu0 0.0
        %8335 = vmatprep.subr.mxu0 0.0
        %8336 = vmatpush1.msra.mxu0 0.0
        %8337 = vmatprep.subr.mxu0 0.0
        %8338 = vmatpush1.msra.mxu0 0.0
        %8339 = vmatprep.subr.mxu0 0.0
        %8340 = vmatpush1.msra.mxu0 0.0
        %8341 = vmatprep.subr.mxu0 0.0
        %8342 = vmatpush1.msra.mxu0 0.0
        %8343 = vmatprep.subr.mxu0 0.0
        %8344 = vmatpush1.msra.mxu0 0.0
        %8345 = vmatprep.subr.mxu0 0.0
        %8346 = vmatpush1.msra.mxu0 0.0
        %8347 = vmatprep.subr.mxu0 0.0
        %8348 = vmatpush1.msra.mxu0 0.0
        %8349 = vmatprep.subr.mxu0 0.0
        %8350 = vmatpush1.msra.mxu0 0.0
        %8351 = vmatprep.mubr.f32.mxu0 0.0
        %8352 = vmatmul.mubr.f32.gmra.mrb[0].mxu0 %v8072
        %v8353 = vpop.f32.mrb[0].mxu0
        %v8354 = vadd.f32 %v8070, %v8353
        %v8355 = vpop.f32.mrb[0].mxu0
        %v8356 = vadd.f32 %v8070, %v8355
        %8357 = vdwg.mxu0
        %8358 = vmatprep.subr.mxu0 %v8005
        %8359 = vmatpush1.msra.mxu0 %v8004
        %8360 = vmatprep.subr.mxu0 %v8021
        %8361 = vmatpush1.msra.mxu0 %v8020
        %8362 = vmatprep.subr.mxu0 %v8037
        %8363 = vmatpush1.msra.mxu0 %v8036
        %8364 = vmatprep.subr.mxu0 %v8053
        %8365 = vmatpush1.msra.mxu0 %v8052
        %8366 = vmatprep.subr.mxu0 0.0
        %8367 = vmatpush1.msra.mxu0 0.0
        %8368 = vmatprep.subr.mxu0 0.0
        %8369 = vmatpush1.msra.mxu0 0.0
        %8370 = vmatprep.subr.mxu0 0.0
        %8371 = vmatpush1.msra.mxu0 0.0
        %8372 = vmatprep.subr.mxu0 0.0
        %8373 = vmatpush1.msra.mxu0 0.0
        %8374 = vmatprep.subr.mxu0 0.0
        %8375 = vmatpush1.msra.mxu0 0.0
        %8376 = vmatprep.subr.mxu0 0.0
        %8377 = vmatpush1.msra.mxu0 0.0
        %8378 = vmatprep.subr.mxu0 0.0
        %8379 = vmatpush1.msra.mxu0 0.0
        %8380 = vmatprep.subr.mxu0 0.0
        %8381 = vmatpush1.msra.mxu0 0.0
        %8382 = vmatprep.subr.mxu0 0.0
        %8383 = vmatpush1.msra.mxu0 0.0
        %8384 = vmatprep.subr.mxu0 0.0
        %8385 = vmatpush1.msra.mxu0 0.0
        %8386 = vmatprep.subr.mxu0 0.0
        %8387 = vmatpush1.msra.mxu0 0.0
        %8388 = vmatprep.subr.mxu0 0.0
        %8389 = vmatpush1.msra.mxu0 0.0
        %8390 = vmatprep.subr.mxu0 0.0
        %8391 = vmatpush1.msra.mxu0 0.0
        %8392 = vmatprep.subr.mxu0 0.0
        %8393 = vmatpush1.msra.mxu0 0.0
        %8394 = vmatprep.subr.mxu0 0.0
        %8395 = vmatpush1.msra.mxu0 0.0
        %8396 = vmatprep.subr.mxu0 0.0
        %8397 = vmatpush1.msra.mxu0 0.0
        %8398 = vmatprep.subr.mxu0 0.0
        %8399 = vmatpush1.msra.mxu0 0.0
        %8400 = vmatprep.subr.mxu0 0.0
        %8401 = vmatpush1.msra.mxu0 0.0
        %8402 = vmatprep.subr.mxu0 0.0
        %8403 = vmatpush1.msra.mxu0 0.0
        %8404 = vmatprep.subr.mxu0 0.0
        %8405 = vmatpush1.msra.mxu0 0.0
        %8406 = vmatprep.subr.mxu0 0.0
        %8407 = vmatpush1.msra.mxu0 0.0
        %8408 = vmatprep.subr.mxu0 0.0
        %8409 = vmatpush1.msra.mxu0 0.0
        %8410 = vmatprep.subr.mxu0 0.0
        %8411 = vmatpush1.msra.mxu0 0.0
        %8412 = vmatprep.subr.mxu0 0.0
        %8413 = vmatpush1.msra.mxu0 0.0
        %8414 = vmatprep.subr.mxu0 0.0
        %8415 = vmatpush1.msra.mxu0 0.0
        %8416 = vmatprep.subr.mxu0 0.0
        %8417 = vmatpush1.msra.mxu0 0.0
        %8418 = vmatprep.subr.mxu0 0.0
        %8419 = vmatpush1.msra.mxu0 0.0
        %8420 = vmatprep.subr.mxu0 0.0
        %8421 = vmatpush1.msra.mxu0 0.0
        %8422 = vmatprep.mubr.f32.mxu0 0.0
        %8423 = vmatmul.mubr.f32.gmra.mrb[0].mxu0 %v8072
        %v8424 = vpop.f32.mrb[0].mxu0
        %v8425 = vadd.f32 %v8070, %v8424
        %v8426 = vpop.f32.mrb[0].mxu0
        %v8427 = vadd.f32 %v8070, %v8426
        %8428 = vdwg.mxu0
        %8429 = vmatprep.subr.mxu0 %v8007
        %8430 = vmatpush1.msra.mxu0 %v8006
        %8431 = vmatprep.subr.mxu0 %v8023
        %8432 = vmatpush1.msra.mxu0 %v8022
        %8433 = vmatprep.subr.mxu0 %v8039
        %8434 = vmatpush1.msra.mxu0 %v8038
        %8435 = vmatprep.subr.mxu0 %v8055
        %8436 = vmatpush1.msra.mxu0 %v8054
        %8437 = vmatprep.subr.mxu0 0.0
        %8438 = vmatpush1.msra.mxu0 0.0
        %8439 = vmatprep.subr.mxu0 0.0
        %8440 = vmatpush1.msra.mxu0 0.0
        %8441 = vmatprep.subr.mxu0 0.0
        %8442 = vmatpush1.msra.mxu0 0.0
        %8443 = vmatprep.subr.mxu0 0.0
        %8444 = vmatpush1.msra.mxu0 0.0
        %8445 = vmatprep.subr.mxu0 0.0
        %8446 = vmatpush1.msra.mxu0 0.0
        %8447 = vmatprep.subr.mxu0 0.0
        %8448 = vmatpush1.msra.mxu0 0.0
        %8449 = vmatprep.subr.mxu0 0.0
        %8450 = vmatpush1.msra.mxu0 0.0
        %8451 = vmatprep.subr.mxu0 0.0
        %8452 = vmatpush1.msra.mxu0 0.0
        %8453 = vmatprep.subr.mxu0 0.0
        %8454 = vmatpush1.msra.mxu0 0.0
        %8455 = vmatprep.subr.mxu0 0.0
        %8456 = vmatpush1.msra.mxu0 0.0
        %8457 = vmatprep.subr.mxu0 0.0
        %8458 = vmatpush1.msra.mxu0 0.0
        %8459 = vmatprep.subr.mxu0 0.0
        %8460 = vmatpush1.msra.mxu0 0.0
        %8461 = vmatprep.subr.mxu0 0.0
        %8462 = vmatpush1.msra.mxu0 0.0
        %8463 = vmatprep.subr.mxu0 0.0
        %8464 = vmatpush1.msra.mxu0 0.0
        %8465 = vmatprep.subr.mxu0 0.0
        %8466 = vmatpush1.msra.mxu0 0.0
        %8467 = vmatprep.subr.mxu0 0.0
        %8468 = vmatpush1.msra.mxu0 0.0
        %8469 = vmatprep.subr.mxu0 0.0
        %8470 = vmatpush1.msra.mxu0 0.0
        %8471 = vmatprep.subr.mxu0 0.0
        %8472 = vmatpush1.msra.mxu0 0.0
        %8473 = vmatprep.subr.mxu0 0.0
        %8474 = vmatpush1.msra.mxu0 0.0
        %8475 = vmatprep.subr.mxu0 0.0
        %8476 = vmatpush1.msra.mxu0 0.0
        %8477 = vmatprep.subr.mxu0 0.0
        %8478 = vmatpush1.msra.mxu0 0.0
        %8479 = vmatprep.subr.mxu0 0.0
        %8480 = vmatpush1.msra.mxu0 0.0
        %8481 = vmatprep.subr.mxu0 0.0
        %8482 = vmatpush1.msra.mxu0 0.0
        %8483 = vmatprep.subr.mxu0 0.0
        %8484 = vmatpush1.msra.mxu0 0.0
        %8485 = vmatprep.subr.mxu0 0.0
        %8486 = vmatpush1.msra.mxu0 0.0
        %8487 = vmatprep.subr.mxu0 0.0
        %8488 = vmatpush1.msra.mxu0 0.0
        %8489 = vmatprep.subr.mxu0 0.0
        %8490 = vmatpush1.msra.mxu0 0.0
        %8491 = vmatprep.subr.mxu0 0.0
        %8492 = vmatpush1.msra.mxu0 0.0
        %8493 = vmatprep.mubr.f32.mxu0 0.0
        %8494 = vmatmul.mubr.f32.gmra.mrb[0].mxu0 %v8072
        %v8495 = vpop.f32.mrb[0].mxu0
        %v8496 = vadd.f32 %v8070, %v8495
        %v8497 = vpop.f32.mrb[0].mxu0
        %v8498 = vadd.f32 %v8070, %v8497
        %8499 = vdwg.mxu0
        %8500 = vmatprep.subr.mxu0 %v8009
        %8501 = vmatpush1.msra.mxu0 %v8008
        %8502 = vmatprep.subr.mxu0 %v8025
        %8503 = vmatpush1.msra.mxu0 %v8024
        %8504 = vmatprep.subr.mxu0 %v8041
        %8505 = vmatpush1.msra.mxu0 %v8040
        %8506 = vmatprep.subr.mxu0 %v8057
        %8507 = vmatpush1.msra.mxu0 %v8056
        %8508 = vmatprep.subr.mxu0 0.0
        %8509 = vmatpush1.msra.mxu0 0.0
        %8510 = vmatprep.subr.mxu0 0.0
        %8511 = vmatpush1.msra.mxu0 0.0
        %8512 = vmatprep.subr.mxu0 0.0
        %8513 = vmatpush1.msra.mxu0 0.0
        %8514 = vmatprep.subr.mxu0 0.0
        %8515 = vmatpush1.msra.mxu0 0.0
        %8516 = vmatprep.subr.mxu0 0.0
        %8517 = vmatpush1.msra.mxu0 0.0
        %8518 = vmatprep.subr.mxu0 0.0
        %8519 = vmatpush1.msra.mxu0 0.0
        %8520 = vmatprep.subr.mxu0 0.0
        %8521 = vmatpush1.msra.mxu0 0.0
        %8522 = vmatprep.subr.mxu0 0.0
        %8523 = vmatpush1.msra.mxu0 0.0
        %8524 = vmatprep.subr.mxu0 0.0
        %8525 = vmatpush1.msra.mxu0 0.0
        %8526 = vmatprep.subr.mxu0 0.0
        %8527 = vmatpush1.msra.mxu0 0.0
        %8528 = vmatprep.subr.mxu0 0.0
        %8529 = vmatpush1.msra.mxu0 0.0
        %8530 = vmatprep.subr.mxu0 0.0
        %8531 = vmatpush1.msra.mxu0 0.0
        %8532 = vmatprep.subr.mxu0 0.0
        %8533 = vmatpush1.msra.mxu0 0.0
        %8534 = vmatprep.subr.mxu0 0.0
        %8535 = vmatpush1.msra.mxu0 0.0
        %8536 = vmatprep.subr.mxu0 0.0
        %8537 = vmatpush1.msra.mxu0 0.0
        %8538 = vmatprep.subr.mxu0 0.0
        %8539 = vmatpush1.msra.mxu0 0.0
        %8540 = vmatprep.subr.mxu0 0.0
        %8541 = vmatpush1.msra.mxu0 0.0
        %8542 = vmatprep.subr.mxu0 0.0
        %8543 = vmatpush1.msra.mxu0 0.0
        %8544 = vmatprep.subr.mxu0 0.0
        %8545 = vmatpush1.msra.mxu0 0.0
        %8546 = vmatprep.subr.mxu0 0.0
        %8547 = vmatpush1.msra.mxu0 0.0
        %8548 = vmatprep.subr.mxu0 0.0
        %8549 = vmatpush1.msra.mxu0 0.0
        %8550 = vmatprep.subr.mxu0 0.0
        %8551 = vmatpush1.msra.mxu0 0.0
        %8552 = vmatprep.subr.mxu0 0.0
        %8553 = vmatpush1.msra.mxu0 0.0
        %8554 = vmatprep.subr.mxu0 0.0
        %8555 = vmatpush1.msra.mxu0 0.0
        %8556 = vmatprep.subr.mxu0 0.0
        %8557 = vmatpush1.msra.mxu0 0.0
        %8558 = vmatprep.subr.mxu0 0.0
        %8559 = vmatpush1.msra.mxu0 0.0
        %8560 = vmatprep.subr.mxu0 0.0
        %8561 = vmatpush1.msra.mxu0 0.0
        %8562 = vmatprep.subr.mxu0 0.0
        %8563 = vmatpush1.msra.mxu0 0.0
        %8564 = vmatprep.mubr.f32.mxu0 0.0
        %8565 = vmatmul.mubr.f32.gmra.mrb[0].mxu0 %v8072
        %v8566 = vpop.f32.mrb[0].mxu0
        %v8567 = vadd.f32 %v8070, %v8566
        %v8568 = vpop.f32.mrb[0].mxu0
        %v8569 = vadd.f32 %v8070, %v8568
        %8570 = vdwg.mxu0
        %8571 = vmatprep.subr.mxu0 %v8011
        %8572 = vmatpush1.msra.mxu0 %v8010
        %8573 = vmatprep.subr.mxu0 %v8027
        %8574 = vmatpush1.msra.mxu0 %v8026
        %8575 = vmatprep.subr.mxu0 %v8043
        %8576 = vmatpush1.msra.mxu0 %v8042
        %8577 = vmatprep.subr.mxu0 %v8059
        %8578 = vmatpush1.msra.mxu0 %v8058
        %8579 = vmatprep.subr.mxu0 0.0
        %8580 = vmatpush1.msra.mxu0 0.0
        %8581 = vmatprep.subr.mxu0 0.0
        %8582 = vmatpush1.msra.mxu0 0.0
        %8583 = vmatprep.subr.mxu0 0.0
        %8584 = vmatpush1.msra.mxu0 0.0
        %8585 = vmatprep.subr.mxu0 0.0
        %8586 = vmatpush1.msra.mxu0 0.0
        %8587 = vmatprep.subr.mxu0 0.0
        %8588 = vmatpush1.msra.mxu0 0.0
        %8589 = vmatprep.subr.mxu0 0.0
        %8590 = vmatpush1.msra.mxu0 0.0
        %8591 = vmatprep.subr.mxu0 0.0
        %8592 = vmatpush1.msra.mxu0 0.0
        %8593 = vmatprep.subr.mxu0 0.0
        %8594 = vmatpush1.msra.mxu0 0.0
        %8595 = vmatprep.subr.mxu0 0.0
        %8596 = vmatpush1.msra.mxu0 0.0
        %8597 = vmatprep.subr.mxu0 0.0
        %8598 = vmatpush1.msra.mxu0 0.0
        %8599 = vmatprep.subr.mxu0 0.0
        %8600 = vmatpush1.msra.mxu0 0.0
        %8601 = vmatprep.subr.mxu0 0.0
        %8602 = vmatpush1.msra.mxu0 0.0
        %8603 = vmatprep.subr.mxu0 0.0
        %8604 = vmatpush1.msra.mxu0 0.0
        %8605 = vmatprep.subr.mxu0 0.0
        %8606 = vmatpush1.msra.mxu0 0.0
        %8607 = vmatprep.subr.mxu0 0.0
        %8608 = vmatpush1.msra.mxu0 0.0
        %8609 = vmatprep.subr.mxu0 0.0
        %8610 = vmatpush1.msra.mxu0 0.0
        %8611 = vmatprep.subr.mxu0 0.0
        %8612 = vmatpush1.msra.mxu0 0.0
        %8613 = vmatprep.subr.mxu0 0.0
        %8614 = vmatpush1.msra.mxu0 0.0
        %8615 = vmatprep.subr.mxu0 0.0
        %8616 = vmatpush1.msra.mxu0 0.0
        %8617 = vmatprep.subr.mxu0 0.0
        %8618 = vmatpush1.msra.mxu0 0.0
        %8619 = vmatprep.subr.mxu0 0.0
        %8620 = vmatpush1.msra.mxu0 0.0
        %8621 = vmatprep.subr.mxu0 0.0
        %8622 = vmatpush1.msra.mxu0 0.0
        %8623 = vmatprep.subr.mxu0 0.0
        %8624 = vmatpush1.msra.mxu0 0.0
        %8625 = vmatprep.subr.mxu0 0.0
        %8626 = vmatpush1.msra.mxu0 0.0
        %8627 = vmatprep.subr.mxu0 0.0
        %8628 = vmatpush1.msra.mxu0 0.0
        %8629 = vmatprep.subr.mxu0 0.0
        %8630 = vmatpush1.msra.mxu0 0.0
        %8631 = vmatprep.subr.mxu0 0.0
        %8632 = vmatpush1.msra.mxu0 0.0
        %8633 = vmatprep.subr.mxu0 0.0
        %8634 = vmatpush1.msra.mxu0 0.0
        %8635 = vmatprep.mubr.f32.mxu0 0.0
        %8636 = vmatmul.mubr.f32.gmra.mrb[0].mxu0 %v8072
        %v8637 = vpop.f32.mrb[0].mxu0
        %v8638 = vadd.f32 %v8070, %v8637
        %v8639 = vpop.f32.mrb[0].mxu0
        %v8640 = vadd.f32 %v8070, %v8639
        %8641 = vdwg.mxu0
        %v8642 = vmul.f32 %v351, %v351
        %v8643 = vmul.f32 %v352, %v352
        %v8644 = vmul.f32 %v353, %v353
        %v8645 = vmul.f32 %v354, %v354
        %v8646 = vmul.f32 %v355, %v355
        %v8647 = vmul.f32 %v356, %v356
        %v8648 = vmul.f32 %v357, %v357
        %v8649 = vmul.f32 %v358, %v358
        %v8650 = vsub.f32 %v351, %v8642
        %v8651 = vsub.f32 %v352, %v8643
        %v8652 = vsub.f32 %v353, %v8644
        %v8653 = vsub.f32 %v354, %v8645
        %v8654 = vsub.f32 %v355, %v8646
        %v8655 = vsub.f32 %v356, %v8647
        %v8656 = vsub.f32 %v357, %v8648
        %v8657 = vsub.f32 %v358, %v8649
        %v8666 = vrot.slane %v8650, 5
        %v8667 = vrot.slane %v8666, 4
        %v8668 = vrot.slane %v8651, 5
        %v8669 = vrot.slane %v8668, 4
        %v8670 = vrot.slane %v8652, 5
        %v8671 = vrot.slane %v8670, 4
        %v8672 = vrot.slane %v8653, 5
        %v8673 = vrot.slane %v8672, 4
        %v8674 = vrot.slane %v8654, 5
        %v8675 = vrot.slane %v8674, 4
        %v8676 = vrot.slane %v8655, 5
        %v8677 = vrot.slane %v8676, 4
        %v8678 = vrot.slane %v8656, 5
        %v8679 = vrot.slane %v8678, 4
        %v8680 = vrot.slane %v8657, 5
        %v8681 = vrot.slane %v8680, 4
        %v8690 = vmul.f32 %v8650, %v8667
        %v8691 = vmul.f32 %v8651, %v8669
        %v8692 = vmul.f32 %v8652, %v8671
        %v8693 = vmul.f32 %v8653, %v8673
        %v8694 = vmul.f32 %v8654, %v8675
        %v8695 = vmul.f32 %v8655, %v8677
        %v8696 = vmul.f32 %v8656, %v8679
        %v8697 = vmul.f32 %v8657, %v8681
        %v8698 = vrot.slane %v8650, 6
        %v8699 = vrot.slane %v8698, 4
        %v8700 = vrot.slane %v8651, 6
        %v8701 = vrot.slane %v8700, 4
        %v8702 = vrot.slane %v8652, 6
        %v8703 = vrot.slane %v8702, 4
        %v8704 = vrot.slane %v8653, 6
        %v8705 = vrot.slane %v8704, 4
        %v8706 = vrot.slane %v8654, 6
        %v8707 = vrot.slane %v8706, 4
        %v8708 = vrot.slane %v8655, 6
        %v8709 = vrot.slane %v8708, 4
        %v8710 = vrot.slane %v8656, 6
        %v8711 = vrot.slane %v8710, 4
        %v8712 = vrot.slane %v8657, 6
        %v8713 = vrot.slane %v8712, 4
        %v8722 = vmul.f32 %v8690, %v8699
        %v8723 = vmul.f32 %v8691, %v8701
        %v8724 = vmul.f32 %v8692, %v8703
        %v8725 = vmul.f32 %v8693, %v8705
        %v8726 = vmul.f32 %v8694, %v8707
        %v8727 = vmul.f32 %v8695, %v8709
        %v8728 = vmul.f32 %v8696, %v8711
        %v8729 = vmul.f32 %v8697, %v8713
        %v8738 = vlaneseq
        %v8739 = vshrl.u32 %v8738, 7
        %v8740 = vsub.s32 0, %v8739
        %v8741 = vrot.slane %v8722, %v8740
        %v8742 = vlaneseq
        %v8743 = vshrl.u32 %v8742, 7
        %v8744 = vsub.s32 4, %v8743
        %v8745 = vrot.slane %v8722, %v8744
        %v8746 = vlaneseq
        %v8747 = vshrl.u32 %v8746, 7
        %v8748 = vsub.s32 0, %v8747
        %v8749 = vrot.slane %v8723, %v8748
        %v8750 = vlaneseq
        %v8751 = vshrl.u32 %v8750, 7
        %v8752 = vsub.s32 4, %v8751
        %v8753 = vrot.slane %v8723, %v8752
        %v8754 = vlaneseq
        %v8755 = vshrl.u32 %v8754, 7
        %v8756 = vsub.s32 0, %v8755
        %v8757 = vrot.slane %v8724, %v8756
        %v8758 = vlaneseq
        %v8759 = vshrl.u32 %v8758, 7
        %v8760 = vsub.s32 4, %v8759
        %v8761 = vrot.slane %v8724, %v8760
        %v8762 = vlaneseq
        %v8763 = vshrl.u32 %v8762, 7
        %v8764 = vsub.s32 0, %v8763
        %v8765 = vrot.slane %v8725, %v8764
        %v8766 = vlaneseq
        %v8767 = vshrl.u32 %v8766, 7
        %v8768 = vsub.s32 4, %v8767
        %v8769 = vrot.slane %v8725, %v8768
        %v8770 = vlaneseq
        %v8771 = vshrl.u32 %v8770, 7
        %v8772 = vsub.s32 0, %v8771
        %v8773 = vrot.slane %v8726, %v8772
        %v8774 = vlaneseq
        %v8775 = vshrl.u32 %v8774, 7
        %v8776 = vsub.s32 4, %v8775
        %v8777 = vrot.slane %v8726, %v8776
        %v8778 = vlaneseq
        %v8779 = vshrl.u32 %v8778, 7
        %v8780 = vsub.s32 0, %v8779
        %v8781 = vrot.slane %v8727, %v8780
        %v8782 = vlaneseq
        %v8783 = vshrl.u32 %v8782, 7
        %v8784 = vsub.s32 4, %v8783
        %v8785 = vrot.slane %v8727, %v8784
        %v8786 = vlaneseq
        %v8787 = vshrl.u32 %v8786, 7
        %v8788 = vsub.s32 0, %v8787
        %v8789 = vrot.slane %v8728, %v8788
        %v8790 = vlaneseq
        %v8791 = vshrl.u32 %v8790, 7
        %v8792 = vsub.s32 4, %v8791
        %v8793 = vrot.slane %v8728, %v8792
        %v8794 = vlaneseq
        %v8795 = vshrl.u32 %v8794, 7
        %v8796 = vsub.s32 0, %v8795
        %v8797 = vrot.slane %v8729, %v8796
        %v8798 = vlaneseq
        %v8799 = vshrl.u32 %v8798, 7
        %v8800 = vsub.s32 4, %v8799
        %v8801 = vrot.slane %v8729, %v8800
        %v8818 = vmul.f32 %v8141, %v8741
        %v8819 = vmul.f32 %v8143, %v8745
        %v8820 = vmul.f32 %v8212, %v8749
        %v8821 = vmul.f32 %v8214, %v8753
        %v8822 = vmul.f32 %v8283, %v8757
        %v8823 = vmul.f32 %v8285, %v8761
        %v8824 = vmul.f32 %v8354, %v8765
        %v8825 = vmul.f32 %v8356, %v8769
        %v8826 = vmul.f32 %v8425, %v8773
        %v8827 = vmul.f32 %v8427, %v8777
        %v8828 = vmul.f32 %v8496, %v8781
        %v8829 = vmul.f32 %v8498, %v8785
        %v8830 = vmul.f32 %v8567, %v8789
        %v8831 = vmul.f32 %v8569, %v8793
        %v8832 = vmul.f32 %v8638, %v8797
        %v8833 = vmul.f32 %v8640, %v8801
        %v8850 = vcombine.low %v8818, %v8819
        %v8851 = vcombine.low %v8820, %v8821
        %v8852 = vcombine.low %v8822, %v8823
        %v8853 = vcombine.low %v8824, %v8825
        %v8855 = vunpack.c.l.s4 1966171168
        %v8856 = vunpack.c.0.s8 %v8855
        %v8857 = vlaneseq
        %v8858 = vshrl.u32 %v8857, 7
        %v8859 = vsub.s32 %v8856, %v8858
        %v8860 = vrot.slane %v8850, %v8859
        %v8862 = vunpack.c.l.s4 1966171168
        %v8863 = vunpack.c.0.s8 %v8862
        %v8864 = vlaneseq
        %v8865 = vshrl.u32 %v8864, 7
        %v8866 = vsub.s32 %v8863, %v8865
        %v8867 = vrot.slane %v8851, %v8866
        %v8869 = vunpack.c.l.s4 1966171168
        %v8870 = vunpack.c.0.s8 %v8869
        %v8871 = vlaneseq
        %v8872 = vshrl.u32 %v8871, 7
        %v8873 = vsub.s32 %v8870, %v8872
        %v8874 = vrot.slane %v8852, %v8873
        %v8876 = vunpack.c.l.s4 1966171168
        %v8877 = vunpack.c.0.s8 %v8876
        %v8878 = vlaneseq
        %v8879 = vshrl.u32 %v8878, 7
        %v8880 = vsub.s32 %v8877, %v8879
        %v8881 = vrot.slane %v8853, %v8880
        %v8882 = vcombine.low %v8860, %v8867
        %v8883 = vcombine.low %v8874, %v8881
        %v8885 = vunpack.c.l.s4 1966171168
        %v8886 = vunpack.c.0.s8 %v8885
        %v8887 = vlaneseq
        %v8888 = vshrl.u32 %v8887, 7
        %v8889 = vsub.s32 %v8886, %v8888
        %v8890 = vrot.slane %v8882, %v8889
        %v8892 = vunpack.c.l.s4 1966171168
        %v8893 = vunpack.c.0.s8 %v8892
        %v8894 = vlaneseq
        %v8895 = vshrl.u32 %v8894, 7
        %v8896 = vsub.s32 %v8893, %v8895
        %v8897 = vrot.slane %v8883, %v8896
        %v8898 = vcombine.low %v8890, %v8897
        %v8899 = vcombine.low %v8826, %v8827
        %v8900 = vcombine.low %v8828, %v8829
        %v8901 = vcombine.low %v8830, %v8831
        %v8902 = vcombine.low %v8832, %v8833
        %v8904 = vunpack.c.l.s4 1966171168
        %v8905 = vunpack.c.0.s8 %v8904
        %v8906 = vlaneseq
        %v8907 = vshrl.u32 %v8906, 7
        %v8908 = vsub.s32 %v8905, %v8907
        %v8909 = vrot.slane %v8899, %v8908
        %v8911 = vunpack.c.l.s4 1966171168
        %v8912 = vunpack.c.0.s8 %v8911
        %v8913 = vlaneseq
        %v8914 = vshrl.u32 %v8913, 7
        %v8915 = vsub.s32 %v8912, %v8914
        %v8916 = vrot.slane %v8900, %v8915
        %v8918 = vunpack.c.l.s4 1966171168
        %v8919 = vunpack.c.0.s8 %v8918
        %v8920 = vlaneseq
        %v8921 = vshrl.u32 %v8920, 7
        %v8922 = vsub.s32 %v8919, %v8921
        %v8923 = vrot.slane %v8901, %v8922
        %v8925 = vunpack.c.l.s4 1966171168
        %v8926 = vunpack.c.0.s8 %v8925
        %v8927 = vlaneseq
        %v8928 = vshrl.u32 %v8927, 7
        %v8929 = vsub.s32 %v8926, %v8928
        %v8930 = vrot.slane %v8902, %v8929
        %v8931 = vcombine.low %v8909, %v8916
        %v8932 = vcombine.low %v8923, %v8930
        %v8934 = vunpack.c.l.s4 1966171168
        %v8935 = vunpack.c.0.s8 %v8934
        %v8936 = vlaneseq
        %v8937 = vshrl.u32 %v8936, 7
        %v8938 = vsub.s32 %v8935, %v8937
        %v8939 = vrot.slane %v8931, %v8938
        %v8941 = vunpack.c.l.s4 1966171168
        %v8942 = vunpack.c.0.s8 %v8941
        %v8943 = vlaneseq
        %v8944 = vshrl.u32 %v8943, 7
        %v8945 = vsub.s32 %v8942, %v8944
        %v8946 = vrot.slane %v8932, %v8945
        %v8947 = vcombine.low %v8939, %v8946
        %8950 = vst [vmem:[%s343] sm:$0xff] %v8898
        %8951 = vst [vmem:[%s343 + $0x8] sm:$0xff] %v8947
        %s8952 = sand.u32 %s228, 1
        %s8953 = scalar_lea.sflag [#allocation5], %s8952
        %s8954 = sand.u32 %s228, 1
        %s8955 = smul.addr %s8954, 16
        %s8956 = scalar_lea.vmem [#allocation6], %s8955
        // Predicated region
        $region61: #{tpu_custom_call.1} parent=55 // pred_check
          %p8957 = pneg %p238
        $region62: #{tpu_custom_call.1} parent=55 // pred_check_branch
          %8959 = sbr.rel (%p8957) target = $region64
        $region63: #{tpu_custom_call.1} parent=55 // pred_region
          %s8960 = smul.u32 16, %s26
          %s8962 = ssub.s32 256, 256
          %8963 = vsyncadd %s8953, %s8962
          %s8964 = smul.addr %s8960, 16
          %s8965 = scalar_lea.hbm %s9, %s8964
          %s8967 = sshll.u32 %s8956, 4
          %s8968 = int_to_ptr.vmem [resolvable:$true] %s8967
          %8970 = dma.vmem_to_hbm [thread:$0]  %s8968, 256, %s8965, %s8953
        $region64: #{tpu_custom_call.1} parent=55 // pred_fallthru
          _
      $region56: #{tpu_custom_call.1} parent=5 // pred_fallthru
        _
      %p8971 = scmp.le.s32.totalorder 2, %s21
      // Predicated region
      $region65: #{tpu_custom_call.1} parent=5 // pred_check
        %p8972 = pneg %p8971
      $region66: #{tpu_custom_call.1} parent=5 // pred_check_branch
        %8974 = sbr.rel (%p8972) target = $region68
      $region67: #{tpu_custom_call.1} parent=5 // pred_region
        %s8975 = ssub.s32 %s21, 2
        // Predicated region
        $region69: #{tpu_custom_call.1} parent=67 // pred_check
          %p8976 = pneg %p244
        $region70: #{tpu_custom_call.1} parent=67 // pred_check_branch
          %8978 = sbr.rel (%p8976) target = $region72
        $region71: #{tpu_custom_call.1} parent=67 // pred_region
          %s8979 = sand.u32 %s229, 1
          %s8980 = scalar_lea.sflag [#allocation5], %s8979
          %s8981 = sand.u32 %s229, 1
          %s8982 = smul.addr %s8981, 16
          %s8983 = scalar_lea.vmem [#allocation6], %s8982
          %8984 = dma.done %s8980, 256
        $region72: #{tpu_custom_call.1} parent=67 // pred_fallthru
          _
      $region68: #{tpu_custom_call.1} parent=5 // pred_fallthru
        _
    $region6: #{tpu_custom_call.1} parent=1 // loop_footer
      %s25 = sadd.s32 1, %s21
    $region7: #{tpu_custom_call.1} parent=1 // loop_footer_branch
      %20 = sbr.rel target = $region3
    $region8: #{tpu_custom_call.1} parent=1 // loop_exit
      _
    %8985 = vsyncpa [#allocation4], 1
    %s8986 = scalar_lea.sflag [#allocation4], 1
    %8987 = vsyncpa %s8986, 1
    %8988 = vsyncpa [#allocation5], 1
    %s8989 = scalar_lea.sflag [#allocation5], 1
    %8990 = vsyncpa %s8989, 1

</llo_original>
